<compile_context>
chip_gen: v7x
topology: tpu7x:2x2x1
jax: 0.10.0
libtpu: 0.0.40
codegen_flags: <defaults>
</compile_context>

<pallas_src>
import math

import jax
import jax.numpy as jnp
import numpy as np
from jax import lax
from jax.experimental import pallas as pl
from jax.experimental.pallas import tpu as pltpu

# Small deterministic problem sizes (toy single-head config of the decoder).
B, S_T, S_M, D, F, L = 2, 8, 16, 32, 64, 6
BT, BM = B * S_T, B * S_M
SCALE = 1.0 / math.sqrt(D)
EPS = 1e-5
NEG_INF = -1e30


def decoder_kernel(y_ref, x_ref,
                   wqkv_s_ref, wo_s_ref, wq_c_ref, wo_c_ref,
                   w1_ref, w2_ref, wkv_all_ref, b1_ref, vecs_ref, o_ref):
    """Whole batch, all L layers unrolled, all weights resident in VMEM."""
    bf = jnp.bfloat16
    y = y_ref[...].astype(jnp.float32)          # (BT, D) carried activations, f32
    x_bf = x_ref[...].astype(bf)                # (BM, D) memory, cast once

    # Additive causal target mask (PyTorch tgt_mask), hoisted once.
    row = lax.broadcasted_iota(jnp.int32, (S_T, S_T), 0)
    col = lax.broadcasted_iota(jnp.int32, (S_T, S_T), 1)
    mask_add = jnp.where(row >= col, 0.0, NEG_INF).astype(jnp.float32)

    # Layer-invariant cross-attention K/V for ALL layers in one N=L*2D matmul.
    kv_all = jnp.dot(x_bf, wkv_all_ref[...],
                     preferred_element_type=jnp.float32)      # (BM, L*2D) f32
    kv_all = kv_all.astype(bf)                                # cast once

    def layernorm(v, g, b):
        # Two-pass variance (review concern re: E[x^2]-E[x]^2 cancellation);
        # rsqrt still goes to the otherwise-idle EUP slot.
        mu = jnp.mean(v, axis=-1, keepdims=True)
        c = v - mu
        var = jnp.mean(c * c, axis=-1, keepdims=True)
        return c * lax.rsqrt(var + EPS) * g + b

    def softmax(s):
        s = s - jnp.max(s, axis=-1, keepdims=True)
        p = jnp.exp(s)
        # Exact reciprocal: kernel is overhead-bound (not VPU/EUP-bound) at
        # these sizes and the approximate vrcp error compounds over 12
        # softmaxes (review correctness concern).
        return p * pl.reciprocal(jnp.sum(p, axis=-1, keepdims=True),
                                 approx=False)

    def mm(a, w_bf):
        # bf16 operands, f32 MXU accumulation.
        return jnp.dot(a.astype(bf), w_bf, preferred_element_type=jnp.float32)

    def attend(q_bf, k_bf, v_bf, add_mask=None):
        # q/k/v already bf16; scores & PV per batch element.
        s = jnp.einsum("bqd,bkd->bqk", q_bf, k_bf,
                       preferred_element_type=jnp.float32) * SCALE
        if add_mask is not None:
            s = s + add_mask
        p = softmax(s)
        return jnp.einsum("bqk,bkd->bqd", p.astype(bf), v_bf,
                          preferred_element_type=jnp.float32)

    for l in range(L):  # static unroll: one big basic block for the scheduler
        vl = vecs_ref[l]                        # (16, D) f32 (tile-aligned pad)
        bo_s, bo_c, b2 = vl[0:1], vl[1:2], vl[2:3]
        g0, g1, g2 = vl[3:4], vl[4:5], vl[5:6]
        be0, be1, be2 = vl[6:7], vl[7:8], vl[8:9]

        # --- self-attention (fused QKV projection, causal mask) + res + LN ---
        qkv = mm(y, wqkv_s_ref[l]).astype(bf)                 # (BT, 3D) bf16, cast once
        q = qkv[:, :D].reshape(B, S_T, D)
        k = qkv[:, D:2 * D].reshape(B, S_T, D)
        v = qkv[:, 2 * D:].reshape(B, S_T, D)
        ctx = attend(q, k, v, mask_add).reshape(BT, D)        # f32
        a = mm(ctx, wo_s_ref[l]) + bo_s
        y = layernorm(y + a, g0, be0)

        # --- cross-attention (memory = x, hoisted KV projection) + res + LN ---
        qc = mm(y, wq_c_ref[l]).astype(bf).reshape(B, S_T, D)
        kv_l = kv_all[:, l * 2 * D:(l + 1) * 2 * D]           # (BM, 2D) bf16
        kc = kv_l[:, :D].reshape(B, S_M, D)
        vc = kv_l[:, D:].reshape(B, S_M, D)
        ctx = attend(qc, kc, vc).reshape(BT, D)
        a = mm(ctx, wo_c_ref[l]) + bo_c
        y = layernorm(y + a, g1, be1)

        # --- position-wise FFN + residual + LN ---
        h = jnp.maximum(mm(y, w1_ref[l]) + b1_ref[l], 0.0)
        f = mm(h, w2_ref[l]) + b2
        y = layernorm(y + f, g2, be2)

    o_ref[...] = y.astype(o_ref.dtype)


def decoder_forward(y, x, params):
    bf = jnp.bfloat16
    # Resident bf16 matmul weights.
    wqkv_s = params["wqkv_s"].astype(bf)                       # (L, D, 3D)
    wo_s = params["wo_s"].astype(bf)                           # (L, D, D)
    wq_c = params["wq_c"].astype(bf)                           # (L, D, D)
    wo_c = params["wo_c"].astype(bf)                           # (L, D, D)
    w1 = params["w1"].astype(bf)                               # (L, D, F)
    w2 = params["w2"].astype(bf)                               # (L, F, D)
    # Hoisted cross-attention K/V projection: (L, D, 2D) -> (D, L*2D).
    wkv_all = jnp.transpose(params["wkv_c"].astype(bf),
                            (1, 0, 2)).reshape(D, L * 2 * D)   # (32, 384)
    # Per-layer small vectors, padded to 16 rows so slices stay tile-aligned:
    # rows [bo_s, bo_c, b2, gamma0..2, beta0..2, zeros x 7].
    vecs = jnp.concatenate(
        [params["bo_s"], params["bo_c"], params["b2"],
         params["gamma"], params["beta"],
         jnp.zeros((L, 7, D), jnp.float32)], axis=1)           # (L, 16, D)
    b1 = params["b1"]                                          # (L, 1, F)

    # Batch folded into the matmul M dimension (wrapper-side reshape is free).
    y_flat = y.reshape(BT, D)
    x_flat = x.reshape(BM, D)

    out_flat = pl.pallas_call(
        decoder_kernel,
        out_shape=jax.ShapeDtypeStruct((BT, D), jnp.float32),
    )(y_flat, x_flat, wqkv_s, wo_s, wq_c, wo_c, w1, w2, wkv_all, b1, vecs)
    return out_flat.reshape(B, S_T, D)


def init_params(key):
    ks = jax.random.split(key, 13)

    def w(k, shape, scale=0.05):
        return (scale * jax.random.normal(k, shape)).astype(jnp.float32)

    return dict(
        wqkv_s=w(ks[0], (L, D, 3 * D)),
        wo_s=w(ks[1], (L, D, D)),
        bo_s=w(ks[2], (L, 1, D)),
        wq_c=w(ks[3], (L, D, D)),
        wkv_c=w(ks[4], (L, D, 2 * D)),
        wo_c=w(ks[5], (L, D, D)),
        bo_c=w(ks[6], (L, 1, D)),
        w1=w(ks[7], (L, D, F)),
        b1=w(ks[8], (L, 1, F)),
        w2=w(ks[9], (L, F, D)),
        b2=w(ks[10], (L, 1, D)),
        gamma=(1.0 + 0.1 * jax.random.normal(ks[11], (L, 3, D))).astype(jnp.float32),
        beta=(0.05 * jax.random.normal(ks[12], (L, 3, D))).astype(jnp.float32),
    )


def decoder_ref(y, x, p):
    """Pure-JAX reference of the same decoder stack.

    Matmul operands are cast to bf16 (f32 accumulation), mirroring the kernel's
    MXU operand dtype so the comparison isolates kernel logic from the expected
    bf16 quantization of the weights/activations.
    """
    bf = jnp.bfloat16

    def mm(a, w):
        return jnp.einsum("bsd,de->bse", a.astype(bf), w.astype(bf),
                          preferred_element_type=jnp.float32)

    def ln(v, g, b):
        mu = v.mean(-1, keepdims=True)
        var = ((v - mu) ** 2).mean(-1, keepdims=True)
        return (v - mu) / jnp.sqrt(var + EPS) * g + b

    def softmax(s):
        s = s - s.max(-1, keepdims=True)
        e = jnp.exp(s)
        return e / e.sum(-1, keepdims=True)

    def attend(q, k, v, mask=None):
        s = jnp.einsum("bqd,bkd->bqk", q.astype(bf), k.astype(bf),
                       preferred_element_type=jnp.float32) * SCALE
        if mask is not None:
            s = jnp.where(mask, s, NEG_INF)
        return jnp.einsum("bqk,bkd->bqd", softmax(s).astype(bf), v.astype(bf),
                          preferred_element_type=jnp.float32)

    causal = np.tril(np.ones((S_T, S_T), dtype=bool))

    for l in range(L):
        qkv = mm(y, p["wqkv_s"][l])
        q, k, v = qkv[..., :D], qkv[..., D:2 * D], qkv[..., 2 * D:]
        a = mm(attend(q, k, v, causal), p["wo_s"][l]) + p["bo_s"][l]
        y = ln(y + a, p["gamma"][l, 0], p["beta"][l, 0])

        qc = mm(y, p["wq_c"][l])
        kv = mm(x, p["wkv_c"][l])
        kc, vc = kv[..., :D], kv[..., D:]
        a = mm(attend(qc, kc, vc), p["wo_c"][l]) + p["bo_c"][l]
        y = ln(y + a, p["gamma"][l, 1], p["beta"][l, 1])

        h = jnp.maximum(mm(y, p["w1"][l]) + p["b1"][l], 0.0)
        f = mm(h, p["w2"][l]) + p["b2"][l]
        y = ln(y + f, p["gamma"][l, 2], p["beta"][l, 2])
    return y


if __name__ == "__main__":
    key = jax.random.PRNGKey(0)
    ky, kx, kp = jax.random.split(key, 3)
    y_in = jax.random.normal(ky, (B, S_T, D), jnp.float32)
    x_in = jax.random.normal(kx, (B, S_M, D), jnp.float32)
    params = init_params(kp)

    out = decoder_forward(y_in, x_in, params)
    jax.block_until_ready(out)

    ref = decoder_ref(y_in, x_in, params)
    assert out.shape == (B, S_T, D)
    np.testing.assert_allclose(np.asarray(out), np.asarray(ref),
                               atol=5e-3, rtol=5e-3)
    print("KERNEL_OK")
</pallas_src>

<mosaic_0001>
module attributes {stable_mosaic.version = 11 : i64} {
  func.func @decoder_kernel(%arg0: memref<16x32xf32, #tpu.memory_space<vmem>>, %arg1: memref<32x32xf32, #tpu.memory_space<vmem>>, %arg2: memref<6x32x96xbf16, #tpu.memory_space<vmem>>, %arg3: memref<6x32x32xbf16, #tpu.memory_space<vmem>>, %arg4: memref<6x32x32xbf16, #tpu.memory_space<vmem>>, %arg5: memref<6x32x32xbf16, #tpu.memory_space<vmem>>, %arg6: memref<6x32x64xbf16, #tpu.memory_space<vmem>>, %arg7: memref<6x64x32xbf16, #tpu.memory_space<vmem>>, %arg8: memref<32x384xbf16, #tpu.memory_space<vmem>>, %arg9: memref<6x1x64xf32, #tpu.memory_space<vmem>>, %arg10: memref<6x16x32xf32, #tpu.memory_space<vmem>>, %arg11: memref<16x32xf32, #tpu.memory_space<vmem>>) attributes {dimension_semantics = [], scalar_prefetch = 0 : i64, scratch_operands = 0 : i64, tpu.core_type = #tpu.core_type<tc>} {
    %c0 = arith.constant 0 : index
    %c0_0 = arith.constant 0 : index
    %0 = vector.load %arg0[%c0, %c0_0] : memref<16x32xf32, #tpu.memory_space<vmem>>, vector<16x32xf32>
    %c0_1 = arith.constant 0 : index
    %c0_2 = arith.constant 0 : index
    %1 = vector.load %arg1[%c0_1, %c0_2] : memref<32x32xf32, #tpu.memory_space<vmem>>, vector<32x32xf32>
    %2 = arith.truncf %1 : vector<32x32xf32> to vector<32x32xbf16>
    %3 = tpu.iota {dimensions = array<i32: 0>} : vector<8x8xi32>
    %4 = tpu.iota {dimensions = array<i32: 1>} : vector<8x8xi32>
    %5 = arith.cmpi sge, %3, %4 : vector<8x8xi32>
    %cst = arith.constant 0.000000e+00 : f32
    %cst_3 = arith.constant -1.000000e+30 : f32
    %6 = vector.broadcast %cst : f32 to vector<8x8xf32>
    %7 = vector.broadcast %cst_3 : f32 to vector<8x8xf32>
    %8 = arith.select %5, %6, %7 : vector<8x8xi1>, vector<8x8xf32>
    %c0_4 = arith.constant 0 : index
    %c0_5 = arith.constant 0 : index
    %9 = vector.load %arg8[%c0_4, %c0_5] : memref<32x384xbf16, #tpu.memory_space<vmem>>, vector<32x384xbf16>
    %cst_6 = arith.constant dense<0.000000e+00> : vector<32x384xf32>
    %10 = tpu.matmul %2, %9, %cst_6 {dimension_numbers = #tpu.dot_dimension_numbers<[1], [0], [0], [1], [0, 0, 1, 1], [], []>} : vector<32x32xbf16>, vector<32x384xbf16>, vector<32x384xf32> -> vector<32x384xf32>
    %11 = arith.truncf %10 : vector<32x384xf32> to vector<32x384xbf16>
    %c0_7 = arith.constant 0 : index
    %c0_8 = arith.constant 0 : index
    %c0_9 = arith.constant 0 : index
    %12 = vector.load %arg10[%c0_7, %c0_8, %c0_9] : memref<6x16x32xf32, #tpu.memory_space<vmem>>, vector<1x16x32xf32>
    %13 = vector.shape_cast %12 : vector<1x16x32xf32> to vector<16x32xf32>
    %14 = vector.extract_strided_slice %13 {offsets = [0, 0], sizes = [1, 32], strides = [1, 1]} : vector<16x32xf32> to vector<1x32xf32>
    %15 = vector.extract_strided_slice %13 {offsets = [1, 0], sizes = [1, 32], strides = [1, 1]} : vector<16x32xf32> to vector<1x32xf32>
    %16 = vector.extract_strided_slice %13 {offsets = [2, 0], sizes = [1, 32], strides = [1, 1]} : vector<16x32xf32> to vector<1x32xf32>
    %17 = vector.extract_strided_slice %13 {offsets = [3, 0], sizes = [1, 32], strides = [1, 1]} : vector<16x32xf32> to vector<1x32xf32>
    %18 = vector.extract_strided_slice %13 {offsets = [4, 0], sizes = [1, 32], strides = [1, 1]} : vector<16x32xf32> to vector<1x32xf32>
    %19 = vector.extract_strided_slice %13 {offsets = [5, 0], sizes = [1, 32], strides = [1, 1]} : vector<16x32xf32> to vector<1x32xf32>
    %20 = vector.extract_strided_slice %13 {offsets = [6, 0], sizes = [1, 32], strides = [1, 1]} : vector<16x32xf32> to vector<1x32xf32>
    %21 = vector.extract_strided_slice %13 {offsets = [7, 0], sizes = [1, 32], strides = [1, 1]} : vector<16x32xf32> to vector<1x32xf32>
    %22 = vector.extract_strided_slice %13 {offsets = [8, 0], sizes = [1, 32], strides = [1, 1]} : vector<16x32xf32> to vector<1x32xf32>
    %c0_10 = arith.constant 0 : index
    %c0_11 = arith.constant 0 : index
    %c0_12 = arith.constant 0 : index
    %23 = vector.load %arg2[%c0_10, %c0_11, %c0_12] : memref<6x32x96xbf16, #tpu.memory_space<vmem>>, vector<1x32x96xbf16>
    %24 = vector.shape_cast %23 : vector<1x32x96xbf16> to vector<32x96xbf16>
    %25 = arith.truncf %0 : vector<16x32xf32> to vector<16x32xbf16>
    %cst_13 = arith.constant dense<0.000000e+00> : vector<16x96xf32>
    %26 = tpu.matmul %25, %24, %cst_13 {dimension_numbers = #tpu.dot_dimension_numbers<[1], [0], [0], [1], [0, 0, 1, 1], [], []>} : vector<16x32xbf16>, vector<32x96xbf16>, vector<16x96xf32> -> vector<16x96xf32>
    %27 = arith.truncf %26 : vector<16x96xf32> to vector<16x96xbf16>
    %28 = vector.extract_strided_slice %27 {offsets = [0, 0], sizes = [16, 32], strides = [1, 1]} : vector<16x96xbf16> to vector<16x32xbf16>
    %29 = vector.shape_cast %28 : vector<16x32xbf16> to vector<2x8x32xbf16>
    %30 = vector.extract_strided_slice %27 {offsets = [0, 32], sizes = [16, 32], strides = [1, 1]} : vector<16x96xbf16> to vector<16x32xbf16>
    %31 = vector.shape_cast %30 : vector<16x32xbf16> to vector<2x8x32xbf16>
    %32 = vector.extract_strided_slice %27 {offsets = [0, 64], sizes = [16, 32], strides = [1, 1]} : vector<16x96xbf16> to vector<16x32xbf16>
    %33 = vector.shape_cast %32 : vector<16x32xbf16> to vector<2x8x32xbf16>
    "tpu.trace_start"() <{level = 10 : i32, message = "bqd,bkd->bqk"}> : () -> ()
    %cst_14 = arith.constant dense<0.000000e+00> : vector<2x8x8xf32>
    %34 = tpu.matmul %29, %31, %cst_14 {dimension_numbers = #tpu.dot_dimension_numbers<[2], [2], [1], [1], [0, 0, 0, 1, 1, 1], [0], [0]>} : vector<2x8x32xbf16>, vector<2x8x32xbf16>, vector<2x8x8xf32> -> vector<2x8x8xf32>
    "tpu.trace_stop"() : () -> ()
    %cst_15 = arith.constant 0.176776692 : f32
    %35 = vector.broadcast %cst_15 : f32 to vector<2x8x8xf32>
    %36 = arith.mulf %34, %35 : vector<2x8x8xf32>
    %37 = vector.shape_cast %8 : vector<8x8xf32> to vector<1x8x8xf32>
    %38 = vector.broadcast %37 : vector<1x8x8xf32> to vector<2x8x8xf32>
    %39 = arith.addf %36, %38 : vector<2x8x8xf32>
    %cst_16 = arith.constant dense<0xFF800000> : vector<2x8xf32>
    %40 = vector.multi_reduction <maximumf>, %39, %cst_16 [2] : vector<2x8x8xf32> to vector<2x8xf32>
    %41 = vector.shape_cast %40 : vector<2x8xf32> to vector<2x8x1xf32>
    %42 = vector.broadcast %41 : vector<2x8x1xf32> to vector<2x8x8xf32>
    %43 = arith.subf %39, %42 : vector<2x8x8xf32>
    %44 = math.exp %43 : vector<2x8x8xf32>
    %cst_17 = arith.constant dense<0.000000e+00> : vector<2x8xf32>
    %45 = vector.multi_reduction <add>, %44, %cst_17 [2] : vector<2x8x8xf32> to vector<2x8xf32>
    %46 = vector.shape_cast %45 : vector<2x8xf32> to vector<2x8x1xf32>
    %47 = tpu.reciprocal %46 : vector<2x8x1xf32> -> vector<2x8x1xf32>
    %48 = vector.broadcast %47 : vector<2x8x1xf32> to vector<2x8x8xf32>
    %49 = arith.mulf %44, %48 : vector<2x8x8xf32>
    %50 = arith.truncf %49 : vector<2x8x8xf32> to vector<2x8x8xbf16>
    "tpu.trace_start"() <{level = 10 : i32, message = "bqk,bkd->bqd"}> : () -> ()
    %cst_18 = arith.constant dense<0.000000e+00> : vector<2x8x32xf32>
    %51 = tpu.matmul %50, %33, %cst_18 {dimension_numbers = #tpu.dot_dimension_numbers<[2], [1], [1], [2], [0, 0, 0, 1, 1, 2], [0], [0]>} : vector<2x8x8xbf16>, vector<2x8x32xbf16>, vector<2x8x32xf32> -> vector<2x8x32xf32>
    "tpu.trace_stop"() : () -> ()
    %52 = vector.shape_cast %51 : vector<2x8x32xf32> to vector<16x32xf32>
    %c0_19 = arith.constant 0 : index
    %c0_20 = arith.constant 0 : index
    %c0_21 = arith.constant 0 : index
    %53 = vector.load %arg3[%c0_19, %c0_20, %c0_21] : memref<6x32x32xbf16, #tpu.memory_space<vmem>>, vector<1x32x32xbf16>
    %54 = vector.shape_cast %53 : vector<1x32x32xbf16> to vector<32x32xbf16>
    %55 = arith.truncf %52 : vector<16x32xf32> to vector<16x32xbf16>
    %cst_22 = arith.constant dense<0.000000e+00> : vector<16x32xf32>
    %56 = tpu.matmul %55, %54, %cst_22 {dimension_numbers = #tpu.dot_dimension_numbers<[1], [0], [0], [1], [0, 0, 1, 1], [], []>} : vector<16x32xbf16>, vector<32x32xbf16>, vector<16x32xf32> -> vector<16x32xf32>
    %57 = vector.broadcast %14 : vector<1x32xf32> to vector<16x32xf32>
    %58 = arith.addf %56, %57 : vector<16x32xf32>
    %59 = arith.addf %0, %58 : vector<16x32xf32>
    %cst_23 = arith.constant dense<0.000000e+00> : vector<16xf32>
    %60 = vector.multi_reduction <add>, %59, %cst_23 [1] : vector<16x32xf32> to vector<16xf32>
    %61 = vector.shape_cast %60 : vector<16xf32> to vector<16x1xf32>
    %cst_24 = arith.constant 3.200000e+01 : f32
    %62 = vector.broadcast %cst_24 : f32 to vector<16x1xf32>
    %63 = arith.divf %61, %62 : vector<16x1xf32>
    %64 = vector.broadcast %63 : vector<16x1xf32> to vector<16x32xf32>
    %65 = arith.subf %59, %64 : vector<16x32xf32>
    %66 = arith.mulf %65, %65 : vector<16x32xf32>
    %cst_25 = arith.constant dense<0.000000e+00> : vector<16xf32>
    %67 = vector.multi_reduction <add>, %66, %cst_25 [1] : vector<16x32xf32> to vector<16xf32>
    %68 = vector.shape_cast %67 : vector<16xf32> to vector<16x1xf32>
    %cst_26 = arith.constant 3.200000e+01 : f32
    %69 = vector.broadcast %cst_26 : f32 to vector<16x1xf32>
    %70 = arith.divf %68, %69 : vector<16x1xf32>
    %cst_27 = arith.constant 9.99999974E-6 : f32
    %71 = vector.broadcast %cst_27 : f32 to vector<16x1xf32>
    %72 = arith.addf %70, %71 : vector<16x1xf32>
    %73 = math.rsqrt %72 : vector<16x1xf32>
    %74 = vector.broadcast %73 : vector<16x1xf32> to vector<16x32xf32>
    %75 = arith.mulf %65, %74 : vector<16x32xf32>
    %76 = vector.broadcast %17 : vector<1x32xf32> to vector<16x32xf32>
    %77 = arith.mulf %75, %76 : vector<16x32xf32>
    %78 = vector.broadcast %20 : vector<1x32xf32> to vector<16x32xf32>
    %79 = arith.addf %77, %78 : vector<16x32xf32>
    %c0_28 = arith.constant 0 : index
    %c0_29 = arith.constant 0 : index
    %c0_30 = arith.constant 0 : index
    %80 = vector.load %arg4[%c0_28, %c0_29, %c0_30] : memref<6x32x32xbf16, #tpu.memory_space<vmem>>, vector<1x32x32xbf16>
    %81 = vector.shape_cast %80 : vector<1x32x32xbf16> to vector<32x32xbf16>
    %82 = arith.truncf %79 : vector<16x32xf32> to vector<16x32xbf16>
    %cst_31 = arith.constant dense<0.000000e+00> : vector<16x32xf32>
    %83 = tpu.matmul %82, %81, %cst_31 {dimension_numbers = #tpu.dot_dimension_numbers<[1], [0], [0], [1], [0, 0, 1, 1], [], []>} : vector<16x32xbf16>, vector<32x32xbf16>, vector<16x32xf32> -> vector<16x32xf32>
    %84 = arith.truncf %83 : vector<16x32xf32> to vector<16x32xbf16>
    %85 = vector.shape_cast %84 : vector<16x32xbf16> to vector<2x8x32xbf16>
    %86 = vector.extract_strided_slice %11 {offsets = [0, 0], sizes = [32, 64], strides = [1, 1]} : vector<32x384xbf16> to vector<32x64xbf16>
    %87 = vector.extract_strided_slice %86 {offsets = [0, 0], sizes = [32, 32], strides = [1, 1]} : vector<32x64xbf16> to vector<32x32xbf16>
    %88 = vector.shape_cast %87 : vector<32x32xbf16> to vector<2x16x32xbf16>
    %89 = vector.extract_strided_slice %86 {offsets = [0, 32], sizes = [32, 32], strides = [1, 1]} : vector<32x64xbf16> to vector<32x32xbf16>
    %90 = vector.shape_cast %89 : vector<32x32xbf16> to vector<2x16x32xbf16>
    "tpu.trace_start"() <{level = 10 : i32, message = "bqd,bkd->bqk"}> : () -> ()
    %cst_32 = arith.constant dense<0.000000e+00> : vector<2x8x16xf32>
    %91 = tpu.matmul %85, %88, %cst_32 {dimension_numbers = #tpu.dot_dimension_numbers<[2], [2], [1], [1], [0, 0, 0, 1, 1, 1], [0], [0]>} : vector<2x8x32xbf16>, vector<2x16x32xbf16>, vector<2x8x16xf32> -> vector<2x8x16xf32>
    "tpu.trace_stop"() : () -> ()
    %cst_33 = arith.constant 0.176776692 : f32
    %92 = vector.broadcast %cst_33 : f32 to vector<2x8x16xf32>
    %93 = arith.mulf %91, %92 : vector<2x8x16xf32>
    %cst_34 = arith.constant dense<0xFF800000> : vector<2x8xf32>
    %94 = vector.multi_reduction <maximumf>, %93, %cst_34 [2] : vector<2x8x16xf32> to vector<2x8xf32>
    %95 = vector.shape_cast %94 : vector<2x8xf32> to vector<2x8x1xf32>
    %96 = vector.broadcast %95 : vector<2x8x1xf32> to vector<2x8x16xf32>
    %97 = arith.subf %93, %96 : vector<2x8x16xf32>
    %98 = math.exp %97 : vector<2x8x16xf32>
    %cst_35 = arith.constant dense<0.000000e+00> : vector<2x8xf32>
    %99 = vector.multi_reduction <add>, %98, %cst_35 [2] : vector<2x8x16xf32> to vector<2x8xf32>
    %100 = vector.shape_cast %99 : vector<2x8xf32> to vector<2x8x1xf32>
    %101 = tpu.reciprocal %100 : vector<2x8x1xf32> -> vector<2x8x1xf32>
    %102 = vector.broadcast %101 : vector<2x8x1xf32> to vector<2x8x16xf32>
    %103 = arith.mulf %98, %102 : vector<2x8x16xf32>
    %104 = arith.truncf %103 : vector<2x8x16xf32> to vector<2x8x16xbf16>
    "tpu.trace_start"() <{level = 10 : i32, message = "bqk,bkd->bqd"}> : () -> ()
    %cst_36 = arith.constant dense<0.000000e+00> : vector<2x8x32xf32>
    %105 = tpu.matmul %104, %90, %cst_36 {dimension_numbers = #tpu.dot_dimension_numbers<[2], [1], [1], [2], [0, 0, 0, 1, 1, 2], [0], [0]>} : vector<2x8x16xbf16>, vector<2x16x32xbf16>, vector<2x8x32xf32> -> vector<2x8x32xf32>
    "tpu.trace_stop"() : () -> ()
    %106 = vector.shape_cast %105 : vector<2x8x32xf32> to vector<16x32xf32>
    %c0_37 = arith.constant 0 : index
    %c0_38 = arith.constant 0 : index
    %c0_39 = arith.constant 0 : index
    %107 = vector.load %arg5[%c0_37, %c0_38, %c0_39] : memref<6x32x32xbf16, #tpu.memory_space<vmem>>, vector<1x32x32xbf16>
    %108 = vector.shape_cast %107 : vector<1x32x32xbf16> to vector<32x32xbf16>
    %109 = arith.truncf %106 : vector<16x32xf32> to vector<16x32xbf16>
    %cst_40 = arith.constant dense<0.000000e+00> : vector<16x32xf32>
    %110 = tpu.matmul %109, %108, %cst_40 {dimension_numbers = #tpu.dot_dimension_numbers<[1], [0], [0], [1], [0, 0, 1, 1], [], []>} : vector<16x32xbf16>, vector<32x32xbf16>, vector<16x32xf32> -> vector<16x32xf32>
    %111 = vector.broadcast %15 : vector<1x32xf32> to vector<16x32xf32>
    %112 = arith.addf %110, %111 : vector<16x32xf32>
    %113 = arith.addf %79, %112 : vector<16x32xf32>
    %cst_41 = arith.constant dense<0.000000e+00> : vector<16xf32>
    %114 = vector.multi_reduction <add>, %113, %cst_41 [1] : vector<16x32xf32> to vector<16xf32>
    %115 = vector.shape_cast %114 : vector<16xf32> to vector<16x1xf32>
    %cst_42 = arith.constant 3.200000e+01 : f32
    %116 = vector.broadcast %cst_42 : f32 to vector<16x1xf32>
    %117 = arith.divf %115, %116 : vector<16x1xf32>
    %118 = vector.broadcast %117 : vector<16x1xf32> to vector<16x32xf32>
    %119 = arith.subf %113, %118 : vector<16x32xf32>
    %120 = arith.mulf %119, %119 : vector<16x32xf32>
    %cst_43 = arith.constant dense<0.000000e+00> : vector<16xf32>
    %121 = vector.multi_reduction <add>, %120, %cst_43 [1] : vector<16x32xf32> to vector<16xf32>
    %122 = vector.shape_cast %121 : vector<16xf32> to vector<16x1xf32>
    %cst_44 = arith.constant 3.200000e+01 : f32
    %123 = vector.broadcast %cst_44 : f32 to vector<16x1xf32>
    %124 = arith.divf %122, %123 : vector<16x1xf32>
    %cst_45 = arith.constant 9.99999974E-6 : f32
    %125 = vector.broadcast %cst_45 : f32 to vector<16x1xf32>
    %126 = arith.addf %124, %125 : vector<16x1xf32>
    %127 = math.rsqrt %126 : vector<16x1xf32>
    %128 = vector.broadcast %127 : vector<16x1xf32> to vector<16x32xf32>
    %129 = arith.mulf %119, %128 : vector<16x32xf32>
    %130 = vector.broadcast %18 : vector<1x32xf32> to vector<16x32xf32>
    %131 = arith.mulf %129, %130 : vector<16x32xf32>
    %132 = vector.broadcast %21 : vector<1x32xf32> to vector<16x32xf32>
    %133 = arith.addf %131, %132 : vector<16x32xf32>
    %c0_46 = arith.constant 0 : index
    %c0_47 = arith.constant 0 : index
    %c0_48 = arith.constant 0 : index
    %134 = vector.load %arg6[%c0_46, %c0_47, %c0_48] : memref<6x32x64xbf16, #tpu.memory_space<vmem>>, vector<1x32x64xbf16>
    %135 = vector.shape_cast %134 : vector<1x32x64xbf16> to vector<32x64xbf16>
    %136 = arith.truncf %133 : vector<16x32xf32> to vector<16x32xbf16>
    %cst_49 = arith.constant dense<0.000000e+00> : vector<16x64xf32>
    %137 = tpu.matmul %136, %135, %cst_49 {dimension_numbers = #tpu.dot_dimension_numbers<[1], [0], [0], [1], [0, 0, 1, 1], [], []>} : vector<16x32xbf16>, vector<32x64xbf16>, vector<16x64xf32> -> vector<16x64xf32>
    %c0_50 = arith.constant 0 : index
    %c0_51 = arith.constant 0 : index
    %c0_52 = arith.constant 0 : index
    %138 = vector.load %arg9[%c0_50, %c0_51, %c0_52] : memref<6x1x64xf32, #tpu.memory_space<vmem>>, vector<1x1x64xf32>
    %139 = vector.shape_cast %138 : vector<1x1x64xf32> to vector<1x64xf32>
    %140 = vector.broadcast %139 : vector<1x64xf32> to vector<16x64xf32>
    %141 = arith.addf %137, %140 : vector<16x64xf32>
    %cst_53 = arith.constant 0.000000e+00 : f32
    %142 = vector.broadcast %cst_53 : f32 to vector<16x64xf32>
    %143 = arith.maximumf %141, %142 : vector<16x64xf32>
    %c0_54 = arith.constant 0 : index
    %c0_55 = arith.constant 0 : index
    %c0_56 = arith.constant 0 : index
    %144 = vector.load %arg7[%c0_54, %c0_55, %c0_56] : memref<6x64x32xbf16, #tpu.memory_space<vmem>>, vector<1x64x32xbf16>
    %145 = vector.shape_cast %144 : vector<1x64x32xbf16> to vector<64x32xbf16>
    %146 = arith.truncf %143 : vector<16x64xf32> to vector<16x64xbf16>
    %cst_57 = arith.constant dense<0.000000e+00> : vector<16x32xf32>
    %147 = tpu.matmul %146, %145, %cst_57 {dimension_numbers = #tpu.dot_dimension_numbers<[1], [0], [0], [1], [0, 0, 1, 1], [], []>} : vector<16x64xbf16>, vector<64x32xbf16>, vector<16x32xf32> -> vector<16x32xf32>
    %148 = vector.broadcast %16 : vector<1x32xf32> to vector<16x32xf32>
    %149 = arith.addf %147, %148 : vector<16x32xf32>
    %150 = arith.addf %133, %149 : vector<16x32xf32>
    %cst_58 = arith.constant dense<0.000000e+00> : vector<16xf32>
    %151 = vector.multi_reduction <add>, %150, %cst_58 [1] : vector<16x32xf32> to vector<16xf32>
    %152 = vector.shape_cast %151 : vector<16xf32> to vector<16x1xf32>
    %cst_59 = arith.constant 3.200000e+01 : f32
    %153 = vector.broadcast %cst_59 : f32 to vector<16x1xf32>
    %154 = arith.divf %152, %153 : vector<16x1xf32>
    %155 = vector.broadcast %154 : vector<16x1xf32> to vector<16x32xf32>
    %156 = arith.subf %150, %155 : vector<16x32xf32>
    %157 = arith.mulf %156, %156 : vector<16x32xf32>
    %cst_60 = arith.constant dense<0.000000e+00> : vector<16xf32>
    %158 = vector.multi_reduction <add>, %157, %cst_60 [1] : vector<16x32xf32> to vector<16xf32>
    %159 = vector.shape_cast %158 : vector<16xf32> to vector<16x1xf32>
    %cst_61 = arith.constant 3.200000e+01 : f32
    %160 = vector.broadcast %cst_61 : f32 to vector<16x1xf32>
    %161 = arith.divf %159, %160 : vector<16x1xf32>
    %cst_62 = arith.constant 9.99999974E-6 : f32
    %162 = vector.broadcast %cst_62 : f32 to vector<16x1xf32>
    %163 = arith.addf %161, %162 : vector<16x1xf32>
    %164 = math.rsqrt %163 : vector<16x1xf32>
    %165 = vector.broadcast %164 : vector<16x1xf32> to vector<16x32xf32>
    %166 = arith.mulf %156, %165 : vector<16x32xf32>
    %167 = vector.broadcast %19 : vector<1x32xf32> to vector<16x32xf32>
    %168 = arith.mulf %166, %167 : vector<16x32xf32>
    %169 = vector.broadcast %22 : vector<1x32xf32> to vector<16x32xf32>
    %170 = arith.addf %168, %169 : vector<16x32xf32>
    %c1 = arith.constant 1 : index
    %c0_63 = arith.constant 0 : index
    %c0_64 = arith.constant 0 : index
    %171 = vector.load %arg10[%c1, %c0_63, %c0_64] : memref<6x16x32xf32, #tpu.memory_space<vmem>>, vector<1x16x32xf32>
    %172 = vector.shape_cast %171 : vector<1x16x32xf32> to vector<16x32xf32>
    %173 = vector.extract_strided_slice %172 {offsets = [0, 0], sizes = [1, 32], strides = [1, 1]} : vector<16x32xf32> to vector<1x32xf32>
    %174 = vector.extract_strided_slice %172 {offsets = [1, 0], sizes = [1, 32], strides = [1, 1]} : vector<16x32xf32> to vector<1x32xf32>
    %175 = vector.extract_strided_slice %172 {offsets = [2, 0], sizes = [1, 32], strides = [1, 1]} : vector<16x32xf32> to vector<1x32xf32>
    %176 = vector.extract_strided_slice %172 {offsets = [3, 0], sizes = [1, 32], strides = [1, 1]} : vector<16x32xf32> to vector<1x32xf32>
    %177 = vector.extract_strided_slice %172 {offsets = [4, 0], sizes = [1, 32], strides = [1, 1]} : vector<16x32xf32> to vector<1x32xf32>
    %178 = vector.extract_strided_slice %172 {offsets = [5, 0], sizes = [1, 32], strides = [1, 1]} : vector<16x32xf32> to vector<1x32xf32>
    %179 = vector.extract_strided_slice %172 {offsets = [6, 0], sizes = [1, 32], strides = [1, 1]} : vector<16x32xf32> to vector<1x32xf32>
    %180 = vector.extract_strided_slice %172 {offsets = [7, 0], sizes = [1, 32], strides = [1, 1]} : vector<16x32xf32> to vector<1x32xf32>
    %181 = vector.extract_strided_slice %172 {offsets = [8, 0], sizes = [1, 32], strides = [1, 1]} : vector<16x32xf32> to vector<1x32xf32>
    %c1_65 = arith.constant 1 : index
    %c0_66 = arith.constant 0 : index
    %c0_67 = arith.constant 0 : index
    %182 = vector.load %arg2[%c1_65, %c0_66, %c0_67] : memref<6x32x96xbf16, #tpu.memory_space<vmem>>, vector<1x32x96xbf16>
    %183 = vector.shape_cast %182 : vector<1x32x96xbf16> to vector<32x96xbf16>
    %184 = arith.truncf %170 : vector<16x32xf32> to vector<16x32xbf16>
    %cst_68 = arith.constant dense<0.000000e+00> : vector<16x96xf32>
    %185 = tpu.matmul %184, %183, %cst_68 {dimension_numbers = #tpu.dot_dimension_numbers<[1], [0], [0], [1], [0, 0, 1, 1], [], []>} : vector<16x32xbf16>, vector<32x96xbf16>, vector<16x96xf32> -> vector<16x96xf32>
    %186 = arith.truncf %185 : vector<16x96xf32> to vector<16x96xbf16>
    %187 = vector.extract_strided_slice %186 {offsets = [0, 0], sizes = [16, 32], strides = [1, 1]} : vector<16x96xbf16> to vector<16x32xbf16>
    %188 = vector.shape_cast %187 : vector<16x32xbf16> to vector<2x8x32xbf16>
    %189 = vector.extract_strided_slice %186 {offsets = [0, 32], sizes = [16, 32], strides = [1, 1]} : vector<16x96xbf16> to vector<16x32xbf16>
    %190 = vector.shape_cast %189 : vector<16x32xbf16> to vector<2x8x32xbf16>
    %191 = vector.extract_strided_slice %186 {offsets = [0, 64], sizes = [16, 32], strides = [1, 1]} : vector<16x96xbf16> to vector<16x32xbf16>
    %192 = vector.shape_cast %191 : vector<16x32xbf16> to vector<2x8x32xbf16>
    "tpu.trace_start"() <{level = 10 : i32, message = "bqd,bkd->bqk"}> : () -> ()
    %cst_69 = arith.constant dense<0.000000e+00> : vector<2x8x8xf32>
    %193 = tpu.matmul %188, %190, %cst_69 {dimension_numbers = #tpu.dot_dimension_numbers<[2], [2], [1], [1], [0, 0, 0, 1, 1, 1], [0], [0]>} : vector<2x8x32xbf16>, vector<2x8x32xbf16>, vector<2x8x8xf32> -> vector<2x8x8xf32>
    "tpu.trace_stop"() : () -> ()
    %cst_70 = arith.constant 0.176776692 : f32
    %194 = vector.broadcast %cst_70 : f32 to vector<2x8x8xf32>
    %195 = arith.mulf %193, %194 : vector<2x8x8xf32>
    %196 = vector.shape_cast %8 : vector<8x8xf32> to vector<1x8x8xf32>
    %197 = vector.broadcast %196 : vector<1x8x8xf32> to vector<2x8x8xf32>
    %198 = arith.addf %195, %197 : vector<2x8x8xf32>
    %cst_71 = arith.constant dense<0xFF800000> : vector<2x8xf32>
    %199 = vector.multi_reduction <maximumf>, %198, %cst_71 [2] : vector<2x8x8xf32> to vector<2x8xf32>
    %200 = vector.shape_cast %199 : vector<2x8xf32> to vector<2x8x1xf32>
    %201 = vector.broadcast %200 : vector<2x8x1xf32> to vector<2x8x8xf32>
    %202 = arith.subf %198, %201 : vector<2x8x8xf32>
    %203 = math.exp %202 : vector<2x8x8xf32>
    %cst_72 = arith.constant dense<0.000000e+00> : vector<2x8xf32>
    %204 = vector.multi_reduction <add>, %203, %cst_72 [2] : vector<2x8x8xf32> to vector<2x8xf32>
    %205 = vector.shape_cast %204 : vector<2x8xf32> to vector<2x8x1xf32>
    %206 = tpu.reciprocal %205 : vector<2x8x1xf32> -> vector<2x8x1xf32>
    %207 = vector.broadcast %206 : vector<2x8x1xf32> to vector<2x8x8xf32>
    %208 = arith.mulf %203, %207 : vector<2x8x8xf32>
    %209 = arith.truncf %208 : vector<2x8x8xf32> to vector<2x8x8xbf16>
    "tpu.trace_start"() <{level = 10 : i32, message = "bqk,bkd->bqd"}> : () -> ()
    %cst_73 = arith.constant dense<0.000000e+00> : vector<2x8x32xf32>
    %210 = tpu.matmul %209, %192, %cst_73 {dimension_numbers = #tpu.dot_dimension_numbers<[2], [1], [1], [2], [0, 0, 0, 1, 1, 2], [0], [0]>} : vector<2x8x8xbf16>, vector<2x8x32xbf16>, vector<2x8x32xf32> -> vector<2x8x32xf32>
    "tpu.trace_stop"() : () -> ()
    %211 = vector.shape_cast %210 : vector<2x8x32xf32> to vector<16x32xf32>
    %c1_74 = arith.constant 1 : index
    %c0_75 = arith.constant 0 : index
    %c0_76 = arith.constant 0 : index
    %212 = vector.load %arg3[%c1_74, %c0_75, %c0_76] : memref<6x32x32xbf16, #tpu.memory_space<vmem>>, vector<1x32x32xbf16>
    %213 = vector.shape_cast %212 : vector<1x32x32xbf16> to vector<32x32xbf16>
    %214 = arith.truncf %211 : vector<16x32xf32> to vector<16x32xbf16>
    %cst_77 = arith.constant dense<0.000000e+00> : vector<16x32xf32>
    %215 = tpu.matmul %214, %213, %cst_77 {dimension_numbers = #tpu.dot_dimension_numbers<[1], [0], [0], [1], [0, 0, 1, 1], [], []>} : vector<16x32xbf16>, vector<32x32xbf16>, vector<16x32xf32> -> vector<16x32xf32>
    %216 = vector.broadcast %173 : vector<1x32xf32> to vector<16x32xf32>
    %217 = arith.addf %215, %216 : vector<16x32xf32>
    %218 = arith.addf %170, %217 : vector<16x32xf32>
    %cst_78 = arith.constant dense<0.000000e+00> : vector<16xf32>
    %219 = vector.multi_reduction <add>, %218, %cst_78 [1] : vector<16x32xf32> to vector<16xf32>
    %220 = vector.shape_cast %219 : vector<16xf32> to vector<16x1xf32>
    %cst_79 = arith.constant 3.200000e+01 : f32
    %221 = vector.broadcast %cst_79 : f32 to vector<16x1xf32>
    %222 = arith.divf %220, %221 : vector<16x1xf32>
    %223 = vector.broadcast %222 : vector<16x1xf32> to vector<16x32xf32>
    %224 = arith.subf %218, %223 : vector<16x32xf32>
    %225 = arith.mulf %224, %224 : vector<16x32xf32>
    %cst_80 = arith.constant dense<0.000000e+00> : vector<16xf32>
    %226 = vector.multi_reduction <add>, %225, %cst_80 [1] : vector<16x32xf32> to vector<16xf32>
    %227 = vector.shape_cast %226 : vector<16xf32> to vector<16x1xf32>
    %cst_81 = arith.constant 3.200000e+01 : f32
    %228 = vector.broadcast %cst_81 : f32 to vector<16x1xf32>
    %229 = arith.divf %227, %228 : vector<16x1xf32>
    %cst_82 = arith.constant 9.99999974E-6 : f32
    %230 = vector.broadcast %cst_82 : f32 to vector<16x1xf32>
    %231 = arith.addf %229, %230 : vector<16x1xf32>
    %232 = math.rsqrt %231 : vector<16x1xf32>
    %233 = vector.broadcast %232 : vector<16x1xf32> to vector<16x32xf32>
    %234 = arith.mulf %224, %233 : vector<16x32xf32>
    %235 = vector.broadcast %176 : vector<1x32xf32> to vector<16x32xf32>
    %236 = arith.mulf %234, %235 : vector<16x32xf32>
    %237 = vector.broadcast %179 : vector<1x32xf32> to vector<16x32xf32>
    %238 = arith.addf %236, %237 : vector<16x32xf32>
    %c1_83 = arith.constant 1 : index
    %c0_84 = arith.constant 0 : index
    %c0_85 = arith.constant 0 : index
    %239 = vector.load %arg4[%c1_83, %c0_84, %c0_85] : memref<6x32x32xbf16, #tpu.memory_space<vmem>>, vector<1x32x32xbf16>
    %240 = vector.shape_cast %239 : vector<1x32x32xbf16> to vector<32x32xbf16>
    %241 = arith.truncf %238 : vector<16x32xf32> to vector<16x32xbf16>
    %cst_86 = arith.constant dense<0.000000e+00> : vector<16x32xf32>
    %242 = tpu.matmul %241, %240, %cst_86 {dimension_numbers = #tpu.dot_dimension_numbers<[1], [0], [0], [1], [0, 0, 1, 1], [], []>} : vector<16x32xbf16>, vector<32x32xbf16>, vector<16x32xf32> -> vector<16x32xf32>
    %243 = arith.truncf %242 : vector<16x32xf32> to vector<16x32xbf16>
    %244 = vector.shape_cast %243 : vector<16x32xbf16> to vector<2x8x32xbf16>
    %245 = vector.extract_strided_slice %11 {offsets = [0, 64], sizes = [32, 64], strides = [1, 1]} : vector<32x384xbf16> to vector<32x64xbf16>
    %246 = vector.extract_strided_slice %245 {offsets = [0, 0], sizes = [32, 32], strides = [1, 1]} : vector<32x64xbf16> to vector<32x32xbf16>
    %247 = vector.shape_cast %246 : vector<32x32xbf16> to vector<2x16x32xbf16>
    %248 = vector.extract_strided_slice %245 {offsets = [0, 32], sizes = [32, 32], strides = [1, 1]} : vector<32x64xbf16> to vector<32x32xbf16>
    %249 = vector.shape_cast %248 : vector<32x32xbf16> to vector<2x16x32xbf16>
    "tpu.trace_start"() <{level = 10 : i32, message = "bqd,bkd->bqk"}> : () -> ()
    %cst_87 = arith.constant dense<0.000000e+00> : vector<2x8x16xf32>
    %250 = tpu.matmul %244, %247, %cst_87 {dimension_numbers = #tpu.dot_dimension_numbers<[2], [2], [1], [1], [0, 0, 0, 1, 1, 1], [0], [0]>} : vector<2x8x32xbf16>, vector<2x16x32xbf16>, vector<2x8x16xf32> -> vector<2x8x16xf32>
    "tpu.trace_stop"() : () -> ()
    %cst_88 = arith.constant 0.176776692 : f32
    %251 = vector.broadcast %cst_88 : f32 to vector<2x8x16xf32>
    %252 = arith.mulf %250, %251 : vector<2x8x16xf32>
    %cst_89 = arith.constant dense<0xFF800000> : vector<2x8xf32>
    %253 = vector.multi_reduction <maximumf>, %252, %cst_89 [2] : vector<2x8x16xf32> to vector<2x8xf32>
    %254 = vector.shape_cast %253 : vector<2x8xf32> to vector<2x8x1xf32>
    %255 = vector.broadcast %254 : vector<2x8x1xf32> to vector<2x8x16xf32>
    %256 = arith.subf %252, %255 : vector<2x8x16xf32>
    %257 = math.exp %256 : vector<2x8x16xf32>
    %cst_90 = arith.constant dense<0.000000e+00> : vector<2x8xf32>
    %258 = vector.multi_reduction <add>, %257, %cst_90 [2] : vector<2x8x16xf32> to vector<2x8xf32>
    %259 = vector.shape_cast %258 : vector<2x8xf32> to vector<2x8x1xf32>
    %260 = tpu.reciprocal %259 : vector<2x8x1xf32> -> vector<2x8x1xf32>
    %261 = vector.broadcast %260 : vector<2x8x1xf32> to vector<2x8x16xf32>
    %262 = arith.mulf %257, %261 : vector<2x8x16xf32>
    %263 = arith.truncf %262 : vector<2x8x16xf32> to vector<2x8x16xbf16>
    "tpu.trace_start"() <{level = 10 : i32, message = "bqk,bkd->bqd"}> : () -> ()
    %cst_91 = arith.constant dense<0.000000e+00> : vector<2x8x32xf32>
    %264 = tpu.matmul %263, %249, %cst_91 {dimension_numbers = #tpu.dot_dimension_numbers<[2], [1], [1], [2], [0, 0, 0, 1, 1, 2], [0], [0]>} : vector<2x8x16xbf16>, vector<2x16x32xbf16>, vector<2x8x32xf32> -> vector<2x8x32xf32>
    "tpu.trace_stop"() : () -> ()
    %265 = vector.shape_cast %264 : vector<2x8x32xf32> to vector<16x32xf32>
    %c1_92 = arith.constant 1 : index
    %c0_93 = arith.constant 0 : index
    %c0_94 = arith.constant 0 : index
    %266 = vector.load %arg5[%c1_92, %c0_93, %c0_94] : memref<6x32x32xbf16, #tpu.memory_space<vmem>>, vector<1x32x32xbf16>
    %267 = vector.shape_cast %266 : vector<1x32x32xbf16> to vector<32x32xbf16>
    %268 = arith.truncf %265 : vector<16x32xf32> to vector<16x32xbf16>
    %cst_95 = arith.constant dense<0.000000e+00> : vector<16x32xf32>
    %269 = tpu.matmul %268, %267, %cst_95 {dimension_numbers = #tpu.dot_dimension_numbers<[1], [0], [0], [1], [0, 0, 1, 1], [], []>} : vector<16x32xbf16>, vector<32x32xbf16>, vector<16x32xf32> -> vector<16x32xf32>
    %270 = vector.broadcast %174 : vector<1x32xf32> to vector<16x32xf32>
    %271 = arith.addf %269, %270 : vector<16x32xf32>
    %272 = arith.addf %238, %271 : vector<16x32xf32>
    %cst_96 = arith.constant dense<0.000000e+00> : vector<16xf32>
    %273 = vector.multi_reduction <add>, %272, %cst_96 [1] : vector<16x32xf32> to vector<16xf32>
    %274 = vector.shape_cast %273 : vector<16xf32> to vector<16x1xf32>
    %cst_97 = arith.constant 3.200000e+01 : f32
    %275 = vector.broadcast %cst_97 : f32 to vector<16x1xf32>
    %276 = arith.divf %274, %275 : vector<16x1xf32>
    %277 = vector.broadcast %276 : vector<16x1xf32> to vector<16x32xf32>
    %278 = arith.subf %272, %277 : vector<16x32xf32>
    %279 = arith.mulf %278, %278 : vector<16x32xf32>
    %cst_98 = arith.constant dense<0.000000e+00> : vector<16xf32>
    %280 = vector.multi_reduction <add>, %279, %cst_98 [1] : vector<16x32xf32> to vector<16xf32>
    %281 = vector.shape_cast %280 : vector<16xf32> to vector<16x1xf32>
    %cst_99 = arith.constant 3.200000e+01 : f32
    %282 = vector.broadcast %cst_99 : f32 to vector<16x1xf32>
    %283 = arith.divf %281, %282 : vector<16x1xf32>
    %cst_100 = arith.constant 9.99999974E-6 : f32
    %284 = vector.broadcast %cst_100 : f32 to vector<16x1xf32>
    %285 = arith.addf %283, %284 : vector<16x1xf32>
    %286 = math.rsqrt %285 : vector<16x1xf32>
    %287 = vector.broadcast %286 : vector<16x1xf32> to vector<16x32xf32>
    %288 = arith.mulf %278, %287 : vector<16x32xf32>
    %289 = vector.broadcast %177 : vector<1x32xf32> to vector<16x32xf32>
    %290 = arith.mulf %288, %289 : vector<16x32xf32>
    %291 = vector.broadcast %180 : vector<1x32xf32> to vector<16x32xf32>
    %292 = arith.addf %290, %291 : vector<16x32xf32>
    %c1_101 = arith.constant 1 : index
    %c0_102 = arith.constant 0 : index
    %c0_103 = arith.constant 0 : index
    %293 = vector.load %arg6[%c1_101, %c0_102, %c0_103] : memref<6x32x64xbf16, #tpu.memory_space<vmem>>, vector<1x32x64xbf16>
    %294 = vector.shape_cast %293 : vector<1x32x64xbf16> to vector<32x64xbf16>
    %295 = arith.truncf %292 : vector<16x32xf32> to vector<16x32xbf16>
    %cst_104 = arith.constant dense<0.000000e+00> : vector<16x64xf32>
    %296 = tpu.matmul %295, %294, %cst_104 {dimension_numbers = #tpu.dot_dimension_numbers<[1], [0], [0], [1], [0, 0, 1, 1], [], []>} : vector<16x32xbf16>, vector<32x64xbf16>, vector<16x64xf32> -> vector<16x64xf32>
    %c1_105 = arith.constant 1 : index
    %c0_106 = arith.constant 0 : index
    %c0_107 = arith.constant 0 : index
    %297 = vector.load %arg9[%c1_105, %c0_106, %c0_107] : memref<6x1x64xf32, #tpu.memory_space<vmem>>, vector<1x1x64xf32>
    %298 = vector.shape_cast %297 : vector<1x1x64xf32> to vector<1x64xf32>
    %299 = vector.broadcast %298 : vector<1x64xf32> to vector<16x64xf32>
    %300 = arith.addf %296, %299 : vector<16x64xf32>
    %cst_108 = arith.constant 0.000000e+00 : f32
    %301 = vector.broadcast %cst_108 : f32 to vector<16x64xf32>
    %302 = arith.maximumf %300, %301 : vector<16x64xf32>
    %c1_109 = arith.constant 1 : index
    %c0_110 = arith.constant 0 : index
    %c0_111 = arith.constant 0 : index
    %303 = vector.load %arg7[%c1_109, %c0_110, %c0_111] : memref<6x64x32xbf16, #tpu.memory_space<vmem>>, vector<1x64x32xbf16>
    %304 = vector.shape_cast %303 : vector<1x64x32xbf16> to vector<64x32xbf16>
    %305 = arith.truncf %302 : vector<16x64xf32> to vector<16x64xbf16>
    %cst_112 = arith.constant dense<0.000000e+00> : vector<16x32xf32>
    %306 = tpu.matmul %305, %304, %cst_112 {dimension_numbers = #tpu.dot_dimension_numbers<[1], [0], [0], [1], [0, 0, 1, 1], [], []>} : vector<16x64xbf16>, vector<64x32xbf16>, vector<16x32xf32> -> vector<16x32xf32>
    %307 = vector.broadcast %175 : vector<1x32xf32> to vector<16x32xf32>
    %308 = arith.addf %306, %307 : vector<16x32xf32>
    %309 = arith.addf %292, %308 : vector<16x32xf32>
    %cst_113 = arith.constant dense<0.000000e+00> : vector<16xf32>
    %310 = vector.multi_reduction <add>, %309, %cst_113 [1] : vector<16x32xf32> to vector<16xf32>
    %311 = vector.shape_cast %310 : vector<16xf32> to vector<16x1xf32>
    %cst_114 = arith.constant 3.200000e+01 : f32
    %312 = vector.broadcast %cst_114 : f32 to vector<16x1xf32>
    %313 = arith.divf %311, %312 : vector<16x1xf32>
    %314 = vector.broadcast %313 : vector<16x1xf32> to vector<16x32xf32>
    %315 = arith.subf %309, %314 : vector<16x32xf32>
    %316 = arith.mulf %315, %315 : vector<16x32xf32>
    %cst_115 = arith.constant dense<0.000000e+00> : vector<16xf32>
    %317 = vector.multi_reduction <add>, %316, %cst_115 [1] : vector<16x32xf32> to vector<16xf32>
    %318 = vector.shape_cast %317 : vector<16xf32> to vector<16x1xf32>
    %cst_116 = arith.constant 3.200000e+01 : f32
    %319 = vector.broadcast %cst_116 : f32 to vector<16x1xf32>
    %320 = arith.divf %318, %319 : vector<16x1xf32>
    %cst_117 = arith.constant 9.99999974E-6 : f32
    %321 = vector.broadcast %cst_117 : f32 to vector<16x1xf32>
    %322 = arith.addf %320, %321 : vector<16x1xf32>
    %323 = math.rsqrt %322 : vector<16x1xf32>
    %324 = vector.broadcast %323 : vector<16x1xf32> to vector<16x32xf32>
    %325 = arith.mulf %315, %324 : vector<16x32xf32>
    %326 = vector.broadcast %178 : vector<1x32xf32> to vector<16x32xf32>
    %327 = arith.mulf %325, %326 : vector<16x32xf32>
    %328 = vector.broadcast %181 : vector<1x32xf32> to vector<16x32xf32>
    %329 = arith.addf %327, %328 : vector<16x32xf32>
    %c2 = arith.constant 2 : index
    %c0_118 = arith.constant 0 : index
    %c0_119 = arith.constant 0 : index
    %330 = vector.load %arg10[%c2, %c0_118, %c0_119] : memref<6x16x32xf32, #tpu.memory_space<vmem>>, vector<1x16x32xf32>
    %331 = vector.shape_cast %330 : vector<1x16x32xf32> to vector<16x32xf32>
    %332 = vector.extract_strided_slice %331 {offsets = [0, 0], sizes = [1, 32], strides = [1, 1]} : vector<16x32xf32> to vector<1x32xf32>
    %333 = vector.extract_strided_slice %331 {offsets = [1, 0], sizes = [1, 32], strides = [1, 1]} : vector<16x32xf32> to vector<1x32xf32>
    %334 = vector.extract_strided_slice %331 {offsets = [2, 0], sizes = [1, 32], strides = [1, 1]} : vector<16x32xf32> to vector<1x32xf32>
    %335 = vector.extract_strided_slice %331 {offsets = [3, 0], sizes = [1, 32], strides = [1, 1]} : vector<16x32xf32> to vector<1x32xf32>
    %336 = vector.extract_strided_slice %331 {offsets = [4, 0], sizes = [1, 32], strides = [1, 1]} : vector<16x32xf32> to vector<1x32xf32>
    %337 = vector.extract_strided_slice %331 {offsets = [5, 0], sizes = [1, 32], strides = [1, 1]} : vector<16x32xf32> to vector<1x32xf32>
    %338 = vector.extract_strided_slice %331 {offsets = [6, 0], sizes = [1, 32], strides = [1, 1]} : vector<16x32xf32> to vector<1x32xf32>
    %339 = vector.extract_strided_slice %331 {offsets = [7, 0], sizes = [1, 32], strides = [1, 1]} : vector<16x32xf32> to vector<1x32xf32>
    %340 = vector.extract_strided_slice %331 {offsets = [8, 0], sizes = [1, 32], strides = [1, 1]} : vector<16x32xf32> to vector<1x32xf32>
    %c2_120 = arith.constant 2 : index
    %c0_121 = arith.constant 0 : index
    %c0_122 = arith.constant 0 : index
    %341 = vector.load %arg2[%c2_120, %c0_121, %c0_122] : memref<6x32x96xbf16, #tpu.memory_space<vmem>>, vector<1x32x96xbf16>
    %342 = vector.shape_cast %341 : vector<1x32x96xbf16> to vector<32x96xbf16>
    %343 = arith.truncf %329 : vector<16x32xf32> to vector<16x32xbf16>
    %cst_123 = arith.constant dense<0.000000e+00> : vector<16x96xf32>
    %344 = tpu.matmul %343, %342, %cst_123 {dimension_numbers = #tpu.dot_dimension_numbers<[1], [0], [0], [1], [0, 0, 1, 1], [], []>} : vector<16x32xbf16>, vector<32x96xbf16>, vector<16x96xf32> -> vector<16x96xf32>
    %345 = arith.truncf %344 : vector<16x96xf32> to vector<16x96xbf16>
    %346 = vector.extract_strided_slice %345 {offsets = [0, 0], sizes = [16, 32], strides = [1, 1]} : vector<16x96xbf16> to vector<16x32xbf16>
    %347 = vector.shape_cast %346 : vector<16x32xbf16> to vector<2x8x32xbf16>
    %348 = vector.extract_strided_slice %345 {offsets = [0, 32], sizes = [16, 32], strides = [1, 1]} : vector<16x96xbf16> to vector<16x32xbf16>
    %349 = vector.shape_cast %348 : vector<16x32xbf16> to vector<2x8x32xbf16>
    %350 = vector.extract_strided_slice %345 {offsets = [0, 64], sizes = [16, 32], strides = [1, 1]} : vector<16x96xbf16> to vector<16x32xbf16>
    %351 = vector.shape_cast %350 : vector<16x32xbf16> to vector<2x8x32xbf16>
    "tpu.trace_start"() <{level = 10 : i32, message = "bqd,bkd->bqk"}> : () -> ()
    %cst_124 = arith.constant dense<0.000000e+00> : vector<2x8x8xf32>
    %352 = tpu.matmul %347, %349, %cst_124 {dimension_numbers = #tpu.dot_dimension_numbers<[2], [2], [1], [1], [0, 0, 0, 1, 1, 1], [0], [0]>} : vector<2x8x32xbf16>, vector<2x8x32xbf16>, vector<2x8x8xf32> -> vector<2x8x8xf32>
    "tpu.trace_stop"() : () -> ()
    %cst_125 = arith.constant 0.176776692 : f32
    %353 = vector.broadcast %cst_125 : f32 to vector<2x8x8xf32>
    %354 = arith.mulf %352, %353 : vector<2x8x8xf32>
    %355 = vector.shape_cast %8 : vector<8x8xf32> to vector<1x8x8xf32>
    %356 = vector.broadcast %355 : vector<1x8x8xf32> to vector<2x8x8xf32>
    %357 = arith.addf %354, %356 : vector<2x8x8xf32>
    %cst_126 = arith.constant dense<0xFF800000> : vector<2x8xf32>
    %358 = vector.multi_reduction <maximumf>, %357, %cst_126 [2] : vector<2x8x8xf32> to vector<2x8xf32>
    %359 = vector.shape_cast %358 : vector<2x8xf32> to vector<2x8x1xf32>
    %360 = vector.broadcast %359 : vector<2x8x1xf32> to vector<2x8x8xf32>
    %361 = arith.subf %357, %360 : vector<2x8x8xf32>
    %362 = math.exp %361 : vector<2x8x8xf32>
    %cst_127 = arith.constant dense<0.000000e+00> : vector<2x8xf32>
    %363 = vector.multi_reduction <add>, %362, %cst_127 [2] : vector<2x8x8xf32> to vector<2x8xf32>
    %364 = vector.shape_cast %363 : vector<2x8xf32> to vector<2x8x1xf32>
    %365 = tpu.reciprocal %364 : vector<2x8x1xf32> -> vector<2x8x1xf32>
    %366 = vector.broadcast %365 : vector<2x8x1xf32> to vector<2x8x8xf32>
    %367 = arith.mulf %362, %366 : vector<2x8x8xf32>
    %368 = arith.truncf %367 : vector<2x8x8xf32> to vector<2x8x8xbf16>
    "tpu.trace_start"() <{level = 10 : i32, message = "bqk,bkd->bqd"}> : () -> ()
    %cst_128 = arith.constant dense<0.000000e+00> : vector<2x8x32xf32>
    %369 = tpu.matmul %368, %351, %cst_128 {dimension_numbers = #tpu.dot_dimension_numbers<[2], [1], [1], [2], [0, 0, 0, 1, 1, 2], [0], [0]>} : vector<2x8x8xbf16>, vector<2x8x32xbf16>, vector<2x8x32xf32> -> vector<2x8x32xf32>
    "tpu.trace_stop"() : () -> ()
    %370 = vector.shape_cast %369 : vector<2x8x32xf32> to vector<16x32xf32>
    %c2_129 = arith.constant 2 : index
    %c0_130 = arith.constant 0 : index
    %c0_131 = arith.constant 0 : index
    %371 = vector.load %arg3[%c2_129, %c0_130, %c0_131] : memref<6x32x32xbf16, #tpu.memory_space<vmem>>, vector<1x32x32xbf16>
    %372 = vector.shape_cast %371 : vector<1x32x32xbf16> to vector<32x32xbf16>
    %373 = arith.truncf %370 : vector<16x32xf32> to vector<16x32xbf16>
    %cst_132 = arith.constant dense<0.000000e+00> : vector<16x32xf32>
    %374 = tpu.matmul %373, %372, %cst_132 {dimension_numbers = #tpu.dot_dimension_numbers<[1], [0], [0], [1], [0, 0, 1, 1], [], []>} : vector<16x32xbf16>, vector<32x32xbf16>, vector<16x32xf32> -> vector<16x32xf32>
    %375 = vector.broadcast %332 : vector<1x32xf32> to vector<16x32xf32>
    %376 = arith.addf %374, %375 : vector<16x32xf32>
    %377 = arith.addf %329, %376 : vector<16x32xf32>
    %cst_133 = arith.constant dense<0.000000e+00> : vector<16xf32>
    %378 = vector.multi_reduction <add>, %377, %cst_133 [1] : vector<16x32xf32> to vector<16xf32>
    %379 = vector.shape_cast %378 : vector<16xf32> to vector<16x1xf32>
    %cst_134 = arith.constant 3.200000e+01 : f32
    %380 = vector.broadcast %cst_134 : f32 to vector<16x1xf32>
    %381 = arith.divf %379, %380 : vector<16x1xf32>
    %382 = vector.broadcast %381 : vector<16x1xf32> to vector<16x32xf32>
    %383 = arith.subf %377, %382 : vector<16x32xf32>
    %384 = arith.mulf %383, %383 : vector<16x32xf32>
    %cst_135 = arith.constant dense<0.000000e+00> : vector<16xf32>
    %385 = vector.multi_reduction <add>, %384, %cst_135 [1] : vector<16x32xf32> to vector<16xf32>
    %386 = vector.shape_cast %385 : vector<16xf32> to vector<16x1xf32>
    %cst_136 = arith.constant 3.200000e+01 : f32
    %387 = vector.broadcast %cst_136 : f32 to vector<16x1xf32>
    %388 = arith.divf %386, %387 : vector<16x1xf32>
    %cst_137 = arith.constant 9.99999974E-6 : f32
    %389 = vector.broadcast %cst_137 : f32 to vector<16x1xf32>
    %390 = arith.addf %388, %389 : vector<16x1xf32>
    %391 = math.rsqrt %390 : vector<16x1xf32>
    %392 = vector.broadcast %391 : vector<16x1xf32> to vector<16x32xf32>
    %393 = arith.mulf %383, %392 : vector<16x32xf32>
    %394 = vector.broadcast %335 : vector<1x32xf32> to vector<16x32xf32>
    %395 = arith.mulf %393, %394 : vector<16x32xf32>
    %396 = vector.broadcast %338 : vector<1x32xf32> to vector<16x32xf32>
    %397 = arith.addf %395, %396 : vector<16x32xf32>
    %c2_138 = arith.constant 2 : index
    %c0_139 = arith.constant 0 : index
    %c0_140 = arith.constant 0 : index
    %398 = vector.load %arg4[%c2_138, %c0_139, %c0_140] : memref<6x32x32xbf16, #tpu.memory_space<vmem>>, vector<1x32x32xbf16>
    %399 = vector.shape_cast %398 : vector<1x32x32xbf16> to vector<32x32xbf16>
    %400 = arith.truncf %397 : vector<16x32xf32> to vector<16x32xbf16>
    %cst_141 = arith.constant dense<0.000000e+00> : vector<16x32xf32>
    %401 = tpu.matmul %400, %399, %cst_141 {dimension_numbers = #tpu.dot_dimension_numbers<[1], [0], [0], [1], [0, 0, 1, 1], [], []>} : vector<16x32xbf16>, vector<32x32xbf16>, vector<16x32xf32> -> vector<16x32xf32>
    %402 = arith.truncf %401 : vector<16x32xf32> to vector<16x32xbf16>
    %403 = vector.shape_cast %402 : vector<16x32xbf16> to vector<2x8x32xbf16>
    %404 = vector.extract_strided_slice %11 {offsets = [0, 128], sizes = [32, 64], strides = [1, 1]} : vector<32x384xbf16> to vector<32x64xbf16>
    %405 = vector.extract_strided_slice %404 {offsets = [0, 0], sizes = [32, 32], strides = [1, 1]} : vector<32x64xbf16> to vector<32x32xbf16>
    %406 = vector.shape_cast %405 : vector<32x32xbf16> to vector<2x16x32xbf16>
    %407 = vector.extract_strided_slice %404 {offsets = [0, 32], sizes = [32, 32], strides = [1, 1]} : vector<32x64xbf16> to vector<32x32xbf16>
    %408 = vector.shape_cast %407 : vector<32x32xbf16> to vector<2x16x32xbf16>
    "tpu.trace_start"() <{level = 10 : i32, message = "bqd,bkd->bqk"}> : () -> ()
    %cst_142 = arith.constant dense<0.000000e+00> : vector<2x8x16xf32>
    %409 = tpu.matmul %403, %406, %cst_142 {dimension_numbers = #tpu.dot_dimension_numbers<[2], [2], [1], [1], [0, 0, 0, 1, 1, 1], [0], [0]>} : vector<2x8x32xbf16>, vector<2x16x32xbf16>, vector<2x8x16xf32> -> vector<2x8x16xf32>
    "tpu.trace_stop"() : () -> ()
    %cst_143 = arith.constant 0.176776692 : f32
    %410 = vector.broadcast %cst_143 : f32 to vector<2x8x16xf32>
    %411 = arith.mulf %409, %410 : vector<2x8x16xf32>
    %cst_144 = arith.constant dense<0xFF800000> : vector<2x8xf32>
    %412 = vector.multi_reduction <maximumf>, %411, %cst_144 [2] : vector<2x8x16xf32> to vector<2x8xf32>
    %413 = vector.shape_cast %412 : vector<2x8xf32> to vector<2x8x1xf32>
    %414 = vector.broadcast %413 : vector<2x8x1xf32> to vector<2x8x16xf32>
    %415 = arith.subf %411, %414 : vector<2x8x16xf32>
    %416 = math.exp %415 : vector<2x8x16xf32>
    %cst_145 = arith.constant dense<0.000000e+00> : vector<2x8xf32>
    %417 = vector.multi_reduction <add>, %416, %cst_145 [2] : vector<2x8x16xf32> to vector<2x8xf32>
    %418 = vector.shape_cast %417 : vector<2x8xf32> to vector<2x8x1xf32>
    %419 = tpu.reciprocal %418 : vector<2x8x1xf32> -> vector<2x8x1xf32>
    %420 = vector.broadcast %419 : vector<2x8x1xf32> to vector<2x8x16xf32>
    %421 = arith.mulf %416, %420 : vector<2x8x16xf32>
    %422 = arith.truncf %421 : vector<2x8x16xf32> to vector<2x8x16xbf16>
    "tpu.trace_start"() <{level = 10 : i32, message = "bqk,bkd->bqd"}> : () -> ()
    %cst_146 = arith.constant dense<0.000000e+00> : vector<2x8x32xf32>
    %423 = tpu.matmul %422, %408, %cst_146 {dimension_numbers = #tpu.dot_dimension_numbers<[2], [1], [1], [2], [0, 0, 0, 1, 1, 2], [0], [0]>} : vector<2x8x16xbf16>, vector<2x16x32xbf16>, vector<2x8x32xf32> -> vector<2x8x32xf32>
    "tpu.trace_stop"() : () -> ()
    %424 = vector.shape_cast %423 : vector<2x8x32xf32> to vector<16x32xf32>
    %c2_147 = arith.constant 2 : index
    %c0_148 = arith.constant 0 : index
    %c0_149 = arith.constant 0 : index
    %425 = vector.load %arg5[%c2_147, %c0_148, %c0_149] : memref<6x32x32xbf16, #tpu.memory_space<vmem>>, vector<1x32x32xbf16>
    %426 = vector.shape_cast %425 : vector<1x32x32xbf16> to vector<32x32xbf16>
    %427 = arith.truncf %424 : vector<16x32xf32> to vector<16x32xbf16>
    %cst_150 = arith.constant dense<0.000000e+00> : vector<16x32xf32>
    %428 = tpu.matmul %427, %426, %cst_150 {dimension_numbers = #tpu.dot_dimension_numbers<[1], [0], [0], [1], [0, 0, 1, 1], [], []>} : vector<16x32xbf16>, vector<32x32xbf16>, vector<16x32xf32> -> vector<16x32xf32>
    %429 = vector.broadcast %333 : vector<1x32xf32> to vector<16x32xf32>
    %430 = arith.addf %428, %429 : vector<16x32xf32>
    %431 = arith.addf %397, %430 : vector<16x32xf32>
    %cst_151 = arith.constant dense<0.000000e+00> : vector<16xf32>
    %432 = vector.multi_reduction <add>, %431, %cst_151 [1] : vector<16x32xf32> to vector<16xf32>
    %433 = vector.shape_cast %432 : vector<16xf32> to vector<16x1xf32>
    %cst_152 = arith.constant 3.200000e+01 : f32
    %434 = vector.broadcast %cst_152 : f32 to vector<16x1xf32>
    %435 = arith.divf %433, %434 : vector<16x1xf32>
    %436 = vector.broadcast %435 : vector<16x1xf32> to vector<16x32xf32>
    %437 = arith.subf %431, %436 : vector<16x32xf32>
    %438 = arith.mulf %437, %437 : vector<16x32xf32>
    %cst_153 = arith.constant dense<0.000000e+00> : vector<16xf32>
    %439 = vector.multi_reduction <add>, %438, %cst_153 [1] : vector<16x32xf32> to vector<16xf32>
    %440 = vector.shape_cast %439 : vector<16xf32> to vector<16x1xf32>
    %cst_154 = arith.constant 3.200000e+01 : f32
    %441 = vector.broadcast %cst_154 : f32 to vector<16x1xf32>
    %442 = arith.divf %440, %441 : vector<16x1xf32>
    %cst_155 = arith.constant 9.99999974E-6 : f32
    %443 = vector.broadcast %cst_155 : f32 to vector<16x1xf32>
    %444 = arith.addf %442, %443 : vector<16x1xf32>
    %445 = math.rsqrt %444 : vector<16x1xf32>
    %446 = vector.broadcast %445 : vector<16x1xf32> to vector<16x32xf32>
    %447 = arith.mulf %437, %446 : vector<16x32xf32>
    %448 = vector.broadcast %336 : vector<1x32xf32> to vector<16x32xf32>
    %449 = arith.mulf %447, %448 : vector<16x32xf32>
    %450 = vector.broadcast %339 : vector<1x32xf32> to vector<16x32xf32>
    %451 = arith.addf %449, %450 : vector<16x32xf32>
    %c2_156 = arith.constant 2 : index
    %c0_157 = arith.constant 0 : index
    %c0_158 = arith.constant 0 : index
    %452 = vector.load %arg6[%c2_156, %c0_157, %c0_158] : memref<6x32x64xbf16, #tpu.memory_space<vmem>>, vector<1x32x64xbf16>
    %453 = vector.shape_cast %452 : vector<1x32x64xbf16> to vector<32x64xbf16>
    %454 = arith.truncf %451 : vector<16x32xf32> to vector<16x32xbf16>
    %cst_159 = arith.constant dense<0.000000e+00> : vector<16x64xf32>
    %455 = tpu.matmul %454, %453, %cst_159 {dimension_numbers = #tpu.dot_dimension_numbers<[1], [0], [0], [1], [0, 0, 1, 1], [], []>} : vector<16x32xbf16>, vector<32x64xbf16>, vector<16x64xf32> -> vector<16x64xf32>
    %c2_160 = arith.constant 2 : index
    %c0_161 = arith.constant 0 : index
    %c0_162 = arith.constant 0 : index
    %456 = vector.load %arg9[%c2_160, %c0_161, %c0_162] : memref<6x1x64xf32, #tpu.memory_space<vmem>>, vector<1x1x64xf32>
    %457 = vector.shape_cast %456 : vector<1x1x64xf32> to vector<1x64xf32>
    %458 = vector.broadcast %457 : vector<1x64xf32> to vector<16x64xf32>
    %459 = arith.addf %455, %458 : vector<16x64xf32>
    %cst_163 = arith.constant 0.000000e+00 : f32
    %460 = vector.broadcast %cst_163 : f32 to vector<16x64xf32>
    %461 = arith.maximumf %459, %460 : vector<16x64xf32>
    %c2_164 = arith.constant 2 : index
    %c0_165 = arith.constant 0 : index
    %c0_166 = arith.constant 0 : index
    %462 = vector.load %arg7[%c2_164, %c0_165, %c0_166] : memref<6x64x32xbf16, #tpu.memory_space<vmem>>, vector<1x64x32xbf16>
    %463 = vector.shape_cast %462 : vector<1x64x32xbf16> to vector<64x32xbf16>
    %464 = arith.truncf %461 : vector<16x64xf32> to vector<16x64xbf16>
    %cst_167 = arith.constant dense<0.000000e+00> : vector<16x32xf32>
    %465 = tpu.matmul %464, %463, %cst_167 {dimension_numbers = #tpu.dot_dimension_numbers<[1], [0], [0], [1], [0, 0, 1, 1], [], []>} : vector<16x64xbf16>, vector<64x32xbf16>, vector<16x32xf32> -> vector<16x32xf32>
    %466 = vector.broadcast %334 : vector<1x32xf32> to vector<16x32xf32>
    %467 = arith.addf %465, %466 : vector<16x32xf32>
    %468 = arith.addf %451, %467 : vector<16x32xf32>
    %cst_168 = arith.constant dense<0.000000e+00> : vector<16xf32>
    %469 = vector.multi_reduction <add>, %468, %cst_168 [1] : vector<16x32xf32> to vector<16xf32>
    %470 = vector.shape_cast %469 : vector<16xf32> to vector<16x1xf32>
    %cst_169 = arith.constant 3.200000e+01 : f32
    %471 = vector.broadcast %cst_169 : f32 to vector<16x1xf32>
    %472 = arith.divf %470, %471 : vector<16x1xf32>
    %473 = vector.broadcast %472 : vector<16x1xf32> to vector<16x32xf32>
    %474 = arith.subf %468, %473 : vector<16x32xf32>
    %475 = arith.mulf %474, %474 : vector<16x32xf32>
    %cst_170 = arith.constant dense<0.000000e+00> : vector<16xf32>
    %476 = vector.multi_reduction <add>, %475, %cst_170 [1] : vector<16x32xf32> to vector<16xf32>
    %477 = vector.shape_cast %476 : vector<16xf32> to vector<16x1xf32>
    %cst_171 = arith.constant 3.200000e+01 : f32
    %478 = vector.broadcast %cst_171 : f32 to vector<16x1xf32>
    %479 = arith.divf %477, %478 : vector<16x1xf32>
    %cst_172 = arith.constant 9.99999974E-6 : f32
    %480 = vector.broadcast %cst_172 : f32 to vector<16x1xf32>
    %481 = arith.addf %479, %480 : vector<16x1xf32>
    %482 = math.rsqrt %481 : vector<16x1xf32>
    %483 = vector.broadcast %482 : vector<16x1xf32> to vector<16x32xf32>
    %484 = arith.mulf %474, %483 : vector<16x32xf32>
    %485 = vector.broadcast %337 : vector<1x32xf32> to vector<16x32xf32>
    %486 = arith.mulf %484, %485 : vector<16x32xf32>
    %487 = vector.broadcast %340 : vector<1x32xf32> to vector<16x32xf32>
    %488 = arith.addf %486, %487 : vector<16x32xf32>
    %c3 = arith.constant 3 : index
    %c0_173 = arith.constant 0 : index
    %c0_174 = arith.constant 0 : index
    %489 = vector.load %arg10[%c3, %c0_173, %c0_174] : memref<6x16x32xf32, #tpu.memory_space<vmem>>, vector<1x16x32xf32>
    %490 = vector.shape_cast %489 : vector<1x16x32xf32> to vector<16x32xf32>
    %491 = vector.extract_strided_slice %490 {offsets = [0, 0], sizes = [1, 32], strides = [1, 1]} : vector<16x32xf32> to vector<1x32xf32>
    %492 = vector.extract_strided_slice %490 {offsets = [1, 0], sizes = [1, 32], strides = [1, 1]} : vector<16x32xf32> to vector<1x32xf32>
    %493 = vector.extract_strided_slice %490 {offsets = [2, 0], sizes = [1, 32], strides = [1, 1]} : vector<16x32xf32> to vector<1x32xf32>
    %494 = vector.extract_strided_slice %490 {offsets = [3, 0], sizes = [1, 32], strides = [1, 1]} : vector<16x32xf32> to vector<1x32xf32>
    %495 = vector.extract_strided_slice %490 {offsets = [4, 0], sizes = [1, 32], strides = [1, 1]} : vector<16x32xf32> to vector<1x32xf32>
    %496 = vector.extract_strided_slice %490 {offsets = [5, 0], sizes = [1, 32], strides = [1, 1]} : vector<16x32xf32> to vector<1x32xf32>
    %497 = vector.extract_strided_slice %490 {offsets = [6, 0], sizes = [1, 32], strides = [1, 1]} : vector<16x32xf32> to vector<1x32xf32>
    %498 = vector.extract_strided_slice %490 {offsets = [7, 0], sizes = [1, 32], strides = [1, 1]} : vector<16x32xf32> to vector<1x32xf32>
    %499 = vector.extract_strided_slice %490 {offsets = [8, 0], sizes = [1, 32], strides = [1, 1]} : vector<16x32xf32> to vector<1x32xf32>
    %c3_175 = arith.constant 3 : index
    %c0_176 = arith.constant 0 : index
    %c0_177 = arith.constant 0 : index
    %500 = vector.load %arg2[%c3_175, %c0_176, %c0_177] : memref<6x32x96xbf16, #tpu.memory_space<vmem>>, vector<1x32x96xbf16>
    %501 = vector.shape_cast %500 : vector<1x32x96xbf16> to vector<32x96xbf16>
    %502 = arith.truncf %488 : vector<16x32xf32> to vector<16x32xbf16>
    %cst_178 = arith.constant dense<0.000000e+00> : vector<16x96xf32>
    %503 = tpu.matmul %502, %501, %cst_178 {dimension_numbers = #tpu.dot_dimension_numbers<[1], [0], [0], [1], [0, 0, 1, 1], [], []>} : vector<16x32xbf16>, vector<32x96xbf16>, vector<16x96xf32> -> vector<16x96xf32>
    %504 = arith.truncf %503 : vector<16x96xf32> to vector<16x96xbf16>
    %505 = vector.extract_strided_slice %504 {offsets = [0, 0], sizes = [16, 32], strides = [1, 1]} : vector<16x96xbf16> to vector<16x32xbf16>
    %506 = vector.shape_cast %505 : vector<16x32xbf16> to vector<2x8x32xbf16>
    %507 = vector.extract_strided_slice %504 {offsets = [0, 32], sizes = [16, 32], strides = [1, 1]} : vector<16x96xbf16> to vector<16x32xbf16>
    %508 = vector.shape_cast %507 : vector<16x32xbf16> to vector<2x8x32xbf16>
    %509 = vector.extract_strided_slice %504 {offsets = [0, 64], sizes = [16, 32], strides = [1, 1]} : vector<16x96xbf16> to vector<16x32xbf16>
    %510 = vector.shape_cast %509 : vector<16x32xbf16> to vector<2x8x32xbf16>
    "tpu.trace_start"() <{level = 10 : i32, message = "bqd,bkd->bqk"}> : () -> ()
    %cst_179 = arith.constant dense<0.000000e+00> : vector<2x8x8xf32>
    %511 = tpu.matmul %506, %508, %cst_179 {dimension_numbers = #tpu.dot_dimension_numbers<[2], [2], [1], [1], [0, 0, 0, 1, 1, 1], [0], [0]>} : vector<2x8x32xbf16>, vector<2x8x32xbf16>, vector<2x8x8xf32> -> vector<2x8x8xf32>
    "tpu.trace_stop"() : () -> ()
    %cst_180 = arith.constant 0.176776692 : f32
    %512 = vector.broadcast %cst_180 : f32 to vector<2x8x8xf32>
    %513 = arith.mulf %511, %512 : vector<2x8x8xf32>
    %514 = vector.shape_cast %8 : vector<8x8xf32> to vector<1x8x8xf32>
    %515 = vector.broadcast %514 : vector<1x8x8xf32> to vector<2x8x8xf32>
    %516 = arith.addf %513, %515 : vector<2x8x8xf32>
    %cst_181 = arith.constant dense<0xFF800000> : vector<2x8xf32>
    %517 = vector.multi_reduction <maximumf>, %516, %cst_181 [2] : vector<2x8x8xf32> to vector<2x8xf32>
    %518 = vector.shape_cast %517 : vector<2x8xf32> to vector<2x8x1xf32>
    %519 = vector.broadcast %518 : vector<2x8x1xf32> to vector<2x8x8xf32>
    %520 = arith.subf %516, %519 : vector<2x8x8xf32>
    %521 = math.exp %520 : vector<2x8x8xf32>
    %cst_182 = arith.constant dense<0.000000e+00> : vector<2x8xf32>
    %522 = vector.multi_reduction <add>, %521, %cst_182 [2] : vector<2x8x8xf32> to vector<2x8xf32>
    %523 = vector.shape_cast %522 : vector<2x8xf32> to vector<2x8x1xf32>
    %524 = tpu.reciprocal %523 : vector<2x8x1xf32> -> vector<2x8x1xf32>
    %525 = vector.broadcast %524 : vector<2x8x1xf32> to vector<2x8x8xf32>
    %526 = arith.mulf %521, %525 : vector<2x8x8xf32>
    %527 = arith.truncf %526 : vector<2x8x8xf32> to vector<2x8x8xbf16>
    "tpu.trace_start"() <{level = 10 : i32, message = "bqk,bkd->bqd"}> : () -> ()
    %cst_183 = arith.constant dense<0.000000e+00> : vector<2x8x32xf32>
    %528 = tpu.matmul %527, %510, %cst_183 {dimension_numbers = #tpu.dot_dimension_numbers<[2], [1], [1], [2], [0, 0, 0, 1, 1, 2], [0], [0]>} : vector<2x8x8xbf16>, vector<2x8x32xbf16>, vector<2x8x32xf32> -> vector<2x8x32xf32>
    "tpu.trace_stop"() : () -> ()
    %529 = vector.shape_cast %528 : vector<2x8x32xf32> to vector<16x32xf32>
    %c3_184 = arith.constant 3 : index
    %c0_185 = arith.constant 0 : index
    %c0_186 = arith.constant 0 : index
    %530 = vector.load %arg3[%c3_184, %c0_185, %c0_186] : memref<6x32x32xbf16, #tpu.memory_space<vmem>>, vector<1x32x32xbf16>
    %531 = vector.shape_cast %530 : vector<1x32x32xbf16> to vector<32x32xbf16>
    %532 = arith.truncf %529 : vector<16x32xf32> to vector<16x32xbf16>
    %cst_187 = arith.constant dense<0.000000e+00> : vector<16x32xf32>
    %533 = tpu.matmul %532, %531, %cst_187 {dimension_numbers = #tpu.dot_dimension_numbers<[1], [0], [0], [1], [0, 0, 1, 1], [], []>} : vector<16x32xbf16>, vector<32x32xbf16>, vector<16x32xf32> -> vector<16x32xf32>
    %534 = vector.broadcast %491 : vector<1x32xf32> to vector<16x32xf32>
    %535 = arith.addf %533, %534 : vector<16x32xf32>
    %536 = arith.addf %488, %535 : vector<16x32xf32>
    %cst_188 = arith.constant dense<0.000000e+00> : vector<16xf32>
    %537 = vector.multi_reduction <add>, %536, %cst_188 [1] : vector<16x32xf32> to vector<16xf32>
    %538 = vector.shape_cast %537 : vector<16xf32> to vector<16x1xf32>
    %cst_189 = arith.constant 3.200000e+01 : f32
    %539 = vector.broadcast %cst_189 : f32 to vector<16x1xf32>
    %540 = arith.divf %538, %539 : vector<16x1xf32>
    %541 = vector.broadcast %540 : vector<16x1xf32> to vector<16x32xf32>
    %542 = arith.subf %536, %541 : vector<16x32xf32>
    %543 = arith.mulf %542, %542 : vector<16x32xf32>
    %cst_190 = arith.constant dense<0.000000e+00> : vector<16xf32>
    %544 = vector.multi_reduction <add>, %543, %cst_190 [1] : vector<16x32xf32> to vector<16xf32>
    %545 = vector.shape_cast %544 : vector<16xf32> to vector<16x1xf32>
    %cst_191 = arith.constant 3.200000e+01 : f32
    %546 = vector.broadcast %cst_191 : f32 to vector<16x1xf32>
    %547 = arith.divf %545, %546 : vector<16x1xf32>
    %cst_192 = arith.constant 9.99999974E-6 : f32
    %548 = vector.broadcast %cst_192 : f32 to vector<16x1xf32>
    %549 = arith.addf %547, %548 : vector<16x1xf32>
    %550 = math.rsqrt %549 : vector<16x1xf32>
    %551 = vector.broadcast %550 : vector<16x1xf32> to vector<16x32xf32>
    %552 = arith.mulf %542, %551 : vector<16x32xf32>
    %553 = vector.broadcast %494 : vector<1x32xf32> to vector<16x32xf32>
    %554 = arith.mulf %552, %553 : vector<16x32xf32>
    %555 = vector.broadcast %497 : vector<1x32xf32> to vector<16x32xf32>
    %556 = arith.addf %554, %555 : vector<16x32xf32>
    %c3_193 = arith.constant 3 : index
    %c0_194 = arith.constant 0 : index
    %c0_195 = arith.constant 0 : index
    %557 = vector.load %arg4[%c3_193, %c0_194, %c0_195] : memref<6x32x32xbf16, #tpu.memory_space<vmem>>, vector<1x32x32xbf16>
    %558 = vector.shape_cast %557 : vector<1x32x32xbf16> to vector<32x32xbf16>
    %559 = arith.truncf %556 : vector<16x32xf32> to vector<16x32xbf16>
    %cst_196 = arith.constant dense<0.000000e+00> : vector<16x32xf32>
    %560 = tpu.matmul %559, %558, %cst_196 {dimension_numbers = #tpu.dot_dimension_numbers<[1], [0], [0], [1], [0, 0, 1, 1], [], []>} : vector<16x32xbf16>, vector<32x32xbf16>, vector<16x32xf32> -> vector<16x32xf32>
    %561 = arith.truncf %560 : vector<16x32xf32> to vector<16x32xbf16>
    %562 = vector.shape_cast %561 : vector<16x32xbf16> to vector<2x8x32xbf16>
    %563 = vector.extract_strided_slice %11 {offsets = [0, 192], sizes = [32, 64], strides = [1, 1]} : vector<32x384xbf16> to vector<32x64xbf16>
    %564 = vector.extract_strided_slice %563 {offsets = [0, 0], sizes = [32, 32], strides = [1, 1]} : vector<32x64xbf16> to vector<32x32xbf16>
    %565 = vector.shape_cast %564 : vector<32x32xbf16> to vector<2x16x32xbf16>
    %566 = vector.extract_strided_slice %563 {offsets = [0, 32], sizes = [32, 32], strides = [1, 1]} : vector<32x64xbf16> to vector<32x32xbf16>
    %567 = vector.shape_cast %566 : vector<32x32xbf16> to vector<2x16x32xbf16>
    "tpu.trace_start"() <{level = 10 : i32, message = "bqd,bkd->bqk"}> : () -> ()
    %cst_197 = arith.constant dense<0.000000e+00> : vector<2x8x16xf32>
    %568 = tpu.matmul %562, %565, %cst_197 {dimension_numbers = #tpu.dot_dimension_numbers<[2], [2], [1], [1], [0, 0, 0, 1, 1, 1], [0], [0]>} : vector<2x8x32xbf16>, vector<2x16x32xbf16>, vector<2x8x16xf32> -> vector<2x8x16xf32>
    "tpu.trace_stop"() : () -> ()
    %cst_198 = arith.constant 0.176776692 : f32
    %569 = vector.broadcast %cst_198 : f32 to vector<2x8x16xf32>
    %570 = arith.mulf %568, %569 : vector<2x8x16xf32>
    %cst_199 = arith.constant dense<0xFF800000> : vector<2x8xf32>
    %571 = vector.multi_reduction <maximumf>, %570, %cst_199 [2] : vector<2x8x16xf32> to vector<2x8xf32>
    %572 = vector.shape_cast %571 : vector<2x8xf32> to vector<2x8x1xf32>
    %573 = vector.broadcast %572 : vector<2x8x1xf32> to vector<2x8x16xf32>
    %574 = arith.subf %570, %573 : vector<2x8x16xf32>
    %575 = math.exp %574 : vector<2x8x16xf32>
    %cst_200 = arith.constant dense<0.000000e+00> : vector<2x8xf32>
    %576 = vector.multi_reduction <add>, %575, %cst_200 [2] : vector<2x8x16xf32> to vector<2x8xf32>
    %577 = vector.shape_cast %576 : vector<2x8xf32> to vector<2x8x1xf32>
    %578 = tpu.reciprocal %577 : vector<2x8x1xf32> -> vector<2x8x1xf32>
    %579 = vector.broadcast %578 : vector<2x8x1xf32> to vector<2x8x16xf32>
    %580 = arith.mulf %575, %579 : vector<2x8x16xf32>
    %581 = arith.truncf %580 : vector<2x8x16xf32> to vector<2x8x16xbf16>
    "tpu.trace_start"() <{level = 10 : i32, message = "bqk,bkd->bqd"}> : () -> ()
    %cst_201 = arith.constant dense<0.000000e+00> : vector<2x8x32xf32>
    %582 = tpu.matmul %581, %567, %cst_201 {dimension_numbers = #tpu.dot_dimension_numbers<[2], [1], [1], [2], [0, 0, 0, 1, 1, 2], [0], [0]>} : vector<2x8x16xbf16>, vector<2x16x32xbf16>, vector<2x8x32xf32> -> vector<2x8x32xf32>
    "tpu.trace_stop"() : () -> ()
    %583 = vector.shape_cast %582 : vector<2x8x32xf32> to vector<16x32xf32>
    %c3_202 = arith.constant 3 : index
    %c0_203 = arith.constant 0 : index
    %c0_204 = arith.constant 0 : index
    %584 = vector.load %arg5[%c3_202, %c0_203, %c0_204] : memref<6x32x32xbf16, #tpu.memory_space<vmem>>, vector<1x32x32xbf16>
    %585 = vector.shape_cast %584 : vector<1x32x32xbf16> to vector<32x32xbf16>
    %586 = arith.truncf %583 : vector<16x32xf32> to vector<16x32xbf16>
    %cst_205 = arith.constant dense<0.000000e+00> : vector<16x32xf32>
    %587 = tpu.matmul %586, %585, %cst_205 {dimension_numbers = #tpu.dot_dimension_numbers<[1], [0], [0], [1], [0, 0, 1, 1], [], []>} : vector<16x32xbf16>, vector<32x32xbf16>, vector<16x32xf32> -> vector<16x32xf32>
    %588 = vector.broadcast %492 : vector<1x32xf32> to vector<16x32xf32>
    %589 = arith.addf %587, %588 : vector<16x32xf32>
    %590 = arith.addf %556, %589 : vector<16x32xf32>
    %cst_206 = arith.constant dense<0.000000e+00> : vector<16xf32>
    %591 = vector.multi_reduction <add>, %590, %cst_206 [1] : vector<16x32xf32> to vector<16xf32>
    %592 = vector.shape_cast %591 : vector<16xf32> to vector<16x1xf32>
    %cst_207 = arith.constant 3.200000e+01 : f32
    %593 = vector.broadcast %cst_207 : f32 to vector<16x1xf32>
    %594 = arith.divf %592, %593 : vector<16x1xf32>
    %595 = vector.broadcast %594 : vector<16x1xf32> to vector<16x32xf32>
    %596 = arith.subf %590, %595 : vector<16x32xf32>
    %597 = arith.mulf %596, %596 : vector<16x32xf32>
    %cst_208 = arith.constant dense<0.000000e+00> : vector<16xf32>
    %598 = vector.multi_reduction <add>, %597, %cst_208 [1] : vector<16x32xf32> to vector<16xf32>
    %599 = vector.shape_cast %598 : vector<16xf32> to vector<16x1xf32>
    %cst_209 = arith.constant 3.200000e+01 : f32
    %600 = vector.broadcast %cst_209 : f32 to vector<16x1xf32>
    %601 = arith.divf %599, %600 : vector<16x1xf32>
    %cst_210 = arith.constant 9.99999974E-6 : f32
    %602 = vector.broadcast %cst_210 : f32 to vector<16x1xf32>
    %603 = arith.addf %601, %602 : vector<16x1xf32>
    %604 = math.rsqrt %603 : vector<16x1xf32>
    %605 = vector.broadcast %604 : vector<16x1xf32> to vector<16x32xf32>
    %606 = arith.mulf %596, %605 : vector<16x32xf32>
    %607 = vector.broadcast %495 : vector<1x32xf32> to vector<16x32xf32>
    %608 = arith.mulf %606, %607 : vector<16x32xf32>
    %609 = vector.broadcast %498 : vector<1x32xf32> to vector<16x32xf32>
    %610 = arith.addf %608, %609 : vector<16x32xf32>
    %c3_211 = arith.constant 3 : index
    %c0_212 = arith.constant 0 : index
    %c0_213 = arith.constant 0 : index
    %611 = vector.load %arg6[%c3_211, %c0_212, %c0_213] : memref<6x32x64xbf16, #tpu.memory_space<vmem>>, vector<1x32x64xbf16>
    %612 = vector.shape_cast %611 : vector<1x32x64xbf16> to vector<32x64xbf16>
    %613 = arith.truncf %610 : vector<16x32xf32> to vector<16x32xbf16>
    %cst_214 = arith.constant dense<0.000000e+00> : vector<16x64xf32>
    %614 = tpu.matmul %613, %612, %cst_214 {dimension_numbers = #tpu.dot_dimension_numbers<[1], [0], [0], [1], [0, 0, 1, 1], [], []>} : vector<16x32xbf16>, vector<32x64xbf16>, vector<16x64xf32> -> vector<16x64xf32>
    %c3_215 = arith.constant 3 : index
    %c0_216 = arith.constant 0 : index
    %c0_217 = arith.constant 0 : index
    %615 = vector.load %arg9[%c3_215, %c0_216, %c0_217] : memref<6x1x64xf32, #tpu.memory_space<vmem>>, vector<1x1x64xf32>
    %616 = vector.shape_cast %615 : vector<1x1x64xf32> to vector<1x64xf32>
    %617 = vector.broadcast %616 : vector<1x64xf32> to vector<16x64xf32>
    %618 = arith.addf %614, %617 : vector<16x64xf32>
    %cst_218 = arith.constant 0.000000e+00 : f32
    %619 = vector.broadcast %cst_218 : f32 to vector<16x64xf32>
    %620 = arith.maximumf %618, %619 : vector<16x64xf32>
    %c3_219 = arith.constant 3 : index
    %c0_220 = arith.constant 0 : index
    %c0_221 = arith.constant 0 : index
    %621 = vector.load %arg7[%c3_219, %c0_220, %c0_221] : memref<6x64x32xbf16, #tpu.memory_space<vmem>>, vector<1x64x32xbf16>
    %622 = vector.shape_cast %621 : vector<1x64x32xbf16> to vector<64x32xbf16>
    %623 = arith.truncf %620 : vector<16x64xf32> to vector<16x64xbf16>
    %cst_222 = arith.constant dense<0.000000e+00> : vector<16x32xf32>
    %624 = tpu.matmul %623, %622, %cst_222 {dimension_numbers = #tpu.dot_dimension_numbers<[1], [0], [0], [1], [0, 0, 1, 1], [], []>} : vector<16x64xbf16>, vector<64x32xbf16>, vector<16x32xf32> -> vector<16x32xf32>
    %625 = vector.broadcast %493 : vector<1x32xf32> to vector<16x32xf32>
    %626 = arith.addf %624, %625 : vector<16x32xf32>
    %627 = arith.addf %610, %626 : vector<16x32xf32>
    %cst_223 = arith.constant dense<0.000000e+00> : vector<16xf32>
    %628 = vector.multi_reduction <add>, %627, %cst_223 [1] : vector<16x32xf32> to vector<16xf32>
    %629 = vector.shape_cast %628 : vector<16xf32> to vector<16x1xf32>
    %cst_224 = arith.constant 3.200000e+01 : f32
    %630 = vector.broadcast %cst_224 : f32 to vector<16x1xf32>
    %631 = arith.divf %629, %630 : vector<16x1xf32>
    %632 = vector.broadcast %631 : vector<16x1xf32> to vector<16x32xf32>
    %633 = arith.subf %627, %632 : vector<16x32xf32>
    %634 = arith.mulf %633, %633 : vector<16x32xf32>
    %cst_225 = arith.constant dense<0.000000e+00> : vector<16xf32>
    %635 = vector.multi_reduction <add>, %634, %cst_225 [1] : vector<16x32xf32> to vector<16xf32>
    %636 = vector.shape_cast %635 : vector<16xf32> to vector<16x1xf32>
    %cst_226 = arith.constant 3.200000e+01 : f32
    %637 = vector.broadcast %cst_226 : f32 to vector<16x1xf32>
    %638 = arith.divf %636, %637 : vector<16x1xf32>
    %cst_227 = arith.constant 9.99999974E-6 : f32
    %639 = vector.broadcast %cst_227 : f32 to vector<16x1xf32>
    %640 = arith.addf %638, %639 : vector<16x1xf32>
    %641 = math.rsqrt %640 : vector<16x1xf32>
    %642 = vector.broadcast %641 : vector<16x1xf32> to vector<16x32xf32>
    %643 = arith.mulf %633, %642 : vector<16x32xf32>
    %644 = vector.broadcast %496 : vector<1x32xf32> to vector<16x32xf32>
    %645 = arith.mulf %643, %644 : vector<16x32xf32>
    %646 = vector.broadcast %499 : vector<1x32xf32> to vector<16x32xf32>
    %647 = arith.addf %645, %646 : vector<16x32xf32>
    %c4 = arith.constant 4 : index
    %c0_228 = arith.constant 0 : index
    %c0_229 = arith.constant 0 : index
    %648 = vector.load %arg10[%c4, %c0_228, %c0_229] : memref<6x16x32xf32, #tpu.memory_space<vmem>>, vector<1x16x32xf32>
    %649 = vector.shape_cast %648 : vector<1x16x32xf32> to vector<16x32xf32>
    %650 = vector.extract_strided_slice %649 {offsets = [0, 0], sizes = [1, 32], strides = [1, 1]} : vector<16x32xf32> to vector<1x32xf32>
    %651 = vector.extract_strided_slice %649 {offsets = [1, 0], sizes = [1, 32], strides = [1, 1]} : vector<16x32xf32> to vector<1x32xf32>
    %652 = vector.extract_strided_slice %649 {offsets = [2, 0], sizes = [1, 32], strides = [1, 1]} : vector<16x32xf32> to vector<1x32xf32>
    %653 = vector.extract_strided_slice %649 {offsets = [3, 0], sizes = [1, 32], strides = [1, 1]} : vector<16x32xf32> to vector<1x32xf32>
    %654 = vector.extract_strided_slice %649 {offsets = [4, 0], sizes = [1, 32], strides = [1, 1]} : vector<16x32xf32> to vector<1x32xf32>
    %655 = vector.extract_strided_slice %649 {offsets = [5, 0], sizes = [1, 32], strides = [1, 1]} : vector<16x32xf32> to vector<1x32xf32>
    %656 = vector.extract_strided_slice %649 {offsets = [6, 0], sizes = [1, 32], strides = [1, 1]} : vector<16x32xf32> to vector<1x32xf32>
    %657 = vector.extract_strided_slice %649 {offsets = [7, 0], sizes = [1, 32], strides = [1, 1]} : vector<16x32xf32> to vector<1x32xf32>
    %658 = vector.extract_strided_slice %649 {offsets = [8, 0], sizes = [1, 32], strides = [1, 1]} : vector<16x32xf32> to vector<1x32xf32>
    %c4_230 = arith.constant 4 : index
    %c0_231 = arith.constant 0 : index
    %c0_232 = arith.constant 0 : index
    %659 = vector.load %arg2[%c4_230, %c0_231, %c0_232] : memref<6x32x96xbf16, #tpu.memory_space<vmem>>, vector<1x32x96xbf16>
    %660 = vector.shape_cast %659 : vector<1x32x96xbf16> to vector<32x96xbf16>
    %661 = arith.truncf %647 : vector<16x32xf32> to vector<16x32xbf16>
    %cst_233 = arith.constant dense<0.000000e+00> : vector<16x96xf32>
    %662 = tpu.matmul %661, %660, %cst_233 {dimension_numbers = #tpu.dot_dimension_numbers<[1], [0], [0], [1], [0, 0, 1, 1], [], []>} : vector<16x32xbf16>, vector<32x96xbf16>, vector<16x96xf32> -> vector<16x96xf32>
    %663 = arith.truncf %662 : vector<16x96xf32> to vector<16x96xbf16>
    %664 = vector.extract_strided_slice %663 {offsets = [0, 0], sizes = [16, 32], strides = [1, 1]} : vector<16x96xbf16> to vector<16x32xbf16>
    %665 = vector.shape_cast %664 : vector<16x32xbf16> to vector<2x8x32xbf16>
    %666 = vector.extract_strided_slice %663 {offsets = [0, 32], sizes = [16, 32], strides = [1, 1]} : vector<16x96xbf16> to vector<16x32xbf16>
    %667 = vector.shape_cast %666 : vector<16x32xbf16> to vector<2x8x32xbf16>
    %668 = vector.extract_strided_slice %663 {offsets = [0, 64], sizes = [16, 32], strides = [1, 1]} : vector<16x96xbf16> to vector<16x32xbf16>
    %669 = vector.shape_cast %668 : vector<16x32xbf16> to vector<2x8x32xbf16>
    "tpu.trace_start"() <{level = 10 : i32, message = "bqd,bkd->bqk"}> : () -> ()
    %cst_234 = arith.constant dense<0.000000e+00> : vector<2x8x8xf32>
    %670 = tpu.matmul %665, %667, %cst_234 {dimension_numbers = #tpu.dot_dimension_numbers<[2], [2], [1], [1], [0, 0, 0, 1, 1, 1], [0], [0]>} : vector<2x8x32xbf16>, vector<2x8x32xbf16>, vector<2x8x8xf32> -> vector<2x8x8xf32>
    "tpu.trace_stop"() : () -> ()
    %cst_235 = arith.constant 0.176776692 : f32
    %671 = vector.broadcast %cst_235 : f32 to vector<2x8x8xf32>
    %672 = arith.mulf %670, %671 : vector<2x8x8xf32>
    %673 = vector.shape_cast %8 : vector<8x8xf32> to vector<1x8x8xf32>
    %674 = vector.broadcast %673 : vector<1x8x8xf32> to vector<2x8x8xf32>
    %675 = arith.addf %672, %674 : vector<2x8x8xf32>
    %cst_236 = arith.constant dense<0xFF800000> : vector<2x8xf32>
    %676 = vector.multi_reduction <maximumf>, %675, %cst_236 [2] : vector<2x8x8xf32> to vector<2x8xf32>
    %677 = vector.shape_cast %676 : vector<2x8xf32> to vector<2x8x1xf32>
    %678 = vector.broadcast %677 : vector<2x8x1xf32> to vector<2x8x8xf32>
    %679 = arith.subf %675, %678 : vector<2x8x8xf32>
    %680 = math.exp %679 : vector<2x8x8xf32>
    %cst_237 = arith.constant dense<0.000000e+00> : vector<2x8xf32>
    %681 = vector.multi_reduction <add>, %680, %cst_237 [2] : vector<2x8x8xf32> to vector<2x8xf32>
    %682 = vector.shape_cast %681 : vector<2x8xf32> to vector<2x8x1xf32>
    %683 = tpu.reciprocal %682 : vector<2x8x1xf32> -> vector<2x8x1xf32>
    %684 = vector.broadcast %683 : vector<2x8x1xf32> to vector<2x8x8xf32>
    %685 = arith.mulf %680, %684 : vector<2x8x8xf32>
    %686 = arith.truncf %685 : vector<2x8x8xf32> to vector<2x8x8xbf16>
    "tpu.trace_start"() <{level = 10 : i32, message = "bqk,bkd->bqd"}> : () -> ()
    %cst_238 = arith.constant dense<0.000000e+00> : vector<2x8x32xf32>
    %687 = tpu.matmul %686, %669, %cst_238 {dimension_numbers = #tpu.dot_dimension_numbers<[2], [1], [1], [2], [0, 0, 0, 1, 1, 2], [0], [0]>} : vector<2x8x8xbf16>, vector<2x8x32xbf16>, vector<2x8x32xf32> -> vector<2x8x32xf32>
    "tpu.trace_stop"() : () -> ()
    %688 = vector.shape_cast %687 : vector<2x8x32xf32> to vector<16x32xf32>
    %c4_239 = arith.constant 4 : index
    %c0_240 = arith.constant 0 : index
    %c0_241 = arith.constant 0 : index
    %689 = vector.load %arg3[%c4_239, %c0_240, %c0_241] : memref<6x32x32xbf16, #tpu.memory_space<vmem>>, vector<1x32x32xbf16>
    %690 = vector.shape_cast %689 : vector<1x32x32xbf16> to vector<32x32xbf16>
    %691 = arith.truncf %688 : vector<16x32xf32> to vector<16x32xbf16>
    %cst_242 = arith.constant dense<0.000000e+00> : vector<16x32xf32>
    %692 = tpu.matmul %691, %690, %cst_242 {dimension_numbers = #tpu.dot_dimension_numbers<[1], [0], [0], [1], [0, 0, 1, 1], [], []>} : vector<16x32xbf16>, vector<32x32xbf16>, vector<16x32xf32> -> vector<16x32xf32>
    %693 = vector.broadcast %650 : vector<1x32xf32> to vector<16x32xf32>
    %694 = arith.addf %692, %693 : vector<16x32xf32>
    %695 = arith.addf %647, %694 : vector<16x32xf32>
    %cst_243 = arith.constant dense<0.000000e+00> : vector<16xf32>
    %696 = vector.multi_reduction <add>, %695, %cst_243 [1] : vector<16x32xf32> to vector<16xf32>
    %697 = vector.shape_cast %696 : vector<16xf32> to vector<16x1xf32>
    %cst_244 = arith.constant 3.200000e+01 : f32
    %698 = vector.broadcast %cst_244 : f32 to vector<16x1xf32>
    %699 = arith.divf %697, %698 : vector<16x1xf32>
    %700 = vector.broadcast %699 : vector<16x1xf32> to vector<16x32xf32>
    %701 = arith.subf %695, %700 : vector<16x32xf32>
    %702 = arith.mulf %701, %701 : vector<16x32xf32>
    %cst_245 = arith.constant dense<0.000000e+00> : vector<16xf32>
    %703 = vector.multi_reduction <add>, %702, %cst_245 [1] : vector<16x32xf32> to vector<16xf32>
    %704 = vector.shape_cast %703 : vector<16xf32> to vector<16x1xf32>
    %cst_246 = arith.constant 3.200000e+01 : f32
    %705 = vector.broadcast %cst_246 : f32 to vector<16x1xf32>
    %706 = arith.divf %704, %705 : vector<16x1xf32>
    %cst_247 = arith.constant 9.99999974E-6 : f32
    %707 = vector.broadcast %cst_247 : f32 to vector<16x1xf32>
    %708 = arith.addf %706, %707 : vector<16x1xf32>
    %709 = math.rsqrt %708 : vector<16x1xf32>
    %710 = vector.broadcast %709 : vector<16x1xf32> to vector<16x32xf32>
    %711 = arith.mulf %701, %710 : vector<16x32xf32>
    %712 = vector.broadcast %653 : vector<1x32xf32> to vector<16x32xf32>
    %713 = arith.mulf %711, %712 : vector<16x32xf32>
    %714 = vector.broadcast %656 : vector<1x32xf32> to vector<16x32xf32>
    %715 = arith.addf %713, %714 : vector<16x32xf32>
    %c4_248 = arith.constant 4 : index
    %c0_249 = arith.constant 0 : index
    %c0_250 = arith.constant 0 : index
    %716 = vector.load %arg4[%c4_248, %c0_249, %c0_250] : memref<6x32x32xbf16, #tpu.memory_space<vmem>>, vector<1x32x32xbf16>
    %717 = vector.shape_cast %716 : vector<1x32x32xbf16> to vector<32x32xbf16>
    %718 = arith.truncf %715 : vector<16x32xf32> to vector<16x32xbf16>
    %cst_251 = arith.constant dense<0.000000e+00> : vector<16x32xf32>
    %719 = tpu.matmul %718, %717, %cst_251 {dimension_numbers = #tpu.dot_dimension_numbers<[1], [0], [0], [1], [0, 0, 1, 1], [], []>} : vector<16x32xbf16>, vector<32x32xbf16>, vector<16x32xf32> -> vector<16x32xf32>
    %720 = arith.truncf %719 : vector<16x32xf32> to vector<16x32xbf16>
    %721 = vector.shape_cast %720 : vector<16x32xbf16> to vector<2x8x32xbf16>
    %722 = vector.extract_strided_slice %11 {offsets = [0, 256], sizes = [32, 64], strides = [1, 1]} : vector<32x384xbf16> to vector<32x64xbf16>
    %723 = vector.extract_strided_slice %722 {offsets = [0, 0], sizes = [32, 32], strides = [1, 1]} : vector<32x64xbf16> to vector<32x32xbf16>
    %724 = vector.shape_cast %723 : vector<32x32xbf16> to vector<2x16x32xbf16>
    %725 = vector.extract_strided_slice %722 {offsets = [0, 32], sizes = [32, 32], strides = [1, 1]} : vector<32x64xbf16> to vector<32x32xbf16>
    %726 = vector.shape_cast %725 : vector<32x32xbf16> to vector<2x16x32xbf16>
    "tpu.trace_start"() <{level = 10 : i32, message = "bqd,bkd->bqk"}> : () -> ()
    %cst_252 = arith.constant dense<0.000000e+00> : vector<2x8x16xf32>
    %727 = tpu.matmul %721, %724, %cst_252 {dimension_numbers = #tpu.dot_dimension_numbers<[2], [2], [1], [1], [0, 0, 0, 1, 1, 1], [0], [0]>} : vector<2x8x32xbf16>, vector<2x16x32xbf16>, vector<2x8x16xf32> -> vector<2x8x16xf32>
    "tpu.trace_stop"() : () -> ()
    %cst_253 = arith.constant 0.176776692 : f32
    %728 = vector.broadcast %cst_253 : f32 to vector<2x8x16xf32>
    %729 = arith.mulf %727, %728 : vector<2x8x16xf32>
    %cst_254 = arith.constant dense<0xFF800000> : vector<2x8xf32>
    %730 = vector.multi_reduction <maximumf>, %729, %cst_254 [2] : vector<2x8x16xf32> to vector<2x8xf32>
    %731 = vector.shape_cast %730 : vector<2x8xf32> to vector<2x8x1xf32>
    %732 = vector.broadcast %731 : vector<2x8x1xf32> to vector<2x8x16xf32>
    %733 = arith.subf %729, %732 : vector<2x8x16xf32>
    %734 = math.exp %733 : vector<2x8x16xf32>
    %cst_255 = arith.constant dense<0.000000e+00> : vector<2x8xf32>
    %735 = vector.multi_reduction <add>, %734, %cst_255 [2] : vector<2x8x16xf32> to vector<2x8xf32>
    %736 = vector.shape_cast %735 : vector<2x8xf32> to vector<2x8x1xf32>
    %737 = tpu.reciprocal %736 : vector<2x8x1xf32> -> vector<2x8x1xf32>
    %738 = vector.broadcast %737 : vector<2x8x1xf32> to vector<2x8x16xf32>
    %739 = arith.mulf %734, %738 : vector<2x8x16xf32>
    %740 = arith.truncf %739 : vector<2x8x16xf32> to vector<2x8x16xbf16>
    "tpu.trace_start"() <{level = 10 : i32, message = "bqk,bkd->bqd"}> : () -> ()
    %cst_256 = arith.constant dense<0.000000e+00> : vector<2x8x32xf32>
    %741 = tpu.matmul %740, %726, %cst_256 {dimension_numbers = #tpu.dot_dimension_numbers<[2], [1], [1], [2], [0, 0, 0, 1, 1, 2], [0], [0]>} : vector<2x8x16xbf16>, vector<2x16x32xbf16>, vector<2x8x32xf32> -> vector<2x8x32xf32>
    "tpu.trace_stop"() : () -> ()
    %742 = vector.shape_cast %741 : vector<2x8x32xf32> to vector<16x32xf32>
    %c4_257 = arith.constant 4 : index
    %c0_258 = arith.constant 0 : index
    %c0_259 = arith.constant 0 : index
    %743 = vector.load %arg5[%c4_257, %c0_258, %c0_259] : memref<6x32x32xbf16, #tpu.memory_space<vmem>>, vector<1x32x32xbf16>
    %744 = vector.shape_cast %743 : vector<1x32x32xbf16> to vector<32x32xbf16>
    %745 = arith.truncf %742 : vector<16x32xf32> to vector<16x32xbf16>
    %cst_260 = arith.constant dense<0.000000e+00> : vector<16x32xf32>
    %746 = tpu.matmul %745, %744, %cst_260 {dimension_numbers = #tpu.dot_dimension_numbers<[1], [0], [0], [1], [0, 0, 1, 1], [], []>} : vector<16x32xbf16>, vector<32x32xbf16>, vector<16x32xf32> -> vector<16x32xf32>
    %747 = vector.broadcast %651 : vector<1x32xf32> to vector<16x32xf32>
    %748 = arith.addf %746, %747 : vector<16x32xf32>
    %749 = arith.addf %715, %748 : vector<16x32xf32>
    %cst_261 = arith.constant dense<0.000000e+00> : vector<16xf32>
    %750 = vector.multi_reduction <add>, %749, %cst_261 [1] : vector<16x32xf32> to vector<16xf32>
    %751 = vector.shape_cast %750 : vector<16xf32> to vector<16x1xf32>
    %cst_262 = arith.constant 3.200000e+01 : f32
    %752 = vector.broadcast %cst_262 : f32 to vector<16x1xf32>
    %753 = arith.divf %751, %752 : vector<16x1xf32>
    %754 = vector.broadcast %753 : vector<16x1xf32> to vector<16x32xf32>
    %755 = arith.subf %749, %754 : vector<16x32xf32>
    %756 = arith.mulf %755, %755 : vector<16x32xf32>
    %cst_263 = arith.constant dense<0.000000e+00> : vector<16xf32>
    %757 = vector.multi_reduction <add>, %756, %cst_263 [1] : vector<16x32xf32> to vector<16xf32>
    %758 = vector.shape_cast %757 : vector<16xf32> to vector<16x1xf32>
    %cst_264 = arith.constant 3.200000e+01 : f32
    %759 = vector.broadcast %cst_264 : f32 to vector<16x1xf32>
    %760 = arith.divf %758, %759 : vector<16x1xf32>
    %cst_265 = arith.constant 9.99999974E-6 : f32
    %761 = vector.broadcast %cst_265 : f32 to vector<16x1xf32>
    %762 = arith.addf %760, %761 : vector<16x1xf32>
    %763 = math.rsqrt %762 : vector<16x1xf32>
    %764 = vector.broadcast %763 : vector<16x1xf32> to vector<16x32xf32>
    %765 = arith.mulf %755, %764 : vector<16x32xf32>
    %766 = vector.broadcast %654 : vector<1x32xf32> to vector<16x32xf32>
    %767 = arith.mulf %765, %766 : vector<16x32xf32>
    %768 = vector.broadcast %657 : vector<1x32xf32> to vector<16x32xf32>
    %769 = arith.addf %767, %768 : vector<16x32xf32>
    %c4_266 = arith.constant 4 : index
    %c0_267 = arith.constant 0 : index
    %c0_268 = arith.constant 0 : index
    %770 = vector.load %arg6[%c4_266, %c0_267, %c0_268] : memref<6x32x64xbf16, #tpu.memory_space<vmem>>, vector<1x32x64xbf16>
    %771 = vector.shape_cast %770 : vector<1x32x64xbf16> to vector<32x64xbf16>
    %772 = arith.truncf %769 : vector<16x32xf32> to vector<16x32xbf16>
    %cst_269 = arith.constant dense<0.000000e+00> : vector<16x64xf32>
    %773 = tpu.matmul %772, %771, %cst_269 {dimension_numbers = #tpu.dot_dimension_numbers<[1], [0], [0], [1], [0, 0, 1, 1], [], []>} : vector<16x32xbf16>, vector<32x64xbf16>, vector<16x64xf32> -> vector<16x64xf32>
    %c4_270 = arith.constant 4 : index
    %c0_271 = arith.constant 0 : index
    %c0_272 = arith.constant 0 : index
    %774 = vector.load %arg9[%c4_270, %c0_271, %c0_272] : memref<6x1x64xf32, #tpu.memory_space<vmem>>, vector<1x1x64xf32>
    %775 = vector.shape_cast %774 : vector<1x1x64xf32> to vector<1x64xf32>
    %776 = vector.broadcast %775 : vector<1x64xf32> to vector<16x64xf32>
    %777 = arith.addf %773, %776 : vector<16x64xf32>
    %cst_273 = arith.constant 0.000000e+00 : f32
    %778 = vector.broadcast %cst_273 : f32 to vector<16x64xf32>
    %779 = arith.maximumf %777, %778 : vector<16x64xf32>
    %c4_274 = arith.constant 4 : index
    %c0_275 = arith.constant 0 : index
    %c0_276 = arith.constant 0 : index
    %780 = vector.load %arg7[%c4_274, %c0_275, %c0_276] : memref<6x64x32xbf16, #tpu.memory_space<vmem>>, vector<1x64x32xbf16>
    %781 = vector.shape_cast %780 : vector<1x64x32xbf16> to vector<64x32xbf16>
    %782 = arith.truncf %779 : vector<16x64xf32> to vector<16x64xbf16>
    %cst_277 = arith.constant dense<0.000000e+00> : vector<16x32xf32>
    %783 = tpu.matmul %782, %781, %cst_277 {dimension_numbers = #tpu.dot_dimension_numbers<[1], [0], [0], [1], [0, 0, 1, 1], [], []>} : vector<16x64xbf16>, vector<64x32xbf16>, vector<16x32xf32> -> vector<16x32xf32>
    %784 = vector.broadcast %652 : vector<1x32xf32> to vector<16x32xf32>
    %785 = arith.addf %783, %784 : vector<16x32xf32>
    %786 = arith.addf %769, %785 : vector<16x32xf32>
    %cst_278 = arith.constant dense<0.000000e+00> : vector<16xf32>
    %787 = vector.multi_reduction <add>, %786, %cst_278 [1] : vector<16x32xf32> to vector<16xf32>
    %788 = vector.shape_cast %787 : vector<16xf32> to vector<16x1xf32>
    %cst_279 = arith.constant 3.200000e+01 : f32
    %789 = vector.broadcast %cst_279 : f32 to vector<16x1xf32>
    %790 = arith.divf %788, %789 : vector<16x1xf32>
    %791 = vector.broadcast %790 : vector<16x1xf32> to vector<16x32xf32>
    %792 = arith.subf %786, %791 : vector<16x32xf32>
    %793 = arith.mulf %792, %792 : vector<16x32xf32>
    %cst_280 = arith.constant dense<0.000000e+00> : vector<16xf32>
    %794 = vector.multi_reduction <add>, %793, %cst_280 [1] : vector<16x32xf32> to vector<16xf32>
    %795 = vector.shape_cast %794 : vector<16xf32> to vector<16x1xf32>
    %cst_281 = arith.constant 3.200000e+01 : f32
    %796 = vector.broadcast %cst_281 : f32 to vector<16x1xf32>
    %797 = arith.divf %795, %796 : vector<16x1xf32>
    %cst_282 = arith.constant 9.99999974E-6 : f32
    %798 = vector.broadcast %cst_282 : f32 to vector<16x1xf32>
    %799 = arith.addf %797, %798 : vector<16x1xf32>
    %800 = math.rsqrt %799 : vector<16x1xf32>
    %801 = vector.broadcast %800 : vector<16x1xf32> to vector<16x32xf32>
    %802 = arith.mulf %792, %801 : vector<16x32xf32>
    %803 = vector.broadcast %655 : vector<1x32xf32> to vector<16x32xf32>
    %804 = arith.mulf %802, %803 : vector<16x32xf32>
    %805 = vector.broadcast %658 : vector<1x32xf32> to vector<16x32xf32>
    %806 = arith.addf %804, %805 : vector<16x32xf32>
    %c5 = arith.constant 5 : index
    %c0_283 = arith.constant 0 : index
    %c0_284 = arith.constant 0 : index
    %807 = vector.load %arg10[%c5, %c0_283, %c0_284] : memref<6x16x32xf32, #tpu.memory_space<vmem>>, vector<1x16x32xf32>
    %808 = vector.shape_cast %807 : vector<1x16x32xf32> to vector<16x32xf32>
    %809 = vector.extract_strided_slice %808 {offsets = [0, 0], sizes = [1, 32], strides = [1, 1]} : vector<16x32xf32> to vector<1x32xf32>
    %810 = vector.extract_strided_slice %808 {offsets = [1, 0], sizes = [1, 32], strides = [1, 1]} : vector<16x32xf32> to vector<1x32xf32>
    %811 = vector.extract_strided_slice %808 {offsets = [2, 0], sizes = [1, 32], strides = [1, 1]} : vector<16x32xf32> to vector<1x32xf32>
    %812 = vector.extract_strided_slice %808 {offsets = [3, 0], sizes = [1, 32], strides = [1, 1]} : vector<16x32xf32> to vector<1x32xf32>
    %813 = vector.extract_strided_slice %808 {offsets = [4, 0], sizes = [1, 32], strides = [1, 1]} : vector<16x32xf32> to vector<1x32xf32>
    %814 = vector.extract_strided_slice %808 {offsets = [5, 0], sizes = [1, 32], strides = [1, 1]} : vector<16x32xf32> to vector<1x32xf32>
    %815 = vector.extract_strided_slice %808 {offsets = [6, 0], sizes = [1, 32], strides = [1, 1]} : vector<16x32xf32> to vector<1x32xf32>
    %816 = vector.extract_strided_slice %808 {offsets = [7, 0], sizes = [1, 32], strides = [1, 1]} : vector<16x32xf32> to vector<1x32xf32>
    %817 = vector.extract_strided_slice %808 {offsets = [8, 0], sizes = [1, 32], strides = [1, 1]} : vector<16x32xf32> to vector<1x32xf32>
    %c5_285 = arith.constant 5 : index
    %c0_286 = arith.constant 0 : index
    %c0_287 = arith.constant 0 : index
    %818 = vector.load %arg2[%c5_285, %c0_286, %c0_287] : memref<6x32x96xbf16, #tpu.memory_space<vmem>>, vector<1x32x96xbf16>
    %819 = vector.shape_cast %818 : vector<1x32x96xbf16> to vector<32x96xbf16>
    %820 = arith.truncf %806 : vector<16x32xf32> to vector<16x32xbf16>
    %cst_288 = arith.constant dense<0.000000e+00> : vector<16x96xf32>
    %821 = tpu.matmul %820, %819, %cst_288 {dimension_numbers = #tpu.dot_dimension_numbers<[1], [0], [0], [1], [0, 0, 1, 1], [], []>} : vector<16x32xbf16>, vector<32x96xbf16>, vector<16x96xf32> -> vector<16x96xf32>
    %822 = arith.truncf %821 : vector<16x96xf32> to vector<16x96xbf16>
    %823 = vector.extract_strided_slice %822 {offsets = [0, 0], sizes = [16, 32], strides = [1, 1]} : vector<16x96xbf16> to vector<16x32xbf16>
    %824 = vector.shape_cast %823 : vector<16x32xbf16> to vector<2x8x32xbf16>
    %825 = vector.extract_strided_slice %822 {offsets = [0, 32], sizes = [16, 32], strides = [1, 1]} : vector<16x96xbf16> to vector<16x32xbf16>
    %826 = vector.shape_cast %825 : vector<16x32xbf16> to vector<2x8x32xbf16>
    %827 = vector.extract_strided_slice %822 {offsets = [0, 64], sizes = [16, 32], strides = [1, 1]} : vector<16x96xbf16> to vector<16x32xbf16>
    %828 = vector.shape_cast %827 : vector<16x32xbf16> to vector<2x8x32xbf16>
    "tpu.trace_start"() <{level = 10 : i32, message = "bqd,bkd->bqk"}> : () -> ()
    %cst_289 = arith.constant dense<0.000000e+00> : vector<2x8x8xf32>
    %829 = tpu.matmul %824, %826, %cst_289 {dimension_numbers = #tpu.dot_dimension_numbers<[2], [2], [1], [1], [0, 0, 0, 1, 1, 1], [0], [0]>} : vector<2x8x32xbf16>, vector<2x8x32xbf16>, vector<2x8x8xf32> -> vector<2x8x8xf32>
    "tpu.trace_stop"() : () -> ()
    %cst_290 = arith.constant 0.176776692 : f32
    %830 = vector.broadcast %cst_290 : f32 to vector<2x8x8xf32>
    %831 = arith.mulf %829, %830 : vector<2x8x8xf32>
    %832 = vector.shape_cast %8 : vector<8x8xf32> to vector<1x8x8xf32>
    %833 = vector.broadcast %832 : vector<1x8x8xf32> to vector<2x8x8xf32>
    %834 = arith.addf %831, %833 : vector<2x8x8xf32>
    %cst_291 = arith.constant dense<0xFF800000> : vector<2x8xf32>
    %835 = vector.multi_reduction <maximumf>, %834, %cst_291 [2] : vector<2x8x8xf32> to vector<2x8xf32>
    %836 = vector.shape_cast %835 : vector<2x8xf32> to vector<2x8x1xf32>
    %837 = vector.broadcast %836 : vector<2x8x1xf32> to vector<2x8x8xf32>
    %838 = arith.subf %834, %837 : vector<2x8x8xf32>
    %839 = math.exp %838 : vector<2x8x8xf32>
    %cst_292 = arith.constant dense<0.000000e+00> : vector<2x8xf32>
    %840 = vector.multi_reduction <add>, %839, %cst_292 [2] : vector<2x8x8xf32> to vector<2x8xf32>
    %841 = vector.shape_cast %840 : vector<2x8xf32> to vector<2x8x1xf32>
    %842 = tpu.reciprocal %841 : vector<2x8x1xf32> -> vector<2x8x1xf32>
    %843 = vector.broadcast %842 : vector<2x8x1xf32> to vector<2x8x8xf32>
    %844 = arith.mulf %839, %843 : vector<2x8x8xf32>
    %845 = arith.truncf %844 : vector<2x8x8xf32> to vector<2x8x8xbf16>
    "tpu.trace_start"() <{level = 10 : i32, message = "bqk,bkd->bqd"}> : () -> ()
    %cst_293 = arith.constant dense<0.000000e+00> : vector<2x8x32xf32>
    %846 = tpu.matmul %845, %828, %cst_293 {dimension_numbers = #tpu.dot_dimension_numbers<[2], [1], [1], [2], [0, 0, 0, 1, 1, 2], [0], [0]>} : vector<2x8x8xbf16>, vector<2x8x32xbf16>, vector<2x8x32xf32> -> vector<2x8x32xf32>
    "tpu.trace_stop"() : () -> ()
    %847 = vector.shape_cast %846 : vector<2x8x32xf32> to vector<16x32xf32>
    %c5_294 = arith.constant 5 : index
    %c0_295 = arith.constant 0 : index
    %c0_296 = arith.constant 0 : index
    %848 = vector.load %arg3[%c5_294, %c0_295, %c0_296] : memref<6x32x32xbf16, #tpu.memory_space<vmem>>, vector<1x32x32xbf16>
    %849 = vector.shape_cast %848 : vector<1x32x32xbf16> to vector<32x32xbf16>
    %850 = arith.truncf %847 : vector<16x32xf32> to vector<16x32xbf16>
    %cst_297 = arith.constant dense<0.000000e+00> : vector<16x32xf32>
    %851 = tpu.matmul %850, %849, %cst_297 {dimension_numbers = #tpu.dot_dimension_numbers<[1], [0], [0], [1], [0, 0, 1, 1], [], []>} : vector<16x32xbf16>, vector<32x32xbf16>, vector<16x32xf32> -> vector<16x32xf32>
    %852 = vector.broadcast %809 : vector<1x32xf32> to vector<16x32xf32>
    %853 = arith.addf %851, %852 : vector<16x32xf32>
    %854 = arith.addf %806, %853 : vector<16x32xf32>
    %cst_298 = arith.constant dense<0.000000e+00> : vector<16xf32>
    %855 = vector.multi_reduction <add>, %854, %cst_298 [1] : vector<16x32xf32> to vector<16xf32>
    %856 = vector.shape_cast %855 : vector<16xf32> to vector<16x1xf32>
    %cst_299 = arith.constant 3.200000e+01 : f32
    %857 = vector.broadcast %cst_299 : f32 to vector<16x1xf32>
    %858 = arith.divf %856, %857 : vector<16x1xf32>
    %859 = vector.broadcast %858 : vector<16x1xf32> to vector<16x32xf32>
    %860 = arith.subf %854, %859 : vector<16x32xf32>
    %861 = arith.mulf %860, %860 : vector<16x32xf32>
    %cst_300 = arith.constant dense<0.000000e+00> : vector<16xf32>
    %862 = vector.multi_reduction <add>, %861, %cst_300 [1] : vector<16x32xf32> to vector<16xf32>
    %863 = vector.shape_cast %862 : vector<16xf32> to vector<16x1xf32>
    %cst_301 = arith.constant 3.200000e+01 : f32
    %864 = vector.broadcast %cst_301 : f32 to vector<16x1xf32>
    %865 = arith.divf %863, %864 : vector<16x1xf32>
    %cst_302 = arith.constant 9.99999974E-6 : f32
    %866 = vector.broadcast %cst_302 : f32 to vector<16x1xf32>
    %867 = arith.addf %865, %866 : vector<16x1xf32>
    %868 = math.rsqrt %867 : vector<16x1xf32>
    %869 = vector.broadcast %868 : vector<16x1xf32> to vector<16x32xf32>
    %870 = arith.mulf %860, %869 : vector<16x32xf32>
    %871 = vector.broadcast %812 : vector<1x32xf32> to vector<16x32xf32>
    %872 = arith.mulf %870, %871 : vector<16x32xf32>
    %873 = vector.broadcast %815 : vector<1x32xf32> to vector<16x32xf32>
    %874 = arith.addf %872, %873 : vector<16x32xf32>
    %c5_303 = arith.constant 5 : index
    %c0_304 = arith.constant 0 : index
    %c0_305 = arith.constant 0 : index
    %875 = vector.load %arg4[%c5_303, %c0_304, %c0_305] : memref<6x32x32xbf16, #tpu.memory_space<vmem>>, vector<1x32x32xbf16>
    %876 = vector.shape_cast %875 : vector<1x32x32xbf16> to vector<32x32xbf16>
    %877 = arith.truncf %874 : vector<16x32xf32> to vector<16x32xbf16>
    %cst_306 = arith.constant dense<0.000000e+00> : vector<16x32xf32>
    %878 = tpu.matmul %877, %876, %cst_306 {dimension_numbers = #tpu.dot_dimension_numbers<[1], [0], [0], [1], [0, 0, 1, 1], [], []>} : vector<16x32xbf16>, vector<32x32xbf16>, vector<16x32xf32> -> vector<16x32xf32>
    %879 = arith.truncf %878 : vector<16x32xf32> to vector<16x32xbf16>
    %880 = vector.shape_cast %879 : vector<16x32xbf16> to vector<2x8x32xbf16>
    %881 = vector.extract_strided_slice %11 {offsets = [0, 320], sizes = [32, 64], strides = [1, 1]} : vector<32x384xbf16> to vector<32x64xbf16>
    %882 = vector.extract_strided_slice %881 {offsets = [0, 0], sizes = [32, 32], strides = [1, 1]} : vector<32x64xbf16> to vector<32x32xbf16>
    %883 = vector.shape_cast %882 : vector<32x32xbf16> to vector<2x16x32xbf16>
    %884 = vector.extract_strided_slice %881 {offsets = [0, 32], sizes = [32, 32], strides = [1, 1]} : vector<32x64xbf16> to vector<32x32xbf16>
    %885 = vector.shape_cast %884 : vector<32x32xbf16> to vector<2x16x32xbf16>
    "tpu.trace_start"() <{level = 10 : i32, message = "bqd,bkd->bqk"}> : () -> ()
    %cst_307 = arith.constant dense<0.000000e+00> : vector<2x8x16xf32>
    %886 = tpu.matmul %880, %883, %cst_307 {dimension_numbers = #tpu.dot_dimension_numbers<[2], [2], [1], [1], [0, 0, 0, 1, 1, 1], [0], [0]>} : vector<2x8x32xbf16>, vector<2x16x32xbf16>, vector<2x8x16xf32> -> vector<2x8x16xf32>
    "tpu.trace_stop"() : () -> ()
    %cst_308 = arith.constant 0.176776692 : f32
    %887 = vector.broadcast %cst_308 : f32 to vector<2x8x16xf32>
    %888 = arith.mulf %886, %887 : vector<2x8x16xf32>
    %cst_309 = arith.constant dense<0xFF800000> : vector<2x8xf32>
    %889 = vector.multi_reduction <maximumf>, %888, %cst_309 [2] : vector<2x8x16xf32> to vector<2x8xf32>
    %890 = vector.shape_cast %889 : vector<2x8xf32> to vector<2x8x1xf32>
    %891 = vector.broadcast %890 : vector<2x8x1xf32> to vector<2x8x16xf32>
    %892 = arith.subf %888, %891 : vector<2x8x16xf32>
    %893 = math.exp %892 : vector<2x8x16xf32>
    %cst_310 = arith.constant dense<0.000000e+00> : vector<2x8xf32>
    %894 = vector.multi_reduction <add>, %893, %cst_310 [2] : vector<2x8x16xf32> to vector<2x8xf32>
    %895 = vector.shape_cast %894 : vector<2x8xf32> to vector<2x8x1xf32>
    %896 = tpu.reciprocal %895 : vector<2x8x1xf32> -> vector<2x8x1xf32>
    %897 = vector.broadcast %896 : vector<2x8x1xf32> to vector<2x8x16xf32>
    %898 = arith.mulf %893, %897 : vector<2x8x16xf32>
    %899 = arith.truncf %898 : vector<2x8x16xf32> to vector<2x8x16xbf16>
    "tpu.trace_start"() <{level = 10 : i32, message = "bqk,bkd->bqd"}> : () -> ()
    %cst_311 = arith.constant dense<0.000000e+00> : vector<2x8x32xf32>
    %900 = tpu.matmul %899, %885, %cst_311 {dimension_numbers = #tpu.dot_dimension_numbers<[2], [1], [1], [2], [0, 0, 0, 1, 1, 2], [0], [0]>} : vector<2x8x16xbf16>, vector<2x16x32xbf16>, vector<2x8x32xf32> -> vector<2x8x32xf32>
    "tpu.trace_stop"() : () -> ()
    %901 = vector.shape_cast %900 : vector<2x8x32xf32> to vector<16x32xf32>
    %c5_312 = arith.constant 5 : index
    %c0_313 = arith.constant 0 : index
    %c0_314 = arith.constant 0 : index
    %902 = vector.load %arg5[%c5_312, %c0_313, %c0_314] : memref<6x32x32xbf16, #tpu.memory_space<vmem>>, vector<1x32x32xbf16>
    %903 = vector.shape_cast %902 : vector<1x32x32xbf16> to vector<32x32xbf16>
    %904 = arith.truncf %901 : vector<16x32xf32> to vector<16x32xbf16>
    %cst_315 = arith.constant dense<0.000000e+00> : vector<16x32xf32>
    %905 = tpu.matmul %904, %903, %cst_315 {dimension_numbers = #tpu.dot_dimension_numbers<[1], [0], [0], [1], [0, 0, 1, 1], [], []>} : vector<16x32xbf16>, vector<32x32xbf16>, vector<16x32xf32> -> vector<16x32xf32>
    %906 = vector.broadcast %810 : vector<1x32xf32> to vector<16x32xf32>
    %907 = arith.addf %905, %906 : vector<16x32xf32>
    %908 = arith.addf %874, %907 : vector<16x32xf32>
    %cst_316 = arith.constant dense<0.000000e+00> : vector<16xf32>
    %909 = vector.multi_reduction <add>, %908, %cst_316 [1] : vector<16x32xf32> to vector<16xf32>
    %910 = vector.shape_cast %909 : vector<16xf32> to vector<16x1xf32>
    %cst_317 = arith.constant 3.200000e+01 : f32
    %911 = vector.broadcast %cst_317 : f32 to vector<16x1xf32>
    %912 = arith.divf %910, %911 : vector<16x1xf32>
    %913 = vector.broadcast %912 : vector<16x1xf32> to vector<16x32xf32>
    %914 = arith.subf %908, %913 : vector<16x32xf32>
    %915 = arith.mulf %914, %914 : vector<16x32xf32>
    %cst_318 = arith.constant dense<0.000000e+00> : vector<16xf32>
    %916 = vector.multi_reduction <add>, %915, %cst_318 [1] : vector<16x32xf32> to vector<16xf32>
    %917 = vector.shape_cast %916 : vector<16xf32> to vector<16x1xf32>
    %cst_319 = arith.constant 3.200000e+01 : f32
    %918 = vector.broadcast %cst_319 : f32 to vector<16x1xf32>
    %919 = arith.divf %917, %918 : vector<16x1xf32>
    %cst_320 = arith.constant 9.99999974E-6 : f32
    %920 = vector.broadcast %cst_320 : f32 to vector<16x1xf32>
    %921 = arith.addf %919, %920 : vector<16x1xf32>
    %922 = math.rsqrt %921 : vector<16x1xf32>
    %923 = vector.broadcast %922 : vector<16x1xf32> to vector<16x32xf32>
    %924 = arith.mulf %914, %923 : vector<16x32xf32>
    %925 = vector.broadcast %813 : vector<1x32xf32> to vector<16x32xf32>
    %926 = arith.mulf %924, %925 : vector<16x32xf32>
    %927 = vector.broadcast %816 : vector<1x32xf32> to vector<16x32xf32>
    %928 = arith.addf %926, %927 : vector<16x32xf32>
    %c5_321 = arith.constant 5 : index
    %c0_322 = arith.constant 0 : index
    %c0_323 = arith.constant 0 : index
    %929 = vector.load %arg6[%c5_321, %c0_322, %c0_323] : memref<6x32x64xbf16, #tpu.memory_space<vmem>>, vector<1x32x64xbf16>
    %930 = vector.shape_cast %929 : vector<1x32x64xbf16> to vector<32x64xbf16>
    %931 = arith.truncf %928 : vector<16x32xf32> to vector<16x32xbf16>
    %cst_324 = arith.constant dense<0.000000e+00> : vector<16x64xf32>
    %932 = tpu.matmul %931, %930, %cst_324 {dimension_numbers = #tpu.dot_dimension_numbers<[1], [0], [0], [1], [0, 0, 1, 1], [], []>} : vector<16x32xbf16>, vector<32x64xbf16>, vector<16x64xf32> -> vector<16x64xf32>
    %c5_325 = arith.constant 5 : index
    %c0_326 = arith.constant 0 : index
    %c0_327 = arith.constant 0 : index
    %933 = vector.load %arg9[%c5_325, %c0_326, %c0_327] : memref<6x1x64xf32, #tpu.memory_space<vmem>>, vector<1x1x64xf32>
    %934 = vector.shape_cast %933 : vector<1x1x64xf32> to vector<1x64xf32>
    %935 = vector.broadcast %934 : vector<1x64xf32> to vector<16x64xf32>
    %936 = arith.addf %932, %935 : vector<16x64xf32>
    %cst_328 = arith.constant 0.000000e+00 : f32
    %937 = vector.broadcast %cst_328 : f32 to vector<16x64xf32>
    %938 = arith.maximumf %936, %937 : vector<16x64xf32>
    %c5_329 = arith.constant 5 : index
    %c0_330 = arith.constant 0 : index
    %c0_331 = arith.constant 0 : index
    %939 = vector.load %arg7[%c5_329, %c0_330, %c0_331] : memref<6x64x32xbf16, #tpu.memory_space<vmem>>, vector<1x64x32xbf16>
    %940 = vector.shape_cast %939 : vector<1x64x32xbf16> to vector<64x32xbf16>
    %941 = arith.truncf %938 : vector<16x64xf32> to vector<16x64xbf16>
    %cst_332 = arith.constant dense<0.000000e+00> : vector<16x32xf32>
    %942 = tpu.matmul %941, %940, %cst_332 {dimension_numbers = #tpu.dot_dimension_numbers<[1], [0], [0], [1], [0, 0, 1, 1], [], []>} : vector<16x64xbf16>, vector<64x32xbf16>, vector<16x32xf32> -> vector<16x32xf32>
    %943 = vector.broadcast %811 : vector<1x32xf32> to vector<16x32xf32>
    %944 = arith.addf %942, %943 : vector<16x32xf32>
    %945 = arith.addf %928, %944 : vector<16x32xf32>
    %cst_333 = arith.constant dense<0.000000e+00> : vector<16xf32>
    %946 = vector.multi_reduction <add>, %945, %cst_333 [1] : vector<16x32xf32> to vector<16xf32>
    %947 = vector.shape_cast %946 : vector<16xf32> to vector<16x1xf32>
    %cst_334 = arith.constant 3.200000e+01 : f32
    %948 = vector.broadcast %cst_334 : f32 to vector<16x1xf32>
    %949 = arith.divf %947, %948 : vector<16x1xf32>
    %950 = vector.broadcast %949 : vector<16x1xf32> to vector<16x32xf32>
    %951 = arith.subf %945, %950 : vector<16x32xf32>
    %952 = arith.mulf %951, %951 : vector<16x32xf32>
    %cst_335 = arith.constant dense<0.000000e+00> : vector<16xf32>
    %953 = vector.multi_reduction <add>, %952, %cst_335 [1] : vector<16x32xf32> to vector<16xf32>
    %954 = vector.shape_cast %953 : vector<16xf32> to vector<16x1xf32>
    %cst_336 = arith.constant 3.200000e+01 : f32
    %955 = vector.broadcast %cst_336 : f32 to vector<16x1xf32>
    %956 = arith.divf %954, %955 : vector<16x1xf32>
    %cst_337 = arith.constant 9.99999974E-6 : f32
    %957 = vector.broadcast %cst_337 : f32 to vector<16x1xf32>
    %958 = arith.addf %956, %957 : vector<16x1xf32>
    %959 = math.rsqrt %958 : vector<16x1xf32>
    %960 = vector.broadcast %959 : vector<16x1xf32> to vector<16x32xf32>
    %961 = arith.mulf %951, %960 : vector<16x32xf32>
    %962 = vector.broadcast %814 : vector<1x32xf32> to vector<16x32xf32>
    %963 = arith.mulf %961, %962 : vector<16x32xf32>
    %964 = vector.broadcast %817 : vector<1x32xf32> to vector<16x32xf32>
    %965 = arith.addf %963, %964 : vector<16x32xf32>
    %c0_338 = arith.constant 0 : index
    %c0_339 = arith.constant 0 : index
    %966 = vector.load %arg11[%c0_338, %c0_339] : memref<16x32xf32, #tpu.memory_space<vmem>>, vector<16x32xf32>
    tpu.vector_store %arg11[%c0_338, %c0_339], %965 {strides = array<i32>} : memref<16x32xf32, #tpu.memory_space<vmem>>, vector<16x32xf32>,
    return
  }
}

</mosaic_0001>

<llo_original>
// kernel: tpu_custom_call.1
$region0: #{tpu_custom_call.1}
  #allocation0 [shape = 'u32[]', space=smem, size = 0x4, offset = 0x4, fixed_abs, tag = 'smem constant byte address 0x4 - core index']
  #allocation1 [shape = 'u32[144,128]{1,0:T(1,128)}', space=vmem, size = 0x12000, scoped, tag = 'internal scratch']
  %s0 = inlined_call_operand.hbm [shape: f32[16,32], index: 0, kind: input, shape index: {}]
  %s1 = inlined_call_operand.hbm [shape: f32[32,32], index: 1, kind: input, shape index: {}]
  %s2 = inlined_call_operand.vmem [shape: bf16[6,32,96], index: 2, kind: input, shape index: {}]
  %s3 = inlined_call_operand.vmem [shape: bf16[6,32,32], index: 3, kind: input, shape index: {}]
  %s4 = inlined_call_operand.vmem [shape: bf16[6,32,32], index: 4, kind: input, shape index: {}]
  %s5 = inlined_call_operand.hbm [shape: bf16[6,32,32], index: 5, kind: input, shape index: {}]
  %s6 = inlined_call_operand.hbm [shape: bf16[6,32,64], index: 6, kind: input, shape index: {}]
  %s7 = inlined_call_operand.vmem [shape: bf16[6,64,32], index: 7, kind: input, shape index: {}]
  %s8 = inlined_call_operand.hbm [shape: bf16[32,384], index: 8, kind: input, shape index: {}]
  %s9 = inlined_call_operand.vmem [shape: f32[6,1,64], index: 9, kind: input, shape index: {}]
  %s10 = inlined_call_operand.hbm [shape: f32[6,16,32], index: 10, kind: input, shape index: {}]
  %s11 = inlined_call_operand.hbm [shape: f32[16,32], index: 11, kind: output, shape index: {}]
  %s12 = sld [smem:[#allocation0]]
  $region78: #{tpu_custom_call.1} parent=0
    _
  %s14 = ssub.s32 1, %s12
  %s15 = scalar_select 0, %s14, %s12
  $region1: #{tpu_custom_call.1} parent=0
    #allocation2 [shape = 'u8[8192]{0}', space=vmem, size = 0x2000, scoped, tag = 'input window, operand 0, single buffered']
    #allocation3 [shape = 's32[1]{0}', space=sflag, size = 0x4, scoped, tag = 'scoped memory for tpu_custom_call.1']
    #allocation4 [shape = 's32[1]{0}', space=sflag, size = 0x4, scoped, tag = 'scoped memory for tpu_custom_call.1']
    #allocation5 [shape = 'u8[16384]{0}', space=vmem, size = 0x4000, scoped, tag = 'input window, operand 1, single buffered']
    #allocation6 [shape = 's32[1]{0}', space=sflag, size = 0x4, scoped, tag = 'scoped memory for tpu_custom_call.1']
    #allocation7 [shape = 'u8[49152]{0}', space=vmem, size = 0xc000, scoped, tag = 'input window, operand 5, single buffered']
    #allocation8 [shape = 'u8[49152]{0}', space=vmem, size = 0xc000, scoped, tag = 'input window, operand 6, single buffered']
    #allocation9 [shape = 's32[1]{0}', space=sflag, size = 0x4, scoped, tag = 'scoped memory for tpu_custom_call.1']
    #allocation10 [shape = 'u8[24576]{0}', space=vmem, size = 0x6000, scoped, tag = 'input window, operand 8, single buffered']
    #allocation11 [shape = 'u8[49152]{0}', space=vmem, size = 0xc000, scoped, tag = 'input window, operand 10, single buffered']
    #allocation12 [shape = 's32[1]{0}', space=sflag, size = 0x4, scoped, tag = 'scoped memory for tpu_custom_call.1']
    #allocation13 [shape = 'u8[8192]{0}', space=vmem, size = 0x2000, scoped, tag = 'output window, operand 0, single buffered']
    %16 = vsyncpa [#allocation3], 0
    %17 = vsyncpa [#allocation6], 0
    %18 = vsyncpa [#allocation9], 0
    %19 = vsyncpa [#allocation12], 0
    %20 = vsyncpa [#allocation4], 0
    // Predicated region
    $region2: #{tpu_custom_call.1} parent=1 // pred_check
      _
    $region3: #{tpu_custom_call.1} parent=1 // pred_check_branch
      %22 = sbr.rel (0) target = $region5
    $region4: #{tpu_custom_call.1} parent=1 // pred_region
      %s24 = ssub.s32 256, 256
      %25 = vsyncadd [#allocation3], %s24
      %s26 = sshll.u32 [#allocation2], 4
      %s27 = int_to_ptr.vmem [resolvable:$true] %s26
      %32 = dma.hbm_to_vmem [thread:$0]  %s0, 256, %s27, [#allocation3], 128, 128, 8
    $region5: #{tpu_custom_call.1} parent=1 // pred_fallthru
      _
    // Predicated region
    $region6: #{tpu_custom_call.1} parent=1 // pred_check
      _
    $region7: #{tpu_custom_call.1} parent=1 // pred_check_branch
      %34 = sbr.rel (0) target = $region9
    $region8: #{tpu_custom_call.1} parent=1 // pred_region
      %s36 = ssub.s32 512, 512
      %37 = vsyncadd [#allocation6], %s36
      %s38 = sshll.u32 [#allocation5], 4
      %s39 = int_to_ptr.vmem [resolvable:$true] %s38
      %44 = dma.hbm_to_vmem [thread:$0]  %s1, 512, %s39, [#allocation6], 128, 128, 8
    $region9: #{tpu_custom_call.1} parent=1 // pred_fallthru
      _
    // Predicated region
    $region10: #{tpu_custom_call.1} parent=1 // pred_check
      _
    $region11: #{tpu_custom_call.1} parent=1 // pred_check_branch
      %46 = sbr.rel (0) target = $region13
    $region12: #{tpu_custom_call.1} parent=1 // pred_region
      _
    $region13: #{tpu_custom_call.1} parent=1 // pred_fallthru
      _
    // Predicated region
    $region14: #{tpu_custom_call.1} parent=1 // pred_check
      _
    $region15: #{tpu_custom_call.1} parent=1 // pred_check_branch
      %48 = sbr.rel (0) target = $region17
    $region16: #{tpu_custom_call.1} parent=1 // pred_region
      _
    $region17: #{tpu_custom_call.1} parent=1 // pred_fallthru
      _
    // Predicated region
    $region18: #{tpu_custom_call.1} parent=1 // pred_check
      _
    $region19: #{tpu_custom_call.1} parent=1 // pred_check_branch
      %50 = sbr.rel (0) target = $region21
    $region20: #{tpu_custom_call.1} parent=1 // pred_region
      _
    $region21: #{tpu_custom_call.1} parent=1 // pred_fallthru
      _
    // Predicated region
    $region22: #{tpu_custom_call.1} parent=1 // pred_check
      _
    $region23: #{tpu_custom_call.1} parent=1 // pred_check_branch
      %52 = sbr.rel (0) target = $region25
    $region24: #{tpu_custom_call.1} parent=1 // pred_region
      %s54 = ssub.s32 1536, 1536
      %55 = vsyncadd [#allocation6], %s54
      %s56 = sshll.u32 [#allocation7], 4
      %s57 = int_to_ptr.vmem [resolvable:$true] %s56
      %62 = dma.hbm_to_vmem [thread:$0]  %s5, 1536, %s57, [#allocation6], 64, 64, 4
    $region25: #{tpu_custom_call.1} parent=1 // pred_fallthru
      _
    // Predicated region
    $region26: #{tpu_custom_call.1} parent=1 // pred_check
      _
    $region27: #{tpu_custom_call.1} parent=1 // pred_check_branch
      %64 = sbr.rel (0) target = $region29
    $region28: #{tpu_custom_call.1} parent=1 // pred_region
      %s66 = ssub.s32 1536, 1536
      %67 = vsyncadd [#allocation9], %s66
      %s68 = sshll.u32 [#allocation8], 4
      %s69 = int_to_ptr.vmem [resolvable:$true] %s68
      %74 = dma.hbm_to_vmem [thread:$0]  %s6, 1536, %s69, [#allocation9], 64, 64, 4
    $region29: #{tpu_custom_call.1} parent=1 // pred_fallthru
      _
    // Predicated region
    $region30: #{tpu_custom_call.1} parent=1 // pred_check
      _
    $region31: #{tpu_custom_call.1} parent=1 // pred_check_branch
      %76 = sbr.rel (0) target = $region33
    $region32: #{tpu_custom_call.1} parent=1 // pred_region
      _
    $region33: #{tpu_custom_call.1} parent=1 // pred_fallthru
      _
    // Predicated region
    $region34: #{tpu_custom_call.1} parent=1 // pred_check
      _
    $region35: #{tpu_custom_call.1} parent=1 // pred_check_branch
      %78 = sbr.rel (0) target = $region37
    $region36: #{tpu_custom_call.1} parent=1 // pred_region
      %s80 = ssub.s32 768, 768
      %81 = vsyncadd [#allocation9], %s80
      %s82 = sshll.u32 [#allocation10], 4
      %s83 = int_to_ptr.vmem [resolvable:$true] %s82
      %88 = dma.hbm_to_vmem [thread:$0]  %s8, 768, %s83, [#allocation9], 192, 192, 12
    $region37: #{tpu_custom_call.1} parent=1 // pred_fallthru
      _
    // Predicated region
    $region38: #{tpu_custom_call.1} parent=1 // pred_check
      _
    $region39: #{tpu_custom_call.1} parent=1 // pred_check_branch
      %90 = sbr.rel (0) target = $region41
    $region40: #{tpu_custom_call.1} parent=1 // pred_region
      _
    $region41: #{tpu_custom_call.1} parent=1 // pred_fallthru
      _
    // Predicated region
    $region42: #{tpu_custom_call.1} parent=1 // pred_check
      _
    $region43: #{tpu_custom_call.1} parent=1 // pred_check_branch
      %92 = sbr.rel (0) target = $region45
    $region44: #{tpu_custom_call.1} parent=1 // pred_region
      %s94 = ssub.s32 1536, 1536
      %95 = vsyncadd [#allocation12], %s94
      %s96 = sshll.u32 [#allocation11], 4
      %s97 = int_to_ptr.vmem [resolvable:$true] %s96
      %102 = dma.hbm_to_vmem [thread:$0]  %s10, 1536, %s97, [#allocation12], 128, 128, 8
    $region45: #{tpu_custom_call.1} parent=1 // pred_fallthru
      _
    // Predicated region
    $region46: #{tpu_custom_call.1} parent=1 // pred_check
      _
    $region47: #{tpu_custom_call.1} parent=1 // pred_check_branch
      %104 = sbr.rel (0) target = $region49
    $region48: #{tpu_custom_call.1} parent=1 // pred_region
      %105 = dma.done [#allocation3], 256
    $region49: #{tpu_custom_call.1} parent=1 // pred_fallthru
      _
    // Predicated region
    $region50: #{tpu_custom_call.1} parent=1 // pred_check
      _
    $region51: #{tpu_custom_call.1} parent=1 // pred_check_branch
      %107 = sbr.rel (0) target = $region53
    $region52: #{tpu_custom_call.1} parent=1 // pred_region
      %108 = dma.done [#allocation6], 512
    $region53: #{tpu_custom_call.1} parent=1 // pred_fallthru
      _
    // Predicated region
    $region54: #{tpu_custom_call.1} parent=1 // pred_check
      _
    $region55: #{tpu_custom_call.1} parent=1 // pred_check_branch
      %110 = sbr.rel (0) target = $region57
    $region56: #{tpu_custom_call.1} parent=1 // pred_region
      %111 = dma.done [#allocation6], 1536
    $region57: #{tpu_custom_call.1} parent=1 // pred_fallthru
      _
    // Predicated region
    $region58: #{tpu_custom_call.1} parent=1 // pred_check
      _
    $region59: #{tpu_custom_call.1} parent=1 // pred_check_branch
      %113 = sbr.rel (0) target = $region61
    $region60: #{tpu_custom_call.1} parent=1 // pred_region
      %114 = dma.done [#allocation9], 1536
    $region61: #{tpu_custom_call.1} parent=1 // pred_fallthru
      _
    // Predicated region
    $region62: #{tpu_custom_call.1} parent=1 // pred_check
      _
    $region63: #{tpu_custom_call.1} parent=1 // pred_check_branch
      %116 = sbr.rel (0) target = $region65
    $region64: #{tpu_custom_call.1} parent=1 // pred_region
      %117 = dma.done [#allocation9], 768
    $region65: #{tpu_custom_call.1} parent=1 // pred_fallthru
      _
    // Predicated region
    $region66: #{tpu_custom_call.1} parent=1 // pred_check
      _
    $region67: #{tpu_custom_call.1} parent=1 // pred_check_branch
      %119 = sbr.rel (0) target = $region69
    $region68: #{tpu_custom_call.1} parent=1 // pred_region
      %120 = dma.done [#allocation12], 1536
    $region69: #{tpu_custom_call.1} parent=1 // pred_fallthru
      _
    %v122 = vld [vmem:[#allocation2] sm:$0xff]
    %v123 = vld [vmem:[#allocation2 + $0x8] sm:$0xff]
    %v124 = vld [vmem:[#allocation5] sm:$0xff]
    %v125 = vld [vmem:[#allocation5 + $0x8] sm:$0xff]
    %v126 = vld [vmem:[#allocation5 + $0x10] sm:$0xff]
    %v127 = vld [vmem:[#allocation5 + $0x18] sm:$0xff]
    %v128 = vpack.c.bf16 %v125, %v124
    %v129 = vpack.c.bf16 %v127, %v126
    %v130 = vlaneseq
    %v131 = vshrl.u32 %v130, 7
    %v132 = vlaneseq
    %v133 = vand.u32 %v132, 127
    %vm134 = vcmp.ge.s32.totalorder %v131, %v133
    %v135 = vsel %vm134, 0.0, -1e+30
    %v136 = vld [vmem:[#allocation10] sm:$0xff]
    %v137 = vld [vmem:[#allocation10 + $0x8] sm:$0xf]
    %v138 = vld [vmem:[#allocation10 + $0xc] sm:$0xff]
    %v139 = vld [vmem:[#allocation10 + $0x14] sm:$0xf]
    %v140 = vld [vmem:[#allocation10 + $0x18] sm:$0xff]
    %v141 = vld [vmem:[#allocation10 + $0x20] sm:$0xf]
    %v142 = vld [vmem:[#allocation10 + $0x24] sm:$0xff]
    %v143 = vld [vmem:[#allocation10 + $0x2c] sm:$0xf]
    %v152 = vunpack.c.l.b16 %v136
    %v153 = vunpack.c.h.b16 %v136
    %v154 = vunpack.c.l.b16 %v137
    %v155 = vunpack.c.l.b16 %v138
    %v156 = vunpack.c.h.b16 %v138
    %v157 = vunpack.c.l.b16 %v139
    %v158 = vunpack.c.l.b16 %v140
    %v159 = vunpack.c.h.b16 %v140
    %v160 = vunpack.c.l.b16 %v141
    %v161 = vunpack.c.l.b16 %v142
    %v162 = vunpack.c.h.b16 %v142
    %v163 = vunpack.c.l.b16 %v143
    %v164 = vpack.c.b16 %v155, %v152
    %v165 = vpack.c.b16 %v156, %v153
    %v166 = vpack.c.b16 %v157, %v154
    %v167 = vpack.c.b16 %v161, %v158
    %v168 = vpack.c.b16 %v162, %v159
    %v169 = vpack.c.b16 %v163, %v160
    %vm176 = vcmask 261120
    %v178 = vsel %vm176, %v128, 0
    %v181 = vsel %vm176, %v129, 0
    %183 = vmatprep.subr.bf16.mxu0 %v165
    %184 = vmatpush1.bf16.msra.mxu0 %v164
    %185 = vmatprep.subr.bf16.mxu0 %v168
    %186 = vmatpush1.bf16.msra.mxu0 %v167
    %187 = vmatprep.subr.bf16.mxu0 0
    %188 = vmatpush1.bf16.msra.mxu0 0
    %189 = vmatprep.subr.bf16.mxu0 0
    %190 = vmatpush1.bf16.msra.mxu0 0
    %191 = vmatprep.subr.bf16.mxu0 0
    %192 = vmatpush1.bf16.msra.mxu0 0
    %193 = vmatprep.subr.bf16.mxu0 0
    %194 = vmatpush1.bf16.msra.mxu0 0
    %195 = vmatprep.subr.bf16.mxu0 0
    %196 = vmatpush1.bf16.msra.mxu0 0
    %197 = vmatprep.subr.bf16.mxu0 0
    %198 = vmatpush1.bf16.msra.mxu0 0
    %199 = vmatprep.subr.bf16.mxu0 0
    %200 = vmatpush1.bf16.msra.mxu0 0
    %201 = vmatprep.subr.bf16.mxu0 0
    %202 = vmatpush1.bf16.msra.mxu0 0
    %203 = vmatprep.subr.bf16.mxu0 0
    %204 = vmatpush1.bf16.msra.mxu0 0
    %205 = vmatprep.subr.bf16.mxu0 0
    %206 = vmatpush1.bf16.msra.mxu0 0
    %207 = vmatprep.subr.bf16.mxu0 0
    %208 = vmatpush1.bf16.msra.mxu0 0
    %209 = vmatprep.subr.bf16.mxu0 0
    %210 = vmatpush1.bf16.msra.mxu0 0
    %211 = vmatprep.subr.bf16.mxu0 0
    %212 = vmatpush1.bf16.msra.mxu0 0
    %213 = vmatprep.subr.bf16.mxu0 0
    %214 = vmatpush1.bf16.msra.mxu0 0
    %215 = vmatprep.mubr.bf16.mxu0 0
    %216 = vmatmul.mubr.bf16.gmra.mrb[0].mxu0 %v178
    %v217 = vpop.f32.mrb[0].mxu0
    %v218 = vadd.f32 0.0, %v217
    %v219 = vpop.f32.mrb[0].mxu0
    %v220 = vadd.f32 0.0, %v219
    %v221 = vpop.f32.mrb[0].mxu0
    %v222 = vadd.f32 0.0, %v221
    %v223 = vpop.f32.mrb[0].mxu0
    %v224 = vadd.f32 0.0, %v223
    %225 = vmatprep.mubr.bf16.mxu0 0
    %226 = vmatmul.mubr.bf16.gmra.mrb[0].mxu0 %v181
    %v227 = vpop.f32.mrb[0].mxu0
    %v228 = vadd.f32 0.0, %v227
    %v229 = vpop.f32.mrb[0].mxu0
    %v230 = vadd.f32 0.0, %v229
    %v231 = vpop.f32.mrb[0].mxu0
    %v232 = vadd.f32 0.0, %v231
    %v233 = vpop.f32.mrb[0].mxu0
    %v234 = vadd.f32 0.0, %v233
    %235 = vdwg.mxu0
    %236 = vmatprep.subr.bf16.mxu0 0
    %237 = vmatpush1.bf16.msra.mxu0 %v166
    %238 = vmatprep.subr.bf16.mxu0 0
    %239 = vmatpush1.bf16.msra.mxu0 %v169
    %240 = vmatprep.subr.bf16.mxu0 0
    %241 = vmatpush1.bf16.msra.mxu0 0
    %242 = vmatprep.subr.bf16.mxu0 0
    %243 = vmatpush1.bf16.msra.mxu0 0
    %244 = vmatprep.subr.bf16.mxu0 0
    %245 = vmatpush1.bf16.msra.mxu0 0
    %246 = vmatprep.subr.bf16.mxu0 0
    %247 = vmatpush1.bf16.msra.mxu0 0
    %248 = vmatprep.subr.bf16.mxu0 0
    %249 = vmatpush1.bf16.msra.mxu0 0
    %250 = vmatprep.subr.bf16.mxu0 0
    %251 = vmatpush1.bf16.msra.mxu0 0
    %252 = vmatprep.subr.bf16.mxu0 0
    %253 = vmatpush1.bf16.msra.mxu0 0
    %254 = vmatprep.subr.bf16.mxu0 0
    %255 = vmatpush1.bf16.msra.mxu0 0
    %256 = vmatprep.subr.bf16.mxu0 0
    %257 = vmatpush1.bf16.msra.mxu0 0
    %258 = vmatprep.subr.bf16.mxu0 0
    %259 = vmatpush1.bf16.msra.mxu0 0
    %260 = vmatprep.subr.bf16.mxu0 0
    %261 = vmatpush1.bf16.msra.mxu0 0
    %262 = vmatprep.subr.bf16.mxu0 0
    %263 = vmatpush1.bf16.msra.mxu0 0
    %264 = vmatprep.subr.bf16.mxu0 0
    %265 = vmatpush1.bf16.msra.mxu0 0
    %266 = vmatprep.subr.bf16.mxu0 0
    %267 = vmatpush1.bf16.msra.mxu0 0
    %268 = vmatprep.mubr.bf16.mxu0 0
    %269 = vmatmul.mubr.bf16.gmra.mrb[0].mxu0 %v178
    %v270 = vpop.f32.mrb[0].mxu0
    %v271 = vadd.f32 0.0, %v270
    %v272 = vpop.f32.mrb[0].mxu0
    %v273 = vpop.f32.mrb[0].mxu0
    %v274 = vadd.f32 0.0, %v273
    %v275 = vpop.f32.mrb[0].mxu0
    %276 = vmatprep.mubr.bf16.mxu0 0
    %277 = vmatmul.mubr.bf16.gmra.mrb[0].mxu0 %v181
    %v278 = vpop.f32.mrb[0].mxu0
    %v279 = vadd.f32 0.0, %v278
    %v280 = vpop.f32.mrb[0].mxu0
    %v281 = vpop.f32.mrb[0].mxu0
    %v282 = vadd.f32 0.0, %v281
    %v283 = vpop.f32.mrb[0].mxu0
    %284 = vdwg.mxu0
    %v285 = vpack.c.bf16 %v222, %v218
    %v286 = vpack.c.bf16 %v224, %v220
    %v287 = vpack.c.bf16 %v274, %v271
    %v288 = vpack.c.bf16 %v232, %v228
    %v289 = vpack.c.bf16 %v234, %v230
    %v290 = vpack.c.bf16 %v282, %v279
    %v291 = vld [vmem:[#allocation11] sm:$0xff]
    %v292 = vld [vmem:[#allocation11 + $0x8] sm:$0xff]
    %v293 = vld [vmem:[%s2] sm:$0xf]
    %v294 = vld [vmem:[%s2 + $0x4] sm:$0xf]
    %v295 = vld [vmem:[%s2 + $0x8] sm:$0xf]
    %v296 = vld [vmem:[%s2 + $0xc] sm:$0xf]
    %v297 = vpack.c.bf16 %v123, %v122
    %v302 = vunpack.c.l.b16 %v293
    %v303 = vunpack.c.l.b16 %v294
    %v304 = vunpack.c.l.b16 %v295
    %v305 = vunpack.c.l.b16 %v296
    %v306 = vpack.c.b16 %v303, %v302
    %v307 = vpack.c.b16 %v305, %v304
    %v311 = vsel %vm176, %v297, 0
    %313 = vmatprep.subr.bf16.mxu0 0
    %314 = vmatpush1.bf16.msra.mxu0 %v306
    %315 = vmatprep.subr.bf16.mxu0 0
    %316 = vmatpush1.bf16.msra.mxu0 %v307
    %317 = vmatprep.subr.bf16.mxu0 0
    %318 = vmatpush1.bf16.msra.mxu0 0
    %319 = vmatprep.subr.bf16.mxu0 0
    %320 = vmatpush1.bf16.msra.mxu0 0
    %321 = vmatprep.subr.bf16.mxu0 0
    %322 = vmatpush1.bf16.msra.mxu0 0
    %323 = vmatprep.subr.bf16.mxu0 0
    %324 = vmatpush1.bf16.msra.mxu0 0
    %325 = vmatprep.subr.bf16.mxu0 0
    %326 = vmatpush1.bf16.msra.mxu0 0
    %327 = vmatprep.subr.bf16.mxu0 0
    %328 = vmatpush1.bf16.msra.mxu0 0
    %329 = vmatprep.subr.bf16.mxu0 0
    %330 = vmatpush1.bf16.msra.mxu0 0
    %331 = vmatprep.subr.bf16.mxu0 0
    %332 = vmatpush1.bf16.msra.mxu0 0
    %333 = vmatprep.subr.bf16.mxu0 0
    %334 = vmatpush1.bf16.msra.mxu0 0
    %335 = vmatprep.subr.bf16.mxu0 0
    %336 = vmatpush1.bf16.msra.mxu0 0
    %337 = vmatprep.subr.bf16.mxu0 0
    %338 = vmatpush1.bf16.msra.mxu0 0
    %339 = vmatprep.subr.bf16.mxu0 0
    %340 = vmatpush1.bf16.msra.mxu0 0
    %341 = vmatprep.subr.bf16.mxu0 0
    %342 = vmatpush1.bf16.msra.mxu0 0
    %343 = vmatprep.subr.bf16.mxu0 0
    %344 = vmatpush1.bf16.msra.mxu0 0
    %345 = vmatprep.mubr.bf16.mxu0 0
    %346 = vmatmul.mubr.bf16.gmra.mrb[0].mxu0 %v311
    %v347 = vpop.f32.mrb[0].mxu0
    %v348 = vadd.f32 0.0, %v347
    %v349 = vpop.f32.mrb[0].mxu0
    %v350 = vpop.f32.mrb[0].mxu0
    %v351 = vadd.f32 0.0, %v350
    %v352 = vpop.f32.mrb[0].mxu0
    %353 = vdwg.mxu0
    %v354 = vpack.c.bf16 %v351, %v348
    %v356 = vunpack.c.l.b16 %v354
    %v357 = vunpack.c.h.b16 %v354
    %v358 = vpack.c.b16 %v356, %v356
    %v359 = vpack.c.b16 %v357, %v357
    %360 = vrot.lane.b32.xlu0 %v358, 96
    %v361 = vpop.permute.xlu0 %360
    %v363 = vsel %vm176, %v358, 0
    %v366 = vsel %vm176, %v361, 0
    %368 = vmatprep.subr.bf16.mxu0 0
    %369 = vmatpush1.bf16.xpose.msra.mxu0 %v366
    %370 = vmatprep.subr.bf16.mxu0 0
    %371 = vmatpush1.bf16.xpose.msra.mxu0 0
    %372 = vmatprep.subr.bf16.mxu0 0
    %373 = vmatpush1.bf16.xpose.msra.mxu0 0
    %374 = vmatprep.subr.bf16.mxu0 0
    %375 = vmatpush1.bf16.xpose.msra.mxu0 0
    %376 = vmatprep.subr.bf16.mxu0 0
    %377 = vmatpush1.bf16.xpose.msra.mxu0 0
    %378 = vmatprep.subr.bf16.mxu0 0
    %379 = vmatpush1.bf16.xpose.msra.mxu0 0
    %380 = vmatprep.subr.bf16.mxu0 0
    %381 = vmatpush1.bf16.xpose.msra.mxu0 0
    %382 = vmatprep.subr.bf16.mxu0 0
    %383 = vmatpush1.bf16.xpose.msra.mxu0 0
    %384 = vmatprep.subr.bf16.mxu0 0
    %385 = vmatpush1.bf16.xpose.msra.mxu0 0
    %386 = vmatprep.subr.bf16.mxu0 0
    %387 = vmatpush1.bf16.xpose.msra.mxu0 0
    %388 = vmatprep.subr.bf16.mxu0 0
    %389 = vmatpush1.bf16.xpose.msra.mxu0 0
    %390 = vmatprep.subr.bf16.mxu0 0
    %391 = vmatpush1.bf16.xpose.msra.mxu0 0
    %392 = vmatprep.subr.bf16.mxu0 0
    %393 = vmatpush1.bf16.xpose.msra.mxu0 0
    %394 = vmatprep.subr.bf16.mxu0 0
    %395 = vmatpush1.bf16.xpose.msra.mxu0 0
    %396 = vmatprep.subr.bf16.mxu0 0
    %397 = vmatpush1.bf16.xpose.msra.mxu0 0
    %398 = vmatprep.subr.bf16.mxu0 0
    %399 = vmatpush1.bf16.xpose.msra.mxu0 0
    %400 = vmatprep.mubr.bf16.mxu0 0
    %401 = vmatmul.mubr.bf16.gmra.mrb[0].mxu0 %v363
    %v402 = vpop.f32.mrb[0].mxu0
    %v403 = vadd.f32 0.0, %v402
    %v404 = vpop.f32.mrb[0].mxu0
    %v405 = vpop.f32.mrb[0].mxu0
    %v406 = vpop.f32.mrb[0].mxu0
    %407 = vdwg.mxu0
    %408 = vrot.lane.b32.xlu0 %v359, 96
    %v409 = vpop.permute.xlu0 %408
    %v411 = vsel %vm176, %v359, 0
    %v414 = vsel %vm176, %v409, 0
    %416 = vmatprep.subr.bf16.mxu0 0
    %417 = vmatpush1.bf16.xpose.msra.mxu0 %v414
    %418 = vmatprep.subr.bf16.mxu0 0
    %419 = vmatpush1.bf16.xpose.msra.mxu0 0
    %420 = vmatprep.subr.bf16.mxu0 0
    %421 = vmatpush1.bf16.xpose.msra.mxu0 0
    %422 = vmatprep.subr.bf16.mxu0 0
    %423 = vmatpush1.bf16.xpose.msra.mxu0 0
    %424 = vmatprep.subr.bf16.mxu0 0
    %425 = vmatpush1.bf16.xpose.msra.mxu0 0
    %426 = vmatprep.subr.bf16.mxu0 0
    %427 = vmatpush1.bf16.xpose.msra.mxu0 0
    %428 = vmatprep.subr.bf16.mxu0 0
    %429 = vmatpush1.bf16.xpose.msra.mxu0 0
    %430 = vmatprep.subr.bf16.mxu0 0
    %431 = vmatpush1.bf16.xpose.msra.mxu0 0
    %432 = vmatprep.subr.bf16.mxu0 0
    %433 = vmatpush1.bf16.xpose.msra.mxu0 0
    %434 = vmatprep.subr.bf16.mxu0 0
    %435 = vmatpush1.bf16.xpose.msra.mxu0 0
    %436 = vmatprep.subr.bf16.mxu0 0
    %437 = vmatpush1.bf16.xpose.msra.mxu0 0
    %438 = vmatprep.subr.bf16.mxu0 0
    %439 = vmatpush1.bf16.xpose.msra.mxu0 0
    %440 = vmatprep.subr.bf16.mxu0 0
    %441 = vmatpush1.bf16.xpose.msra.mxu0 0
    %442 = vmatprep.subr.bf16.mxu0 0
    %443 = vmatpush1.bf16.xpose.msra.mxu0 0
    %444 = vmatprep.subr.bf16.mxu0 0
    %445 = vmatpush1.bf16.xpose.msra.mxu0 0
    %446 = vmatprep.subr.bf16.mxu0 0
    %447 = vmatpush1.bf16.xpose.msra.mxu0 0
    %448 = vmatprep.mubr.bf16.mxu0 0
    %449 = vmatmul.mubr.bf16.gmra.mrb[0].mxu0 %v411
    %v450 = vpop.f32.mrb[0].mxu0
    %v451 = vadd.f32 0.0, %v450
    %v452 = vpop.f32.mrb[0].mxu0
    %v453 = vpop.f32.mrb[0].mxu0
    %v454 = vpop.f32.mrb[0].mxu0
    %455 = vdwg.mxu0
    %v456 = vmul.f32 %v403, 0.17677669
    %v457 = vmul.f32 %v451, 0.17677669
    %v458 = vadd.f32 %v456, %v135
    %v459 = vadd.f32 %v457, %v135
    %vm460 = vcmask 64512
    %v461 = vsel %vm460, %v458, -inf
    %462 = vmax.xlane.f32.xlu0 %v461
    %v463 = vpop.xlane.xlu0 %462
    %v464 = vsel %vm460, %v459, -inf
    %465 = vmax.xlane.f32.xlu0 %v464
    %v466 = vpop.xlane.xlu0 %465
    %v467 = vsub.f32 %v458, %v463
    %v468 = vsub.f32 %v459, %v466
    %v469 = vmul.f32 %v467, 1.442695
    %v470 = vpow.pop %v469
    %v471 = vmul.f32 %v468, 1.442695
    %v472 = vpow.pop %v471
    %v473 = vsel %vm460, %v470, 0.0
    %474 = vadd.xlane.f32.xlu0 %v473
    %v475 = vpop.xlane.xlu0 %474
    %v476 = vsel %vm460, %v472, 0.0
    %477 = vadd.xlane.f32.xlu0 %v476
    %v478 = vpop.xlane.xlu0 %477
    %v479 = vrcp.pop %v475
    %v480 = vrcp.pop %v478
    %v481 = vmul.f32 %v470, %v479
    %v482 = vmul.f32 %v472, %v480
    %v483 = vpack.c.bf16 %v481, %v481
    %v484 = vpack.c.bf16 %v482, %v482
    %485 = vrot.lane.b32.xlu0 %v358, 64
    %v486 = vpop.permute.xlu0 %485
    %v488 = vsel %vm460, %v483, 0
    %vm490 = vcmask 1043456
    %v492 = vsel %vm490, %v486, 0
    %494 = vmatprep.subr.bf16.mxu0 0
    %495 = vmatpush1.bf16.msra.mxu0 %v492
    %496 = vmatprep.subr.bf16.mxu0 0
    %497 = vmatpush1.bf16.msra.mxu0 0
    %498 = vmatprep.subr.bf16.mxu0 0
    %499 = vmatpush1.bf16.msra.mxu0 0
    %500 = vmatprep.subr.bf16.mxu0 0
    %501 = vmatpush1.bf16.msra.mxu0 0
    %502 = vmatprep.subr.bf16.mxu0 0
    %503 = vmatpush1.bf16.msra.mxu0 0
    %504 = vmatprep.subr.bf16.mxu0 0
    %505 = vmatpush1.bf16.msra.mxu0 0
    %506 = vmatprep.subr.bf16.mxu0 0
    %507 = vmatpush1.bf16.msra.mxu0 0
    %508 = vmatprep.subr.bf16.mxu0 0
    %509 = vmatpush1.bf16.msra.mxu0 0
    %510 = vmatprep.subr.bf16.mxu0 0
    %511 = vmatpush1.bf16.msra.mxu0 0
    %512 = vmatprep.subr.bf16.mxu0 0
    %513 = vmatpush1.bf16.msra.mxu0 0
    %514 = vmatprep.subr.bf16.mxu0 0
    %515 = vmatpush1.bf16.msra.mxu0 0
    %516 = vmatprep.subr.bf16.mxu0 0
    %517 = vmatpush1.bf16.msra.mxu0 0
    %518 = vmatprep.subr.bf16.mxu0 0
    %519 = vmatpush1.bf16.msra.mxu0 0
    %520 = vmatprep.subr.bf16.mxu0 0
    %521 = vmatpush1.bf16.msra.mxu0 0
    %522 = vmatprep.subr.bf16.mxu0 0
    %523 = vmatpush1.bf16.msra.mxu0 0
    %524 = vmatprep.subr.bf16.mxu0 0
    %525 = vmatpush1.bf16.msra.mxu0 0
    %526 = vmatprep.mubr.bf16.mxu0 0
    %527 = vmatmul.mubr.bf16.gmra.mrb[0].mxu0 %v488
    %v528 = vpop.f32.mrb[0].mxu0
    %v529 = vadd.f32 0.0, %v528
    %v530 = vpop.f32.mrb[0].mxu0
    %v531 = vpop.f32.mrb[0].mxu0
    %v532 = vpop.f32.mrb[0].mxu0
    %533 = vdwg.mxu0
    %534 = vrot.lane.b32.xlu0 %v359, 64
    %v535 = vpop.permute.xlu0 %534
    %v537 = vsel %vm460, %v484, 0
    %v540 = vsel %vm490, %v535, 0
    %542 = vmatprep.subr.bf16.mxu0 0
    %543 = vmatpush1.bf16.msra.mxu0 %v540
    %544 = vmatprep.subr.bf16.mxu0 0
    %545 = vmatpush1.bf16.msra.mxu0 0
    %546 = vmatprep.subr.bf16.mxu0 0
    %547 = vmatpush1.bf16.msra.mxu0 0
    %548 = vmatprep.subr.bf16.mxu0 0
    %549 = vmatpush1.bf16.msra.mxu0 0
    %550 = vmatprep.subr.bf16.mxu0 0
    %551 = vmatpush1.bf16.msra.mxu0 0
    %552 = vmatprep.subr.bf16.mxu0 0
    %553 = vmatpush1.bf16.msra.mxu0 0
    %554 = vmatprep.subr.bf16.mxu0 0
    %555 = vmatpush1.bf16.msra.mxu0 0
    %556 = vmatprep.subr.bf16.mxu0 0
    %557 = vmatpush1.bf16.msra.mxu0 0
    %558 = vmatprep.subr.bf16.mxu0 0
    %559 = vmatpush1.bf16.msra.mxu0 0
    %560 = vmatprep.subr.bf16.mxu0 0
    %561 = vmatpush1.bf16.msra.mxu0 0
    %562 = vmatprep.subr.bf16.mxu0 0
    %563 = vmatpush1.bf16.msra.mxu0 0
    %564 = vmatprep.subr.bf16.mxu0 0
    %565 = vmatpush1.bf16.msra.mxu0 0
    %566 = vmatprep.subr.bf16.mxu0 0
    %567 = vmatpush1.bf16.msra.mxu0 0
    %568 = vmatprep.subr.bf16.mxu0 0
    %569 = vmatpush1.bf16.msra.mxu0 0
    %570 = vmatprep.subr.bf16.mxu0 0
    %571 = vmatpush1.bf16.msra.mxu0 0
    %572 = vmatprep.subr.bf16.mxu0 0
    %573 = vmatpush1.bf16.msra.mxu0 0
    %574 = vmatprep.mubr.bf16.mxu0 0
    %575 = vmatmul.mubr.bf16.gmra.mrb[0].mxu0 %v537
    %v576 = vpop.f32.mrb[0].mxu0
    %v577 = vadd.f32 0.0, %v576
    %v578 = vpop.f32.mrb[0].mxu0
    %v579 = vpop.f32.mrb[0].mxu0
    %v580 = vpop.f32.mrb[0].mxu0
    %581 = vdwg.mxu0
    %v582 = vld [vmem:[%s3] sm:$0xf]
    %v583 = vld [vmem:[%s3 + $0x4] sm:$0xf]
    %v584 = vld [vmem:[%s3 + $0x8] sm:$0xf]
    %v585 = vld [vmem:[%s3 + $0xc] sm:$0xf]
    %v586 = vpack.c.bf16 %v577, %v529
    %v587 = vlaneseq
    %v588 = vshrl.u32 %v587, 7
    %v589 = vsub.s32 0, %v588
    %v590 = vrot.slane %v291, %v589
    %v595 = vunpack.c.l.b16 %v582
    %v596 = vunpack.c.l.b16 %v583
    %v597 = vunpack.c.l.b16 %v584
    %v598 = vunpack.c.l.b16 %v585
    %v599 = vpack.c.b16 %v596, %v595
    %v600 = vpack.c.b16 %v598, %v597
    %v604 = vsel %vm176, %v586, 0
    %606 = vmatprep.subr.bf16.mxu0 0
    %607 = vmatpush1.bf16.msra.mxu0 %v599
    %608 = vmatprep.subr.bf16.mxu0 0
    %609 = vmatpush1.bf16.msra.mxu0 %v600
    %610 = vmatprep.subr.bf16.mxu0 0
    %611 = vmatpush1.bf16.msra.mxu0 0
    %612 = vmatprep.subr.bf16.mxu0 0
    %613 = vmatpush1.bf16.msra.mxu0 0
    %614 = vmatprep.subr.bf16.mxu0 0
    %615 = vmatpush1.bf16.msra.mxu0 0
    %616 = vmatprep.subr.bf16.mxu0 0
    %617 = vmatpush1.bf16.msra.mxu0 0
    %618 = vmatprep.subr.bf16.mxu0 0
    %619 = vmatpush1.bf16.msra.mxu0 0
    %620 = vmatprep.subr.bf16.mxu0 0
    %621 = vmatpush1.bf16.msra.mxu0 0
    %622 = vmatprep.subr.bf16.mxu0 0
    %623 = vmatpush1.bf16.msra.mxu0 0
    %624 = vmatprep.subr.bf16.mxu0 0
    %625 = vmatpush1.bf16.msra.mxu0 0
    %626 = vmatprep.subr.bf16.mxu0 0
    %627 = vmatpush1.bf16.msra.mxu0 0
    %628 = vmatprep.subr.bf16.mxu0 0
    %629 = vmatpush1.bf16.msra.mxu0 0
    %630 = vmatprep.subr.bf16.mxu0 0
    %631 = vmatpush1.bf16.msra.mxu0 0
    %632 = vmatprep.subr.bf16.mxu0 0
    %633 = vmatpush1.bf16.msra.mxu0 0
    %634 = vmatprep.subr.bf16.mxu0 0
    %635 = vmatpush1.bf16.msra.mxu0 0
    %636 = vmatprep.subr.bf16.mxu0 0
    %637 = vmatpush1.bf16.msra.mxu0 0
    %638 = vmatprep.mubr.bf16.mxu0 0
    %639 = vmatmul.mubr.bf16.gmra.mrb[0].mxu0 %v604
    %v640 = vpop.f32.mrb[0].mxu0
    %v641 = vadd.f32 %v590, %v640
    %v642 = vpop.f32.mrb[0].mxu0
    %v643 = vpop.f32.mrb[0].mxu0
    %v644 = vadd.f32 %v590, %v643
    %v645 = vpop.f32.mrb[0].mxu0
    %646 = vdwg.mxu0
    %v647 = vadd.f32 %v122, %v641
    %v648 = vadd.f32 %v123, %v644
    %v649 = vsel %vm176, %v647, 0.0
    %650 = vadd.xlane.f32.xlu0 %v649
    %v651 = vpop.xlane.xlu0 %650
    %v652 = vsel %vm176, %v648, 0.0
    %653 = vadd.xlane.f32.xlu0 %v652
    %v654 = vpop.xlane.xlu0 %653
    %v655 = vrcp.pop 32.0
    %v656 = vmul.f32 %v651, %v655
    %v657 = vmul.f32 %v654, %v655
    %v658 = vsub.f32 %v647, %v656
    %v659 = vsub.f32 %v648, %v657
    %v660 = vmul.f32 %v658, %v658
    %v661 = vmul.f32 %v659, %v659
    %v662 = vsel %vm176, %v660, 0.0
    %663 = vadd.xlane.f32.xlu0 %v662
    %v664 = vpop.xlane.xlu0 %663
    %v665 = vsel %vm176, %v661, 0.0
    %666 = vadd.xlane.f32.xlu0 %v665
    %v667 = vpop.xlane.xlu0 %666
    %v668 = vmul.f32 %v664, %v655
    %v669 = vmul.f32 %v667, %v655
    %v670 = vadd.f32 %v668, 1e-05
    %v671 = vadd.f32 %v669, 1e-05
    %v672 = vrsqrt.pop %v670
    %v673 = vrsqrt.pop %v671
    %v674 = vmul.f32 %v658, %v672
    %v675 = vmul.f32 %v659, %v673
    %v676 = vlaneseq
    %v677 = vshrl.u32 %v676, 7
    %v678 = vsub.s32 3, %v677
    %v679 = vrot.slane %v291, %v678
    %v680 = vmul.f32 %v674, %v679
    %v681 = vmul.f32 %v675, %v679
    %v682 = vlaneseq
    %v683 = vshrl.u32 %v682, 7
    %v684 = vsub.s32 6, %v683
    %v685 = vrot.slane %v291, %v684
    %v686 = vadd.f32 %v680, %v685
    %v687 = vadd.f32 %v681, %v685
    %v688 = vld [vmem:[%s4] sm:$0xf]
    %v689 = vld [vmem:[%s4 + $0x4] sm:$0xf]
    %v690 = vld [vmem:[%s4 + $0x8] sm:$0xf]
    %v691 = vld [vmem:[%s4 + $0xc] sm:$0xf]
    %v692 = vpack.c.bf16 %v687, %v686
    %v697 = vunpack.c.l.b16 %v688
    %v698 = vunpack.c.l.b16 %v689
    %v699 = vunpack.c.l.b16 %v690
    %v700 = vunpack.c.l.b16 %v691
    %v701 = vpack.c.b16 %v698, %v697
    %v702 = vpack.c.b16 %v700, %v699
    %v706 = vsel %vm176, %v692, 0
    %708 = vmatprep.subr.bf16.mxu0 0
    %709 = vmatpush1.bf16.msra.mxu0 %v701
    %710 = vmatprep.subr.bf16.mxu0 0
    %711 = vmatpush1.bf16.msra.mxu0 %v702
    %712 = vmatprep.subr.bf16.mxu0 0
    %713 = vmatpush1.bf16.msra.mxu0 0
    %714 = vmatprep.subr.bf16.mxu0 0
    %715 = vmatpush1.bf16.msra.mxu0 0
    %716 = vmatprep.subr.bf16.mxu0 0
    %717 = vmatpush1.bf16.msra.mxu0 0
    %718 = vmatprep.subr.bf16.mxu0 0
    %719 = vmatpush1.bf16.msra.mxu0 0
    %720 = vmatprep.subr.bf16.mxu0 0
    %721 = vmatpush1.bf16.msra.mxu0 0
    %722 = vmatprep.subr.bf16.mxu0 0
    %723 = vmatpush1.bf16.msra.mxu0 0
    %724 = vmatprep.subr.bf16.mxu0 0
    %725 = vmatpush1.bf16.msra.mxu0 0
    %726 = vmatprep.subr.bf16.mxu0 0
    %727 = vmatpush1.bf16.msra.mxu0 0
    %728 = vmatprep.subr.bf16.mxu0 0
    %729 = vmatpush1.bf16.msra.mxu0 0
    %730 = vmatprep.subr.bf16.mxu0 0
    %731 = vmatpush1.bf16.msra.mxu0 0
    %732 = vmatprep.subr.bf16.mxu0 0
    %733 = vmatpush1.bf16.msra.mxu0 0
    %734 = vmatprep.subr.bf16.mxu0 0
    %735 = vmatpush1.bf16.msra.mxu0 0
    %736 = vmatprep.subr.bf16.mxu0 0
    %737 = vmatpush1.bf16.msra.mxu0 0
    %738 = vmatprep.subr.bf16.mxu0 0
    %739 = vmatpush1.bf16.msra.mxu0 0
    %740 = vmatprep.mubr.bf16.mxu0 0
    %741 = vmatmul.mubr.bf16.gmra.mrb[0].mxu0 %v706
    %v742 = vpop.f32.mrb[0].mxu0
    %v743 = vadd.f32 0.0, %v742
    %v744 = vpop.f32.mrb[0].mxu0
    %v745 = vpop.f32.mrb[0].mxu0
    %v746 = vadd.f32 0.0, %v745
    %v747 = vpop.f32.mrb[0].mxu0
    %748 = vdwg.mxu0
    %v749 = vpack.c.bf16 %v746, %v743
    %v751 = vunpack.c.l.b16 %v749
    %v752 = vunpack.c.h.b16 %v749
    %v753 = vpack.c.b16 %v751, %v751
    %v754 = vpack.c.b16 %v752, %v752
    %v756 = vsel %vm176, %v753, 0
    %v759 = vsel %vm176, %v285, 0
    %761 = vmatprep.subr.bf16.mxu0 0
    %762 = vmatpush1.bf16.xpose.msra.mxu0 %v759
    %763 = vmatprep.subr.bf16.mxu0 0
    %764 = vmatpush1.bf16.xpose.msra.mxu0 0
    %765 = vmatprep.subr.bf16.mxu0 0
    %766 = vmatpush1.bf16.xpose.msra.mxu0 0
    %767 = vmatprep.subr.bf16.mxu0 0
    %768 = vmatpush1.bf16.xpose.msra.mxu0 0
    %769 = vmatprep.subr.bf16.mxu0 0
    %770 = vmatpush1.bf16.xpose.msra.mxu0 0
    %771 = vmatprep.subr.bf16.mxu0 0
    %772 = vmatpush1.bf16.xpose.msra.mxu0 0
    %773 = vmatprep.subr.bf16.mxu0 0
    %774 = vmatpush1.bf16.xpose.msra.mxu0 0
    %775 = vmatprep.subr.bf16.mxu0 0
    %776 = vmatpush1.bf16.xpose.msra.mxu0 0
    %777 = vmatprep.subr.bf16.mxu0 0
    %778 = vmatpush1.bf16.xpose.msra.mxu0 0
    %779 = vmatprep.subr.bf16.mxu0 0
    %780 = vmatpush1.bf16.xpose.msra.mxu0 0
    %781 = vmatprep.subr.bf16.mxu0 0
    %782 = vmatpush1.bf16.xpose.msra.mxu0 0
    %783 = vmatprep.subr.bf16.mxu0 0
    %784 = vmatpush1.bf16.xpose.msra.mxu0 0
    %785 = vmatprep.subr.bf16.mxu0 0
    %786 = vmatpush1.bf16.xpose.msra.mxu0 0
    %787 = vmatprep.subr.bf16.mxu0 0
    %788 = vmatpush1.bf16.xpose.msra.mxu0 0
    %789 = vmatprep.subr.bf16.mxu0 0
    %790 = vmatpush1.bf16.xpose.msra.mxu0 0
    %791 = vmatprep.subr.bf16.mxu0 0
    %792 = vmatpush1.bf16.xpose.msra.mxu0 0
    %793 = vmatprep.mubr.bf16.mxu0 0
    %794 = vmatmul.mubr.bf16.gmra.mrb[0].mxu0 %v756
    %v795 = vpop.f32.mrb[0].mxu0
    %v796 = vadd.f32 0.0, %v795
    %v797 = vpop.f32.mrb[0].mxu0
    %v798 = vpop.f32.mrb[0].mxu0
    %v799 = vpop.f32.mrb[0].mxu0
    %800 = vdwg.mxu0
    %v802 = vsel %vm176, %v754, 0
    %v805 = vsel %vm176, %v288, 0
    %807 = vmatprep.subr.bf16.mxu0 0
    %808 = vmatpush1.bf16.xpose.msra.mxu0 %v805
    %809 = vmatprep.subr.bf16.mxu0 0
    %810 = vmatpush1.bf16.xpose.msra.mxu0 0
    %811 = vmatprep.subr.bf16.mxu0 0
    %812 = vmatpush1.bf16.xpose.msra.mxu0 0
    %813 = vmatprep.subr.bf16.mxu0 0
    %814 = vmatpush1.bf16.xpose.msra.mxu0 0
    %815 = vmatprep.subr.bf16.mxu0 0
    %816 = vmatpush1.bf16.xpose.msra.mxu0 0
    %817 = vmatprep.subr.bf16.mxu0 0
    %818 = vmatpush1.bf16.xpose.msra.mxu0 0
    %819 = vmatprep.subr.bf16.mxu0 0
    %820 = vmatpush1.bf16.xpose.msra.mxu0 0
    %821 = vmatprep.subr.bf16.mxu0 0
    %822 = vmatpush1.bf16.xpose.msra.mxu0 0
    %823 = vmatprep.subr.bf16.mxu0 0
    %824 = vmatpush1.bf16.xpose.msra.mxu0 0
    %825 = vmatprep.subr.bf16.mxu0 0
    %826 = vmatpush1.bf16.xpose.msra.mxu0 0
    %827 = vmatprep.subr.bf16.mxu0 0
    %828 = vmatpush1.bf16.xpose.msra.mxu0 0
    %829 = vmatprep.subr.bf16.mxu0 0
    %830 = vmatpush1.bf16.xpose.msra.mxu0 0
    %831 = vmatprep.subr.bf16.mxu0 0
    %832 = vmatpush1.bf16.xpose.msra.mxu0 0
    %833 = vmatprep.subr.bf16.mxu0 0
    %834 = vmatpush1.bf16.xpose.msra.mxu0 0
    %835 = vmatprep.subr.bf16.mxu0 0
    %836 = vmatpush1.bf16.xpose.msra.mxu0 0
    %837 = vmatprep.subr.bf16.mxu0 0
    %838 = vmatpush1.bf16.xpose.msra.mxu0 0
    %839 = vmatprep.mubr.bf16.mxu0 0
    %840 = vmatmul.mubr.bf16.gmra.mrb[0].mxu0 %v802
    %v841 = vpop.f32.mrb[0].mxu0
    %v842 = vadd.f32 0.0, %v841
    %v843 = vpop.f32.mrb[0].mxu0
    %v844 = vpop.f32.mrb[0].mxu0
    %v845 = vpop.f32.mrb[0].mxu0
    %846 = vdwg.mxu0
    %v847 = vmul.f32 %v796, 0.17677669
    %v848 = vmul.f32 %v842, 0.17677669
    %vm849 = vcmask 130048
    %v850 = vsel %vm849, %v847, -inf
    %851 = vmax.xlane.f32.xlu0 %v850
    %v852 = vpop.xlane.xlu0 %851
    %v853 = vsel %vm849, %v848, -inf
    %854 = vmax.xlane.f32.xlu0 %v853
    %v855 = vpop.xlane.xlu0 %854
    %v856 = vsub.f32 %v847, %v852
    %v857 = vsub.f32 %v848, %v855
    %v858 = vmul.f32 %v856, 1.442695
    %v859 = vpow.pop %v858
    %v860 = vmul.f32 %v857, 1.442695
    %v861 = vpow.pop %v860
    %v862 = vsel %vm849, %v859, 0.0
    %863 = vadd.xlane.f32.xlu0 %v862
    %v864 = vpop.xlane.xlu0 %863
    %v865 = vsel %vm849, %v861, 0.0
    %866 = vadd.xlane.f32.xlu0 %v865
    %v867 = vpop.xlane.xlu0 %866
    %v868 = vrcp.pop %v864
    %v869 = vrcp.pop %v867
    %v870 = vmul.f32 %v859, %v868
    %v871 = vmul.f32 %v861, %v869
    %v872 = vpack.c.bf16 %v870, %v870
    %v873 = vpack.c.bf16 %v871, %v871
    %875 = vrot.lane.b32.xlu0 %v285, 96
    %v876 = vpop.permute.xlu0 %875
    %v879 = vsel %vm849, %v872, 0
    %881 = vmatprep.subr.bf16.mxu0 0
    %882 = vmatpush1.bf16.msra.mxu0 %v876
    %883 = vmatprep.subr.bf16.mxu0 0
    %884 = vmatpush1.bf16.msra.mxu0 0
    %885 = vmatprep.subr.bf16.mxu0 0
    %886 = vmatpush1.bf16.msra.mxu0 0
    %887 = vmatprep.subr.bf16.mxu0 0
    %888 = vmatpush1.bf16.msra.mxu0 0
    %889 = vmatprep.subr.bf16.mxu0 0
    %890 = vmatpush1.bf16.msra.mxu0 0
    %891 = vmatprep.subr.bf16.mxu0 0
    %892 = vmatpush1.bf16.msra.mxu0 0
    %893 = vmatprep.subr.bf16.mxu0 0
    %894 = vmatpush1.bf16.msra.mxu0 0
    %895 = vmatprep.subr.bf16.mxu0 0
    %896 = vmatpush1.bf16.msra.mxu0 0
    %897 = vmatprep.subr.bf16.mxu0 0
    %898 = vmatpush1.bf16.msra.mxu0 0
    %899 = vmatprep.subr.bf16.mxu0 0
    %900 = vmatpush1.bf16.msra.mxu0 0
    %901 = vmatprep.subr.bf16.mxu0 0
    %902 = vmatpush1.bf16.msra.mxu0 0
    %903 = vmatprep.subr.bf16.mxu0 0
    %904 = vmatpush1.bf16.msra.mxu0 0
    %905 = vmatprep.subr.bf16.mxu0 0
    %906 = vmatpush1.bf16.msra.mxu0 0
    %907 = vmatprep.subr.bf16.mxu0 0
    %908 = vmatpush1.bf16.msra.mxu0 0
    %909 = vmatprep.subr.bf16.mxu0 0
    %910 = vmatpush1.bf16.msra.mxu0 0
    %911 = vmatprep.subr.bf16.mxu0 0
    %912 = vmatpush1.bf16.msra.mxu0 0
    %913 = vmatprep.mubr.bf16.mxu0 0
    %914 = vmatmul.mubr.bf16.gmra.mrb[0].mxu0 %v879
    %v915 = vpop.f32.mrb[0].mxu0
    %v916 = vadd.f32 0.0, %v915
    %v917 = vpop.f32.mrb[0].mxu0
    %v918 = vpop.f32.mrb[0].mxu0
    %v919 = vpop.f32.mrb[0].mxu0
    %920 = vdwg.mxu0
    %922 = vrot.lane.b32.xlu0 %v288, 96
    %v923 = vpop.permute.xlu0 %922
    %v926 = vsel %vm849, %v873, 0
    %928 = vmatprep.subr.bf16.mxu0 0
    %929 = vmatpush1.bf16.msra.mxu0 %v923
    %930 = vmatprep.subr.bf16.mxu0 0
    %931 = vmatpush1.bf16.msra.mxu0 0
    %932 = vmatprep.subr.bf16.mxu0 0
    %933 = vmatpush1.bf16.msra.mxu0 0
    %934 = vmatprep.subr.bf16.mxu0 0
    %935 = vmatpush1.bf16.msra.mxu0 0
    %936 = vmatprep.subr.bf16.mxu0 0
    %937 = vmatpush1.bf16.msra.mxu0 0
    %938 = vmatprep.subr.bf16.mxu0 0
    %939 = vmatpush1.bf16.msra.mxu0 0
    %940 = vmatprep.subr.bf16.mxu0 0
    %941 = vmatpush1.bf16.msra.mxu0 0
    %942 = vmatprep.subr.bf16.mxu0 0
    %943 = vmatpush1.bf16.msra.mxu0 0
    %944 = vmatprep.subr.bf16.mxu0 0
    %945 = vmatpush1.bf16.msra.mxu0 0
    %946 = vmatprep.subr.bf16.mxu0 0
    %947 = vmatpush1.bf16.msra.mxu0 0
    %948 = vmatprep.subr.bf16.mxu0 0
    %949 = vmatpush1.bf16.msra.mxu0 0
    %950 = vmatprep.subr.bf16.mxu0 0
    %951 = vmatpush1.bf16.msra.mxu0 0
    %952 = vmatprep.subr.bf16.mxu0 0
    %953 = vmatpush1.bf16.msra.mxu0 0
    %954 = vmatprep.subr.bf16.mxu0 0
    %955 = vmatpush1.bf16.msra.mxu0 0
    %956 = vmatprep.subr.bf16.mxu0 0
    %957 = vmatpush1.bf16.msra.mxu0 0
    %958 = vmatprep.subr.bf16.mxu0 0
    %959 = vmatpush1.bf16.msra.mxu0 0
    %960 = vmatprep.mubr.bf16.mxu0 0
    %961 = vmatmul.mubr.bf16.gmra.mrb[0].mxu0 %v926
    %v962 = vpop.f32.mrb[0].mxu0
    %v963 = vadd.f32 0.0, %v962
    %v964 = vpop.f32.mrb[0].mxu0
    %v965 = vpop.f32.mrb[0].mxu0
    %v966 = vpop.f32.mrb[0].mxu0
    %967 = vdwg.mxu0
    %v968 = vld [vmem:[#allocation7] sm:$0xf]
    %v969 = vld [vmem:[#allocation7 + $0x4] sm:$0xf]
    %v970 = vld [vmem:[#allocation7 + $0x8] sm:$0xf]
    %v971 = vld [vmem:[#allocation7 + $0xc] sm:$0xf]
    %v972 = vpack.c.bf16 %v963, %v916
    %v973 = vlaneseq
    %v974 = vshrl.u32 %v973, 7
    %v975 = vsub.s32 1, %v974
    %v976 = vrot.slane %v291, %v975
    %v981 = vunpack.c.l.b16 %v968
    %v982 = vunpack.c.l.b16 %v969
    %v983 = vunpack.c.l.b16 %v970
    %v984 = vunpack.c.l.b16 %v971
    %v985 = vpack.c.b16 %v982, %v981
    %v986 = vpack.c.b16 %v984, %v983
    %v990 = vsel %vm176, %v972, 0
    %992 = vmatprep.subr.bf16.mxu0 0
    %993 = vmatpush1.bf16.msra.mxu0 %v985
    %994 = vmatprep.subr.bf16.mxu0 0
    %995 = vmatpush1.bf16.msra.mxu0 %v986
    %996 = vmatprep.subr.bf16.mxu0 0
    %997 = vmatpush1.bf16.msra.mxu0 0
    %998 = vmatprep.subr.bf16.mxu0 0
    %999 = vmatpush1.bf16.msra.mxu0 0
    %1000 = vmatprep.subr.bf16.mxu0 0
    %1001 = vmatpush1.bf16.msra.mxu0 0
    %1002 = vmatprep.subr.bf16.mxu0 0
    %1003 = vmatpush1.bf16.msra.mxu0 0
    %1004 = vmatprep.subr.bf16.mxu0 0
    %1005 = vmatpush1.bf16.msra.mxu0 0
    %1006 = vmatprep.subr.bf16.mxu0 0
    %1007 = vmatpush1.bf16.msra.mxu0 0
    %1008 = vmatprep.subr.bf16.mxu0 0
    %1009 = vmatpush1.bf16.msra.mxu0 0
    %1010 = vmatprep.subr.bf16.mxu0 0
    %1011 = vmatpush1.bf16.msra.mxu0 0
    %1012 = vmatprep.subr.bf16.mxu0 0
    %1013 = vmatpush1.bf16.msra.mxu0 0
    %1014 = vmatprep.subr.bf16.mxu0 0
    %1015 = vmatpush1.bf16.msra.mxu0 0
    %1016 = vmatprep.subr.bf16.mxu0 0
    %1017 = vmatpush1.bf16.msra.mxu0 0
    %1018 = vmatprep.subr.bf16.mxu0 0
    %1019 = vmatpush1.bf16.msra.mxu0 0
    %1020 = vmatprep.subr.bf16.mxu0 0
    %1021 = vmatpush1.bf16.msra.mxu0 0
    %1022 = vmatprep.subr.bf16.mxu0 0
    %1023 = vmatpush1.bf16.msra.mxu0 0
    %1024 = vmatprep.mubr.bf16.mxu0 0
    %1025 = vmatmul.mubr.bf16.gmra.mrb[0].mxu0 %v990
    %v1026 = vpop.f32.mrb[0].mxu0
    %v1027 = vadd.f32 %v976, %v1026
    %v1028 = vpop.f32.mrb[0].mxu0
    %v1029 = vpop.f32.mrb[0].mxu0
    %v1030 = vadd.f32 %v976, %v1029
    %v1031 = vpop.f32.mrb[0].mxu0
    %1032 = vdwg.mxu0
    %v1033 = vadd.f32 %v686, %v1027
    %v1034 = vadd.f32 %v687, %v1030
    %v1035 = vsel %vm176, %v1033, 0.0
    %1036 = vadd.xlane.f32.xlu0 %v1035
    %v1037 = vpop.xlane.xlu0 %1036
    %v1038 = vsel %vm176, %v1034, 0.0
    %1039 = vadd.xlane.f32.xlu0 %v1038
    %v1040 = vpop.xlane.xlu0 %1039
    %v1041 = vmul.f32 %v1037, %v655
    %v1042 = vmul.f32 %v1040, %v655
    %v1043 = vsub.f32 %v1033, %v1041
    %v1044 = vsub.f32 %v1034, %v1042
    %v1045 = vmul.f32 %v1043, %v1043
    %v1046 = vmul.f32 %v1044, %v1044
    %v1047 = vsel %vm176, %v1045, 0.0
    %1048 = vadd.xlane.f32.xlu0 %v1047
    %v1049 = vpop.xlane.xlu0 %1048
    %v1050 = vsel %vm176, %v1046, 0.0
    %1051 = vadd.xlane.f32.xlu0 %v1050
    %v1052 = vpop.xlane.xlu0 %1051
    %v1053 = vmul.f32 %v1049, %v655
    %v1054 = vmul.f32 %v1052, %v655
    %v1055 = vadd.f32 %v1053, 1e-05
    %v1056 = vadd.f32 %v1054, 1e-05
    %v1057 = vrsqrt.pop %v1055
    %v1058 = vrsqrt.pop %v1056
    %v1059 = vmul.f32 %v1043, %v1057
    %v1060 = vmul.f32 %v1044, %v1058
    %v1061 = vlaneseq
    %v1062 = vshrl.u32 %v1061, 7
    %v1063 = vsub.s32 4, %v1062
    %v1064 = vrot.slane %v291, %v1063
    %v1065 = vmul.f32 %v1059, %v1064
    %v1066 = vmul.f32 %v1060, %v1064
    %v1067 = vlaneseq
    %v1068 = vshrl.u32 %v1067, 7
    %v1069 = vsub.s32 7, %v1068
    %v1070 = vrot.slane %v291, %v1069
    %v1071 = vadd.f32 %v1065, %v1070
    %v1072 = vadd.f32 %v1066, %v1070
    %v1073 = vld [vmem:[#allocation8] sm:$0xf]
    %v1074 = vld [vmem:[#allocation8 + $0x4] sm:$0xf]
    %v1075 = vld [vmem:[#allocation8 + $0x8] sm:$0xf]
    %v1076 = vld [vmem:[#allocation8 + $0xc] sm:$0xf]
    %v1077 = vpack.c.bf16 %v1072, %v1071
    %v1078 = vld [vmem:[%s9] sm:$0x1]
    %v1080 = vlaneseq
    %v1081 = vshrl.u32 %v1080, 7
    %v1082 = vsub.s32 0, %v1081
    %v1083 = vrot.slane %v1078, %v1082
    %v1089 = vunpack.c.l.b16 %v1073
    %v1090 = vunpack.c.l.b16 %v1074
    %v1091 = vunpack.c.l.b16 %v1075
    %v1092 = vunpack.c.l.b16 %v1076
    %v1093 = vpack.c.b16 %v1090, %v1089
    %v1094 = vpack.c.b16 %v1092, %v1091
    %v1098 = vsel %vm176, %v1077, 0
    %1100 = vmatprep.subr.bf16.mxu0 0
    %1101 = vmatpush1.bf16.msra.mxu0 %v1093
    %1102 = vmatprep.subr.bf16.mxu0 0
    %1103 = vmatpush1.bf16.msra.mxu0 %v1094
    %1104 = vmatprep.subr.bf16.mxu0 0
    %1105 = vmatpush1.bf16.msra.mxu0 0
    %1106 = vmatprep.subr.bf16.mxu0 0
    %1107 = vmatpush1.bf16.msra.mxu0 0
    %1108 = vmatprep.subr.bf16.mxu0 0
    %1109 = vmatpush1.bf16.msra.mxu0 0
    %1110 = vmatprep.subr.bf16.mxu0 0
    %1111 = vmatpush1.bf16.msra.mxu0 0
    %1112 = vmatprep.subr.bf16.mxu0 0
    %1113 = vmatpush1.bf16.msra.mxu0 0
    %1114 = vmatprep.subr.bf16.mxu0 0
    %1115 = vmatpush1.bf16.msra.mxu0 0
    %1116 = vmatprep.subr.bf16.mxu0 0
    %1117 = vmatpush1.bf16.msra.mxu0 0
    %1118 = vmatprep.subr.bf16.mxu0 0
    %1119 = vmatpush1.bf16.msra.mxu0 0
    %1120 = vmatprep.subr.bf16.mxu0 0
    %1121 = vmatpush1.bf16.msra.mxu0 0
    %1122 = vmatprep.subr.bf16.mxu0 0
    %1123 = vmatpush1.bf16.msra.mxu0 0
    %1124 = vmatprep.subr.bf16.mxu0 0
    %1125 = vmatpush1.bf16.msra.mxu0 0
    %1126 = vmatprep.subr.bf16.mxu0 0
    %1127 = vmatpush1.bf16.msra.mxu0 0
    %1128 = vmatprep.subr.bf16.mxu0 0
    %1129 = vmatpush1.bf16.msra.mxu0 0
    %1130 = vmatprep.subr.bf16.mxu0 0
    %1131 = vmatpush1.bf16.msra.mxu0 0
    %1132 = vmatprep.mubr.bf16.mxu0 0
    %1133 = vmatmul.mubr.bf16.gmra.mrb[0].mxu0 %v1098
    %v1134 = vpop.f32.mrb[0].mxu0
    %v1135 = vadd.f32 %v1083, %v1134
    %v1136 = vpop.f32.mrb[0].mxu0
    %v1137 = vpop.f32.mrb[0].mxu0
    %v1138 = vadd.f32 %v1083, %v1137
    %v1139 = vpop.f32.mrb[0].mxu0
    %1140 = vdwg.mxu0
    %v1141 = vmax.f32 %v1135, 0.0
    %v1142 = vmax.f32 %v1138, 0.0
    %v1143 = vld [vmem:[%s7] sm:$0xf]
    %v1144 = vld [vmem:[%s7 + $0x4] sm:$0xf]
    %v1145 = vld [vmem:[%s7 + $0x8] sm:$0xf]
    %v1146 = vld [vmem:[%s7 + $0xc] sm:$0xf]
    %v1147 = vld [vmem:[%s7 + $0x10] sm:$0xf]
    %v1148 = vld [vmem:[%s7 + $0x14] sm:$0xf]
    %v1149 = vld [vmem:[%s7 + $0x18] sm:$0xf]
    %v1150 = vld [vmem:[%s7 + $0x1c] sm:$0xf]
    %v1151 = vpack.c.bf16 %v1142, %v1141
    %v1152 = vlaneseq
    %v1153 = vshrl.u32 %v1152, 7
    %v1154 = vsub.s32 2, %v1153
    %v1155 = vrot.slane %v291, %v1154
    %v1164 = vunpack.c.l.b16 %v1143
    %v1165 = vunpack.c.l.b16 %v1144
    %v1166 = vunpack.c.l.b16 %v1145
    %v1167 = vunpack.c.l.b16 %v1146
    %v1168 = vunpack.c.l.b16 %v1147
    %v1169 = vunpack.c.l.b16 %v1148
    %v1170 = vunpack.c.l.b16 %v1149
    %v1171 = vunpack.c.l.b16 %v1150
    %v1172 = vpack.c.b16 %v1165, %v1164
    %v1173 = vpack.c.b16 %v1167, %v1166
    %v1174 = vpack.c.b16 %v1169, %v1168
    %v1175 = vpack.c.b16 %v1171, %v1170
    %vm1180 = vcmask 523264
    %v1182 = vsel %vm1180, %v1151, 0
    %1184 = vmatprep.subr.bf16.mxu0 0
    %1185 = vmatpush1.bf16.msra.mxu0 %v1172
    %1186 = vmatprep.subr.bf16.mxu0 0
    %1187 = vmatpush1.bf16.msra.mxu0 %v1173
    %1188 = vmatprep.subr.bf16.mxu0 0
    %1189 = vmatpush1.bf16.msra.mxu0 %v1174
    %1190 = vmatprep.subr.bf16.mxu0 0
    %1191 = vmatpush1.bf16.msra.mxu0 %v1175
    %1192 = vmatprep.subr.bf16.mxu0 0
    %1193 = vmatpush1.bf16.msra.mxu0 0
    %1194 = vmatprep.subr.bf16.mxu0 0
    %1195 = vmatpush1.bf16.msra.mxu0 0
    %1196 = vmatprep.subr.bf16.mxu0 0
    %1197 = vmatpush1.bf16.msra.mxu0 0
    %1198 = vmatprep.subr.bf16.mxu0 0
    %1199 = vmatpush1.bf16.msra.mxu0 0
    %1200 = vmatprep.subr.bf16.mxu0 0
    %1201 = vmatpush1.bf16.msra.mxu0 0
    %1202 = vmatprep.subr.bf16.mxu0 0
    %1203 = vmatpush1.bf16.msra.mxu0 0
    %1204 = vmatprep.subr.bf16.mxu0 0
    %1205 = vmatpush1.bf16.msra.mxu0 0
    %1206 = vmatprep.subr.bf16.mxu0 0
    %1207 = vmatpush1.bf16.msra.mxu0 0
    %1208 = vmatprep.subr.bf16.mxu0 0
    %1209 = vmatpush1.bf16.msra.mxu0 0
    %1210 = vmatprep.subr.bf16.mxu0 0
    %1211 = vmatpush1.bf16.msra.mxu0 0
    %1212 = vmatprep.subr.bf16.mxu0 0
    %1213 = vmatpush1.bf16.msra.mxu0 0
    %1214 = vmatprep.subr.bf16.mxu0 0
    %1215 = vmatpush1.bf16.msra.mxu0 0
    %1216 = vmatprep.mubr.bf16.mxu0 0
    %1217 = vmatmul.mubr.bf16.gmra.mrb[0].mxu0 %v1182
    %v1218 = vpop.f32.mrb[0].mxu0
    %v1219 = vadd.f32 %v1155, %v1218
    %v1220 = vpop.f32.mrb[0].mxu0
    %v1221 = vpop.f32.mrb[0].mxu0
    %v1222 = vadd.f32 %v1155, %v1221
    %v1223 = vpop.f32.mrb[0].mxu0
    %1224 = vdwg.mxu0
    %v1225 = vadd.f32 %v1071, %v1219
    %v1226 = vadd.f32 %v1072, %v1222
    %v1227 = vsel %vm176, %v1225, 0.0
    %1228 = vadd.xlane.f32.xlu0 %v1227
    %v1229 = vpop.xlane.xlu0 %1228
    %v1230 = vsel %vm176, %v1226, 0.0
    %1231 = vadd.xlane.f32.xlu0 %v1230
    %v1232 = vpop.xlane.xlu0 %1231
    %v1233 = vmul.f32 %v1229, %v655
    %v1234 = vmul.f32 %v1232, %v655
    %v1235 = vsub.f32 %v1225, %v1233
    %v1236 = vsub.f32 %v1226, %v1234
    %v1237 = vmul.f32 %v1235, %v1235
    %v1238 = vmul.f32 %v1236, %v1236
    %v1239 = vsel %vm176, %v1237, 0.0
    %1240 = vadd.xlane.f32.xlu0 %v1239
    %v1241 = vpop.xlane.xlu0 %1240
    %v1242 = vsel %vm176, %v1238, 0.0
    %1243 = vadd.xlane.f32.xlu0 %v1242
    %v1244 = vpop.xlane.xlu0 %1243
    %v1245 = vmul.f32 %v1241, %v655
    %v1246 = vmul.f32 %v1244, %v655
    %v1247 = vadd.f32 %v1245, 1e-05
    %v1248 = vadd.f32 %v1246, 1e-05
    %v1249 = vrsqrt.pop %v1247
    %v1250 = vrsqrt.pop %v1248
    %v1251 = vmul.f32 %v1235, %v1249
    %v1252 = vmul.f32 %v1236, %v1250
    %v1253 = vlaneseq
    %v1254 = vshrl.u32 %v1253, 7
    %v1255 = vsub.s32 5, %v1254
    %v1256 = vrot.slane %v291, %v1255
    %v1257 = vmul.f32 %v1251, %v1256
    %v1258 = vmul.f32 %v1252, %v1256
    %v1259 = vlaneseq
    %v1260 = vshrl.u32 %v1259, 7
    %v1261 = vsub.s32 0, %v1260
    %v1262 = vrot.slane %v292, %v1261
    %v1263 = vadd.f32 %v1257, %v1262
    %v1264 = vadd.f32 %v1258, %v1262
    %s1265 = scalar_lea.vmem [#allocation11], 16
    %v1266 = vld [vmem:[%s1265] sm:$0xff]
    %v1267 = vld [vmem:[%s1265 + $0x8] sm:$0xff]
    %s1268 = scalar_lea.vmem %s2, 16
    %v1269 = vld [vmem:[%s1268] sm:$0xf]
    %v1270 = vld [vmem:[%s1268 + $0x4] sm:$0xf]
    %v1271 = vld [vmem:[%s1268 + $0x8] sm:$0xf]
    %v1272 = vld [vmem:[%s1268 + $0xc] sm:$0xf]
    %v1273 = vpack.c.bf16 %v1264, %v1263
    %v1278 = vunpack.c.l.b16 %v1269
    %v1279 = vunpack.c.l.b16 %v1270
    %v1280 = vunpack.c.l.b16 %v1271
    %v1281 = vunpack.c.l.b16 %v1272
    %v1282 = vpack.c.b16 %v1279, %v1278
    %v1283 = vpack.c.b16 %v1281, %v1280
    %v1287 = vsel %vm176, %v1273, 0
    %1289 = vmatprep.subr.bf16.mxu0 0
    %1290 = vmatpush1.bf16.msra.mxu0 %v1282
    %1291 = vmatprep.subr.bf16.mxu0 0
    %1292 = vmatpush1.bf16.msra.mxu0 %v1283
    %1293 = vmatprep.subr.bf16.mxu0 0
    %1294 = vmatpush1.bf16.msra.mxu0 0
    %1295 = vmatprep.subr.bf16.mxu0 0
    %1296 = vmatpush1.bf16.msra.mxu0 0
    %1297 = vmatprep.subr.bf16.mxu0 0
    %1298 = vmatpush1.bf16.msra.mxu0 0
    %1299 = vmatprep.subr.bf16.mxu0 0
    %1300 = vmatpush1.bf16.msra.mxu0 0
    %1301 = vmatprep.subr.bf16.mxu0 0
    %1302 = vmatpush1.bf16.msra.mxu0 0
    %1303 = vmatprep.subr.bf16.mxu0 0
    %1304 = vmatpush1.bf16.msra.mxu0 0
    %1305 = vmatprep.subr.bf16.mxu0 0
    %1306 = vmatpush1.bf16.msra.mxu0 0
    %1307 = vmatprep.subr.bf16.mxu0 0
    %1308 = vmatpush1.bf16.msra.mxu0 0
    %1309 = vmatprep.subr.bf16.mxu0 0
    %1310 = vmatpush1.bf16.msra.mxu0 0
    %1311 = vmatprep.subr.bf16.mxu0 0
    %1312 = vmatpush1.bf16.msra.mxu0 0
    %1313 = vmatprep.subr.bf16.mxu0 0
    %1314 = vmatpush1.bf16.msra.mxu0 0
    %1315 = vmatprep.subr.bf16.mxu0 0
    %1316 = vmatpush1.bf16.msra.mxu0 0
    %1317 = vmatprep.subr.bf16.mxu0 0
    %1318 = vmatpush1.bf16.msra.mxu0 0
    %1319 = vmatprep.subr.bf16.mxu0 0
    %1320 = vmatpush1.bf16.msra.mxu0 0
    %1321 = vmatprep.mubr.bf16.mxu0 0
    %1322 = vmatmul.mubr.bf16.gmra.mrb[0].mxu0 %v1287
    %v1323 = vpop.f32.mrb[0].mxu0
    %v1324 = vadd.f32 0.0, %v1323
    %v1325 = vpop.f32.mrb[0].mxu0
    %v1326 = vpop.f32.mrb[0].mxu0
    %v1327 = vadd.f32 0.0, %v1326
    %v1328 = vpop.f32.mrb[0].mxu0
    %1329 = vdwg.mxu0
    %v1330 = vpack.c.bf16 %v1327, %v1324
    %v1332 = vunpack.c.l.b16 %v1330
    %v1333 = vunpack.c.h.b16 %v1330
    %v1334 = vpack.c.b16 %v1332, %v1332
    %v1335 = vpack.c.b16 %v1333, %v1333
    %1336 = vrot.lane.b32.xlu0 %v1334, 96
    %v1337 = vpop.permute.xlu0 %1336
    %v1339 = vsel %vm176, %v1334, 0
    %v1342 = vsel %vm176, %v1337, 0
    %1344 = vmatprep.subr.bf16.mxu0 0
    %1345 = vmatpush1.bf16.xpose.msra.mxu0 %v1342
    %1346 = vmatprep.subr.bf16.mxu0 0
    %1347 = vmatpush1.bf16.xpose.msra.mxu0 0
    %1348 = vmatprep.subr.bf16.mxu0 0
    %1349 = vmatpush1.bf16.xpose.msra.mxu0 0
    %1350 = vmatprep.subr.bf16.mxu0 0
    %1351 = vmatpush1.bf16.xpose.msra.mxu0 0
    %1352 = vmatprep.subr.bf16.mxu0 0
    %1353 = vmatpush1.bf16.xpose.msra.mxu0 0
    %1354 = vmatprep.subr.bf16.mxu0 0
    %1355 = vmatpush1.bf16.xpose.msra.mxu0 0
    %1356 = vmatprep.subr.bf16.mxu0 0
    %1357 = vmatpush1.bf16.xpose.msra.mxu0 0
    %1358 = vmatprep.subr.bf16.mxu0 0
    %1359 = vmatpush1.bf16.xpose.msra.mxu0 0
    %1360 = vmatprep.subr.bf16.mxu0 0
    %1361 = vmatpush1.bf16.xpose.msra.mxu0 0
    %1362 = vmatprep.subr.bf16.mxu0 0
    %1363 = vmatpush1.bf16.xpose.msra.mxu0 0
    %1364 = vmatprep.subr.bf16.mxu0 0
    %1365 = vmatpush1.bf16.xpose.msra.mxu0 0
    %1366 = vmatprep.subr.bf16.mxu0 0
    %1367 = vmatpush1.bf16.xpose.msra.mxu0 0
    %1368 = vmatprep.subr.bf16.mxu0 0
    %1369 = vmatpush1.bf16.xpose.msra.mxu0 0
    %1370 = vmatprep.subr.bf16.mxu0 0
    %1371 = vmatpush1.bf16.xpose.msra.mxu0 0
    %1372 = vmatprep.subr.bf16.mxu0 0
    %1373 = vmatpush1.bf16.xpose.msra.mxu0 0
    %1374 = vmatprep.subr.bf16.mxu0 0
    %1375 = vmatpush1.bf16.xpose.msra.mxu0 0
    %1376 = vmatprep.mubr.bf16.mxu0 0
    %1377 = vmatmul.mubr.bf16.gmra.mrb[0].mxu0 %v1339
    %v1378 = vpop.f32.mrb[0].mxu0
    %v1379 = vadd.f32 0.0, %v1378
    %v1380 = vpop.f32.mrb[0].mxu0
    %v1381 = vpop.f32.mrb[0].mxu0
    %v1382 = vpop.f32.mrb[0].mxu0
    %1383 = vdwg.mxu0
    %1384 = vrot.lane.b32.xlu0 %v1335, 96
    %v1385 = vpop.permute.xlu0 %1384
    %v1387 = vsel %vm176, %v1335, 0
    %v1390 = vsel %vm176, %v1385, 0
    %1392 = vmatprep.subr.bf16.mxu0 0
    %1393 = vmatpush1.bf16.xpose.msra.mxu0 %v1390
    %1394 = vmatprep.subr.bf16.mxu0 0
    %1395 = vmatpush1.bf16.xpose.msra.mxu0 0
    %1396 = vmatprep.subr.bf16.mxu0 0
    %1397 = vmatpush1.bf16.xpose.msra.mxu0 0
    %1398 = vmatprep.subr.bf16.mxu0 0
    %1399 = vmatpush1.bf16.xpose.msra.mxu0 0
    %1400 = vmatprep.subr.bf16.mxu0 0
    %1401 = vmatpush1.bf16.xpose.msra.mxu0 0
    %1402 = vmatprep.subr.bf16.mxu0 0
    %1403 = vmatpush1.bf16.xpose.msra.mxu0 0
    %1404 = vmatprep.subr.bf16.mxu0 0
    %1405 = vmatpush1.bf16.xpose.msra.mxu0 0
    %1406 = vmatprep.subr.bf16.mxu0 0
    %1407 = vmatpush1.bf16.xpose.msra.mxu0 0
    %1408 = vmatprep.subr.bf16.mxu0 0
    %1409 = vmatpush1.bf16.xpose.msra.mxu0 0
    %1410 = vmatprep.subr.bf16.mxu0 0
    %1411 = vmatpush1.bf16.xpose.msra.mxu0 0
    %1412 = vmatprep.subr.bf16.mxu0 0
    %1413 = vmatpush1.bf16.xpose.msra.mxu0 0
    %1414 = vmatprep.subr.bf16.mxu0 0
    %1415 = vmatpush1.bf16.xpose.msra.mxu0 0
    %1416 = vmatprep.subr.bf16.mxu0 0
    %1417 = vmatpush1.bf16.xpose.msra.mxu0 0
    %1418 = vmatprep.subr.bf16.mxu0 0
    %1419 = vmatpush1.bf16.xpose.msra.mxu0 0
    %1420 = vmatprep.subr.bf16.mxu0 0
    %1421 = vmatpush1.bf16.xpose.msra.mxu0 0
    %1422 = vmatprep.subr.bf16.mxu0 0
    %1423 = vmatpush1.bf16.xpose.msra.mxu0 0
    %1424 = vmatprep.mubr.bf16.mxu0 0
    %1425 = vmatmul.mubr.bf16.gmra.mrb[0].mxu0 %v1387
    %v1426 = vpop.f32.mrb[0].mxu0
    %v1427 = vadd.f32 0.0, %v1426
    %v1428 = vpop.f32.mrb[0].mxu0
    %v1429 = vpop.f32.mrb[0].mxu0
    %v1430 = vpop.f32.mrb[0].mxu0
    %1431 = vdwg.mxu0
    %v1432 = vmul.f32 %v1379, 0.17677669
    %v1433 = vmul.f32 %v1427, 0.17677669
    %v1434 = vadd.f32 %v1432, %v135
    %v1435 = vadd.f32 %v1433, %v135
    %v1436 = vsel %vm460, %v1434, -inf
    %1437 = vmax.xlane.f32.xlu0 %v1436
    %v1438 = vpop.xlane.xlu0 %1437
    %v1439 = vsel %vm460, %v1435, -inf
    %1440 = vmax.xlane.f32.xlu0 %v1439
    %v1441 = vpop.xlane.xlu0 %1440
    %v1442 = vsub.f32 %v1434, %v1438
    %v1443 = vsub.f32 %v1435, %v1441
    %v1444 = vmul.f32 %v1442, 1.442695
    %v1445 = vpow.pop %v1444
    %v1446 = vmul.f32 %v1443, 1.442695
    %v1447 = vpow.pop %v1446
    %v1448 = vsel %vm460, %v1445, 0.0
    %1449 = vadd.xlane.f32.xlu0 %v1448
    %v1450 = vpop.xlane.xlu0 %1449
    %v1451 = vsel %vm460, %v1447, 0.0
    %1452 = vadd.xlane.f32.xlu0 %v1451
    %v1453 = vpop.xlane.xlu0 %1452
    %v1454 = vrcp.pop %v1450
    %v1455 = vrcp.pop %v1453
    %v1456 = vmul.f32 %v1445, %v1454
    %v1457 = vmul.f32 %v1447, %v1455
    %v1458 = vpack.c.bf16 %v1456, %v1456
    %v1459 = vpack.c.bf16 %v1457, %v1457
    %1460 = vrot.lane.b32.xlu0 %v1334, 64
    %v1461 = vpop.permute.xlu0 %1460
    %v1463 = vsel %vm460, %v1458, 0
    %v1466 = vsel %vm490, %v1461, 0
    %1468 = vmatprep.subr.bf16.mxu0 0
    %1469 = vmatpush1.bf16.msra.mxu0 %v1466
    %1470 = vmatprep.subr.bf16.mxu0 0
    %1471 = vmatpush1.bf16.msra.mxu0 0
    %1472 = vmatprep.subr.bf16.mxu0 0
    %1473 = vmatpush1.bf16.msra.mxu0 0
    %1474 = vmatprep.subr.bf16.mxu0 0
    %1475 = vmatpush1.bf16.msra.mxu0 0
    %1476 = vmatprep.subr.bf16.mxu0 0
    %1477 = vmatpush1.bf16.msra.mxu0 0
    %1478 = vmatprep.subr.bf16.mxu0 0
    %1479 = vmatpush1.bf16.msra.mxu0 0
    %1480 = vmatprep.subr.bf16.mxu0 0
    %1481 = vmatpush1.bf16.msra.mxu0 0
    %1482 = vmatprep.subr.bf16.mxu0 0
    %1483 = vmatpush1.bf16.msra.mxu0 0
    %1484 = vmatprep.subr.bf16.mxu0 0
    %1485 = vmatpush1.bf16.msra.mxu0 0
    %1486 = vmatprep.subr.bf16.mxu0 0
    %1487 = vmatpush1.bf16.msra.mxu0 0
    %1488 = vmatprep.subr.bf16.mxu0 0
    %1489 = vmatpush1.bf16.msra.mxu0 0
    %1490 = vmatprep.subr.bf16.mxu0 0
    %1491 = vmatpush1.bf16.msra.mxu0 0
    %1492 = vmatprep.subr.bf16.mxu0 0
    %1493 = vmatpush1.bf16.msra.mxu0 0
    %1494 = vmatprep.subr.bf16.mxu0 0
    %1495 = vmatpush1.bf16.msra.mxu0 0
    %1496 = vmatprep.subr.bf16.mxu0 0
    %1497 = vmatpush1.bf16.msra.mxu0 0
    %1498 = vmatprep.subr.bf16.mxu0 0
    %1499 = vmatpush1.bf16.msra.mxu0 0
    %1500 = vmatprep.mubr.bf16.mxu0 0
    %1501 = vmatmul.mubr.bf16.gmra.mrb[0].mxu0 %v1463
    %v1502 = vpop.f32.mrb[0].mxu0
    %v1503 = vadd.f32 0.0, %v1502
    %v1504 = vpop.f32.mrb[0].mxu0
    %v1505 = vpop.f32.mrb[0].mxu0
    %v1506 = vpop.f32.mrb[0].mxu0
    %1507 = vdwg.mxu0
    %1508 = vrot.lane.b32.xlu0 %v1335, 64
    %v1509 = vpop.permute.xlu0 %1508
    %v1511 = vsel %vm460, %v1459, 0
    %v1514 = vsel %vm490, %v1509, 0
    %1516 = vmatprep.subr.bf16.mxu0 0
    %1517 = vmatpush1.bf16.msra.mxu0 %v1514
    %1518 = vmatprep.subr.bf16.mxu0 0
    %1519 = vmatpush1.bf16.msra.mxu0 0
    %1520 = vmatprep.subr.bf16.mxu0 0
    %1521 = vmatpush1.bf16.msra.mxu0 0
    %1522 = vmatprep.subr.bf16.mxu0 0
    %1523 = vmatpush1.bf16.msra.mxu0 0
    %1524 = vmatprep.subr.bf16.mxu0 0
    %1525 = vmatpush1.bf16.msra.mxu0 0
    %1526 = vmatprep.subr.bf16.mxu0 0
    %1527 = vmatpush1.bf16.msra.mxu0 0
    %1528 = vmatprep.subr.bf16.mxu0 0
    %1529 = vmatpush1.bf16.msra.mxu0 0
    %1530 = vmatprep.subr.bf16.mxu0 0
    %1531 = vmatpush1.bf16.msra.mxu0 0
    %1532 = vmatprep.subr.bf16.mxu0 0
    %1533 = vmatpush1.bf16.msra.mxu0 0
    %1534 = vmatprep.subr.bf16.mxu0 0
    %1535 = vmatpush1.bf16.msra.mxu0 0
    %1536 = vmatprep.subr.bf16.mxu0 0
    %1537 = vmatpush1.bf16.msra.mxu0 0
    %1538 = vmatprep.subr.bf16.mxu0 0
    %1539 = vmatpush1.bf16.msra.mxu0 0
    %1540 = vmatprep.subr.bf16.mxu0 0
    %1541 = vmatpush1.bf16.msra.mxu0 0
    %1542 = vmatprep.subr.bf16.mxu0 0
    %1543 = vmatpush1.bf16.msra.mxu0 0
    %1544 = vmatprep.subr.bf16.mxu0 0
    %1545 = vmatpush1.bf16.msra.mxu0 0
    %1546 = vmatprep.subr.bf16.mxu0 0
    %1547 = vmatpush1.bf16.msra.mxu0 0
    %1548 = vmatprep.mubr.bf16.mxu0 0
    %1549 = vmatmul.mubr.bf16.gmra.mrb[0].mxu0 %v1511
    %v1550 = vpop.f32.mrb[0].mxu0
    %v1551 = vadd.f32 0.0, %v1550
    %v1552 = vpop.f32.mrb[0].mxu0
    %v1553 = vpop.f32.mrb[0].mxu0
    %v1554 = vpop.f32.mrb[0].mxu0
    %1555 = vdwg.mxu0
    %s1556 = scalar_lea.vmem %s3, 16
    %v1557 = vld [vmem:[%s1556] sm:$0xf]
    %v1558 = vld [vmem:[%s1556 + $0x4] sm:$0xf]
    %v1559 = vld [vmem:[%s1556 + $0x8] sm:$0xf]
    %v1560 = vld [vmem:[%s1556 + $0xc] sm:$0xf]
    %v1561 = vpack.c.bf16 %v1551, %v1503
    %v1562 = vlaneseq
    %v1563 = vshrl.u32 %v1562, 7
    %v1564 = vsub.s32 0, %v1563
    %v1565 = vrot.slane %v1266, %v1564
    %v1570 = vunpack.c.l.b16 %v1557
    %v1571 = vunpack.c.l.b16 %v1558
    %v1572 = vunpack.c.l.b16 %v1559
    %v1573 = vunpack.c.l.b16 %v1560
    %v1574 = vpack.c.b16 %v1571, %v1570
    %v1575 = vpack.c.b16 %v1573, %v1572
    %v1579 = vsel %vm176, %v1561, 0
    %1581 = vmatprep.subr.bf16.mxu0 0
    %1582 = vmatpush1.bf16.msra.mxu0 %v1574
    %1583 = vmatprep.subr.bf16.mxu0 0
    %1584 = vmatpush1.bf16.msra.mxu0 %v1575
    %1585 = vmatprep.subr.bf16.mxu0 0
    %1586 = vmatpush1.bf16.msra.mxu0 0
    %1587 = vmatprep.subr.bf16.mxu0 0
    %1588 = vmatpush1.bf16.msra.mxu0 0
    %1589 = vmatprep.subr.bf16.mxu0 0
    %1590 = vmatpush1.bf16.msra.mxu0 0
    %1591 = vmatprep.subr.bf16.mxu0 0
    %1592 = vmatpush1.bf16.msra.mxu0 0
    %1593 = vmatprep.subr.bf16.mxu0 0
    %1594 = vmatpush1.bf16.msra.mxu0 0
    %1595 = vmatprep.subr.bf16.mxu0 0
    %1596 = vmatpush1.bf16.msra.mxu0 0
    %1597 = vmatprep.subr.bf16.mxu0 0
    %1598 = vmatpush1.bf16.msra.mxu0 0
    %1599 = vmatprep.subr.bf16.mxu0 0
    %1600 = vmatpush1.bf16.msra.mxu0 0
    %1601 = vmatprep.subr.bf16.mxu0 0
    %1602 = vmatpush1.bf16.msra.mxu0 0
    %1603 = vmatprep.subr.bf16.mxu0 0
    %1604 = vmatpush1.bf16.msra.mxu0 0
    %1605 = vmatprep.subr.bf16.mxu0 0
    %1606 = vmatpush1.bf16.msra.mxu0 0
    %1607 = vmatprep.subr.bf16.mxu0 0
    %1608 = vmatpush1.bf16.msra.mxu0 0
    %1609 = vmatprep.subr.bf16.mxu0 0
    %1610 = vmatpush1.bf16.msra.mxu0 0
    %1611 = vmatprep.subr.bf16.mxu0 0
    %1612 = vmatpush1.bf16.msra.mxu0 0
    %1613 = vmatprep.mubr.bf16.mxu0 0
    %1614 = vmatmul.mubr.bf16.gmra.mrb[0].mxu0 %v1579
    %v1615 = vpop.f32.mrb[0].mxu0
    %v1616 = vadd.f32 %v1565, %v1615
    %v1617 = vpop.f32.mrb[0].mxu0
    %v1618 = vpop.f32.mrb[0].mxu0
    %v1619 = vadd.f32 %v1565, %v1618
    %v1620 = vpop.f32.mrb[0].mxu0
    %1621 = vdwg.mxu0
    %v1622 = vadd.f32 %v1263, %v1616
    %v1623 = vadd.f32 %v1264, %v1619
    %v1624 = vsel %vm176, %v1622, 0.0
    %1625 = vadd.xlane.f32.xlu0 %v1624
    %v1626 = vpop.xlane.xlu0 %1625
    %v1627 = vsel %vm176, %v1623, 0.0
    %1628 = vadd.xlane.f32.xlu0 %v1627
    %v1629 = vpop.xlane.xlu0 %1628
    %v1630 = vmul.f32 %v1626, %v655
    %v1631 = vmul.f32 %v1629, %v655
    %v1632 = vsub.f32 %v1622, %v1630
    %v1633 = vsub.f32 %v1623, %v1631
    %v1634 = vmul.f32 %v1632, %v1632
    %v1635 = vmul.f32 %v1633, %v1633
    %v1636 = vsel %vm176, %v1634, 0.0
    %1637 = vadd.xlane.f32.xlu0 %v1636
    %v1638 = vpop.xlane.xlu0 %1637
    %v1639 = vsel %vm176, %v1635, 0.0
    %1640 = vadd.xlane.f32.xlu0 %v1639
    %v1641 = vpop.xlane.xlu0 %1640
    %v1642 = vmul.f32 %v1638, %v655
    %v1643 = vmul.f32 %v1641, %v655
    %v1644 = vadd.f32 %v1642, 1e-05
    %v1645 = vadd.f32 %v1643, 1e-05
    %v1646 = vrsqrt.pop %v1644
    %v1647 = vrsqrt.pop %v1645
    %v1648 = vmul.f32 %v1632, %v1646
    %v1649 = vmul.f32 %v1633, %v1647
    %v1650 = vlaneseq
    %v1651 = vshrl.u32 %v1650, 7
    %v1652 = vsub.s32 3, %v1651
    %v1653 = vrot.slane %v1266, %v1652
    %v1654 = vmul.f32 %v1648, %v1653
    %v1655 = vmul.f32 %v1649, %v1653
    %v1656 = vlaneseq
    %v1657 = vshrl.u32 %v1656, 7
    %v1658 = vsub.s32 6, %v1657
    %v1659 = vrot.slane %v1266, %v1658
    %v1660 = vadd.f32 %v1654, %v1659
    %v1661 = vadd.f32 %v1655, %v1659
    %s1662 = scalar_lea.vmem %s4, 16
    %v1663 = vld [vmem:[%s1662] sm:$0xf]
    %v1664 = vld [vmem:[%s1662 + $0x4] sm:$0xf]
    %v1665 = vld [vmem:[%s1662 + $0x8] sm:$0xf]
    %v1666 = vld [vmem:[%s1662 + $0xc] sm:$0xf]
    %v1667 = vpack.c.bf16 %v1661, %v1660
    %v1672 = vunpack.c.l.b16 %v1663
    %v1673 = vunpack.c.l.b16 %v1664
    %v1674 = vunpack.c.l.b16 %v1665
    %v1675 = vunpack.c.l.b16 %v1666
    %v1676 = vpack.c.b16 %v1673, %v1672
    %v1677 = vpack.c.b16 %v1675, %v1674
    %v1681 = vsel %vm176, %v1667, 0
    %1683 = vmatprep.subr.bf16.mxu0 0
    %1684 = vmatpush1.bf16.msra.mxu0 %v1676
    %1685 = vmatprep.subr.bf16.mxu0 0
    %1686 = vmatpush1.bf16.msra.mxu0 %v1677
    %1687 = vmatprep.subr.bf16.mxu0 0
    %1688 = vmatpush1.bf16.msra.mxu0 0
    %1689 = vmatprep.subr.bf16.mxu0 0
    %1690 = vmatpush1.bf16.msra.mxu0 0
    %1691 = vmatprep.subr.bf16.mxu0 0
    %1692 = vmatpush1.bf16.msra.mxu0 0
    %1693 = vmatprep.subr.bf16.mxu0 0
    %1694 = vmatpush1.bf16.msra.mxu0 0
    %1695 = vmatprep.subr.bf16.mxu0 0
    %1696 = vmatpush1.bf16.msra.mxu0 0
    %1697 = vmatprep.subr.bf16.mxu0 0
    %1698 = vmatpush1.bf16.msra.mxu0 0
    %1699 = vmatprep.subr.bf16.mxu0 0
    %1700 = vmatpush1.bf16.msra.mxu0 0
    %1701 = vmatprep.subr.bf16.mxu0 0
    %1702 = vmatpush1.bf16.msra.mxu0 0
    %1703 = vmatprep.subr.bf16.mxu0 0
    %1704 = vmatpush1.bf16.msra.mxu0 0
    %1705 = vmatprep.subr.bf16.mxu0 0
    %1706 = vmatpush1.bf16.msra.mxu0 0
    %1707 = vmatprep.subr.bf16.mxu0 0
    %1708 = vmatpush1.bf16.msra.mxu0 0
    %1709 = vmatprep.subr.bf16.mxu0 0
    %1710 = vmatpush1.bf16.msra.mxu0 0
    %1711 = vmatprep.subr.bf16.mxu0 0
    %1712 = vmatpush1.bf16.msra.mxu0 0
    %1713 = vmatprep.subr.bf16.mxu0 0
    %1714 = vmatpush1.bf16.msra.mxu0 0
    %1715 = vmatprep.mubr.bf16.mxu0 0
    %1716 = vmatmul.mubr.bf16.gmra.mrb[0].mxu0 %v1681
    %v1717 = vpop.f32.mrb[0].mxu0
    %v1718 = vadd.f32 0.0, %v1717
    %v1719 = vpop.f32.mrb[0].mxu0
    %v1720 = vpop.f32.mrb[0].mxu0
    %v1721 = vadd.f32 0.0, %v1720
    %v1722 = vpop.f32.mrb[0].mxu0
    %1723 = vdwg.mxu0
    %v1724 = vpack.c.bf16 %v1721, %v1718
    %v1726 = vunpack.c.l.b16 %v1724
    %v1727 = vunpack.c.h.b16 %v1724
    %v1728 = vpack.c.b16 %v1726, %v1726
    %v1729 = vpack.c.b16 %v1727, %v1727
    %1730 = vrot.lane.b32.xlu0 %v285, 64
    %v1731 = vpop.permute.xlu0 %1730
    %v1733 = vsel %vm176, %v1728, 0
    %v1736 = vsel %vm176, %v1731, 0
    %1738 = vmatprep.subr.bf16.mxu0 0
    %1739 = vmatpush1.bf16.xpose.msra.mxu0 %v1736
    %1740 = vmatprep.subr.bf16.mxu0 0
    %1741 = vmatpush1.bf16.xpose.msra.mxu0 0
    %1742 = vmatprep.subr.bf16.mxu0 0
    %1743 = vmatpush1.bf16.xpose.msra.mxu0 0
    %1744 = vmatprep.subr.bf16.mxu0 0
    %1745 = vmatpush1.bf16.xpose.msra.mxu0 0
    %1746 = vmatprep.subr.bf16.mxu0 0
    %1747 = vmatpush1.bf16.xpose.msra.mxu0 0
    %1748 = vmatprep.subr.bf16.mxu0 0
    %1749 = vmatpush1.bf16.xpose.msra.mxu0 0
    %1750 = vmatprep.subr.bf16.mxu0 0
    %1751 = vmatpush1.bf16.xpose.msra.mxu0 0
    %1752 = vmatprep.subr.bf16.mxu0 0
    %1753 = vmatpush1.bf16.xpose.msra.mxu0 0
    %1754 = vmatprep.subr.bf16.mxu0 0
    %1755 = vmatpush1.bf16.xpose.msra.mxu0 0
    %1756 = vmatprep.subr.bf16.mxu0 0
    %1757 = vmatpush1.bf16.xpose.msra.mxu0 0
    %1758 = vmatprep.subr.bf16.mxu0 0
    %1759 = vmatpush1.bf16.xpose.msra.mxu0 0
    %1760 = vmatprep.subr.bf16.mxu0 0
    %1761 = vmatpush1.bf16.xpose.msra.mxu0 0
    %1762 = vmatprep.subr.bf16.mxu0 0
    %1763 = vmatpush1.bf16.xpose.msra.mxu0 0
    %1764 = vmatprep.subr.bf16.mxu0 0
    %1765 = vmatpush1.bf16.xpose.msra.mxu0 0
    %1766 = vmatprep.subr.bf16.mxu0 0
    %1767 = vmatpush1.bf16.xpose.msra.mxu0 0
    %1768 = vmatprep.subr.bf16.mxu0 0
    %1769 = vmatpush1.bf16.xpose.msra.mxu0 0
    %1770 = vmatprep.mubr.bf16.mxu0 0
    %1771 = vmatmul.mubr.bf16.gmra.mrb[0].mxu0 %v1733
    %v1772 = vpop.f32.mrb[0].mxu0
    %v1773 = vadd.f32 0.0, %v1772
    %v1774 = vpop.f32.mrb[0].mxu0
    %v1775 = vpop.f32.mrb[0].mxu0
    %v1776 = vpop.f32.mrb[0].mxu0
    %1777 = vdwg.mxu0
    %1778 = vrot.lane.b32.xlu0 %v288, 64
    %v1779 = vpop.permute.xlu0 %1778
    %v1781 = vsel %vm176, %v1729, 0
    %v1784 = vsel %vm176, %v1779, 0
    %1786 = vmatprep.subr.bf16.mxu0 0
    %1787 = vmatpush1.bf16.xpose.msra.mxu0 %v1784
    %1788 = vmatprep.subr.bf16.mxu0 0
    %1789 = vmatpush1.bf16.xpose.msra.mxu0 0
    %1790 = vmatprep.subr.bf16.mxu0 0
    %1791 = vmatpush1.bf16.xpose.msra.mxu0 0
    %1792 = vmatprep.subr.bf16.mxu0 0
    %1793 = vmatpush1.bf16.xpose.msra.mxu0 0
    %1794 = vmatprep.subr.bf16.mxu0 0
    %1795 = vmatpush1.bf16.xpose.msra.mxu0 0
    %1796 = vmatprep.subr.bf16.mxu0 0
    %1797 = vmatpush1.bf16.xpose.msra.mxu0 0
    %1798 = vmatprep.subr.bf16.mxu0 0
    %1799 = vmatpush1.bf16.xpose.msra.mxu0 0
    %1800 = vmatprep.subr.bf16.mxu0 0
    %1801 = vmatpush1.bf16.xpose.msra.mxu0 0
    %1802 = vmatprep.subr.bf16.mxu0 0
    %1803 = vmatpush1.bf16.xpose.msra.mxu0 0
    %1804 = vmatprep.subr.bf16.mxu0 0
    %1805 = vmatpush1.bf16.xpose.msra.mxu0 0
    %1806 = vmatprep.subr.bf16.mxu0 0
    %1807 = vmatpush1.bf16.xpose.msra.mxu0 0
    %1808 = vmatprep.subr.bf16.mxu0 0
    %1809 = vmatpush1.bf16.xpose.msra.mxu0 0
    %1810 = vmatprep.subr.bf16.mxu0 0
    %1811 = vmatpush1.bf16.xpose.msra.mxu0 0
    %1812 = vmatprep.subr.bf16.mxu0 0
    %1813 = vmatpush1.bf16.xpose.msra.mxu0 0
    %1814 = vmatprep.subr.bf16.mxu0 0
    %1815 = vmatpush1.bf16.xpose.msra.mxu0 0
    %1816 = vmatprep.subr.bf16.mxu0 0
    %1817 = vmatpush1.bf16.xpose.msra.mxu0 0
    %1818 = vmatprep.mubr.bf16.mxu0 0
    %1819 = vmatmul.mubr.bf16.gmra.mrb[0].mxu0 %v1781
    %v1820 = vpop.f32.mrb[0].mxu0
    %v1821 = vadd.f32 0.0, %v1820
    %v1822 = vpop.f32.mrb[0].mxu0
    %v1823 = vpop.f32.mrb[0].mxu0
    %v1824 = vpop.f32.mrb[0].mxu0
    %1825 = vdwg.mxu0
    %v1826 = vmul.f32 %v1773, 0.17677669
    %v1827 = vmul.f32 %v1821, 0.17677669
    %v1828 = vsel %vm849, %v1826, -inf
    %1829 = vmax.xlane.f32.xlu0 %v1828
    %v1830 = vpop.xlane.xlu0 %1829
    %v1831 = vsel %vm849, %v1827, -inf
    %1832 = vmax.xlane.f32.xlu0 %v1831
    %v1833 = vpop.xlane.xlu0 %1832
    %v1834 = vsub.f32 %v1826, %v1830
    %v1835 = vsub.f32 %v1827, %v1833
    %v1836 = vmul.f32 %v1834, 1.442695
    %v1837 = vpow.pop %v1836
    %v1838 = vmul.f32 %v1835, 1.442695
    %v1839 = vpow.pop %v1838
    %v1840 = vsel %vm849, %v1837, 0.0
    %1841 = vadd.xlane.f32.xlu0 %v1840
    %v1842 = vpop.xlane.xlu0 %1841
    %v1843 = vsel %vm849, %v1839, 0.0
    %1844 = vadd.xlane.f32.xlu0 %v1843
    %v1845 = vpop.xlane.xlu0 %1844
    %v1846 = vrcp.pop %v1842
    %v1847 = vrcp.pop %v1845
    %v1848 = vmul.f32 %v1837, %v1846
    %v1849 = vmul.f32 %v1839, %v1847
    %v1850 = vpack.c.bf16 %v1848, %v1848
    %v1851 = vpack.c.bf16 %v1849, %v1849
    %1852 = vrot.lane.b32.xlu0 %v285, 32
    %v1853 = vpop.permute.xlu0 %1852
    %v1856 = vsel %vm849, %v1850, 0
    %1858 = vmatprep.subr.bf16.mxu0 0
    %1859 = vmatpush1.bf16.msra.mxu0 %v1853
    %1860 = vmatprep.subr.bf16.mxu0 0
    %1861 = vmatpush1.bf16.msra.mxu0 0
    %1862 = vmatprep.subr.bf16.mxu0 0
    %1863 = vmatpush1.bf16.msra.mxu0 0
    %1864 = vmatprep.subr.bf16.mxu0 0
    %1865 = vmatpush1.bf16.msra.mxu0 0
    %1866 = vmatprep.subr.bf16.mxu0 0
    %1867 = vmatpush1.bf16.msra.mxu0 0
    %1868 = vmatprep.subr.bf16.mxu0 0
    %1869 = vmatpush1.bf16.msra.mxu0 0
    %1870 = vmatprep.subr.bf16.mxu0 0
    %1871 = vmatpush1.bf16.msra.mxu0 0
    %1872 = vmatprep.subr.bf16.mxu0 0
    %1873 = vmatpush1.bf16.msra.mxu0 0
    %1874 = vmatprep.subr.bf16.mxu0 0
    %1875 = vmatpush1.bf16.msra.mxu0 0
    %1876 = vmatprep.subr.bf16.mxu0 0
    %1877 = vmatpush1.bf16.msra.mxu0 0
    %1878 = vmatprep.subr.bf16.mxu0 0
    %1879 = vmatpush1.bf16.msra.mxu0 0
    %1880 = vmatprep.subr.bf16.mxu0 0
    %1881 = vmatpush1.bf16.msra.mxu0 0
    %1882 = vmatprep.subr.bf16.mxu0 0
    %1883 = vmatpush1.bf16.msra.mxu0 0
    %1884 = vmatprep.subr.bf16.mxu0 0
    %1885 = vmatpush1.bf16.msra.mxu0 0
    %1886 = vmatprep.subr.bf16.mxu0 0
    %1887 = vmatpush1.bf16.msra.mxu0 0
    %1888 = vmatprep.subr.bf16.mxu0 0
    %1889 = vmatpush1.bf16.msra.mxu0 0
    %1890 = vmatprep.mubr.bf16.mxu0 0
    %1891 = vmatmul.mubr.bf16.gmra.mrb[0].mxu0 %v1856
    %v1892 = vpop.f32.mrb[0].mxu0
    %v1893 = vadd.f32 0.0, %v1892
    %v1894 = vpop.f32.mrb[0].mxu0
    %v1895 = vpop.f32.mrb[0].mxu0
    %v1896 = vpop.f32.mrb[0].mxu0
    %1897 = vdwg.mxu0
    %1898 = vrot.lane.b32.xlu0 %v288, 32
    %v1899 = vpop.permute.xlu0 %1898
    %v1902 = vsel %vm849, %v1851, 0
    %1904 = vmatprep.subr.bf16.mxu0 0
    %1905 = vmatpush1.bf16.msra.mxu0 %v1899
    %1906 = vmatprep.subr.bf16.mxu0 0
    %1907 = vmatpush1.bf16.msra.mxu0 0
    %1908 = vmatprep.subr.bf16.mxu0 0
    %1909 = vmatpush1.bf16.msra.mxu0 0
    %1910 = vmatprep.subr.bf16.mxu0 0
    %1911 = vmatpush1.bf16.msra.mxu0 0
    %1912 = vmatprep.subr.bf16.mxu0 0
    %1913 = vmatpush1.bf16.msra.mxu0 0
    %1914 = vmatprep.subr.bf16.mxu0 0
    %1915 = vmatpush1.bf16.msra.mxu0 0
    %1916 = vmatprep.subr.bf16.mxu0 0
    %1917 = vmatpush1.bf16.msra.mxu0 0
    %1918 = vmatprep.subr.bf16.mxu0 0
    %1919 = vmatpush1.bf16.msra.mxu0 0
    %1920 = vmatprep.subr.bf16.mxu0 0
    %1921 = vmatpush1.bf16.msra.mxu0 0
    %1922 = vmatprep.subr.bf16.mxu0 0
    %1923 = vmatpush1.bf16.msra.mxu0 0
    %1924 = vmatprep.subr.bf16.mxu0 0
    %1925 = vmatpush1.bf16.msra.mxu0 0
    %1926 = vmatprep.subr.bf16.mxu0 0
    %1927 = vmatpush1.bf16.msra.mxu0 0
    %1928 = vmatprep.subr.bf16.mxu0 0
    %1929 = vmatpush1.bf16.msra.mxu0 0
    %1930 = vmatprep.subr.bf16.mxu0 0
    %1931 = vmatpush1.bf16.msra.mxu0 0
    %1932 = vmatprep.subr.bf16.mxu0 0
    %1933 = vmatpush1.bf16.msra.mxu0 0
    %1934 = vmatprep.subr.bf16.mxu0 0
    %1935 = vmatpush1.bf16.msra.mxu0 0
    %1936 = vmatprep.mubr.bf16.mxu0 0
    %1937 = vmatmul.mubr.bf16.gmra.mrb[0].mxu0 %v1902
    %v1938 = vpop.f32.mrb[0].mxu0
    %v1939 = vadd.f32 0.0, %v1938
    %v1940 = vpop.f32.mrb[0].mxu0
    %v1941 = vpop.f32.mrb[0].mxu0
    %v1942 = vpop.f32.mrb[0].mxu0
    %1943 = vdwg.mxu0
    %s1944 = scalar_lea.vmem [#allocation7], 16
    %v1945 = vld [vmem:[%s1944] sm:$0xf]
    %v1946 = vld [vmem:[%s1944 + $0x4] sm:$0xf]
    %v1947 = vld [vmem:[%s1944 + $0x8] sm:$0xf]
    %v1948 = vld [vmem:[%s1944 + $0xc] sm:$0xf]
    %v1949 = vpack.c.bf16 %v1939, %v1893
    %v1950 = vlaneseq
    %v1951 = vshrl.u32 %v1950, 7
    %v1952 = vsub.s32 1, %v1951
    %v1953 = vrot.slane %v1266, %v1952
    %v1958 = vunpack.c.l.b16 %v1945
    %v1959 = vunpack.c.l.b16 %v1946
    %v1960 = vunpack.c.l.b16 %v1947
    %v1961 = vunpack.c.l.b16 %v1948
    %v1962 = vpack.c.b16 %v1959, %v1958
    %v1963 = vpack.c.b16 %v1961, %v1960
    %v1967 = vsel %vm176, %v1949, 0
    %1969 = vmatprep.subr.bf16.mxu0 0
    %1970 = vmatpush1.bf16.msra.mxu0 %v1962
    %1971 = vmatprep.subr.bf16.mxu0 0
    %1972 = vmatpush1.bf16.msra.mxu0 %v1963
    %1973 = vmatprep.subr.bf16.mxu0 0
    %1974 = vmatpush1.bf16.msra.mxu0 0
    %1975 = vmatprep.subr.bf16.mxu0 0
    %1976 = vmatpush1.bf16.msra.mxu0 0
    %1977 = vmatprep.subr.bf16.mxu0 0
    %1978 = vmatpush1.bf16.msra.mxu0 0
    %1979 = vmatprep.subr.bf16.mxu0 0
    %1980 = vmatpush1.bf16.msra.mxu0 0
    %1981 = vmatprep.subr.bf16.mxu0 0
    %1982 = vmatpush1.bf16.msra.mxu0 0
    %1983 = vmatprep.subr.bf16.mxu0 0
    %1984 = vmatpush1.bf16.msra.mxu0 0
    %1985 = vmatprep.subr.bf16.mxu0 0
    %1986 = vmatpush1.bf16.msra.mxu0 0
    %1987 = vmatprep.subr.bf16.mxu0 0
    %1988 = vmatpush1.bf16.msra.mxu0 0
    %1989 = vmatprep.subr.bf16.mxu0 0
    %1990 = vmatpush1.bf16.msra.mxu0 0
    %1991 = vmatprep.subr.bf16.mxu0 0
    %1992 = vmatpush1.bf16.msra.mxu0 0
    %1993 = vmatprep.subr.bf16.mxu0 0
    %1994 = vmatpush1.bf16.msra.mxu0 0
    %1995 = vmatprep.subr.bf16.mxu0 0
    %1996 = vmatpush1.bf16.msra.mxu0 0
    %1997 = vmatprep.subr.bf16.mxu0 0
    %1998 = vmatpush1.bf16.msra.mxu0 0
    %1999 = vmatprep.subr.bf16.mxu0 0
    %2000 = vmatpush1.bf16.msra.mxu0 0
    %2001 = vmatprep.mubr.bf16.mxu0 0
    %2002 = vmatmul.mubr.bf16.gmra.mrb[0].mxu0 %v1967
    %v2003 = vpop.f32.mrb[0].mxu0
    %v2004 = vadd.f32 %v1953, %v2003
    %v2005 = vpop.f32.mrb[0].mxu0
    %v2006 = vpop.f32.mrb[0].mxu0
    %v2007 = vadd.f32 %v1953, %v2006
    %v2008 = vpop.f32.mrb[0].mxu0
    %2009 = vdwg.mxu0
    %v2010 = vadd.f32 %v1660, %v2004
    %v2011 = vadd.f32 %v1661, %v2007
    %v2012 = vsel %vm176, %v2010, 0.0
    %2013 = vadd.xlane.f32.xlu0 %v2012
    %v2014 = vpop.xlane.xlu0 %2013
    %v2015 = vsel %vm176, %v2011, 0.0
    %2016 = vadd.xlane.f32.xlu0 %v2015
    %v2017 = vpop.xlane.xlu0 %2016
    %v2018 = vmul.f32 %v2014, %v655
    %v2019 = vmul.f32 %v2017, %v655
    %v2020 = vsub.f32 %v2010, %v2018
    %v2021 = vsub.f32 %v2011, %v2019
    %v2022 = vmul.f32 %v2020, %v2020
    %v2023 = vmul.f32 %v2021, %v2021
    %v2024 = vsel %vm176, %v2022, 0.0
    %2025 = vadd.xlane.f32.xlu0 %v2024
    %v2026 = vpop.xlane.xlu0 %2025
    %v2027 = vsel %vm176, %v2023, 0.0
    %2028 = vadd.xlane.f32.xlu0 %v2027
    %v2029 = vpop.xlane.xlu0 %2028
    %v2030 = vmul.f32 %v2026, %v655
    %v2031 = vmul.f32 %v2029, %v655
    %v2032 = vadd.f32 %v2030, 1e-05
    %v2033 = vadd.f32 %v2031, 1e-05
    %v2034 = vrsqrt.pop %v2032
    %v2035 = vrsqrt.pop %v2033
    %v2036 = vmul.f32 %v2020, %v2034
    %v2037 = vmul.f32 %v2021, %v2035
    %v2038 = vlaneseq
    %v2039 = vshrl.u32 %v2038, 7
    %v2040 = vsub.s32 4, %v2039
    %v2041 = vrot.slane %v1266, %v2040
    %v2042 = vmul.f32 %v2036, %v2041
    %v2043 = vmul.f32 %v2037, %v2041
    %v2044 = vlaneseq
    %v2045 = vshrl.u32 %v2044, 7
    %v2046 = vsub.s32 7, %v2045
    %v2047 = vrot.slane %v1266, %v2046
    %v2048 = vadd.f32 %v2042, %v2047
    %v2049 = vadd.f32 %v2043, %v2047
    %s2050 = scalar_lea.vmem [#allocation8], 16
    %v2051 = vld [vmem:[%s2050] sm:$0xf]
    %v2052 = vld [vmem:[%s2050 + $0x4] sm:$0xf]
    %v2053 = vld [vmem:[%s2050 + $0x8] sm:$0xf]
    %v2054 = vld [vmem:[%s2050 + $0xc] sm:$0xf]
    %v2055 = vpack.c.bf16 %v2049, %v2048
    %s2056 = scalar_lea.vmem %s9, 1
    %v2057 = vld [vmem:[%s2056] sm:$0x1]
    %v2059 = vlaneseq
    %v2060 = vshrl.u32 %v2059, 7
    %v2061 = vsub.s32 0, %v2060
    %v2062 = vrot.slane %v2057, %v2061
    %v2068 = vunpack.c.l.b16 %v2051
    %v2069 = vunpack.c.l.b16 %v2052
    %v2070 = vunpack.c.l.b16 %v2053
    %v2071 = vunpack.c.l.b16 %v2054
    %v2072 = vpack.c.b16 %v2069, %v2068
    %v2073 = vpack.c.b16 %v2071, %v2070
    %v2077 = vsel %vm176, %v2055, 0
    %2079 = vmatprep.subr.bf16.mxu0 0
    %2080 = vmatpush1.bf16.msra.mxu0 %v2072
    %2081 = vmatprep.subr.bf16.mxu0 0
    %2082 = vmatpush1.bf16.msra.mxu0 %v2073
    %2083 = vmatprep.subr.bf16.mxu0 0
    %2084 = vmatpush1.bf16.msra.mxu0 0
    %2085 = vmatprep.subr.bf16.mxu0 0
    %2086 = vmatpush1.bf16.msra.mxu0 0
    %2087 = vmatprep.subr.bf16.mxu0 0
    %2088 = vmatpush1.bf16.msra.mxu0 0
    %2089 = vmatprep.subr.bf16.mxu0 0
    %2090 = vmatpush1.bf16.msra.mxu0 0
    %2091 = vmatprep.subr.bf16.mxu0 0
    %2092 = vmatpush1.bf16.msra.mxu0 0
    %2093 = vmatprep.subr.bf16.mxu0 0
    %2094 = vmatpush1.bf16.msra.mxu0 0
    %2095 = vmatprep.subr.bf16.mxu0 0
    %2096 = vmatpush1.bf16.msra.mxu0 0
    %2097 = vmatprep.subr.bf16.mxu0 0
    %2098 = vmatpush1.bf16.msra.mxu0 0
    %2099 = vmatprep.subr.bf16.mxu0 0
    %2100 = vmatpush1.bf16.msra.mxu0 0
    %2101 = vmatprep.subr.bf16.mxu0 0
    %2102 = vmatpush1.bf16.msra.mxu0 0
    %2103 = vmatprep.subr.bf16.mxu0 0
    %2104 = vmatpush1.bf16.msra.mxu0 0
    %2105 = vmatprep.subr.bf16.mxu0 0
    %2106 = vmatpush1.bf16.msra.mxu0 0
    %2107 = vmatprep.subr.bf16.mxu0 0
    %2108 = vmatpush1.bf16.msra.mxu0 0
    %2109 = vmatprep.subr.bf16.mxu0 0
    %2110 = vmatpush1.bf16.msra.mxu0 0
    %2111 = vmatprep.mubr.bf16.mxu0 0
    %2112 = vmatmul.mubr.bf16.gmra.mrb[0].mxu0 %v2077
    %v2113 = vpop.f32.mrb[0].mxu0
    %v2114 = vadd.f32 %v2062, %v2113
    %v2115 = vpop.f32.mrb[0].mxu0
    %v2116 = vpop.f32.mrb[0].mxu0
    %v2117 = vadd.f32 %v2062, %v2116
    %v2118 = vpop.f32.mrb[0].mxu0
    %2119 = vdwg.mxu0
    %v2120 = vmax.f32 %v2114, 0.0
    %v2121 = vmax.f32 %v2117, 0.0
    %s2122 = scalar_lea.vmem %s7, 32
    %v2123 = vld [vmem:[%s2122] sm:$0xf]
    %v2124 = vld [vmem:[%s2122 + $0x4] sm:$0xf]
    %v2125 = vld [vmem:[%s2122 + $0x8] sm:$0xf]
    %v2126 = vld [vmem:[%s2122 + $0xc] sm:$0xf]
    %v2127 = vld [vmem:[%s2122 + $0x10] sm:$0xf]
    %v2128 = vld [vmem:[%s2122 + $0x14] sm:$0xf]
    %v2129 = vld [vmem:[%s2122 + $0x18] sm:$0xf]
    %v2130 = vld [vmem:[%s2122 + $0x1c] sm:$0xf]
    %v2131 = vpack.c.bf16 %v2121, %v2120
    %v2132 = vlaneseq
    %v2133 = vshrl.u32 %v2132, 7
    %v2134 = vsub.s32 2, %v2133
    %v2135 = vrot.slane %v1266, %v2134
    %v2144 = vunpack.c.l.b16 %v2123
    %v2145 = vunpack.c.l.b16 %v2124
    %v2146 = vunpack.c.l.b16 %v2125
    %v2147 = vunpack.c.l.b16 %v2126
    %v2148 = vunpack.c.l.b16 %v2127
    %v2149 = vunpack.c.l.b16 %v2128
    %v2150 = vunpack.c.l.b16 %v2129
    %v2151 = vunpack.c.l.b16 %v2130
    %v2152 = vpack.c.b16 %v2145, %v2144
    %v2153 = vpack.c.b16 %v2147, %v2146
    %v2154 = vpack.c.b16 %v2149, %v2148
    %v2155 = vpack.c.b16 %v2151, %v2150
    %v2161 = vsel %vm1180, %v2131, 0
    %2163 = vmatprep.subr.bf16.mxu0 0
    %2164 = vmatpush1.bf16.msra.mxu0 %v2152
    %2165 = vmatprep.subr.bf16.mxu0 0
    %2166 = vmatpush1.bf16.msra.mxu0 %v2153
    %2167 = vmatprep.subr.bf16.mxu0 0
    %2168 = vmatpush1.bf16.msra.mxu0 %v2154
    %2169 = vmatprep.subr.bf16.mxu0 0
    %2170 = vmatpush1.bf16.msra.mxu0 %v2155
    %2171 = vmatprep.subr.bf16.mxu0 0
    %2172 = vmatpush1.bf16.msra.mxu0 0
    %2173 = vmatprep.subr.bf16.mxu0 0
    %2174 = vmatpush1.bf16.msra.mxu0 0
    %2175 = vmatprep.subr.bf16.mxu0 0
    %2176 = vmatpush1.bf16.msra.mxu0 0
    %2177 = vmatprep.subr.bf16.mxu0 0
    %2178 = vmatpush1.bf16.msra.mxu0 0
    %2179 = vmatprep.subr.bf16.mxu0 0
    %2180 = vmatpush1.bf16.msra.mxu0 0
    %2181 = vmatprep.subr.bf16.mxu0 0
    %2182 = vmatpush1.bf16.msra.mxu0 0
    %2183 = vmatprep.subr.bf16.mxu0 0
    %2184 = vmatpush1.bf16.msra.mxu0 0
    %2185 = vmatprep.subr.bf16.mxu0 0
    %2186 = vmatpush1.bf16.msra.mxu0 0
    %2187 = vmatprep.subr.bf16.mxu0 0
    %2188 = vmatpush1.bf16.msra.mxu0 0
    %2189 = vmatprep.subr.bf16.mxu0 0
    %2190 = vmatpush1.bf16.msra.mxu0 0
    %2191 = vmatprep.subr.bf16.mxu0 0
    %2192 = vmatpush1.bf16.msra.mxu0 0
    %2193 = vmatprep.subr.bf16.mxu0 0
    %2194 = vmatpush1.bf16.msra.mxu0 0
    %2195 = vmatprep.mubr.bf16.mxu0 0
    %2196 = vmatmul.mubr.bf16.gmra.mrb[0].mxu0 %v2161
    %v2197 = vpop.f32.mrb[0].mxu0
    %v2198 = vadd.f32 %v2135, %v2197
    %v2199 = vpop.f32.mrb[0].mxu0
    %v2200 = vpop.f32.mrb[0].mxu0
    %v2201 = vadd.f32 %v2135, %v2200
    %v2202 = vpop.f32.mrb[0].mxu0
    %2203 = vdwg.mxu0
    %v2204 = vadd.f32 %v2048, %v2198
    %v2205 = vadd.f32 %v2049, %v2201
    %v2206 = vsel %vm176, %v2204, 0.0
    %2207 = vadd.xlane.f32.xlu0 %v2206
    %v2208 = vpop.xlane.xlu0 %2207
    %v2209 = vsel %vm176, %v2205, 0.0
    %2210 = vadd.xlane.f32.xlu0 %v2209
    %v2211 = vpop.xlane.xlu0 %2210
    %v2212 = vmul.f32 %v2208, %v655
    %v2213 = vmul.f32 %v2211, %v655
    %v2214 = vsub.f32 %v2204, %v2212
    %v2215 = vsub.f32 %v2205, %v2213
    %v2216 = vmul.f32 %v2214, %v2214
    %v2217 = vmul.f32 %v2215, %v2215
    %v2218 = vsel %vm176, %v2216, 0.0
    %2219 = vadd.xlane.f32.xlu0 %v2218
    %v2220 = vpop.xlane.xlu0 %2219
    %v2221 = vsel %vm176, %v2217, 0.0
    %2222 = vadd.xlane.f32.xlu0 %v2221
    %v2223 = vpop.xlane.xlu0 %2222
    %v2224 = vmul.f32 %v2220, %v655
    %v2225 = vmul.f32 %v2223, %v655
    %v2226 = vadd.f32 %v2224, 1e-05
    %v2227 = vadd.f32 %v2225, 1e-05
    %v2228 = vrsqrt.pop %v2226
    %v2229 = vrsqrt.pop %v2227
    %v2230 = vmul.f32 %v2214, %v2228
    %v2231 = vmul.f32 %v2215, %v2229
    %v2232 = vlaneseq
    %v2233 = vshrl.u32 %v2232, 7
    %v2234 = vsub.s32 5, %v2233
    %v2235 = vrot.slane %v1266, %v2234
    %v2236 = vmul.f32 %v2230, %v2235
    %v2237 = vmul.f32 %v2231, %v2235
    %v2238 = vlaneseq
    %v2239 = vshrl.u32 %v2238, 7
    %v2240 = vsub.s32 0, %v2239
    %v2241 = vrot.slane %v1267, %v2240
    %v2242 = vadd.f32 %v2236, %v2241
    %v2243 = vadd.f32 %v2237, %v2241
    %s2244 = scalar_lea.vmem [#allocation11], 32
    %v2245 = vld [vmem:[%s2244] sm:$0xff]
    %v2246 = vld [vmem:[%s2244 + $0x8] sm:$0xff]
    %s2247 = scalar_lea.vmem %s2, 32
    %v2248 = vld [vmem:[%s2247] sm:$0xf]
    %v2249 = vld [vmem:[%s2247 + $0x4] sm:$0xf]
    %v2250 = vld [vmem:[%s2247 + $0x8] sm:$0xf]
    %v2251 = vld [vmem:[%s2247 + $0xc] sm:$0xf]
    %v2252 = vpack.c.bf16 %v2243, %v2242
    %v2257 = vunpack.c.l.b16 %v2248
    %v2258 = vunpack.c.l.b16 %v2249
    %v2259 = vunpack.c.l.b16 %v2250
    %v2260 = vunpack.c.l.b16 %v2251
    %v2261 = vpack.c.b16 %v2258, %v2257
    %v2262 = vpack.c.b16 %v2260, %v2259
    %v2266 = vsel %vm176, %v2252, 0
    %2268 = vmatprep.subr.bf16.mxu0 0
    %2269 = vmatpush1.bf16.msra.mxu0 %v2261
    %2270 = vmatprep.subr.bf16.mxu0 0
    %2271 = vmatpush1.bf16.msra.mxu0 %v2262
    %2272 = vmatprep.subr.bf16.mxu0 0
    %2273 = vmatpush1.bf16.msra.mxu0 0
    %2274 = vmatprep.subr.bf16.mxu0 0
    %2275 = vmatpush1.bf16.msra.mxu0 0
    %2276 = vmatprep.subr.bf16.mxu0 0
    %2277 = vmatpush1.bf16.msra.mxu0 0
    %2278 = vmatprep.subr.bf16.mxu0 0
    %2279 = vmatpush1.bf16.msra.mxu0 0
    %2280 = vmatprep.subr.bf16.mxu0 0
    %2281 = vmatpush1.bf16.msra.mxu0 0
    %2282 = vmatprep.subr.bf16.mxu0 0
    %2283 = vmatpush1.bf16.msra.mxu0 0
    %2284 = vmatprep.subr.bf16.mxu0 0
    %2285 = vmatpush1.bf16.msra.mxu0 0
    %2286 = vmatprep.subr.bf16.mxu0 0
    %2287 = vmatpush1.bf16.msra.mxu0 0
    %2288 = vmatprep.subr.bf16.mxu0 0
    %2289 = vmatpush1.bf16.msra.mxu0 0
    %2290 = vmatprep.subr.bf16.mxu0 0
    %2291 = vmatpush1.bf16.msra.mxu0 0
    %2292 = vmatprep.subr.bf16.mxu0 0
    %2293 = vmatpush1.bf16.msra.mxu0 0
    %2294 = vmatprep.subr.bf16.mxu0 0
    %2295 = vmatpush1.bf16.msra.mxu0 0
    %2296 = vmatprep.subr.bf16.mxu0 0
    %2297 = vmatpush1.bf16.msra.mxu0 0
    %2298 = vmatprep.subr.bf16.mxu0 0
    %2299 = vmatpush1.bf16.msra.mxu0 0
    %2300 = vmatprep.mubr.bf16.mxu0 0
    %2301 = vmatmul.mubr.bf16.gmra.mrb[0].mxu0 %v2266
    %v2302 = vpop.f32.mrb[0].mxu0
    %v2303 = vadd.f32 0.0, %v2302
    %v2304 = vpop.f32.mrb[0].mxu0
    %v2305 = vpop.f32.mrb[0].mxu0
    %v2306 = vadd.f32 0.0, %v2305
    %v2307 = vpop.f32.mrb[0].mxu0
    %2308 = vdwg.mxu0
    %v2309 = vpack.c.bf16 %v2306, %v2303
    %v2311 = vunpack.c.l.b16 %v2309
    %v2312 = vunpack.c.h.b16 %v2309
    %v2313 = vpack.c.b16 %v2311, %v2311
    %v2314 = vpack.c.b16 %v2312, %v2312
    %2315 = vrot.lane.b32.xlu0 %v2313, 96
    %v2316 = vpop.permute.xlu0 %2315
    %v2318 = vsel %vm176, %v2313, 0
    %v2321 = vsel %vm176, %v2316, 0
    %2323 = vmatprep.subr.bf16.mxu0 0
    %2324 = vmatpush1.bf16.xpose.msra.mxu0 %v2321
    %2325 = vmatprep.subr.bf16.mxu0 0
    %2326 = vmatpush1.bf16.xpose.msra.mxu0 0
    %2327 = vmatprep.subr.bf16.mxu0 0
    %2328 = vmatpush1.bf16.xpose.msra.mxu0 0
    %2329 = vmatprep.subr.bf16.mxu0 0
    %2330 = vmatpush1.bf16.xpose.msra.mxu0 0
    %2331 = vmatprep.subr.bf16.mxu0 0
    %2332 = vmatpush1.bf16.xpose.msra.mxu0 0
    %2333 = vmatprep.subr.bf16.mxu0 0
    %2334 = vmatpush1.bf16.xpose.msra.mxu0 0
    %2335 = vmatprep.subr.bf16.mxu0 0
    %2336 = vmatpush1.bf16.xpose.msra.mxu0 0
    %2337 = vmatprep.subr.bf16.mxu0 0
    %2338 = vmatpush1.bf16.xpose.msra.mxu0 0
    %2339 = vmatprep.subr.bf16.mxu0 0
    %2340 = vmatpush1.bf16.xpose.msra.mxu0 0
    %2341 = vmatprep.subr.bf16.mxu0 0
    %2342 = vmatpush1.bf16.xpose.msra.mxu0 0
    %2343 = vmatprep.subr.bf16.mxu0 0
    %2344 = vmatpush1.bf16.xpose.msra.mxu0 0
    %2345 = vmatprep.subr.bf16.mxu0 0
    %2346 = vmatpush1.bf16.xpose.msra.mxu0 0
    %2347 = vmatprep.subr.bf16.mxu0 0
    %2348 = vmatpush1.bf16.xpose.msra.mxu0 0
    %2349 = vmatprep.subr.bf16.mxu0 0
    %2350 = vmatpush1.bf16.xpose.msra.mxu0 0
    %2351 = vmatprep.subr.bf16.mxu0 0
    %2352 = vmatpush1.bf16.xpose.msra.mxu0 0
    %2353 = vmatprep.subr.bf16.mxu0 0
    %2354 = vmatpush1.bf16.xpose.msra.mxu0 0
    %2355 = vmatprep.mubr.bf16.mxu0 0
    %2356 = vmatmul.mubr.bf16.gmra.mrb[0].mxu0 %v2318
    %v2357 = vpop.f32.mrb[0].mxu0
    %v2358 = vadd.f32 0.0, %v2357
    %v2359 = vpop.f32.mrb[0].mxu0
    %v2360 = vpop.f32.mrb[0].mxu0
    %v2361 = vpop.f32.mrb[0].mxu0
    %2362 = vdwg.mxu0
    %2363 = vrot.lane.b32.xlu0 %v2314, 96
    %v2364 = vpop.permute.xlu0 %2363
    %v2366 = vsel %vm176, %v2314, 0
    %v2369 = vsel %vm176, %v2364, 0
    %2371 = vmatprep.subr.bf16.mxu0 0
    %2372 = vmatpush1.bf16.xpose.msra.mxu0 %v2369
    %2373 = vmatprep.subr.bf16.mxu0 0
    %2374 = vmatpush1.bf16.xpose.msra.mxu0 0
    %2375 = vmatprep.subr.bf16.mxu0 0
    %2376 = vmatpush1.bf16.xpose.msra.mxu0 0
    %2377 = vmatprep.subr.bf16.mxu0 0
    %2378 = vmatpush1.bf16.xpose.msra.mxu0 0
    %2379 = vmatprep.subr.bf16.mxu0 0
    %2380 = vmatpush1.bf16.xpose.msra.mxu0 0
    %2381 = vmatprep.subr.bf16.mxu0 0
    %2382 = vmatpush1.bf16.xpose.msra.mxu0 0
    %2383 = vmatprep.subr.bf16.mxu0 0
    %2384 = vmatpush1.bf16.xpose.msra.mxu0 0
    %2385 = vmatprep.subr.bf16.mxu0 0
    %2386 = vmatpush1.bf16.xpose.msra.mxu0 0
    %2387 = vmatprep.subr.bf16.mxu0 0
    %2388 = vmatpush1.bf16.xpose.msra.mxu0 0
    %2389 = vmatprep.subr.bf16.mxu0 0
    %2390 = vmatpush1.bf16.xpose.msra.mxu0 0
    %2391 = vmatprep.subr.bf16.mxu0 0
    %2392 = vmatpush1.bf16.xpose.msra.mxu0 0
    %2393 = vmatprep.subr.bf16.mxu0 0
    %2394 = vmatpush1.bf16.xpose.msra.mxu0 0
    %2395 = vmatprep.subr.bf16.mxu0 0
    %2396 = vmatpush1.bf16.xpose.msra.mxu0 0
    %2397 = vmatprep.subr.bf16.mxu0 0
    %2398 = vmatpush1.bf16.xpose.msra.mxu0 0
    %2399 = vmatprep.subr.bf16.mxu0 0
    %2400 = vmatpush1.bf16.xpose.msra.mxu0 0
    %2401 = vmatprep.subr.bf16.mxu0 0
    %2402 = vmatpush1.bf16.xpose.msra.mxu0 0
    %2403 = vmatprep.mubr.bf16.mxu0 0
    %2404 = vmatmul.mubr.bf16.gmra.mrb[0].mxu0 %v2366
    %v2405 = vpop.f32.mrb[0].mxu0
    %v2406 = vadd.f32 0.0, %v2405
    %v2407 = vpop.f32.mrb[0].mxu0
    %v2408 = vpop.f32.mrb[0].mxu0
    %v2409 = vpop.f32.mrb[0].mxu0
    %2410 = vdwg.mxu0
    %v2411 = vmul.f32 %v2358, 0.17677669
    %v2412 = vmul.f32 %v2406, 0.17677669
    %v2413 = vadd.f32 %v2411, %v135
    %v2414 = vadd.f32 %v2412, %v135
    %v2415 = vsel %vm460, %v2413, -inf
    %2416 = vmax.xlane.f32.xlu0 %v2415
    %v2417 = vpop.xlane.xlu0 %2416
    %v2418 = vsel %vm460, %v2414, -inf
    %2419 = vmax.xlane.f32.xlu0 %v2418
    %v2420 = vpop.xlane.xlu0 %2419
    %v2421 = vsub.f32 %v2413, %v2417
    %v2422 = vsub.f32 %v2414, %v2420
    %v2423 = vmul.f32 %v2421, 1.442695
    %v2424 = vpow.pop %v2423
    %v2425 = vmul.f32 %v2422, 1.442695
    %v2426 = vpow.pop %v2425
    %v2427 = vsel %vm460, %v2424, 0.0
    %2428 = vadd.xlane.f32.xlu0 %v2427
    %v2429 = vpop.xlane.xlu0 %2428
    %v2430 = vsel %vm460, %v2426, 0.0
    %2431 = vadd.xlane.f32.xlu0 %v2430
    %v2432 = vpop.xlane.xlu0 %2431
    %v2433 = vrcp.pop %v2429
    %v2434 = vrcp.pop %v2432
    %v2435 = vmul.f32 %v2424, %v2433
    %v2436 = vmul.f32 %v2426, %v2434
    %v2437 = vpack.c.bf16 %v2435, %v2435
    %v2438 = vpack.c.bf16 %v2436, %v2436
    %2439 = vrot.lane.b32.xlu0 %v2313, 64
    %v2440 = vpop.permute.xlu0 %2439
    %v2442 = vsel %vm460, %v2437, 0
    %v2445 = vsel %vm490, %v2440, 0
    %2447 = vmatprep.subr.bf16.mxu0 0
    %2448 = vmatpush1.bf16.msra.mxu0 %v2445
    %2449 = vmatprep.subr.bf16.mxu0 0
    %2450 = vmatpush1.bf16.msra.mxu0 0
    %2451 = vmatprep.subr.bf16.mxu0 0
    %2452 = vmatpush1.bf16.msra.mxu0 0
    %2453 = vmatprep.subr.bf16.mxu0 0
    %2454 = vmatpush1.bf16.msra.mxu0 0
    %2455 = vmatprep.subr.bf16.mxu0 0
    %2456 = vmatpush1.bf16.msra.mxu0 0
    %2457 = vmatprep.subr.bf16.mxu0 0
    %2458 = vmatpush1.bf16.msra.mxu0 0
    %2459 = vmatprep.subr.bf16.mxu0 0
    %2460 = vmatpush1.bf16.msra.mxu0 0
    %2461 = vmatprep.subr.bf16.mxu0 0
    %2462 = vmatpush1.bf16.msra.mxu0 0
    %2463 = vmatprep.subr.bf16.mxu0 0
    %2464 = vmatpush1.bf16.msra.mxu0 0
    %2465 = vmatprep.subr.bf16.mxu0 0
    %2466 = vmatpush1.bf16.msra.mxu0 0
    %2467 = vmatprep.subr.bf16.mxu0 0
    %2468 = vmatpush1.bf16.msra.mxu0 0
    %2469 = vmatprep.subr.bf16.mxu0 0
    %2470 = vmatpush1.bf16.msra.mxu0 0
    %2471 = vmatprep.subr.bf16.mxu0 0
    %2472 = vmatpush1.bf16.msra.mxu0 0
    %2473 = vmatprep.subr.bf16.mxu0 0
    %2474 = vmatpush1.bf16.msra.mxu0 0
    %2475 = vmatprep.subr.bf16.mxu0 0
    %2476 = vmatpush1.bf16.msra.mxu0 0
    %2477 = vmatprep.subr.bf16.mxu0 0
    %2478 = vmatpush1.bf16.msra.mxu0 0
    %2479 = vmatprep.mubr.bf16.mxu0 0
    %2480 = vmatmul.mubr.bf16.gmra.mrb[0].mxu0 %v2442
    %v2481 = vpop.f32.mrb[0].mxu0
    %v2482 = vadd.f32 0.0, %v2481
    %v2483 = vpop.f32.mrb[0].mxu0
    %v2484 = vpop.f32.mrb[0].mxu0
    %v2485 = vpop.f32.mrb[0].mxu0
    %2486 = vdwg.mxu0
    %2487 = vrot.lane.b32.xlu0 %v2314, 64
    %v2488 = vpop.permute.xlu0 %2487
    %v2490 = vsel %vm460, %v2438, 0
    %v2493 = vsel %vm490, %v2488, 0
    %2495 = vmatprep.subr.bf16.mxu0 0
    %2496 = vmatpush1.bf16.msra.mxu0 %v2493
    %2497 = vmatprep.subr.bf16.mxu0 0
    %2498 = vmatpush1.bf16.msra.mxu0 0
    %2499 = vmatprep.subr.bf16.mxu0 0
    %2500 = vmatpush1.bf16.msra.mxu0 0
    %2501 = vmatprep.subr.bf16.mxu0 0
    %2502 = vmatpush1.bf16.msra.mxu0 0
    %2503 = vmatprep.subr.bf16.mxu0 0
    %2504 = vmatpush1.bf16.msra.mxu0 0
    %2505 = vmatprep.subr.bf16.mxu0 0
    %2506 = vmatpush1.bf16.msra.mxu0 0
    %2507 = vmatprep.subr.bf16.mxu0 0
    %2508 = vmatpush1.bf16.msra.mxu0 0
    %2509 = vmatprep.subr.bf16.mxu0 0
    %2510 = vmatpush1.bf16.msra.mxu0 0
    %2511 = vmatprep.subr.bf16.mxu0 0
    %2512 = vmatpush1.bf16.msra.mxu0 0
    %2513 = vmatprep.subr.bf16.mxu0 0
    %2514 = vmatpush1.bf16.msra.mxu0 0
    %2515 = vmatprep.subr.bf16.mxu0 0
    %2516 = vmatpush1.bf16.msra.mxu0 0
    %2517 = vmatprep.subr.bf16.mxu0 0
    %2518 = vmatpush1.bf16.msra.mxu0 0
    %2519 = vmatprep.subr.bf16.mxu0 0
    %2520 = vmatpush1.bf16.msra.mxu0 0
    %2521 = vmatprep.subr.bf16.mxu0 0
    %2522 = vmatpush1.bf16.msra.mxu0 0
    %2523 = vmatprep.subr.bf16.mxu0 0
    %2524 = vmatpush1.bf16.msra.mxu0 0
    %2525 = vmatprep.subr.bf16.mxu0 0
    %2526 = vmatpush1.bf16.msra.mxu0 0
    %2527 = vmatprep.mubr.bf16.mxu0 0
    %2528 = vmatmul.mubr.bf16.gmra.mrb[0].mxu0 %v2490
    %v2529 = vpop.f32.mrb[0].mxu0
    %v2530 = vadd.f32 0.0, %v2529
    %v2531 = vpop.f32.mrb[0].mxu0
    %v2532 = vpop.f32.mrb[0].mxu0
    %v2533 = vpop.f32.mrb[0].mxu0
    %2534 = vdwg.mxu0
    %s2535 = scalar_lea.vmem %s3, 32
    %v2536 = vld [vmem:[%s2535] sm:$0xf]
    %v2537 = vld [vmem:[%s2535 + $0x4] sm:$0xf]
    %v2538 = vld [vmem:[%s2535 + $0x8] sm:$0xf]
    %v2539 = vld [vmem:[%s2535 + $0xc] sm:$0xf]
    %v2540 = vpack.c.bf16 %v2530, %v2482
    %v2541 = vlaneseq
    %v2542 = vshrl.u32 %v2541, 7
    %v2543 = vsub.s32 0, %v2542
    %v2544 = vrot.slane %v2245, %v2543
    %v2549 = vunpack.c.l.b16 %v2536
    %v2550 = vunpack.c.l.b16 %v2537
    %v2551 = vunpack.c.l.b16 %v2538
    %v2552 = vunpack.c.l.b16 %v2539
    %v2553 = vpack.c.b16 %v2550, %v2549
    %v2554 = vpack.c.b16 %v2552, %v2551
    %v2558 = vsel %vm176, %v2540, 0
    %2560 = vmatprep.subr.bf16.mxu0 0
    %2561 = vmatpush1.bf16.msra.mxu0 %v2553
    %2562 = vmatprep.subr.bf16.mxu0 0
    %2563 = vmatpush1.bf16.msra.mxu0 %v2554
    %2564 = vmatprep.subr.bf16.mxu0 0
    %2565 = vmatpush1.bf16.msra.mxu0 0
    %2566 = vmatprep.subr.bf16.mxu0 0
    %2567 = vmatpush1.bf16.msra.mxu0 0
    %2568 = vmatprep.subr.bf16.mxu0 0
    %2569 = vmatpush1.bf16.msra.mxu0 0
    %2570 = vmatprep.subr.bf16.mxu0 0
    %2571 = vmatpush1.bf16.msra.mxu0 0
    %2572 = vmatprep.subr.bf16.mxu0 0
    %2573 = vmatpush1.bf16.msra.mxu0 0
    %2574 = vmatprep.subr.bf16.mxu0 0
    %2575 = vmatpush1.bf16.msra.mxu0 0
    %2576 = vmatprep.subr.bf16.mxu0 0
    %2577 = vmatpush1.bf16.msra.mxu0 0
    %2578 = vmatprep.subr.bf16.mxu0 0
    %2579 = vmatpush1.bf16.msra.mxu0 0
    %2580 = vmatprep.subr.bf16.mxu0 0
    %2581 = vmatpush1.bf16.msra.mxu0 0
    %2582 = vmatprep.subr.bf16.mxu0 0
    %2583 = vmatpush1.bf16.msra.mxu0 0
    %2584 = vmatprep.subr.bf16.mxu0 0
    %2585 = vmatpush1.bf16.msra.mxu0 0
    %2586 = vmatprep.subr.bf16.mxu0 0
    %2587 = vmatpush1.bf16.msra.mxu0 0
    %2588 = vmatprep.subr.bf16.mxu0 0
    %2589 = vmatpush1.bf16.msra.mxu0 0
    %2590 = vmatprep.subr.bf16.mxu0 0
    %2591 = vmatpush1.bf16.msra.mxu0 0
    %2592 = vmatprep.mubr.bf16.mxu0 0
    %2593 = vmatmul.mubr.bf16.gmra.mrb[0].mxu0 %v2558
    %v2594 = vpop.f32.mrb[0].mxu0
    %v2595 = vadd.f32 %v2544, %v2594
    %v2596 = vpop.f32.mrb[0].mxu0
    %v2597 = vpop.f32.mrb[0].mxu0
    %v2598 = vadd.f32 %v2544, %v2597
    %v2599 = vpop.f32.mrb[0].mxu0
    %2600 = vdwg.mxu0
    %v2601 = vadd.f32 %v2242, %v2595
    %v2602 = vadd.f32 %v2243, %v2598
    %v2603 = vsel %vm176, %v2601, 0.0
    %2604 = vadd.xlane.f32.xlu0 %v2603
    %v2605 = vpop.xlane.xlu0 %2604
    %v2606 = vsel %vm176, %v2602, 0.0
    %2607 = vadd.xlane.f32.xlu0 %v2606
    %v2608 = vpop.xlane.xlu0 %2607
    %v2609 = vmul.f32 %v2605, %v655
    %v2610 = vmul.f32 %v2608, %v655
    %v2611 = vsub.f32 %v2601, %v2609
    %v2612 = vsub.f32 %v2602, %v2610
    %v2613 = vmul.f32 %v2611, %v2611
    %v2614 = vmul.f32 %v2612, %v2612
    %v2615 = vsel %vm176, %v2613, 0.0
    %2616 = vadd.xlane.f32.xlu0 %v2615
    %v2617 = vpop.xlane.xlu0 %2616
    %v2618 = vsel %vm176, %v2614, 0.0
    %2619 = vadd.xlane.f32.xlu0 %v2618
    %v2620 = vpop.xlane.xlu0 %2619
    %v2621 = vmul.f32 %v2617, %v655
    %v2622 = vmul.f32 %v2620, %v655
    %v2623 = vadd.f32 %v2621, 1e-05
    %v2624 = vadd.f32 %v2622, 1e-05
    %v2625 = vrsqrt.pop %v2623
    %v2626 = vrsqrt.pop %v2624
    %v2627 = vmul.f32 %v2611, %v2625
    %v2628 = vmul.f32 %v2612, %v2626
    %v2629 = vlaneseq
    %v2630 = vshrl.u32 %v2629, 7
    %v2631 = vsub.s32 3, %v2630
    %v2632 = vrot.slane %v2245, %v2631
    %v2633 = vmul.f32 %v2627, %v2632
    %v2634 = vmul.f32 %v2628, %v2632
    %v2635 = vlaneseq
    %v2636 = vshrl.u32 %v2635, 7
    %v2637 = vsub.s32 6, %v2636
    %v2638 = vrot.slane %v2245, %v2637
    %v2639 = vadd.f32 %v2633, %v2638
    %v2640 = vadd.f32 %v2634, %v2638
    %s2641 = scalar_lea.vmem %s4, 32
    %v2642 = vld [vmem:[%s2641] sm:$0xf]
    %v2643 = vld [vmem:[%s2641 + $0x4] sm:$0xf]
    %v2644 = vld [vmem:[%s2641 + $0x8] sm:$0xf]
    %v2645 = vld [vmem:[%s2641 + $0xc] sm:$0xf]
    %v2646 = vpack.c.bf16 %v2640, %v2639
    %v2651 = vunpack.c.l.b16 %v2642
    %v2652 = vunpack.c.l.b16 %v2643
    %v2653 = vunpack.c.l.b16 %v2644
    %v2654 = vunpack.c.l.b16 %v2645
    %v2655 = vpack.c.b16 %v2652, %v2651
    %v2656 = vpack.c.b16 %v2654, %v2653
    %v2660 = vsel %vm176, %v2646, 0
    %2662 = vmatprep.subr.bf16.mxu0 0
    %2663 = vmatpush1.bf16.msra.mxu0 %v2655
    %2664 = vmatprep.subr.bf16.mxu0 0
    %2665 = vmatpush1.bf16.msra.mxu0 %v2656
    %2666 = vmatprep.subr.bf16.mxu0 0
    %2667 = vmatpush1.bf16.msra.mxu0 0
    %2668 = vmatprep.subr.bf16.mxu0 0
    %2669 = vmatpush1.bf16.msra.mxu0 0
    %2670 = vmatprep.subr.bf16.mxu0 0
    %2671 = vmatpush1.bf16.msra.mxu0 0
    %2672 = vmatprep.subr.bf16.mxu0 0
    %2673 = vmatpush1.bf16.msra.mxu0 0
    %2674 = vmatprep.subr.bf16.mxu0 0
    %2675 = vmatpush1.bf16.msra.mxu0 0
    %2676 = vmatprep.subr.bf16.mxu0 0
    %2677 = vmatpush1.bf16.msra.mxu0 0
    %2678 = vmatprep.subr.bf16.mxu0 0
    %2679 = vmatpush1.bf16.msra.mxu0 0
    %2680 = vmatprep.subr.bf16.mxu0 0
    %2681 = vmatpush1.bf16.msra.mxu0 0
    %2682 = vmatprep.subr.bf16.mxu0 0
    %2683 = vmatpush1.bf16.msra.mxu0 0
    %2684 = vmatprep.subr.bf16.mxu0 0
    %2685 = vmatpush1.bf16.msra.mxu0 0
    %2686 = vmatprep.subr.bf16.mxu0 0
    %2687 = vmatpush1.bf16.msra.mxu0 0
    %2688 = vmatprep.subr.bf16.mxu0 0
    %2689 = vmatpush1.bf16.msra.mxu0 0
    %2690 = vmatprep.subr.bf16.mxu0 0
    %2691 = vmatpush1.bf16.msra.mxu0 0
    %2692 = vmatprep.subr.bf16.mxu0 0
    %2693 = vmatpush1.bf16.msra.mxu0 0
    %2694 = vmatprep.mubr.bf16.mxu0 0
    %2695 = vmatmul.mubr.bf16.gmra.mrb[0].mxu0 %v2660
    %v2696 = vpop.f32.mrb[0].mxu0
    %v2697 = vadd.f32 0.0, %v2696
    %v2698 = vpop.f32.mrb[0].mxu0
    %v2699 = vpop.f32.mrb[0].mxu0
    %v2700 = vadd.f32 0.0, %v2699
    %v2701 = vpop.f32.mrb[0].mxu0
    %2702 = vdwg.mxu0
    %v2703 = vpack.c.bf16 %v2700, %v2697
    %v2705 = vunpack.c.l.b16 %v2703
    %v2706 = vunpack.c.h.b16 %v2703
    %v2707 = vpack.c.b16 %v2705, %v2705
    %v2708 = vpack.c.b16 %v2706, %v2706
    %v2710 = vsel %vm176, %v2707, 0
    %v2713 = vsel %vm176, %v286, 0
    %2715 = vmatprep.subr.bf16.mxu0 0
    %2716 = vmatpush1.bf16.xpose.msra.mxu0 %v2713
    %2717 = vmatprep.subr.bf16.mxu0 0
    %2718 = vmatpush1.bf16.xpose.msra.mxu0 0
    %2719 = vmatprep.subr.bf16.mxu0 0
    %2720 = vmatpush1.bf16.xpose.msra.mxu0 0
    %2721 = vmatprep.subr.bf16.mxu0 0
    %2722 = vmatpush1.bf16.xpose.msra.mxu0 0
    %2723 = vmatprep.subr.bf16.mxu0 0
    %2724 = vmatpush1.bf16.xpose.msra.mxu0 0
    %2725 = vmatprep.subr.bf16.mxu0 0
    %2726 = vmatpush1.bf16.xpose.msra.mxu0 0
    %2727 = vmatprep.subr.bf16.mxu0 0
    %2728 = vmatpush1.bf16.xpose.msra.mxu0 0
    %2729 = vmatprep.subr.bf16.mxu0 0
    %2730 = vmatpush1.bf16.xpose.msra.mxu0 0
    %2731 = vmatprep.subr.bf16.mxu0 0
    %2732 = vmatpush1.bf16.xpose.msra.mxu0 0
    %2733 = vmatprep.subr.bf16.mxu0 0
    %2734 = vmatpush1.bf16.xpose.msra.mxu0 0
    %2735 = vmatprep.subr.bf16.mxu0 0
    %2736 = vmatpush1.bf16.xpose.msra.mxu0 0
    %2737 = vmatprep.subr.bf16.mxu0 0
    %2738 = vmatpush1.bf16.xpose.msra.mxu0 0
    %2739 = vmatprep.subr.bf16.mxu0 0
    %2740 = vmatpush1.bf16.xpose.msra.mxu0 0
    %2741 = vmatprep.subr.bf16.mxu0 0
    %2742 = vmatpush1.bf16.xpose.msra.mxu0 0
    %2743 = vmatprep.subr.bf16.mxu0 0
    %2744 = vmatpush1.bf16.xpose.msra.mxu0 0
    %2745 = vmatprep.subr.bf16.mxu0 0
    %2746 = vmatpush1.bf16.xpose.msra.mxu0 0
    %2747 = vmatprep.mubr.bf16.mxu0 0
    %2748 = vmatmul.mubr.bf16.gmra.mrb[0].mxu0 %v2710
    %v2749 = vpop.f32.mrb[0].mxu0
    %v2750 = vadd.f32 0.0, %v2749
    %v2751 = vpop.f32.mrb[0].mxu0
    %v2752 = vpop.f32.mrb[0].mxu0
    %v2753 = vpop.f32.mrb[0].mxu0
    %2754 = vdwg.mxu0
    %v2756 = vsel %vm176, %v2708, 0
    %v2759 = vsel %vm176, %v289, 0
    %2761 = vmatprep.subr.bf16.mxu0 0
    %2762 = vmatpush1.bf16.xpose.msra.mxu0 %v2759
    %2763 = vmatprep.subr.bf16.mxu0 0
    %2764 = vmatpush1.bf16.xpose.msra.mxu0 0
    %2765 = vmatprep.subr.bf16.mxu0 0
    %2766 = vmatpush1.bf16.xpose.msra.mxu0 0
    %2767 = vmatprep.subr.bf16.mxu0 0
    %2768 = vmatpush1.bf16.xpose.msra.mxu0 0
    %2769 = vmatprep.subr.bf16.mxu0 0
    %2770 = vmatpush1.bf16.xpose.msra.mxu0 0
    %2771 = vmatprep.subr.bf16.mxu0 0
    %2772 = vmatpush1.bf16.xpose.msra.mxu0 0
    %2773 = vmatprep.subr.bf16.mxu0 0
    %2774 = vmatpush1.bf16.xpose.msra.mxu0 0
    %2775 = vmatprep.subr.bf16.mxu0 0
    %2776 = vmatpush1.bf16.xpose.msra.mxu0 0
    %2777 = vmatprep.subr.bf16.mxu0 0
    %2778 = vmatpush1.bf16.xpose.msra.mxu0 0
    %2779 = vmatprep.subr.bf16.mxu0 0
    %2780 = vmatpush1.bf16.xpose.msra.mxu0 0
    %2781 = vmatprep.subr.bf16.mxu0 0
    %2782 = vmatpush1.bf16.xpose.msra.mxu0 0
    %2783 = vmatprep.subr.bf16.mxu0 0
    %2784 = vmatpush1.bf16.xpose.msra.mxu0 0
    %2785 = vmatprep.subr.bf16.mxu0 0
    %2786 = vmatpush1.bf16.xpose.msra.mxu0 0
    %2787 = vmatprep.subr.bf16.mxu0 0
    %2788 = vmatpush1.bf16.xpose.msra.mxu0 0
    %2789 = vmatprep.subr.bf16.mxu0 0
    %2790 = vmatpush1.bf16.xpose.msra.mxu0 0
    %2791 = vmatprep.subr.bf16.mxu0 0
    %2792 = vmatpush1.bf16.xpose.msra.mxu0 0
    %2793 = vmatprep.mubr.bf16.mxu0 0
    %2794 = vmatmul.mubr.bf16.gmra.mrb[0].mxu0 %v2756
    %v2795 = vpop.f32.mrb[0].mxu0
    %v2796 = vadd.f32 0.0, %v2795
    %v2797 = vpop.f32.mrb[0].mxu0
    %v2798 = vpop.f32.mrb[0].mxu0
    %v2799 = vpop.f32.mrb[0].mxu0
    %2800 = vdwg.mxu0
    %v2801 = vmul.f32 %v2750, 0.17677669
    %v2802 = vmul.f32 %v2796, 0.17677669
    %v2803 = vsel %vm849, %v2801, -inf
    %2804 = vmax.xlane.f32.xlu0 %v2803
    %v2805 = vpop.xlane.xlu0 %2804
    %v2806 = vsel %vm849, %v2802, -inf
    %2807 = vmax.xlane.f32.xlu0 %v2806
    %v2808 = vpop.xlane.xlu0 %2807
    %v2809 = vsub.f32 %v2801, %v2805
    %v2810 = vsub.f32 %v2802, %v2808
    %v2811 = vmul.f32 %v2809, 1.442695
    %v2812 = vpow.pop %v2811
    %v2813 = vmul.f32 %v2810, 1.442695
    %v2814 = vpow.pop %v2813
    %v2815 = vsel %vm849, %v2812, 0.0
    %2816 = vadd.xlane.f32.xlu0 %v2815
    %v2817 = vpop.xlane.xlu0 %2816
    %v2818 = vsel %vm849, %v2814, 0.0
    %2819 = vadd.xlane.f32.xlu0 %v2818
    %v2820 = vpop.xlane.xlu0 %2819
    %v2821 = vrcp.pop %v2817
    %v2822 = vrcp.pop %v2820
    %v2823 = vmul.f32 %v2812, %v2821
    %v2824 = vmul.f32 %v2814, %v2822
    %v2825 = vpack.c.bf16 %v2823, %v2823
    %v2826 = vpack.c.bf16 %v2824, %v2824
    %2828 = vrot.lane.b32.xlu0 %v286, 96
    %v2829 = vpop.permute.xlu0 %2828
    %v2832 = vsel %vm849, %v2825, 0
    %2834 = vmatprep.subr.bf16.mxu0 0
    %2835 = vmatpush1.bf16.msra.mxu0 %v2829
    %2836 = vmatprep.subr.bf16.mxu0 0
    %2837 = vmatpush1.bf16.msra.mxu0 0
    %2838 = vmatprep.subr.bf16.mxu0 0
    %2839 = vmatpush1.bf16.msra.mxu0 0
    %2840 = vmatprep.subr.bf16.mxu0 0
    %2841 = vmatpush1.bf16.msra.mxu0 0
    %2842 = vmatprep.subr.bf16.mxu0 0
    %2843 = vmatpush1.bf16.msra.mxu0 0
    %2844 = vmatprep.subr.bf16.mxu0 0
    %2845 = vmatpush1.bf16.msra.mxu0 0
    %2846 = vmatprep.subr.bf16.mxu0 0
    %2847 = vmatpush1.bf16.msra.mxu0 0
    %2848 = vmatprep.subr.bf16.mxu0 0
    %2849 = vmatpush1.bf16.msra.mxu0 0
    %2850 = vmatprep.subr.bf16.mxu0 0
    %2851 = vmatpush1.bf16.msra.mxu0 0
    %2852 = vmatprep.subr.bf16.mxu0 0
    %2853 = vmatpush1.bf16.msra.mxu0 0
    %2854 = vmatprep.subr.bf16.mxu0 0
    %2855 = vmatpush1.bf16.msra.mxu0 0
    %2856 = vmatprep.subr.bf16.mxu0 0
    %2857 = vmatpush1.bf16.msra.mxu0 0
    %2858 = vmatprep.subr.bf16.mxu0 0
    %2859 = vmatpush1.bf16.msra.mxu0 0
    %2860 = vmatprep.subr.bf16.mxu0 0
    %2861 = vmatpush1.bf16.msra.mxu0 0
    %2862 = vmatprep.subr.bf16.mxu0 0
    %2863 = vmatpush1.bf16.msra.mxu0 0
    %2864 = vmatprep.subr.bf16.mxu0 0
    %2865 = vmatpush1.bf16.msra.mxu0 0
    %2866 = vmatprep.mubr.bf16.mxu0 0
    %2867 = vmatmul.mubr.bf16.gmra.mrb[0].mxu0 %v2832
    %v2868 = vpop.f32.mrb[0].mxu0
    %v2869 = vadd.f32 0.0, %v2868
    %v2870 = vpop.f32.mrb[0].mxu0
    %v2871 = vpop.f32.mrb[0].mxu0
    %v2872 = vpop.f32.mrb[0].mxu0
    %2873 = vdwg.mxu0
    %2875 = vrot.lane.b32.xlu0 %v289, 96
    %v2876 = vpop.permute.xlu0 %2875
    %v2879 = vsel %vm849, %v2826, 0
    %2881 = vmatprep.subr.bf16.mxu0 0
    %2882 = vmatpush1.bf16.msra.mxu0 %v2876
    %2883 = vmatprep.subr.bf16.mxu0 0
    %2884 = vmatpush1.bf16.msra.mxu0 0
    %2885 = vmatprep.subr.bf16.mxu0 0
    %2886 = vmatpush1.bf16.msra.mxu0 0
    %2887 = vmatprep.subr.bf16.mxu0 0
    %2888 = vmatpush1.bf16.msra.mxu0 0
    %2889 = vmatprep.subr.bf16.mxu0 0
    %2890 = vmatpush1.bf16.msra.mxu0 0
    %2891 = vmatprep.subr.bf16.mxu0 0
    %2892 = vmatpush1.bf16.msra.mxu0 0
    %2893 = vmatprep.subr.bf16.mxu0 0
    %2894 = vmatpush1.bf16.msra.mxu0 0
    %2895 = vmatprep.subr.bf16.mxu0 0
    %2896 = vmatpush1.bf16.msra.mxu0 0
    %2897 = vmatprep.subr.bf16.mxu0 0
    %2898 = vmatpush1.bf16.msra.mxu0 0
    %2899 = vmatprep.subr.bf16.mxu0 0
    %2900 = vmatpush1.bf16.msra.mxu0 0
    %2901 = vmatprep.subr.bf16.mxu0 0
    %2902 = vmatpush1.bf16.msra.mxu0 0
    %2903 = vmatprep.subr.bf16.mxu0 0
    %2904 = vmatpush1.bf16.msra.mxu0 0
    %2905 = vmatprep.subr.bf16.mxu0 0
    %2906 = vmatpush1.bf16.msra.mxu0 0
    %2907 = vmatprep.subr.bf16.mxu0 0
    %2908 = vmatpush1.bf16.msra.mxu0 0
    %2909 = vmatprep.subr.bf16.mxu0 0
    %2910 = vmatpush1.bf16.msra.mxu0 0
    %2911 = vmatprep.subr.bf16.mxu0 0
    %2912 = vmatpush1.bf16.msra.mxu0 0
    %2913 = vmatprep.mubr.bf16.mxu0 0
    %2914 = vmatmul.mubr.bf16.gmra.mrb[0].mxu0 %v2879
    %v2915 = vpop.f32.mrb[0].mxu0
    %v2916 = vadd.f32 0.0, %v2915
    %v2917 = vpop.f32.mrb[0].mxu0
    %v2918 = vpop.f32.mrb[0].mxu0
    %v2919 = vpop.f32.mrb[0].mxu0
    %2920 = vdwg.mxu0
    %s2921 = scalar_lea.vmem [#allocation7], 32
    %v2922 = vld [vmem:[%s2921] sm:$0xf]
    %v2923 = vld [vmem:[%s2921 + $0x4] sm:$0xf]
    %v2924 = vld [vmem:[%s2921 + $0x8] sm:$0xf]
    %v2925 = vld [vmem:[%s2921 + $0xc] sm:$0xf]
    %v2926 = vpack.c.bf16 %v2916, %v2869
    %v2927 = vlaneseq
    %v2928 = vshrl.u32 %v2927, 7
    %v2929 = vsub.s32 1, %v2928
    %v2930 = vrot.slane %v2245, %v2929
    %v2935 = vunpack.c.l.b16 %v2922
    %v2936 = vunpack.c.l.b16 %v2923
    %v2937 = vunpack.c.l.b16 %v2924
    %v2938 = vunpack.c.l.b16 %v2925
    %v2939 = vpack.c.b16 %v2936, %v2935
    %v2940 = vpack.c.b16 %v2938, %v2937
    %v2944 = vsel %vm176, %v2926, 0
    %2946 = vmatprep.subr.bf16.mxu0 0
    %2947 = vmatpush1.bf16.msra.mxu0 %v2939
    %2948 = vmatprep.subr.bf16.mxu0 0
    %2949 = vmatpush1.bf16.msra.mxu0 %v2940
    %2950 = vmatprep.subr.bf16.mxu0 0
    %2951 = vmatpush1.bf16.msra.mxu0 0
    %2952 = vmatprep.subr.bf16.mxu0 0
    %2953 = vmatpush1.bf16.msra.mxu0 0
    %2954 = vmatprep.subr.bf16.mxu0 0
    %2955 = vmatpush1.bf16.msra.mxu0 0
    %2956 = vmatprep.subr.bf16.mxu0 0
    %2957 = vmatpush1.bf16.msra.mxu0 0
    %2958 = vmatprep.subr.bf16.mxu0 0
    %2959 = vmatpush1.bf16.msra.mxu0 0
    %2960 = vmatprep.subr.bf16.mxu0 0
    %2961 = vmatpush1.bf16.msra.mxu0 0
    %2962 = vmatprep.subr.bf16.mxu0 0
    %2963 = vmatpush1.bf16.msra.mxu0 0
    %2964 = vmatprep.subr.bf16.mxu0 0
    %2965 = vmatpush1.bf16.msra.mxu0 0
    %2966 = vmatprep.subr.bf16.mxu0 0
    %2967 = vmatpush1.bf16.msra.mxu0 0
    %2968 = vmatprep.subr.bf16.mxu0 0
    %2969 = vmatpush1.bf16.msra.mxu0 0
    %2970 = vmatprep.subr.bf16.mxu0 0
    %2971 = vmatpush1.bf16.msra.mxu0 0
    %2972 = vmatprep.subr.bf16.mxu0 0
    %2973 = vmatpush1.bf16.msra.mxu0 0
    %2974 = vmatprep.subr.bf16.mxu0 0
    %2975 = vmatpush1.bf16.msra.mxu0 0
    %2976 = vmatprep.subr.bf16.mxu0 0
    %2977 = vmatpush1.bf16.msra.mxu0 0
    %2978 = vmatprep.mubr.bf16.mxu0 0
    %2979 = vmatmul.mubr.bf16.gmra.mrb[0].mxu0 %v2944
    %v2980 = vpop.f32.mrb[0].mxu0
    %v2981 = vadd.f32 %v2930, %v2980
    %v2982 = vpop.f32.mrb[0].mxu0
    %v2983 = vpop.f32.mrb[0].mxu0
    %v2984 = vadd.f32 %v2930, %v2983
    %v2985 = vpop.f32.mrb[0].mxu0
    %2986 = vdwg.mxu0
    %v2987 = vadd.f32 %v2639, %v2981
    %v2988 = vadd.f32 %v2640, %v2984
    %v2989 = vsel %vm176, %v2987, 0.0
    %2990 = vadd.xlane.f32.xlu0 %v2989
    %v2991 = vpop.xlane.xlu0 %2990
    %v2992 = vsel %vm176, %v2988, 0.0
    %2993 = vadd.xlane.f32.xlu0 %v2992
    %v2994 = vpop.xlane.xlu0 %2993
    %v2995 = vmul.f32 %v2991, %v655
    %v2996 = vmul.f32 %v2994, %v655
    %v2997 = vsub.f32 %v2987, %v2995
    %v2998 = vsub.f32 %v2988, %v2996
    %v2999 = vmul.f32 %v2997, %v2997
    %v3000 = vmul.f32 %v2998, %v2998
    %v3001 = vsel %vm176, %v2999, 0.0
    %3002 = vadd.xlane.f32.xlu0 %v3001
    %v3003 = vpop.xlane.xlu0 %3002
    %v3004 = vsel %vm176, %v3000, 0.0
    %3005 = vadd.xlane.f32.xlu0 %v3004
    %v3006 = vpop.xlane.xlu0 %3005
    %v3007 = vmul.f32 %v3003, %v655
    %v3008 = vmul.f32 %v3006, %v655
    %v3009 = vadd.f32 %v3007, 1e-05
    %v3010 = vadd.f32 %v3008, 1e-05
    %v3011 = vrsqrt.pop %v3009
    %v3012 = vrsqrt.pop %v3010
    %v3013 = vmul.f32 %v2997, %v3011
    %v3014 = vmul.f32 %v2998, %v3012
    %v3015 = vlaneseq
    %v3016 = vshrl.u32 %v3015, 7
    %v3017 = vsub.s32 4, %v3016
    %v3018 = vrot.slane %v2245, %v3017
    %v3019 = vmul.f32 %v3013, %v3018
    %v3020 = vmul.f32 %v3014, %v3018
    %v3021 = vlaneseq
    %v3022 = vshrl.u32 %v3021, 7
    %v3023 = vsub.s32 7, %v3022
    %v3024 = vrot.slane %v2245, %v3023
    %v3025 = vadd.f32 %v3019, %v3024
    %v3026 = vadd.f32 %v3020, %v3024
    %s3027 = scalar_lea.vmem [#allocation8], 32
    %v3028 = vld [vmem:[%s3027] sm:$0xf]
    %v3029 = vld [vmem:[%s3027 + $0x4] sm:$0xf]
    %v3030 = vld [vmem:[%s3027 + $0x8] sm:$0xf]
    %v3031 = vld [vmem:[%s3027 + $0xc] sm:$0xf]
    %v3032 = vpack.c.bf16 %v3026, %v3025
    %s3033 = scalar_lea.vmem %s9, 2
    %v3034 = vld [vmem:[%s3033] sm:$0x1]
    %v3036 = vlaneseq
    %v3037 = vshrl.u32 %v3036, 7
    %v3038 = vsub.s32 0, %v3037
    %v3039 = vrot.slane %v3034, %v3038
    %v3045 = vunpack.c.l.b16 %v3028
    %v3046 = vunpack.c.l.b16 %v3029
    %v3047 = vunpack.c.l.b16 %v3030
    %v3048 = vunpack.c.l.b16 %v3031
    %v3049 = vpack.c.b16 %v3046, %v3045
    %v3050 = vpack.c.b16 %v3048, %v3047
    %v3054 = vsel %vm176, %v3032, 0
    %3056 = vmatprep.subr.bf16.mxu0 0
    %3057 = vmatpush1.bf16.msra.mxu0 %v3049
    %3058 = vmatprep.subr.bf16.mxu0 0
    %3059 = vmatpush1.bf16.msra.mxu0 %v3050
    %3060 = vmatprep.subr.bf16.mxu0 0
    %3061 = vmatpush1.bf16.msra.mxu0 0
    %3062 = vmatprep.subr.bf16.mxu0 0
    %3063 = vmatpush1.bf16.msra.mxu0 0
    %3064 = vmatprep.subr.bf16.mxu0 0
    %3065 = vmatpush1.bf16.msra.mxu0 0
    %3066 = vmatprep.subr.bf16.mxu0 0
    %3067 = vmatpush1.bf16.msra.mxu0 0
    %3068 = vmatprep.subr.bf16.mxu0 0
    %3069 = vmatpush1.bf16.msra.mxu0 0
    %3070 = vmatprep.subr.bf16.mxu0 0
    %3071 = vmatpush1.bf16.msra.mxu0 0
    %3072 = vmatprep.subr.bf16.mxu0 0
    %3073 = vmatpush1.bf16.msra.mxu0 0
    %3074 = vmatprep.subr.bf16.mxu0 0
    %3075 = vmatpush1.bf16.msra.mxu0 0
    %3076 = vmatprep.subr.bf16.mxu0 0
    %3077 = vmatpush1.bf16.msra.mxu0 0
    %3078 = vmatprep.subr.bf16.mxu0 0
    %3079 = vmatpush1.bf16.msra.mxu0 0
    %3080 = vmatprep.subr.bf16.mxu0 0
    %3081 = vmatpush1.bf16.msra.mxu0 0
    %3082 = vmatprep.subr.bf16.mxu0 0
    %3083 = vmatpush1.bf16.msra.mxu0 0
    %3084 = vmatprep.subr.bf16.mxu0 0
    %3085 = vmatpush1.bf16.msra.mxu0 0
    %3086 = vmatprep.subr.bf16.mxu0 0
    %3087 = vmatpush1.bf16.msra.mxu0 0
    %3088 = vmatprep.mubr.bf16.mxu0 0
    %3089 = vmatmul.mubr.bf16.gmra.mrb[0].mxu0 %v3054
    %v3090 = vpop.f32.mrb[0].mxu0
    %v3091 = vadd.f32 %v3039, %v3090
    %v3092 = vpop.f32.mrb[0].mxu0
    %v3093 = vpop.f32.mrb[0].mxu0
    %v3094 = vadd.f32 %v3039, %v3093
    %v3095 = vpop.f32.mrb[0].mxu0
    %3096 = vdwg.mxu0
    %v3097 = vmax.f32 %v3091, 0.0
    %v3098 = vmax.f32 %v3094, 0.0
    %s3099 = scalar_lea.vmem %s7, 64
    %v3100 = vld [vmem:[%s3099] sm:$0xf]
    %v3101 = vld [vmem:[%s3099 + $0x4] sm:$0xf]
    %v3102 = vld [vmem:[%s3099 + $0x8] sm:$0xf]
    %v3103 = vld [vmem:[%s3099 + $0xc] sm:$0xf]
    %v3104 = vld [vmem:[%s3099 + $0x10] sm:$0xf]
    %v3105 = vld [vmem:[%s3099 + $0x14] sm:$0xf]
    %v3106 = vld [vmem:[%s3099 + $0x18] sm:$0xf]
    %v3107 = vld [vmem:[%s3099 + $0x1c] sm:$0xf]
    %v3108 = vpack.c.bf16 %v3098, %v3097
    %v3109 = vlaneseq
    %v3110 = vshrl.u32 %v3109, 7
    %v3111 = vsub.s32 2, %v3110
    %v3112 = vrot.slane %v2245, %v3111
    %v3121 = vunpack.c.l.b16 %v3100
    %v3122 = vunpack.c.l.b16 %v3101
    %v3123 = vunpack.c.l.b16 %v3102
    %v3124 = vunpack.c.l.b16 %v3103
    %v3125 = vunpack.c.l.b16 %v3104
    %v3126 = vunpack.c.l.b16 %v3105
    %v3127 = vunpack.c.l.b16 %v3106
    %v3128 = vunpack.c.l.b16 %v3107
    %v3129 = vpack.c.b16 %v3122, %v3121
    %v3130 = vpack.c.b16 %v3124, %v3123
    %v3131 = vpack.c.b16 %v3126, %v3125
    %v3132 = vpack.c.b16 %v3128, %v3127
    %v3138 = vsel %vm1180, %v3108, 0
    %3140 = vmatprep.subr.bf16.mxu0 0
    %3141 = vmatpush1.bf16.msra.mxu0 %v3129
    %3142 = vmatprep.subr.bf16.mxu0 0
    %3143 = vmatpush1.bf16.msra.mxu0 %v3130
    %3144 = vmatprep.subr.bf16.mxu0 0
    %3145 = vmatpush1.bf16.msra.mxu0 %v3131
    %3146 = vmatprep.subr.bf16.mxu0 0
    %3147 = vmatpush1.bf16.msra.mxu0 %v3132
    %3148 = vmatprep.subr.bf16.mxu0 0
    %3149 = vmatpush1.bf16.msra.mxu0 0
    %3150 = vmatprep.subr.bf16.mxu0 0
    %3151 = vmatpush1.bf16.msra.mxu0 0
    %3152 = vmatprep.subr.bf16.mxu0 0
    %3153 = vmatpush1.bf16.msra.mxu0 0
    %3154 = vmatprep.subr.bf16.mxu0 0
    %3155 = vmatpush1.bf16.msra.mxu0 0
    %3156 = vmatprep.subr.bf16.mxu0 0
    %3157 = vmatpush1.bf16.msra.mxu0 0
    %3158 = vmatprep.subr.bf16.mxu0 0
    %3159 = vmatpush1.bf16.msra.mxu0 0
    %3160 = vmatprep.subr.bf16.mxu0 0
    %3161 = vmatpush1.bf16.msra.mxu0 0
    %3162 = vmatprep.subr.bf16.mxu0 0
    %3163 = vmatpush1.bf16.msra.mxu0 0
    %3164 = vmatprep.subr.bf16.mxu0 0
    %3165 = vmatpush1.bf16.msra.mxu0 0
    %3166 = vmatprep.subr.bf16.mxu0 0
    %3167 = vmatpush1.bf16.msra.mxu0 0
    %3168 = vmatprep.subr.bf16.mxu0 0
    %3169 = vmatpush1.bf16.msra.mxu0 0
    %3170 = vmatprep.subr.bf16.mxu0 0
    %3171 = vmatpush1.bf16.msra.mxu0 0
    %3172 = vmatprep.mubr.bf16.mxu0 0
    %3173 = vmatmul.mubr.bf16.gmra.mrb[0].mxu0 %v3138
    %v3174 = vpop.f32.mrb[0].mxu0
    %v3175 = vadd.f32 %v3112, %v3174
    %v3176 = vpop.f32.mrb[0].mxu0
    %v3177 = vpop.f32.mrb[0].mxu0
    %v3178 = vadd.f32 %v3112, %v3177
    %v3179 = vpop.f32.mrb[0].mxu0
    %3180 = vdwg.mxu0
    %v3181 = vadd.f32 %v3025, %v3175
    %v3182 = vadd.f32 %v3026, %v3178
    %v3183 = vsel %vm176, %v3181, 0.0
    %3184 = vadd.xlane.f32.xlu0 %v3183
    %v3185 = vpop.xlane.xlu0 %3184
    %v3186 = vsel %vm176, %v3182, 0.0
    %3187 = vadd.xlane.f32.xlu0 %v3186
    %v3188 = vpop.xlane.xlu0 %3187
    %v3189 = vmul.f32 %v3185, %v655
    %v3190 = vmul.f32 %v3188, %v655
    %v3191 = vsub.f32 %v3181, %v3189
    %v3192 = vsub.f32 %v3182, %v3190
    %v3193 = vmul.f32 %v3191, %v3191
    %v3194 = vmul.f32 %v3192, %v3192
    %v3195 = vsel %vm176, %v3193, 0.0
    %3196 = vadd.xlane.f32.xlu0 %v3195
    %v3197 = vpop.xlane.xlu0 %3196
    %v3198 = vsel %vm176, %v3194, 0.0
    %3199 = vadd.xlane.f32.xlu0 %v3198
    %v3200 = vpop.xlane.xlu0 %3199
    %v3201 = vmul.f32 %v3197, %v655
    %v3202 = vmul.f32 %v3200, %v655
    %v3203 = vadd.f32 %v3201, 1e-05
    %v3204 = vadd.f32 %v3202, 1e-05
    %v3205 = vrsqrt.pop %v3203
    %v3206 = vrsqrt.pop %v3204
    %v3207 = vmul.f32 %v3191, %v3205
    %v3208 = vmul.f32 %v3192, %v3206
    %v3209 = vlaneseq
    %v3210 = vshrl.u32 %v3209, 7
    %v3211 = vsub.s32 5, %v3210
    %v3212 = vrot.slane %v2245, %v3211
    %v3213 = vmul.f32 %v3207, %v3212
    %v3214 = vmul.f32 %v3208, %v3212
    %v3215 = vlaneseq
    %v3216 = vshrl.u32 %v3215, 7
    %v3217 = vsub.s32 0, %v3216
    %v3218 = vrot.slane %v2246, %v3217
    %v3219 = vadd.f32 %v3213, %v3218
    %v3220 = vadd.f32 %v3214, %v3218
    %s3221 = scalar_lea.vmem [#allocation11], 48
    %v3222 = vld [vmem:[%s3221] sm:$0xff]
    %v3223 = vld [vmem:[%s3221 + $0x8] sm:$0xff]
    %s3224 = scalar_lea.vmem %s2, 48
    %v3225 = vld [vmem:[%s3224] sm:$0xf]
    %v3226 = vld [vmem:[%s3224 + $0x4] sm:$0xf]
    %v3227 = vld [vmem:[%s3224 + $0x8] sm:$0xf]
    %v3228 = vld [vmem:[%s3224 + $0xc] sm:$0xf]
    %v3229 = vpack.c.bf16 %v3220, %v3219
    %v3234 = vunpack.c.l.b16 %v3225
    %v3235 = vunpack.c.l.b16 %v3226
    %v3236 = vunpack.c.l.b16 %v3227
    %v3237 = vunpack.c.l.b16 %v3228
    %v3238 = vpack.c.b16 %v3235, %v3234
    %v3239 = vpack.c.b16 %v3237, %v3236
    %v3243 = vsel %vm176, %v3229, 0
    %3245 = vmatprep.subr.bf16.mxu0 0
    %3246 = vmatpush1.bf16.msra.mxu0 %v3238
    %3247 = vmatprep.subr.bf16.mxu0 0
    %3248 = vmatpush1.bf16.msra.mxu0 %v3239
    %3249 = vmatprep.subr.bf16.mxu0 0
    %3250 = vmatpush1.bf16.msra.mxu0 0
    %3251 = vmatprep.subr.bf16.mxu0 0
    %3252 = vmatpush1.bf16.msra.mxu0 0
    %3253 = vmatprep.subr.bf16.mxu0 0
    %3254 = vmatpush1.bf16.msra.mxu0 0
    %3255 = vmatprep.subr.bf16.mxu0 0
    %3256 = vmatpush1.bf16.msra.mxu0 0
    %3257 = vmatprep.subr.bf16.mxu0 0
    %3258 = vmatpush1.bf16.msra.mxu0 0
    %3259 = vmatprep.subr.bf16.mxu0 0
    %3260 = vmatpush1.bf16.msra.mxu0 0
    %3261 = vmatprep.subr.bf16.mxu0 0
    %3262 = vmatpush1.bf16.msra.mxu0 0
    %3263 = vmatprep.subr.bf16.mxu0 0
    %3264 = vmatpush1.bf16.msra.mxu0 0
    %3265 = vmatprep.subr.bf16.mxu0 0
    %3266 = vmatpush1.bf16.msra.mxu0 0
    %3267 = vmatprep.subr.bf16.mxu0 0
    %3268 = vmatpush1.bf16.msra.mxu0 0
    %3269 = vmatprep.subr.bf16.mxu0 0
    %3270 = vmatpush1.bf16.msra.mxu0 0
    %3271 = vmatprep.subr.bf16.mxu0 0
    %3272 = vmatpush1.bf16.msra.mxu0 0
    %3273 = vmatprep.subr.bf16.mxu0 0
    %3274 = vmatpush1.bf16.msra.mxu0 0
    %3275 = vmatprep.subr.bf16.mxu0 0
    %3276 = vmatpush1.bf16.msra.mxu0 0
    %3277 = vmatprep.mubr.bf16.mxu0 0
    %3278 = vmatmul.mubr.bf16.gmra.mrb[0].mxu0 %v3243
    %v3279 = vpop.f32.mrb[0].mxu0
    %v3280 = vadd.f32 0.0, %v3279
    %v3281 = vpop.f32.mrb[0].mxu0
    %v3282 = vpop.f32.mrb[0].mxu0
    %v3283 = vadd.f32 0.0, %v3282
    %v3284 = vpop.f32.mrb[0].mxu0
    %3285 = vdwg.mxu0
    %v3286 = vpack.c.bf16 %v3283, %v3280
    %v3288 = vunpack.c.l.b16 %v3286
    %v3289 = vunpack.c.h.b16 %v3286
    %v3290 = vpack.c.b16 %v3288, %v3288
    %v3291 = vpack.c.b16 %v3289, %v3289
    %3292 = vrot.lane.b32.xlu0 %v3290, 96
    %v3293 = vpop.permute.xlu0 %3292
    %v3295 = vsel %vm176, %v3290, 0
    %v3298 = vsel %vm176, %v3293, 0
    %3300 = vmatprep.subr.bf16.mxu0 0
    %3301 = vmatpush1.bf16.xpose.msra.mxu0 %v3298
    %3302 = vmatprep.subr.bf16.mxu0 0
    %3303 = vmatpush1.bf16.xpose.msra.mxu0 0
    %3304 = vmatprep.subr.bf16.mxu0 0
    %3305 = vmatpush1.bf16.xpose.msra.mxu0 0
    %3306 = vmatprep.subr.bf16.mxu0 0
    %3307 = vmatpush1.bf16.xpose.msra.mxu0 0
    %3308 = vmatprep.subr.bf16.mxu0 0
    %3309 = vmatpush1.bf16.xpose.msra.mxu0 0
    %3310 = vmatprep.subr.bf16.mxu0 0
    %3311 = vmatpush1.bf16.xpose.msra.mxu0 0
    %3312 = vmatprep.subr.bf16.mxu0 0
    %3313 = vmatpush1.bf16.xpose.msra.mxu0 0
    %3314 = vmatprep.subr.bf16.mxu0 0
    %3315 = vmatpush1.bf16.xpose.msra.mxu0 0
    %3316 = vmatprep.subr.bf16.mxu0 0
    %3317 = vmatpush1.bf16.xpose.msra.mxu0 0
    %3318 = vmatprep.subr.bf16.mxu0 0
    %3319 = vmatpush1.bf16.xpose.msra.mxu0 0
    %3320 = vmatprep.subr.bf16.mxu0 0
    %3321 = vmatpush1.bf16.xpose.msra.mxu0 0
    %3322 = vmatprep.subr.bf16.mxu0 0
    %3323 = vmatpush1.bf16.xpose.msra.mxu0 0
    %3324 = vmatprep.subr.bf16.mxu0 0
    %3325 = vmatpush1.bf16.xpose.msra.mxu0 0
    %3326 = vmatprep.subr.bf16.mxu0 0
    %3327 = vmatpush1.bf16.xpose.msra.mxu0 0
    %3328 = vmatprep.subr.bf16.mxu0 0
    %3329 = vmatpush1.bf16.xpose.msra.mxu0 0
    %3330 = vmatprep.subr.bf16.mxu0 0
    %3331 = vmatpush1.bf16.xpose.msra.mxu0 0
    %3332 = vmatprep.mubr.bf16.mxu0 0
    %3333 = vmatmul.mubr.bf16.gmra.mrb[0].mxu0 %v3295
    %v3334 = vpop.f32.mrb[0].mxu0
    %v3335 = vadd.f32 0.0, %v3334
    %v3336 = vpop.f32.mrb[0].mxu0
    %v3337 = vpop.f32.mrb[0].mxu0
    %v3338 = vpop.f32.mrb[0].mxu0
    %3339 = vdwg.mxu0
    %3340 = vrot.lane.b32.xlu0 %v3291, 96
    %v3341 = vpop.permute.xlu0 %3340
    %v3343 = vsel %vm176, %v3291, 0
    %v3346 = vsel %vm176, %v3341, 0
    %3348 = vmatprep.subr.bf16.mxu0 0
    %3349 = vmatpush1.bf16.xpose.msra.mxu0 %v3346
    %3350 = vmatprep.subr.bf16.mxu0 0
    %3351 = vmatpush1.bf16.xpose.msra.mxu0 0
    %3352 = vmatprep.subr.bf16.mxu0 0
    %3353 = vmatpush1.bf16.xpose.msra.mxu0 0
    %3354 = vmatprep.subr.bf16.mxu0 0
    %3355 = vmatpush1.bf16.xpose.msra.mxu0 0
    %3356 = vmatprep.subr.bf16.mxu0 0
    %3357 = vmatpush1.bf16.xpose.msra.mxu0 0
    %3358 = vmatprep.subr.bf16.mxu0 0
    %3359 = vmatpush1.bf16.xpose.msra.mxu0 0
    %3360 = vmatprep.subr.bf16.mxu0 0
    %3361 = vmatpush1.bf16.xpose.msra.mxu0 0
    %3362 = vmatprep.subr.bf16.mxu0 0
    %3363 = vmatpush1.bf16.xpose.msra.mxu0 0
    %3364 = vmatprep.subr.bf16.mxu0 0
    %3365 = vmatpush1.bf16.xpose.msra.mxu0 0
    %3366 = vmatprep.subr.bf16.mxu0 0
    %3367 = vmatpush1.bf16.xpose.msra.mxu0 0
    %3368 = vmatprep.subr.bf16.mxu0 0
    %3369 = vmatpush1.bf16.xpose.msra.mxu0 0
    %3370 = vmatprep.subr.bf16.mxu0 0
    %3371 = vmatpush1.bf16.xpose.msra.mxu0 0
    %3372 = vmatprep.subr.bf16.mxu0 0
    %3373 = vmatpush1.bf16.xpose.msra.mxu0 0
    %3374 = vmatprep.subr.bf16.mxu0 0
    %3375 = vmatpush1.bf16.xpose.msra.mxu0 0
    %3376 = vmatprep.subr.bf16.mxu0 0
    %3377 = vmatpush1.bf16.xpose.msra.mxu0 0
    %3378 = vmatprep.subr.bf16.mxu0 0
    %3379 = vmatpush1.bf16.xpose.msra.mxu0 0
    %3380 = vmatprep.mubr.bf16.mxu0 0
    %3381 = vmatmul.mubr.bf16.gmra.mrb[0].mxu0 %v3343
    %v3382 = vpop.f32.mrb[0].mxu0
    %v3383 = vadd.f32 0.0, %v3382
    %v3384 = vpop.f32.mrb[0].mxu0
    %v3385 = vpop.f32.mrb[0].mxu0
    %v3386 = vpop.f32.mrb[0].mxu0
    %3387 = vdwg.mxu0
    %v3388 = vmul.f32 %v3335, 0.17677669
    %v3389 = vmul.f32 %v3383, 0.17677669
    %v3390 = vadd.f32 %v3388, %v135
    %v3391 = vadd.f32 %v3389, %v135
    %v3392 = vsel %vm460, %v3390, -inf
    %3393 = vmax.xlane.f32.xlu0 %v3392
    %v3394 = vpop.xlane.xlu0 %3393
    %v3395 = vsel %vm460, %v3391, -inf
    %3396 = vmax.xlane.f32.xlu0 %v3395
    %v3397 = vpop.xlane.xlu0 %3396
    %v3398 = vsub.f32 %v3390, %v3394
    %v3399 = vsub.f32 %v3391, %v3397
    %v3400 = vmul.f32 %v3398, 1.442695
    %v3401 = vpow.pop %v3400
    %v3402 = vmul.f32 %v3399, 1.442695
    %v3403 = vpow.pop %v3402
    %v3404 = vsel %vm460, %v3401, 0.0
    %3405 = vadd.xlane.f32.xlu0 %v3404
    %v3406 = vpop.xlane.xlu0 %3405
    %v3407 = vsel %vm460, %v3403, 0.0
    %3408 = vadd.xlane.f32.xlu0 %v3407
    %v3409 = vpop.xlane.xlu0 %3408
    %v3410 = vrcp.pop %v3406
    %v3411 = vrcp.pop %v3409
    %v3412 = vmul.f32 %v3401, %v3410
    %v3413 = vmul.f32 %v3403, %v3411
    %v3414 = vpack.c.bf16 %v3412, %v3412
    %v3415 = vpack.c.bf16 %v3413, %v3413
    %3416 = vrot.lane.b32.xlu0 %v3290, 64
    %v3417 = vpop.permute.xlu0 %3416
    %v3419 = vsel %vm460, %v3414, 0
    %v3422 = vsel %vm490, %v3417, 0
    %3424 = vmatprep.subr.bf16.mxu0 0
    %3425 = vmatpush1.bf16.msra.mxu0 %v3422
    %3426 = vmatprep.subr.bf16.mxu0 0
    %3427 = vmatpush1.bf16.msra.mxu0 0
    %3428 = vmatprep.subr.bf16.mxu0 0
    %3429 = vmatpush1.bf16.msra.mxu0 0
    %3430 = vmatprep.subr.bf16.mxu0 0
    %3431 = vmatpush1.bf16.msra.mxu0 0
    %3432 = vmatprep.subr.bf16.mxu0 0
    %3433 = vmatpush1.bf16.msra.mxu0 0
    %3434 = vmatprep.subr.bf16.mxu0 0
    %3435 = vmatpush1.bf16.msra.mxu0 0
    %3436 = vmatprep.subr.bf16.mxu0 0
    %3437 = vmatpush1.bf16.msra.mxu0 0
    %3438 = vmatprep.subr.bf16.mxu0 0
    %3439 = vmatpush1.bf16.msra.mxu0 0
    %3440 = vmatprep.subr.bf16.mxu0 0
    %3441 = vmatpush1.bf16.msra.mxu0 0
    %3442 = vmatprep.subr.bf16.mxu0 0
    %3443 = vmatpush1.bf16.msra.mxu0 0
    %3444 = vmatprep.subr.bf16.mxu0 0
    %3445 = vmatpush1.bf16.msra.mxu0 0
    %3446 = vmatprep.subr.bf16.mxu0 0
    %3447 = vmatpush1.bf16.msra.mxu0 0
    %3448 = vmatprep.subr.bf16.mxu0 0
    %3449 = vmatpush1.bf16.msra.mxu0 0
    %3450 = vmatprep.subr.bf16.mxu0 0
    %3451 = vmatpush1.bf16.msra.mxu0 0
    %3452 = vmatprep.subr.bf16.mxu0 0
    %3453 = vmatpush1.bf16.msra.mxu0 0
    %3454 = vmatprep.subr.bf16.mxu0 0
    %3455 = vmatpush1.bf16.msra.mxu0 0
    %3456 = vmatprep.mubr.bf16.mxu0 0
    %3457 = vmatmul.mubr.bf16.gmra.mrb[0].mxu0 %v3419
    %v3458 = vpop.f32.mrb[0].mxu0
    %v3459 = vadd.f32 0.0, %v3458
    %v3460 = vpop.f32.mrb[0].mxu0
    %v3461 = vpop.f32.mrb[0].mxu0
    %v3462 = vpop.f32.mrb[0].mxu0
    %3463 = vdwg.mxu0
    %3464 = vrot.lane.b32.xlu0 %v3291, 64
    %v3465 = vpop.permute.xlu0 %3464
    %v3467 = vsel %vm460, %v3415, 0
    %v3470 = vsel %vm490, %v3465, 0
    %3472 = vmatprep.subr.bf16.mxu0 0
    %3473 = vmatpush1.bf16.msra.mxu0 %v3470
    %3474 = vmatprep.subr.bf16.mxu0 0
    %3475 = vmatpush1.bf16.msra.mxu0 0
    %3476 = vmatprep.subr.bf16.mxu0 0
    %3477 = vmatpush1.bf16.msra.mxu0 0
    %3478 = vmatprep.subr.bf16.mxu0 0
    %3479 = vmatpush1.bf16.msra.mxu0 0
    %3480 = vmatprep.subr.bf16.mxu0 0
    %3481 = vmatpush1.bf16.msra.mxu0 0
    %3482 = vmatprep.subr.bf16.mxu0 0
    %3483 = vmatpush1.bf16.msra.mxu0 0
    %3484 = vmatprep.subr.bf16.mxu0 0
    %3485 = vmatpush1.bf16.msra.mxu0 0
    %3486 = vmatprep.subr.bf16.mxu0 0
    %3487 = vmatpush1.bf16.msra.mxu0 0
    %3488 = vmatprep.subr.bf16.mxu0 0
    %3489 = vmatpush1.bf16.msra.mxu0 0
    %3490 = vmatprep.subr.bf16.mxu0 0
    %3491 = vmatpush1.bf16.msra.mxu0 0
    %3492 = vmatprep.subr.bf16.mxu0 0
    %3493 = vmatpush1.bf16.msra.mxu0 0
    %3494 = vmatprep.subr.bf16.mxu0 0
    %3495 = vmatpush1.bf16.msra.mxu0 0
    %3496 = vmatprep.subr.bf16.mxu0 0
    %3497 = vmatpush1.bf16.msra.mxu0 0
    %3498 = vmatprep.subr.bf16.mxu0 0
    %3499 = vmatpush1.bf16.msra.mxu0 0
    %3500 = vmatprep.subr.bf16.mxu0 0
    %3501 = vmatpush1.bf16.msra.mxu0 0
    %3502 = vmatprep.subr.bf16.mxu0 0
    %3503 = vmatpush1.bf16.msra.mxu0 0
    %3504 = vmatprep.mubr.bf16.mxu0 0
    %3505 = vmatmul.mubr.bf16.gmra.mrb[0].mxu0 %v3467
    %v3506 = vpop.f32.mrb[0].mxu0
    %v3507 = vadd.f32 0.0, %v3506
    %v3508 = vpop.f32.mrb[0].mxu0
    %v3509 = vpop.f32.mrb[0].mxu0
    %v3510 = vpop.f32.mrb[0].mxu0
    %3511 = vdwg.mxu0
    %s3512 = scalar_lea.vmem %s3, 48
    %v3513 = vld [vmem:[%s3512] sm:$0xf]
    %v3514 = vld [vmem:[%s3512 + $0x4] sm:$0xf]
    %v3515 = vld [vmem:[%s3512 + $0x8] sm:$0xf]
    %v3516 = vld [vmem:[%s3512 + $0xc] sm:$0xf]
    %v3517 = vpack.c.bf16 %v3507, %v3459
    %v3518 = vlaneseq
    %v3519 = vshrl.u32 %v3518, 7
    %v3520 = vsub.s32 0, %v3519
    %v3521 = vrot.slane %v3222, %v3520
    %v3526 = vunpack.c.l.b16 %v3513
    %v3527 = vunpack.c.l.b16 %v3514
    %v3528 = vunpack.c.l.b16 %v3515
    %v3529 = vunpack.c.l.b16 %v3516
    %v3530 = vpack.c.b16 %v3527, %v3526
    %v3531 = vpack.c.b16 %v3529, %v3528
    %v3535 = vsel %vm176, %v3517, 0
    %3537 = vmatprep.subr.bf16.mxu0 0
    %3538 = vmatpush1.bf16.msra.mxu0 %v3530
    %3539 = vmatprep.subr.bf16.mxu0 0
    %3540 = vmatpush1.bf16.msra.mxu0 %v3531
    %3541 = vmatprep.subr.bf16.mxu0 0
    %3542 = vmatpush1.bf16.msra.mxu0 0
    %3543 = vmatprep.subr.bf16.mxu0 0
    %3544 = vmatpush1.bf16.msra.mxu0 0
    %3545 = vmatprep.subr.bf16.mxu0 0
    %3546 = vmatpush1.bf16.msra.mxu0 0
    %3547 = vmatprep.subr.bf16.mxu0 0
    %3548 = vmatpush1.bf16.msra.mxu0 0
    %3549 = vmatprep.subr.bf16.mxu0 0
    %3550 = vmatpush1.bf16.msra.mxu0 0
    %3551 = vmatprep.subr.bf16.mxu0 0
    %3552 = vmatpush1.bf16.msra.mxu0 0
    %3553 = vmatprep.subr.bf16.mxu0 0
    %3554 = vmatpush1.bf16.msra.mxu0 0
    %3555 = vmatprep.subr.bf16.mxu0 0
    %3556 = vmatpush1.bf16.msra.mxu0 0
    %3557 = vmatprep.subr.bf16.mxu0 0
    %3558 = vmatpush1.bf16.msra.mxu0 0
    %3559 = vmatprep.subr.bf16.mxu0 0
    %3560 = vmatpush1.bf16.msra.mxu0 0
    %3561 = vmatprep.subr.bf16.mxu0 0
    %3562 = vmatpush1.bf16.msra.mxu0 0
    %3563 = vmatprep.subr.bf16.mxu0 0
    %3564 = vmatpush1.bf16.msra.mxu0 0
    %3565 = vmatprep.subr.bf16.mxu0 0
    %3566 = vmatpush1.bf16.msra.mxu0 0
    %3567 = vmatprep.subr.bf16.mxu0 0
    %3568 = vmatpush1.bf16.msra.mxu0 0
    %3569 = vmatprep.mubr.bf16.mxu0 0
    %3570 = vmatmul.mubr.bf16.gmra.mrb[0].mxu0 %v3535
    %v3571 = vpop.f32.mrb[0].mxu0
    %v3572 = vadd.f32 %v3521, %v3571
    %v3573 = vpop.f32.mrb[0].mxu0
    %v3574 = vpop.f32.mrb[0].mxu0
    %v3575 = vadd.f32 %v3521, %v3574
    %v3576 = vpop.f32.mrb[0].mxu0
    %3577 = vdwg.mxu0
    %v3578 = vadd.f32 %v3219, %v3572
    %v3579 = vadd.f32 %v3220, %v3575
    %v3580 = vsel %vm176, %v3578, 0.0
    %3581 = vadd.xlane.f32.xlu0 %v3580
    %v3582 = vpop.xlane.xlu0 %3581
    %v3583 = vsel %vm176, %v3579, 0.0
    %3584 = vadd.xlane.f32.xlu0 %v3583
    %v3585 = vpop.xlane.xlu0 %3584
    %v3586 = vmul.f32 %v3582, %v655
    %v3587 = vmul.f32 %v3585, %v655
    %v3588 = vsub.f32 %v3578, %v3586
    %v3589 = vsub.f32 %v3579, %v3587
    %v3590 = vmul.f32 %v3588, %v3588
    %v3591 = vmul.f32 %v3589, %v3589
    %v3592 = vsel %vm176, %v3590, 0.0
    %3593 = vadd.xlane.f32.xlu0 %v3592
    %v3594 = vpop.xlane.xlu0 %3593
    %v3595 = vsel %vm176, %v3591, 0.0
    %3596 = vadd.xlane.f32.xlu0 %v3595
    %v3597 = vpop.xlane.xlu0 %3596
    %v3598 = vmul.f32 %v3594, %v655
    %v3599 = vmul.f32 %v3597, %v655
    %v3600 = vadd.f32 %v3598, 1e-05
    %v3601 = vadd.f32 %v3599, 1e-05
    %v3602 = vrsqrt.pop %v3600
    %v3603 = vrsqrt.pop %v3601
    %v3604 = vmul.f32 %v3588, %v3602
    %v3605 = vmul.f32 %v3589, %v3603
    %v3606 = vlaneseq
    %v3607 = vshrl.u32 %v3606, 7
    %v3608 = vsub.s32 3, %v3607
    %v3609 = vrot.slane %v3222, %v3608
    %v3610 = vmul.f32 %v3604, %v3609
    %v3611 = vmul.f32 %v3605, %v3609
    %v3612 = vlaneseq
    %v3613 = vshrl.u32 %v3612, 7
    %v3614 = vsub.s32 6, %v3613
    %v3615 = vrot.slane %v3222, %v3614
    %v3616 = vadd.f32 %v3610, %v3615
    %v3617 = vadd.f32 %v3611, %v3615
    %s3618 = scalar_lea.vmem %s4, 48
    %v3619 = vld [vmem:[%s3618] sm:$0xf]
    %v3620 = vld [vmem:[%s3618 + $0x4] sm:$0xf]
    %v3621 = vld [vmem:[%s3618 + $0x8] sm:$0xf]
    %v3622 = vld [vmem:[%s3618 + $0xc] sm:$0xf]
    %v3623 = vpack.c.bf16 %v3617, %v3616
    %v3628 = vunpack.c.l.b16 %v3619
    %v3629 = vunpack.c.l.b16 %v3620
    %v3630 = vunpack.c.l.b16 %v3621
    %v3631 = vunpack.c.l.b16 %v3622
    %v3632 = vpack.c.b16 %v3629, %v3628
    %v3633 = vpack.c.b16 %v3631, %v3630
    %v3637 = vsel %vm176, %v3623, 0
    %3639 = vmatprep.subr.bf16.mxu0 0
    %3640 = vmatpush1.bf16.msra.mxu0 %v3632
    %3641 = vmatprep.subr.bf16.mxu0 0
    %3642 = vmatpush1.bf16.msra.mxu0 %v3633
    %3643 = vmatprep.subr.bf16.mxu0 0
    %3644 = vmatpush1.bf16.msra.mxu0 0
    %3645 = vmatprep.subr.bf16.mxu0 0
    %3646 = vmatpush1.bf16.msra.mxu0 0
    %3647 = vmatprep.subr.bf16.mxu0 0
    %3648 = vmatpush1.bf16.msra.mxu0 0
    %3649 = vmatprep.subr.bf16.mxu0 0
    %3650 = vmatpush1.bf16.msra.mxu0 0
    %3651 = vmatprep.subr.bf16.mxu0 0
    %3652 = vmatpush1.bf16.msra.mxu0 0
    %3653 = vmatprep.subr.bf16.mxu0 0
    %3654 = vmatpush1.bf16.msra.mxu0 0
    %3655 = vmatprep.subr.bf16.mxu0 0
    %3656 = vmatpush1.bf16.msra.mxu0 0
    %3657 = vmatprep.subr.bf16.mxu0 0
    %3658 = vmatpush1.bf16.msra.mxu0 0
    %3659 = vmatprep.subr.bf16.mxu0 0
    %3660 = vmatpush1.bf16.msra.mxu0 0
    %3661 = vmatprep.subr.bf16.mxu0 0
    %3662 = vmatpush1.bf16.msra.mxu0 0
    %3663 = vmatprep.subr.bf16.mxu0 0
    %3664 = vmatpush1.bf16.msra.mxu0 0
    %3665 = vmatprep.subr.bf16.mxu0 0
    %3666 = vmatpush1.bf16.msra.mxu0 0
    %3667 = vmatprep.subr.bf16.mxu0 0
    %3668 = vmatpush1.bf16.msra.mxu0 0
    %3669 = vmatprep.subr.bf16.mxu0 0
    %3670 = vmatpush1.bf16.msra.mxu0 0
    %3671 = vmatprep.mubr.bf16.mxu0 0
    %3672 = vmatmul.mubr.bf16.gmra.mrb[0].mxu0 %v3637
    %v3673 = vpop.f32.mrb[0].mxu0
    %v3674 = vadd.f32 0.0, %v3673
    %v3675 = vpop.f32.mrb[0].mxu0
    %v3676 = vpop.f32.mrb[0].mxu0
    %v3677 = vadd.f32 0.0, %v3676
    %v3678 = vpop.f32.mrb[0].mxu0
    %3679 = vdwg.mxu0
    %v3680 = vpack.c.bf16 %v3677, %v3674
    %v3682 = vunpack.c.l.b16 %v3680
    %v3683 = vunpack.c.h.b16 %v3680
    %v3684 = vpack.c.b16 %v3682, %v3682
    %v3685 = vpack.c.b16 %v3683, %v3683
    %3686 = vrot.lane.b32.xlu0 %v286, 64
    %v3687 = vpop.permute.xlu0 %3686
    %v3689 = vsel %vm176, %v3684, 0
    %v3692 = vsel %vm176, %v3687, 0
    %3694 = vmatprep.subr.bf16.mxu0 0
    %3695 = vmatpush1.bf16.xpose.msra.mxu0 %v3692
    %3696 = vmatprep.subr.bf16.mxu0 0
    %3697 = vmatpush1.bf16.xpose.msra.mxu0 0
    %3698 = vmatprep.subr.bf16.mxu0 0
    %3699 = vmatpush1.bf16.xpose.msra.mxu0 0
    %3700 = vmatprep.subr.bf16.mxu0 0
    %3701 = vmatpush1.bf16.xpose.msra.mxu0 0
    %3702 = vmatprep.subr.bf16.mxu0 0
    %3703 = vmatpush1.bf16.xpose.msra.mxu0 0
    %3704 = vmatprep.subr.bf16.mxu0 0
    %3705 = vmatpush1.bf16.xpose.msra.mxu0 0
    %3706 = vmatprep.subr.bf16.mxu0 0
    %3707 = vmatpush1.bf16.xpose.msra.mxu0 0
    %3708 = vmatprep.subr.bf16.mxu0 0
    %3709 = vmatpush1.bf16.xpose.msra.mxu0 0
    %3710 = vmatprep.subr.bf16.mxu0 0
    %3711 = vmatpush1.bf16.xpose.msra.mxu0 0
    %3712 = vmatprep.subr.bf16.mxu0 0
    %3713 = vmatpush1.bf16.xpose.msra.mxu0 0
    %3714 = vmatprep.subr.bf16.mxu0 0
    %3715 = vmatpush1.bf16.xpose.msra.mxu0 0
    %3716 = vmatprep.subr.bf16.mxu0 0
    %3717 = vmatpush1.bf16.xpose.msra.mxu0 0
    %3718 = vmatprep.subr.bf16.mxu0 0
    %3719 = vmatpush1.bf16.xpose.msra.mxu0 0
    %3720 = vmatprep.subr.bf16.mxu0 0
    %3721 = vmatpush1.bf16.xpose.msra.mxu0 0
    %3722 = vmatprep.subr.bf16.mxu0 0
    %3723 = vmatpush1.bf16.xpose.msra.mxu0 0
    %3724 = vmatprep.subr.bf16.mxu0 0
    %3725 = vmatpush1.bf16.xpose.msra.mxu0 0
    %3726 = vmatprep.mubr.bf16.mxu0 0
    %3727 = vmatmul.mubr.bf16.gmra.mrb[0].mxu0 %v3689
    %v3728 = vpop.f32.mrb[0].mxu0
    %v3729 = vadd.f32 0.0, %v3728
    %v3730 = vpop.f32.mrb[0].mxu0
    %v3731 = vpop.f32.mrb[0].mxu0
    %v3732 = vpop.f32.mrb[0].mxu0
    %3733 = vdwg.mxu0
    %3734 = vrot.lane.b32.xlu0 %v289, 64
    %v3735 = vpop.permute.xlu0 %3734
    %v3737 = vsel %vm176, %v3685, 0
    %v3740 = vsel %vm176, %v3735, 0
    %3742 = vmatprep.subr.bf16.mxu0 0
    %3743 = vmatpush1.bf16.xpose.msra.mxu0 %v3740
    %3744 = vmatprep.subr.bf16.mxu0 0
    %3745 = vmatpush1.bf16.xpose.msra.mxu0 0
    %3746 = vmatprep.subr.bf16.mxu0 0
    %3747 = vmatpush1.bf16.xpose.msra.mxu0 0
    %3748 = vmatprep.subr.bf16.mxu0 0
    %3749 = vmatpush1.bf16.xpose.msra.mxu0 0
    %3750 = vmatprep.subr.bf16.mxu0 0
    %3751 = vmatpush1.bf16.xpose.msra.mxu0 0
    %3752 = vmatprep.subr.bf16.mxu0 0
    %3753 = vmatpush1.bf16.xpose.msra.mxu0 0
    %3754 = vmatprep.subr.bf16.mxu0 0
    %3755 = vmatpush1.bf16.xpose.msra.mxu0 0
    %3756 = vmatprep.subr.bf16.mxu0 0
    %3757 = vmatpush1.bf16.xpose.msra.mxu0 0
    %3758 = vmatprep.subr.bf16.mxu0 0
    %3759 = vmatpush1.bf16.xpose.msra.mxu0 0
    %3760 = vmatprep.subr.bf16.mxu0 0
    %3761 = vmatpush1.bf16.xpose.msra.mxu0 0
    %3762 = vmatprep.subr.bf16.mxu0 0
    %3763 = vmatpush1.bf16.xpose.msra.mxu0 0
    %3764 = vmatprep.subr.bf16.mxu0 0
    %3765 = vmatpush1.bf16.xpose.msra.mxu0 0
    %3766 = vmatprep.subr.bf16.mxu0 0
    %3767 = vmatpush1.bf16.xpose.msra.mxu0 0
    %3768 = vmatprep.subr.bf16.mxu0 0
    %3769 = vmatpush1.bf16.xpose.msra.mxu0 0
    %3770 = vmatprep.subr.bf16.mxu0 0
    %3771 = vmatpush1.bf16.xpose.msra.mxu0 0
    %3772 = vmatprep.subr.bf16.mxu0 0
    %3773 = vmatpush1.bf16.xpose.msra.mxu0 0
    %3774 = vmatprep.mubr.bf16.mxu0 0
    %3775 = vmatmul.mubr.bf16.gmra.mrb[0].mxu0 %v3737
    %v3776 = vpop.f32.mrb[0].mxu0
    %v3777 = vadd.f32 0.0, %v3776
    %v3778 = vpop.f32.mrb[0].mxu0
    %v3779 = vpop.f32.mrb[0].mxu0
    %v3780 = vpop.f32.mrb[0].mxu0
    %3781 = vdwg.mxu0
    %v3782 = vmul.f32 %v3729, 0.17677669
    %v3783 = vmul.f32 %v3777, 0.17677669
    %v3784 = vsel %vm849, %v3782, -inf
    %3785 = vmax.xlane.f32.xlu0 %v3784
    %v3786 = vpop.xlane.xlu0 %3785
    %v3787 = vsel %vm849, %v3783, -inf
    %3788 = vmax.xlane.f32.xlu0 %v3787
    %v3789 = vpop.xlane.xlu0 %3788
    %v3790 = vsub.f32 %v3782, %v3786
    %v3791 = vsub.f32 %v3783, %v3789
    %v3792 = vmul.f32 %v3790, 1.442695
    %v3793 = vpow.pop %v3792
    %v3794 = vmul.f32 %v3791, 1.442695
    %v3795 = vpow.pop %v3794
    %v3796 = vsel %vm849, %v3793, 0.0
    %3797 = vadd.xlane.f32.xlu0 %v3796
    %v3798 = vpop.xlane.xlu0 %3797
    %v3799 = vsel %vm849, %v3795, 0.0
    %3800 = vadd.xlane.f32.xlu0 %v3799
    %v3801 = vpop.xlane.xlu0 %3800
    %v3802 = vrcp.pop %v3798
    %v3803 = vrcp.pop %v3801
    %v3804 = vmul.f32 %v3793, %v3802
    %v3805 = vmul.f32 %v3795, %v3803
    %v3806 = vpack.c.bf16 %v3804, %v3804
    %v3807 = vpack.c.bf16 %v3805, %v3805
    %3808 = vrot.lane.b32.xlu0 %v286, 32
    %v3809 = vpop.permute.xlu0 %3808
    %v3812 = vsel %vm849, %v3806, 0
    %3814 = vmatprep.subr.bf16.mxu0 0
    %3815 = vmatpush1.bf16.msra.mxu0 %v3809
    %3816 = vmatprep.subr.bf16.mxu0 0
    %3817 = vmatpush1.bf16.msra.mxu0 0
    %3818 = vmatprep.subr.bf16.mxu0 0
    %3819 = vmatpush1.bf16.msra.mxu0 0
    %3820 = vmatprep.subr.bf16.mxu0 0
    %3821 = vmatpush1.bf16.msra.mxu0 0
    %3822 = vmatprep.subr.bf16.mxu0 0
    %3823 = vmatpush1.bf16.msra.mxu0 0
    %3824 = vmatprep.subr.bf16.mxu0 0
    %3825 = vmatpush1.bf16.msra.mxu0 0
    %3826 = vmatprep.subr.bf16.mxu0 0
    %3827 = vmatpush1.bf16.msra.mxu0 0
    %3828 = vmatprep.subr.bf16.mxu0 0
    %3829 = vmatpush1.bf16.msra.mxu0 0
    %3830 = vmatprep.subr.bf16.mxu0 0
    %3831 = vmatpush1.bf16.msra.mxu0 0
    %3832 = vmatprep.subr.bf16.mxu0 0
    %3833 = vmatpush1.bf16.msra.mxu0 0
    %3834 = vmatprep.subr.bf16.mxu0 0
    %3835 = vmatpush1.bf16.msra.mxu0 0
    %3836 = vmatprep.subr.bf16.mxu0 0
    %3837 = vmatpush1.bf16.msra.mxu0 0
    %3838 = vmatprep.subr.bf16.mxu0 0
    %3839 = vmatpush1.bf16.msra.mxu0 0
    %3840 = vmatprep.subr.bf16.mxu0 0
    %3841 = vmatpush1.bf16.msra.mxu0 0
    %3842 = vmatprep.subr.bf16.mxu0 0
    %3843 = vmatpush1.bf16.msra.mxu0 0
    %3844 = vmatprep.subr.bf16.mxu0 0
    %3845 = vmatpush1.bf16.msra.mxu0 0
    %3846 = vmatprep.mubr.bf16.mxu0 0
    %3847 = vmatmul.mubr.bf16.gmra.mrb[0].mxu0 %v3812
    %v3848 = vpop.f32.mrb[0].mxu0
    %v3849 = vadd.f32 0.0, %v3848
    %v3850 = vpop.f32.mrb[0].mxu0
    %v3851 = vpop.f32.mrb[0].mxu0
    %v3852 = vpop.f32.mrb[0].mxu0
    %3853 = vdwg.mxu0
    %3854 = vrot.lane.b32.xlu0 %v289, 32
    %v3855 = vpop.permute.xlu0 %3854
    %v3858 = vsel %vm849, %v3807, 0
    %3860 = vmatprep.subr.bf16.mxu0 0
    %3861 = vmatpush1.bf16.msra.mxu0 %v3855
    %3862 = vmatprep.subr.bf16.mxu0 0
    %3863 = vmatpush1.bf16.msra.mxu0 0
    %3864 = vmatprep.subr.bf16.mxu0 0
    %3865 = vmatpush1.bf16.msra.mxu0 0
    %3866 = vmatprep.subr.bf16.mxu0 0
    %3867 = vmatpush1.bf16.msra.mxu0 0
    %3868 = vmatprep.subr.bf16.mxu0 0
    %3869 = vmatpush1.bf16.msra.mxu0 0
    %3870 = vmatprep.subr.bf16.mxu0 0
    %3871 = vmatpush1.bf16.msra.mxu0 0
    %3872 = vmatprep.subr.bf16.mxu0 0
    %3873 = vmatpush1.bf16.msra.mxu0 0
    %3874 = vmatprep.subr.bf16.mxu0 0
    %3875 = vmatpush1.bf16.msra.mxu0 0
    %3876 = vmatprep.subr.bf16.mxu0 0
    %3877 = vmatpush1.bf16.msra.mxu0 0
    %3878 = vmatprep.subr.bf16.mxu0 0
    %3879 = vmatpush1.bf16.msra.mxu0 0
    %3880 = vmatprep.subr.bf16.mxu0 0
    %3881 = vmatpush1.bf16.msra.mxu0 0
    %3882 = vmatprep.subr.bf16.mxu0 0
    %3883 = vmatpush1.bf16.msra.mxu0 0
    %3884 = vmatprep.subr.bf16.mxu0 0
    %3885 = vmatpush1.bf16.msra.mxu0 0
    %3886 = vmatprep.subr.bf16.mxu0 0
    %3887 = vmatpush1.bf16.msra.mxu0 0
    %3888 = vmatprep.subr.bf16.mxu0 0
    %3889 = vmatpush1.bf16.msra.mxu0 0
    %3890 = vmatprep.subr.bf16.mxu0 0
    %3891 = vmatpush1.bf16.msra.mxu0 0
    %3892 = vmatprep.mubr.bf16.mxu0 0
    %3893 = vmatmul.mubr.bf16.gmra.mrb[0].mxu0 %v3858
    %v3894 = vpop.f32.mrb[0].mxu0
    %v3895 = vadd.f32 0.0, %v3894
    %v3896 = vpop.f32.mrb[0].mxu0
    %v3897 = vpop.f32.mrb[0].mxu0
    %v3898 = vpop.f32.mrb[0].mxu0
    %3899 = vdwg.mxu0
    %s3900 = scalar_lea.vmem [#allocation7], 48
    %v3901 = vld [vmem:[%s3900] sm:$0xf]
    %v3902 = vld [vmem:[%s3900 + $0x4] sm:$0xf]
    %v3903 = vld [vmem:[%s3900 + $0x8] sm:$0xf]
    %v3904 = vld [vmem:[%s3900 + $0xc] sm:$0xf]
    %v3905 = vpack.c.bf16 %v3895, %v3849
    %v3906 = vlaneseq
    %v3907 = vshrl.u32 %v3906, 7
    %v3908 = vsub.s32 1, %v3907
    %v3909 = vrot.slane %v3222, %v3908
    %v3914 = vunpack.c.l.b16 %v3901
    %v3915 = vunpack.c.l.b16 %v3902
    %v3916 = vunpack.c.l.b16 %v3903
    %v3917 = vunpack.c.l.b16 %v3904
    %v3918 = vpack.c.b16 %v3915, %v3914
    %v3919 = vpack.c.b16 %v3917, %v3916
    %v3923 = vsel %vm176, %v3905, 0
    %3925 = vmatprep.subr.bf16.mxu0 0
    %3926 = vmatpush1.bf16.msra.mxu0 %v3918
    %3927 = vmatprep.subr.bf16.mxu0 0
    %3928 = vmatpush1.bf16.msra.mxu0 %v3919
    %3929 = vmatprep.subr.bf16.mxu0 0
    %3930 = vmatpush1.bf16.msra.mxu0 0
    %3931 = vmatprep.subr.bf16.mxu0 0
    %3932 = vmatpush1.bf16.msra.mxu0 0
    %3933 = vmatprep.subr.bf16.mxu0 0
    %3934 = vmatpush1.bf16.msra.mxu0 0
    %3935 = vmatprep.subr.bf16.mxu0 0
    %3936 = vmatpush1.bf16.msra.mxu0 0
    %3937 = vmatprep.subr.bf16.mxu0 0
    %3938 = vmatpush1.bf16.msra.mxu0 0
    %3939 = vmatprep.subr.bf16.mxu0 0
    %3940 = vmatpush1.bf16.msra.mxu0 0
    %3941 = vmatprep.subr.bf16.mxu0 0
    %3942 = vmatpush1.bf16.msra.mxu0 0
    %3943 = vmatprep.subr.bf16.mxu0 0
    %3944 = vmatpush1.bf16.msra.mxu0 0
    %3945 = vmatprep.subr.bf16.mxu0 0
    %3946 = vmatpush1.bf16.msra.mxu0 0
    %3947 = vmatprep.subr.bf16.mxu0 0
    %3948 = vmatpush1.bf16.msra.mxu0 0
    %3949 = vmatprep.subr.bf16.mxu0 0
    %3950 = vmatpush1.bf16.msra.mxu0 0
    %3951 = vmatprep.subr.bf16.mxu0 0
    %3952 = vmatpush1.bf16.msra.mxu0 0
    %3953 = vmatprep.subr.bf16.mxu0 0
    %3954 = vmatpush1.bf16.msra.mxu0 0
    %3955 = vmatprep.subr.bf16.mxu0 0
    %3956 = vmatpush1.bf16.msra.mxu0 0
    %3957 = vmatprep.mubr.bf16.mxu0 0
    %3958 = vmatmul.mubr.bf16.gmra.mrb[0].mxu0 %v3923
    %v3959 = vpop.f32.mrb[0].mxu0
    %v3960 = vadd.f32 %v3909, %v3959
    %v3961 = vpop.f32.mrb[0].mxu0
    %v3962 = vpop.f32.mrb[0].mxu0
    %v3963 = vadd.f32 %v3909, %v3962
    %v3964 = vpop.f32.mrb[0].mxu0
    %3965 = vdwg.mxu0
    %v3966 = vadd.f32 %v3616, %v3960
    %v3967 = vadd.f32 %v3617, %v3963
    %v3968 = vsel %vm176, %v3966, 0.0
    %3969 = vadd.xlane.f32.xlu0 %v3968
    %v3970 = vpop.xlane.xlu0 %3969
    %v3971 = vsel %vm176, %v3967, 0.0
    %3972 = vadd.xlane.f32.xlu0 %v3971
    %v3973 = vpop.xlane.xlu0 %3972
    %v3974 = vmul.f32 %v3970, %v655
    %v3975 = vmul.f32 %v3973, %v655
    %v3976 = vsub.f32 %v3966, %v3974
    %v3977 = vsub.f32 %v3967, %v3975
    %v3978 = vmul.f32 %v3976, %v3976
    %v3979 = vmul.f32 %v3977, %v3977
    %v3980 = vsel %vm176, %v3978, 0.0
    %3981 = vadd.xlane.f32.xlu0 %v3980
    %v3982 = vpop.xlane.xlu0 %3981
    %v3983 = vsel %vm176, %v3979, 0.0
    %3984 = vadd.xlane.f32.xlu0 %v3983
    %v3985 = vpop.xlane.xlu0 %3984
    %v3986 = vmul.f32 %v3982, %v655
    %v3987 = vmul.f32 %v3985, %v655
    %v3988 = vadd.f32 %v3986, 1e-05
    %v3989 = vadd.f32 %v3987, 1e-05
    %v3990 = vrsqrt.pop %v3988
    %v3991 = vrsqrt.pop %v3989
    %v3992 = vmul.f32 %v3976, %v3990
    %v3993 = vmul.f32 %v3977, %v3991
    %v3994 = vlaneseq
    %v3995 = vshrl.u32 %v3994, 7
    %v3996 = vsub.s32 4, %v3995
    %v3997 = vrot.slane %v3222, %v3996
    %v3998 = vmul.f32 %v3992, %v3997
    %v3999 = vmul.f32 %v3993, %v3997
    %v4000 = vlaneseq
    %v4001 = vshrl.u32 %v4000, 7
    %v4002 = vsub.s32 7, %v4001
    %v4003 = vrot.slane %v3222, %v4002
    %v4004 = vadd.f32 %v3998, %v4003
    %v4005 = vadd.f32 %v3999, %v4003
    %s4006 = scalar_lea.vmem [#allocation8], 48
    %v4007 = vld [vmem:[%s4006] sm:$0xf]
    %v4008 = vld [vmem:[%s4006 + $0x4] sm:$0xf]
    %v4009 = vld [vmem:[%s4006 + $0x8] sm:$0xf]
    %v4010 = vld [vmem:[%s4006 + $0xc] sm:$0xf]
    %v4011 = vpack.c.bf16 %v4005, %v4004
    %s4012 = scalar_lea.vmem %s9, 3
    %v4013 = vld [vmem:[%s4012] sm:$0x1]
    %v4015 = vlaneseq
    %v4016 = vshrl.u32 %v4015, 7
    %v4017 = vsub.s32 0, %v4016
    %v4018 = vrot.slane %v4013, %v4017
    %v4024 = vunpack.c.l.b16 %v4007
    %v4025 = vunpack.c.l.b16 %v4008
    %v4026 = vunpack.c.l.b16 %v4009
    %v4027 = vunpack.c.l.b16 %v4010
    %v4028 = vpack.c.b16 %v4025, %v4024
    %v4029 = vpack.c.b16 %v4027, %v4026
    %v4033 = vsel %vm176, %v4011, 0
    %4035 = vmatprep.subr.bf16.mxu0 0
    %4036 = vmatpush1.bf16.msra.mxu0 %v4028
    %4037 = vmatprep.subr.bf16.mxu0 0
    %4038 = vmatpush1.bf16.msra.mxu0 %v4029
    %4039 = vmatprep.subr.bf16.mxu0 0
    %4040 = vmatpush1.bf16.msra.mxu0 0
    %4041 = vmatprep.subr.bf16.mxu0 0
    %4042 = vmatpush1.bf16.msra.mxu0 0
    %4043 = vmatprep.subr.bf16.mxu0 0
    %4044 = vmatpush1.bf16.msra.mxu0 0
    %4045 = vmatprep.subr.bf16.mxu0 0
    %4046 = vmatpush1.bf16.msra.mxu0 0
    %4047 = vmatprep.subr.bf16.mxu0 0
    %4048 = vmatpush1.bf16.msra.mxu0 0
    %4049 = vmatprep.subr.bf16.mxu0 0
    %4050 = vmatpush1.bf16.msra.mxu0 0
    %4051 = vmatprep.subr.bf16.mxu0 0
    %4052 = vmatpush1.bf16.msra.mxu0 0
    %4053 = vmatprep.subr.bf16.mxu0 0
    %4054 = vmatpush1.bf16.msra.mxu0 0
    %4055 = vmatprep.subr.bf16.mxu0 0
    %4056 = vmatpush1.bf16.msra.mxu0 0
    %4057 = vmatprep.subr.bf16.mxu0 0
    %4058 = vmatpush1.bf16.msra.mxu0 0
    %4059 = vmatprep.subr.bf16.mxu0 0
    %4060 = vmatpush1.bf16.msra.mxu0 0
    %4061 = vmatprep.subr.bf16.mxu0 0
    %4062 = vmatpush1.bf16.msra.mxu0 0
    %4063 = vmatprep.subr.bf16.mxu0 0
    %4064 = vmatpush1.bf16.msra.mxu0 0
    %4065 = vmatprep.subr.bf16.mxu0 0
    %4066 = vmatpush1.bf16.msra.mxu0 0
    %4067 = vmatprep.mubr.bf16.mxu0 0
    %4068 = vmatmul.mubr.bf16.gmra.mrb[0].mxu0 %v4033
    %v4069 = vpop.f32.mrb[0].mxu0
    %v4070 = vadd.f32 %v4018, %v4069
    %v4071 = vpop.f32.mrb[0].mxu0
    %v4072 = vpop.f32.mrb[0].mxu0
    %v4073 = vadd.f32 %v4018, %v4072
    %v4074 = vpop.f32.mrb[0].mxu0
    %4075 = vdwg.mxu0
    %v4076 = vmax.f32 %v4070, 0.0
    %v4077 = vmax.f32 %v4073, 0.0
    %s4078 = scalar_lea.vmem %s7, 96
    %v4079 = vld [vmem:[%s4078] sm:$0xf]
    %v4080 = vld [vmem:[%s4078 + $0x4] sm:$0xf]
    %v4081 = vld [vmem:[%s4078 + $0x8] sm:$0xf]
    %v4082 = vld [vmem:[%s4078 + $0xc] sm:$0xf]
    %v4083 = vld [vmem:[%s4078 + $0x10] sm:$0xf]
    %v4084 = vld [vmem:[%s4078 + $0x14] sm:$0xf]
    %v4085 = vld [vmem:[%s4078 + $0x18] sm:$0xf]
    %v4086 = vld [vmem:[%s4078 + $0x1c] sm:$0xf]
    %v4087 = vpack.c.bf16 %v4077, %v4076
    %v4088 = vlaneseq
    %v4089 = vshrl.u32 %v4088, 7
    %v4090 = vsub.s32 2, %v4089
    %v4091 = vrot.slane %v3222, %v4090
    %v4100 = vunpack.c.l.b16 %v4079
    %v4101 = vunpack.c.l.b16 %v4080
    %v4102 = vunpack.c.l.b16 %v4081
    %v4103 = vunpack.c.l.b16 %v4082
    %v4104 = vunpack.c.l.b16 %v4083
    %v4105 = vunpack.c.l.b16 %v4084
    %v4106 = vunpack.c.l.b16 %v4085
    %v4107 = vunpack.c.l.b16 %v4086
    %v4108 = vpack.c.b16 %v4101, %v4100
    %v4109 = vpack.c.b16 %v4103, %v4102
    %v4110 = vpack.c.b16 %v4105, %v4104
    %v4111 = vpack.c.b16 %v4107, %v4106
    %v4117 = vsel %vm1180, %v4087, 0
    %4119 = vmatprep.subr.bf16.mxu0 0
    %4120 = vmatpush1.bf16.msra.mxu0 %v4108
    %4121 = vmatprep.subr.bf16.mxu0 0
    %4122 = vmatpush1.bf16.msra.mxu0 %v4109
    %4123 = vmatprep.subr.bf16.mxu0 0
    %4124 = vmatpush1.bf16.msra.mxu0 %v4110
    %4125 = vmatprep.subr.bf16.mxu0 0
    %4126 = vmatpush1.bf16.msra.mxu0 %v4111
    %4127 = vmatprep.subr.bf16.mxu0 0
    %4128 = vmatpush1.bf16.msra.mxu0 0
    %4129 = vmatprep.subr.bf16.mxu0 0
    %4130 = vmatpush1.bf16.msra.mxu0 0
    %4131 = vmatprep.subr.bf16.mxu0 0
    %4132 = vmatpush1.bf16.msra.mxu0 0
    %4133 = vmatprep.subr.bf16.mxu0 0
    %4134 = vmatpush1.bf16.msra.mxu0 0
    %4135 = vmatprep.subr.bf16.mxu0 0
    %4136 = vmatpush1.bf16.msra.mxu0 0
    %4137 = vmatprep.subr.bf16.mxu0 0
    %4138 = vmatpush1.bf16.msra.mxu0 0
    %4139 = vmatprep.subr.bf16.mxu0 0
    %4140 = vmatpush1.bf16.msra.mxu0 0
    %4141 = vmatprep.subr.bf16.mxu0 0
    %4142 = vmatpush1.bf16.msra.mxu0 0
    %4143 = vmatprep.subr.bf16.mxu0 0
    %4144 = vmatpush1.bf16.msra.mxu0 0
    %4145 = vmatprep.subr.bf16.mxu0 0
    %4146 = vmatpush1.bf16.msra.mxu0 0
    %4147 = vmatprep.subr.bf16.mxu0 0
    %4148 = vmatpush1.bf16.msra.mxu0 0
    %4149 = vmatprep.subr.bf16.mxu0 0
    %4150 = vmatpush1.bf16.msra.mxu0 0
    %4151 = vmatprep.mubr.bf16.mxu0 0
    %4152 = vmatmul.mubr.bf16.gmra.mrb[0].mxu0 %v4117
    %v4153 = vpop.f32.mrb[0].mxu0
    %v4154 = vadd.f32 %v4091, %v4153
    %v4155 = vpop.f32.mrb[0].mxu0
    %v4156 = vpop.f32.mrb[0].mxu0
    %v4157 = vadd.f32 %v4091, %v4156
    %v4158 = vpop.f32.mrb[0].mxu0
    %4159 = vdwg.mxu0
    %v4160 = vadd.f32 %v4004, %v4154
    %v4161 = vadd.f32 %v4005, %v4157
    %v4162 = vsel %vm176, %v4160, 0.0
    %4163 = vadd.xlane.f32.xlu0 %v4162
    %v4164 = vpop.xlane.xlu0 %4163
    %v4165 = vsel %vm176, %v4161, 0.0
    %4166 = vadd.xlane.f32.xlu0 %v4165
    %v4167 = vpop.xlane.xlu0 %4166
    %v4168 = vmul.f32 %v4164, %v655
    %v4169 = vmul.f32 %v4167, %v655
    %v4170 = vsub.f32 %v4160, %v4168
    %v4171 = vsub.f32 %v4161, %v4169
    %v4172 = vmul.f32 %v4170, %v4170
    %v4173 = vmul.f32 %v4171, %v4171
    %v4174 = vsel %vm176, %v4172, 0.0
    %4175 = vadd.xlane.f32.xlu0 %v4174
    %v4176 = vpop.xlane.xlu0 %4175
    %v4177 = vsel %vm176, %v4173, 0.0
    %4178 = vadd.xlane.f32.xlu0 %v4177
    %v4179 = vpop.xlane.xlu0 %4178
    %v4180 = vmul.f32 %v4176, %v655
    %v4181 = vmul.f32 %v4179, %v655
    %v4182 = vadd.f32 %v4180, 1e-05
    %v4183 = vadd.f32 %v4181, 1e-05
    %v4184 = vrsqrt.pop %v4182
    %v4185 = vrsqrt.pop %v4183
    %v4186 = vmul.f32 %v4170, %v4184
    %v4187 = vmul.f32 %v4171, %v4185
    %v4188 = vlaneseq
    %v4189 = vshrl.u32 %v4188, 7
    %v4190 = vsub.s32 5, %v4189
    %v4191 = vrot.slane %v3222, %v4190
    %v4192 = vmul.f32 %v4186, %v4191
    %v4193 = vmul.f32 %v4187, %v4191
    %v4194 = vlaneseq
    %v4195 = vshrl.u32 %v4194, 7
    %v4196 = vsub.s32 0, %v4195
    %v4197 = vrot.slane %v3223, %v4196
    %v4198 = vadd.f32 %v4192, %v4197
    %v4199 = vadd.f32 %v4193, %v4197
    %s4200 = scalar_lea.vmem [#allocation11], 64
    %v4201 = vld [vmem:[%s4200] sm:$0xff]
    %v4202 = vld [vmem:[%s4200 + $0x8] sm:$0xff]
    %s4203 = scalar_lea.vmem %s2, 64
    %v4204 = vld [vmem:[%s4203] sm:$0xf]
    %v4205 = vld [vmem:[%s4203 + $0x4] sm:$0xf]
    %v4206 = vld [vmem:[%s4203 + $0x8] sm:$0xf]
    %v4207 = vld [vmem:[%s4203 + $0xc] sm:$0xf]
    %v4208 = vpack.c.bf16 %v4199, %v4198
    %v4213 = vunpack.c.l.b16 %v4204
    %v4214 = vunpack.c.l.b16 %v4205
    %v4215 = vunpack.c.l.b16 %v4206
    %v4216 = vunpack.c.l.b16 %v4207
    %v4217 = vpack.c.b16 %v4214, %v4213
    %v4218 = vpack.c.b16 %v4216, %v4215
    %v4222 = vsel %vm176, %v4208, 0
    %4224 = vmatprep.subr.bf16.mxu0 0
    %4225 = vmatpush1.bf16.msra.mxu0 %v4217
    %4226 = vmatprep.subr.bf16.mxu0 0
    %4227 = vmatpush1.bf16.msra.mxu0 %v4218
    %4228 = vmatprep.subr.bf16.mxu0 0
    %4229 = vmatpush1.bf16.msra.mxu0 0
    %4230 = vmatprep.subr.bf16.mxu0 0
    %4231 = vmatpush1.bf16.msra.mxu0 0
    %4232 = vmatprep.subr.bf16.mxu0 0
    %4233 = vmatpush1.bf16.msra.mxu0 0
    %4234 = vmatprep.subr.bf16.mxu0 0
    %4235 = vmatpush1.bf16.msra.mxu0 0
    %4236 = vmatprep.subr.bf16.mxu0 0
    %4237 = vmatpush1.bf16.msra.mxu0 0
    %4238 = vmatprep.subr.bf16.mxu0 0
    %4239 = vmatpush1.bf16.msra.mxu0 0
    %4240 = vmatprep.subr.bf16.mxu0 0
    %4241 = vmatpush1.bf16.msra.mxu0 0
    %4242 = vmatprep.subr.bf16.mxu0 0
    %4243 = vmatpush1.bf16.msra.mxu0 0
    %4244 = vmatprep.subr.bf16.mxu0 0
    %4245 = vmatpush1.bf16.msra.mxu0 0
    %4246 = vmatprep.subr.bf16.mxu0 0
    %4247 = vmatpush1.bf16.msra.mxu0 0
    %4248 = vmatprep.subr.bf16.mxu0 0
    %4249 = vmatpush1.bf16.msra.mxu0 0
    %4250 = vmatprep.subr.bf16.mxu0 0
    %4251 = vmatpush1.bf16.msra.mxu0 0
    %4252 = vmatprep.subr.bf16.mxu0 0
    %4253 = vmatpush1.bf16.msra.mxu0 0
    %4254 = vmatprep.subr.bf16.mxu0 0
    %4255 = vmatpush1.bf16.msra.mxu0 0
    %4256 = vmatprep.mubr.bf16.mxu0 0
    %4257 = vmatmul.mubr.bf16.gmra.mrb[0].mxu0 %v4222
    %v4258 = vpop.f32.mrb[0].mxu0
    %v4259 = vadd.f32 0.0, %v4258
    %v4260 = vpop.f32.mrb[0].mxu0
    %v4261 = vpop.f32.mrb[0].mxu0
    %v4262 = vadd.f32 0.0, %v4261
    %v4263 = vpop.f32.mrb[0].mxu0
    %4264 = vdwg.mxu0
    %v4265 = vpack.c.bf16 %v4262, %v4259
    %v4267 = vunpack.c.l.b16 %v4265
    %v4268 = vunpack.c.h.b16 %v4265
    %v4269 = vpack.c.b16 %v4267, %v4267
    %v4270 = vpack.c.b16 %v4268, %v4268
    %4271 = vrot.lane.b32.xlu0 %v4269, 96
    %v4272 = vpop.permute.xlu0 %4271
    %v4274 = vsel %vm176, %v4269, 0
    %v4277 = vsel %vm176, %v4272, 0
    %4279 = vmatprep.subr.bf16.mxu0 0
    %4280 = vmatpush1.bf16.xpose.msra.mxu0 %v4277
    %4281 = vmatprep.subr.bf16.mxu0 0
    %4282 = vmatpush1.bf16.xpose.msra.mxu0 0
    %4283 = vmatprep.subr.bf16.mxu0 0
    %4284 = vmatpush1.bf16.xpose.msra.mxu0 0
    %4285 = vmatprep.subr.bf16.mxu0 0
    %4286 = vmatpush1.bf16.xpose.msra.mxu0 0
    %4287 = vmatprep.subr.bf16.mxu0 0
    %4288 = vmatpush1.bf16.xpose.msra.mxu0 0
    %4289 = vmatprep.subr.bf16.mxu0 0
    %4290 = vmatpush1.bf16.xpose.msra.mxu0 0
    %4291 = vmatprep.subr.bf16.mxu0 0
    %4292 = vmatpush1.bf16.xpose.msra.mxu0 0
    %4293 = vmatprep.subr.bf16.mxu0 0
    %4294 = vmatpush1.bf16.xpose.msra.mxu0 0
    %4295 = vmatprep.subr.bf16.mxu0 0
    %4296 = vmatpush1.bf16.xpose.msra.mxu0 0
    %4297 = vmatprep.subr.bf16.mxu0 0
    %4298 = vmatpush1.bf16.xpose.msra.mxu0 0
    %4299 = vmatprep.subr.bf16.mxu0 0
    %4300 = vmatpush1.bf16.xpose.msra.mxu0 0
    %4301 = vmatprep.subr.bf16.mxu0 0
    %4302 = vmatpush1.bf16.xpose.msra.mxu0 0
    %4303 = vmatprep.subr.bf16.mxu0 0
    %4304 = vmatpush1.bf16.xpose.msra.mxu0 0
    %4305 = vmatprep.subr.bf16.mxu0 0
    %4306 = vmatpush1.bf16.xpose.msra.mxu0 0
    %4307 = vmatprep.subr.bf16.mxu0 0
    %4308 = vmatpush1.bf16.xpose.msra.mxu0 0
    %4309 = vmatprep.subr.bf16.mxu0 0
    %4310 = vmatpush1.bf16.xpose.msra.mxu0 0
    %4311 = vmatprep.mubr.bf16.mxu0 0
    %4312 = vmatmul.mubr.bf16.gmra.mrb[0].mxu0 %v4274
    %v4313 = vpop.f32.mrb[0].mxu0
    %v4314 = vadd.f32 0.0, %v4313
    %v4315 = vpop.f32.mrb[0].mxu0
    %v4316 = vpop.f32.mrb[0].mxu0
    %v4317 = vpop.f32.mrb[0].mxu0
    %4318 = vdwg.mxu0
    %4319 = vrot.lane.b32.xlu0 %v4270, 96
    %v4320 = vpop.permute.xlu0 %4319
    %v4322 = vsel %vm176, %v4270, 0
    %v4325 = vsel %vm176, %v4320, 0
    %4327 = vmatprep.subr.bf16.mxu0 0
    %4328 = vmatpush1.bf16.xpose.msra.mxu0 %v4325
    %4329 = vmatprep.subr.bf16.mxu0 0
    %4330 = vmatpush1.bf16.xpose.msra.mxu0 0
    %4331 = vmatprep.subr.bf16.mxu0 0
    %4332 = vmatpush1.bf16.xpose.msra.mxu0 0
    %4333 = vmatprep.subr.bf16.mxu0 0
    %4334 = vmatpush1.bf16.xpose.msra.mxu0 0
    %4335 = vmatprep.subr.bf16.mxu0 0
    %4336 = vmatpush1.bf16.xpose.msra.mxu0 0
    %4337 = vmatprep.subr.bf16.mxu0 0
    %4338 = vmatpush1.bf16.xpose.msra.mxu0 0
    %4339 = vmatprep.subr.bf16.mxu0 0
    %4340 = vmatpush1.bf16.xpose.msra.mxu0 0
    %4341 = vmatprep.subr.bf16.mxu0 0
    %4342 = vmatpush1.bf16.xpose.msra.mxu0 0
    %4343 = vmatprep.subr.bf16.mxu0 0
    %4344 = vmatpush1.bf16.xpose.msra.mxu0 0
    %4345 = vmatprep.subr.bf16.mxu0 0
    %4346 = vmatpush1.bf16.xpose.msra.mxu0 0
    %4347 = vmatprep.subr.bf16.mxu0 0
    %4348 = vmatpush1.bf16.xpose.msra.mxu0 0
    %4349 = vmatprep.subr.bf16.mxu0 0
    %4350 = vmatpush1.bf16.xpose.msra.mxu0 0
    %4351 = vmatprep.subr.bf16.mxu0 0
    %4352 = vmatpush1.bf16.xpose.msra.mxu0 0
    %4353 = vmatprep.subr.bf16.mxu0 0
    %4354 = vmatpush1.bf16.xpose.msra.mxu0 0
    %4355 = vmatprep.subr.bf16.mxu0 0
    %4356 = vmatpush1.bf16.xpose.msra.mxu0 0
    %4357 = vmatprep.subr.bf16.mxu0 0
    %4358 = vmatpush1.bf16.xpose.msra.mxu0 0
    %4359 = vmatprep.mubr.bf16.mxu0 0
    %4360 = vmatmul.mubr.bf16.gmra.mrb[0].mxu0 %v4322
    %v4361 = vpop.f32.mrb[0].mxu0
    %v4362 = vadd.f32 0.0, %v4361
    %v4363 = vpop.f32.mrb[0].mxu0
    %v4364 = vpop.f32.mrb[0].mxu0
    %v4365 = vpop.f32.mrb[0].mxu0
    %4366 = vdwg.mxu0
    %v4367 = vmul.f32 %v4314, 0.17677669
    %v4368 = vmul.f32 %v4362, 0.17677669
    %v4369 = vadd.f32 %v4367, %v135
    %v4370 = vadd.f32 %v4368, %v135
    %v4371 = vsel %vm460, %v4369, -inf
    %4372 = vmax.xlane.f32.xlu0 %v4371
    %v4373 = vpop.xlane.xlu0 %4372
    %v4374 = vsel %vm460, %v4370, -inf
    %4375 = vmax.xlane.f32.xlu0 %v4374
    %v4376 = vpop.xlane.xlu0 %4375
    %v4377 = vsub.f32 %v4369, %v4373
    %v4378 = vsub.f32 %v4370, %v4376
    %v4379 = vmul.f32 %v4377, 1.442695
    %v4380 = vpow.pop %v4379
    %v4381 = vmul.f32 %v4378, 1.442695
    %v4382 = vpow.pop %v4381
    %v4383 = vsel %vm460, %v4380, 0.0
    %4384 = vadd.xlane.f32.xlu0 %v4383
    %v4385 = vpop.xlane.xlu0 %4384
    %v4386 = vsel %vm460, %v4382, 0.0
    %4387 = vadd.xlane.f32.xlu0 %v4386
    %v4388 = vpop.xlane.xlu0 %4387
    %v4389 = vrcp.pop %v4385
    %v4390 = vrcp.pop %v4388
    %v4391 = vmul.f32 %v4380, %v4389
    %v4392 = vmul.f32 %v4382, %v4390
    %v4393 = vpack.c.bf16 %v4391, %v4391
    %v4394 = vpack.c.bf16 %v4392, %v4392
    %4395 = vrot.lane.b32.xlu0 %v4269, 64
    %v4396 = vpop.permute.xlu0 %4395
    %v4398 = vsel %vm460, %v4393, 0
    %v4401 = vsel %vm490, %v4396, 0
    %4403 = vmatprep.subr.bf16.mxu0 0
    %4404 = vmatpush1.bf16.msra.mxu0 %v4401
    %4405 = vmatprep.subr.bf16.mxu0 0
    %4406 = vmatpush1.bf16.msra.mxu0 0
    %4407 = vmatprep.subr.bf16.mxu0 0
    %4408 = vmatpush1.bf16.msra.mxu0 0
    %4409 = vmatprep.subr.bf16.mxu0 0
    %4410 = vmatpush1.bf16.msra.mxu0 0
    %4411 = vmatprep.subr.bf16.mxu0 0
    %4412 = vmatpush1.bf16.msra.mxu0 0
    %4413 = vmatprep.subr.bf16.mxu0 0
    %4414 = vmatpush1.bf16.msra.mxu0 0
    %4415 = vmatprep.subr.bf16.mxu0 0
    %4416 = vmatpush1.bf16.msra.mxu0 0
    %4417 = vmatprep.subr.bf16.mxu0 0
    %4418 = vmatpush1.bf16.msra.mxu0 0
    %4419 = vmatprep.subr.bf16.mxu0 0
    %4420 = vmatpush1.bf16.msra.mxu0 0
    %4421 = vmatprep.subr.bf16.mxu0 0
    %4422 = vmatpush1.bf16.msra.mxu0 0
    %4423 = vmatprep.subr.bf16.mxu0 0
    %4424 = vmatpush1.bf16.msra.mxu0 0
    %4425 = vmatprep.subr.bf16.mxu0 0
    %4426 = vmatpush1.bf16.msra.mxu0 0
    %4427 = vmatprep.subr.bf16.mxu0 0
    %4428 = vmatpush1.bf16.msra.mxu0 0
    %4429 = vmatprep.subr.bf16.mxu0 0
    %4430 = vmatpush1.bf16.msra.mxu0 0
    %4431 = vmatprep.subr.bf16.mxu0 0
    %4432 = vmatpush1.bf16.msra.mxu0 0
    %4433 = vmatprep.subr.bf16.mxu0 0
    %4434 = vmatpush1.bf16.msra.mxu0 0
    %4435 = vmatprep.mubr.bf16.mxu0 0
    %4436 = vmatmul.mubr.bf16.gmra.mrb[0].mxu0 %v4398
    %v4437 = vpop.f32.mrb[0].mxu0
    %v4438 = vadd.f32 0.0, %v4437
    %v4439 = vpop.f32.mrb[0].mxu0
    %v4440 = vpop.f32.mrb[0].mxu0
    %v4441 = vpop.f32.mrb[0].mxu0
    %4442 = vdwg.mxu0
    %4443 = vrot.lane.b32.xlu0 %v4270, 64
    %v4444 = vpop.permute.xlu0 %4443
    %v4446 = vsel %vm460, %v4394, 0
    %v4449 = vsel %vm490, %v4444, 0
    %4451 = vmatprep.subr.bf16.mxu0 0
    %4452 = vmatpush1.bf16.msra.mxu0 %v4449
    %4453 = vmatprep.subr.bf16.mxu0 0
    %4454 = vmatpush1.bf16.msra.mxu0 0
    %4455 = vmatprep.subr.bf16.mxu0 0
    %4456 = vmatpush1.bf16.msra.mxu0 0
    %4457 = vmatprep.subr.bf16.mxu0 0
    %4458 = vmatpush1.bf16.msra.mxu0 0
    %4459 = vmatprep.subr.bf16.mxu0 0
    %4460 = vmatpush1.bf16.msra.mxu0 0
    %4461 = vmatprep.subr.bf16.mxu0 0
    %4462 = vmatpush1.bf16.msra.mxu0 0
    %4463 = vmatprep.subr.bf16.mxu0 0
    %4464 = vmatpush1.bf16.msra.mxu0 0
    %4465 = vmatprep.subr.bf16.mxu0 0
    %4466 = vmatpush1.bf16.msra.mxu0 0
    %4467 = vmatprep.subr.bf16.mxu0 0
    %4468 = vmatpush1.bf16.msra.mxu0 0
    %4469 = vmatprep.subr.bf16.mxu0 0
    %4470 = vmatpush1.bf16.msra.mxu0 0
    %4471 = vmatprep.subr.bf16.mxu0 0
    %4472 = vmatpush1.bf16.msra.mxu0 0
    %4473 = vmatprep.subr.bf16.mxu0 0
    %4474 = vmatpush1.bf16.msra.mxu0 0
    %4475 = vmatprep.subr.bf16.mxu0 0
    %4476 = vmatpush1.bf16.msra.mxu0 0
    %4477 = vmatprep.subr.bf16.mxu0 0
    %4478 = vmatpush1.bf16.msra.mxu0 0
    %4479 = vmatprep.subr.bf16.mxu0 0
    %4480 = vmatpush1.bf16.msra.mxu0 0
    %4481 = vmatprep.subr.bf16.mxu0 0
    %4482 = vmatpush1.bf16.msra.mxu0 0
    %4483 = vmatprep.mubr.bf16.mxu0 0
    %4484 = vmatmul.mubr.bf16.gmra.mrb[0].mxu0 %v4446
    %v4485 = vpop.f32.mrb[0].mxu0
    %v4486 = vadd.f32 0.0, %v4485
    %v4487 = vpop.f32.mrb[0].mxu0
    %v4488 = vpop.f32.mrb[0].mxu0
    %v4489 = vpop.f32.mrb[0].mxu0
    %4490 = vdwg.mxu0
    %s4491 = scalar_lea.vmem %s3, 64
    %v4492 = vld [vmem:[%s4491] sm:$0xf]
    %v4493 = vld [vmem:[%s4491 + $0x4] sm:$0xf]
    %v4494 = vld [vmem:[%s4491 + $0x8] sm:$0xf]
    %v4495 = vld [vmem:[%s4491 + $0xc] sm:$0xf]
    %v4496 = vpack.c.bf16 %v4486, %v4438
    %v4497 = vlaneseq
    %v4498 = vshrl.u32 %v4497, 7
    %v4499 = vsub.s32 0, %v4498
    %v4500 = vrot.slane %v4201, %v4499
    %v4505 = vunpack.c.l.b16 %v4492
    %v4506 = vunpack.c.l.b16 %v4493
    %v4507 = vunpack.c.l.b16 %v4494
    %v4508 = vunpack.c.l.b16 %v4495
    %v4509 = vpack.c.b16 %v4506, %v4505
    %v4510 = vpack.c.b16 %v4508, %v4507
    %v4514 = vsel %vm176, %v4496, 0
    %4516 = vmatprep.subr.bf16.mxu0 0
    %4517 = vmatpush1.bf16.msra.mxu0 %v4509
    %4518 = vmatprep.subr.bf16.mxu0 0
    %4519 = vmatpush1.bf16.msra.mxu0 %v4510
    %4520 = vmatprep.subr.bf16.mxu0 0
    %4521 = vmatpush1.bf16.msra.mxu0 0
    %4522 = vmatprep.subr.bf16.mxu0 0
    %4523 = vmatpush1.bf16.msra.mxu0 0
    %4524 = vmatprep.subr.bf16.mxu0 0
    %4525 = vmatpush1.bf16.msra.mxu0 0
    %4526 = vmatprep.subr.bf16.mxu0 0
    %4527 = vmatpush1.bf16.msra.mxu0 0
    %4528 = vmatprep.subr.bf16.mxu0 0
    %4529 = vmatpush1.bf16.msra.mxu0 0
    %4530 = vmatprep.subr.bf16.mxu0 0
    %4531 = vmatpush1.bf16.msra.mxu0 0
    %4532 = vmatprep.subr.bf16.mxu0 0
    %4533 = vmatpush1.bf16.msra.mxu0 0
    %4534 = vmatprep.subr.bf16.mxu0 0
    %4535 = vmatpush1.bf16.msra.mxu0 0
    %4536 = vmatprep.subr.bf16.mxu0 0
    %4537 = vmatpush1.bf16.msra.mxu0 0
    %4538 = vmatprep.subr.bf16.mxu0 0
    %4539 = vmatpush1.bf16.msra.mxu0 0
    %4540 = vmatprep.subr.bf16.mxu0 0
    %4541 = vmatpush1.bf16.msra.mxu0 0
    %4542 = vmatprep.subr.bf16.mxu0 0
    %4543 = vmatpush1.bf16.msra.mxu0 0
    %4544 = vmatprep.subr.bf16.mxu0 0
    %4545 = vmatpush1.bf16.msra.mxu0 0
    %4546 = vmatprep.subr.bf16.mxu0 0
    %4547 = vmatpush1.bf16.msra.mxu0 0
    %4548 = vmatprep.mubr.bf16.mxu0 0
    %4549 = vmatmul.mubr.bf16.gmra.mrb[0].mxu0 %v4514
    %v4550 = vpop.f32.mrb[0].mxu0
    %v4551 = vadd.f32 %v4500, %v4550
    %v4552 = vpop.f32.mrb[0].mxu0
    %v4553 = vpop.f32.mrb[0].mxu0
    %v4554 = vadd.f32 %v4500, %v4553
    %v4555 = vpop.f32.mrb[0].mxu0
    %4556 = vdwg.mxu0
    %v4557 = vadd.f32 %v4198, %v4551
    %v4558 = vadd.f32 %v4199, %v4554
    %v4559 = vsel %vm176, %v4557, 0.0
    %4560 = vadd.xlane.f32.xlu0 %v4559
    %v4561 = vpop.xlane.xlu0 %4560
    %v4562 = vsel %vm176, %v4558, 0.0
    %4563 = vadd.xlane.f32.xlu0 %v4562
    %v4564 = vpop.xlane.xlu0 %4563
    %v4565 = vmul.f32 %v4561, %v655
    %v4566 = vmul.f32 %v4564, %v655
    %v4567 = vsub.f32 %v4557, %v4565
    %v4568 = vsub.f32 %v4558, %v4566
    %v4569 = vmul.f32 %v4567, %v4567
    %v4570 = vmul.f32 %v4568, %v4568
    %v4571 = vsel %vm176, %v4569, 0.0
    %4572 = vadd.xlane.f32.xlu0 %v4571
    %v4573 = vpop.xlane.xlu0 %4572
    %v4574 = vsel %vm176, %v4570, 0.0
    %4575 = vadd.xlane.f32.xlu0 %v4574
    %v4576 = vpop.xlane.xlu0 %4575
    %v4577 = vmul.f32 %v4573, %v655
    %v4578 = vmul.f32 %v4576, %v655
    %v4579 = vadd.f32 %v4577, 1e-05
    %v4580 = vadd.f32 %v4578, 1e-05
    %v4581 = vrsqrt.pop %v4579
    %v4582 = vrsqrt.pop %v4580
    %v4583 = vmul.f32 %v4567, %v4581
    %v4584 = vmul.f32 %v4568, %v4582
    %v4585 = vlaneseq
    %v4586 = vshrl.u32 %v4585, 7
    %v4587 = vsub.s32 3, %v4586
    %v4588 = vrot.slane %v4201, %v4587
    %v4589 = vmul.f32 %v4583, %v4588
    %v4590 = vmul.f32 %v4584, %v4588
    %v4591 = vlaneseq
    %v4592 = vshrl.u32 %v4591, 7
    %v4593 = vsub.s32 6, %v4592
    %v4594 = vrot.slane %v4201, %v4593
    %v4595 = vadd.f32 %v4589, %v4594
    %v4596 = vadd.f32 %v4590, %v4594
    %s4597 = scalar_lea.vmem %s4, 64
    %v4598 = vld [vmem:[%s4597] sm:$0xf]
    %v4599 = vld [vmem:[%s4597 + $0x4] sm:$0xf]
    %v4600 = vld [vmem:[%s4597 + $0x8] sm:$0xf]
    %v4601 = vld [vmem:[%s4597 + $0xc] sm:$0xf]
    %v4602 = vpack.c.bf16 %v4596, %v4595
    %v4607 = vunpack.c.l.b16 %v4598
    %v4608 = vunpack.c.l.b16 %v4599
    %v4609 = vunpack.c.l.b16 %v4600
    %v4610 = vunpack.c.l.b16 %v4601
    %v4611 = vpack.c.b16 %v4608, %v4607
    %v4612 = vpack.c.b16 %v4610, %v4609
    %v4616 = vsel %vm176, %v4602, 0
    %4618 = vmatprep.subr.bf16.mxu0 0
    %4619 = vmatpush1.bf16.msra.mxu0 %v4611
    %4620 = vmatprep.subr.bf16.mxu0 0
    %4621 = vmatpush1.bf16.msra.mxu0 %v4612
    %4622 = vmatprep.subr.bf16.mxu0 0
    %4623 = vmatpush1.bf16.msra.mxu0 0
    %4624 = vmatprep.subr.bf16.mxu0 0
    %4625 = vmatpush1.bf16.msra.mxu0 0
    %4626 = vmatprep.subr.bf16.mxu0 0
    %4627 = vmatpush1.bf16.msra.mxu0 0
    %4628 = vmatprep.subr.bf16.mxu0 0
    %4629 = vmatpush1.bf16.msra.mxu0 0
    %4630 = vmatprep.subr.bf16.mxu0 0
    %4631 = vmatpush1.bf16.msra.mxu0 0
    %4632 = vmatprep.subr.bf16.mxu0 0
    %4633 = vmatpush1.bf16.msra.mxu0 0
    %4634 = vmatprep.subr.bf16.mxu0 0
    %4635 = vmatpush1.bf16.msra.mxu0 0
    %4636 = vmatprep.subr.bf16.mxu0 0
    %4637 = vmatpush1.bf16.msra.mxu0 0
    %4638 = vmatprep.subr.bf16.mxu0 0
    %4639 = vmatpush1.bf16.msra.mxu0 0
    %4640 = vmatprep.subr.bf16.mxu0 0
    %4641 = vmatpush1.bf16.msra.mxu0 0
    %4642 = vmatprep.subr.bf16.mxu0 0
    %4643 = vmatpush1.bf16.msra.mxu0 0
    %4644 = vmatprep.subr.bf16.mxu0 0
    %4645 = vmatpush1.bf16.msra.mxu0 0
    %4646 = vmatprep.subr.bf16.mxu0 0
    %4647 = vmatpush1.bf16.msra.mxu0 0
    %4648 = vmatprep.subr.bf16.mxu0 0
    %4649 = vmatpush1.bf16.msra.mxu0 0
    %4650 = vmatprep.mubr.bf16.mxu0 0
    %4651 = vmatmul.mubr.bf16.gmra.mrb[0].mxu0 %v4616
    %v4652 = vpop.f32.mrb[0].mxu0
    %v4653 = vadd.f32 0.0, %v4652
    %v4654 = vpop.f32.mrb[0].mxu0
    %v4655 = vpop.f32.mrb[0].mxu0
    %v4656 = vadd.f32 0.0, %v4655
    %v4657 = vpop.f32.mrb[0].mxu0
    %4658 = vdwg.mxu0
    %v4659 = vpack.c.bf16 %v4656, %v4653
    %v4661 = vunpack.c.l.b16 %v4659
    %v4662 = vunpack.c.h.b16 %v4659
    %v4663 = vpack.c.b16 %v4661, %v4661
    %v4664 = vpack.c.b16 %v4662, %v4662
    %v4666 = vsel %vm176, %v4663, 0
    %v4669 = vsel %vm176, %v287, 0
    %4671 = vmatprep.subr.bf16.mxu0 0
    %4672 = vmatpush1.bf16.xpose.msra.mxu0 %v4669
    %4673 = vmatprep.subr.bf16.mxu0 0
    %4674 = vmatpush1.bf16.xpose.msra.mxu0 0
    %4675 = vmatprep.subr.bf16.mxu0 0
    %4676 = vmatpush1.bf16.xpose.msra.mxu0 0
    %4677 = vmatprep.subr.bf16.mxu0 0
    %4678 = vmatpush1.bf16.xpose.msra.mxu0 0
    %4679 = vmatprep.subr.bf16.mxu0 0
    %4680 = vmatpush1.bf16.xpose.msra.mxu0 0
    %4681 = vmatprep.subr.bf16.mxu0 0
    %4682 = vmatpush1.bf16.xpose.msra.mxu0 0
    %4683 = vmatprep.subr.bf16.mxu0 0
    %4684 = vmatpush1.bf16.xpose.msra.mxu0 0
    %4685 = vmatprep.subr.bf16.mxu0 0
    %4686 = vmatpush1.bf16.xpose.msra.mxu0 0
    %4687 = vmatprep.subr.bf16.mxu0 0
    %4688 = vmatpush1.bf16.xpose.msra.mxu0 0
    %4689 = vmatprep.subr.bf16.mxu0 0
    %4690 = vmatpush1.bf16.xpose.msra.mxu0 0
    %4691 = vmatprep.subr.bf16.mxu0 0
    %4692 = vmatpush1.bf16.xpose.msra.mxu0 0
    %4693 = vmatprep.subr.bf16.mxu0 0
    %4694 = vmatpush1.bf16.xpose.msra.mxu0 0
    %4695 = vmatprep.subr.bf16.mxu0 0
    %4696 = vmatpush1.bf16.xpose.msra.mxu0 0
    %4697 = vmatprep.subr.bf16.mxu0 0
    %4698 = vmatpush1.bf16.xpose.msra.mxu0 0
    %4699 = vmatprep.subr.bf16.mxu0 0
    %4700 = vmatpush1.bf16.xpose.msra.mxu0 0
    %4701 = vmatprep.subr.bf16.mxu0 0
    %4702 = vmatpush1.bf16.xpose.msra.mxu0 0
    %4703 = vmatprep.mubr.bf16.mxu0 0
    %4704 = vmatmul.mubr.bf16.gmra.mrb[0].mxu0 %v4666
    %v4705 = vpop.f32.mrb[0].mxu0
    %v4706 = vadd.f32 0.0, %v4705
    %v4707 = vpop.f32.mrb[0].mxu0
    %v4708 = vpop.f32.mrb[0].mxu0
    %v4709 = vpop.f32.mrb[0].mxu0
    %4710 = vdwg.mxu0
    %v4712 = vsel %vm176, %v4664, 0
    %v4715 = vsel %vm176, %v290, 0
    %4717 = vmatprep.subr.bf16.mxu0 0
    %4718 = vmatpush1.bf16.xpose.msra.mxu0 %v4715
    %4719 = vmatprep.subr.bf16.mxu0 0
    %4720 = vmatpush1.bf16.xpose.msra.mxu0 0
    %4721 = vmatprep.subr.bf16.mxu0 0
    %4722 = vmatpush1.bf16.xpose.msra.mxu0 0
    %4723 = vmatprep.subr.bf16.mxu0 0
    %4724 = vmatpush1.bf16.xpose.msra.mxu0 0
    %4725 = vmatprep.subr.bf16.mxu0 0
    %4726 = vmatpush1.bf16.xpose.msra.mxu0 0
    %4727 = vmatprep.subr.bf16.mxu0 0
    %4728 = vmatpush1.bf16.xpose.msra.mxu0 0
    %4729 = vmatprep.subr.bf16.mxu0 0
    %4730 = vmatpush1.bf16.xpose.msra.mxu0 0
    %4731 = vmatprep.subr.bf16.mxu0 0
    %4732 = vmatpush1.bf16.xpose.msra.mxu0 0
    %4733 = vmatprep.subr.bf16.mxu0 0
    %4734 = vmatpush1.bf16.xpose.msra.mxu0 0
    %4735 = vmatprep.subr.bf16.mxu0 0
    %4736 = vmatpush1.bf16.xpose.msra.mxu0 0
    %4737 = vmatprep.subr.bf16.mxu0 0
    %4738 = vmatpush1.bf16.xpose.msra.mxu0 0
    %4739 = vmatprep.subr.bf16.mxu0 0
    %4740 = vmatpush1.bf16.xpose.msra.mxu0 0
    %4741 = vmatprep.subr.bf16.mxu0 0
    %4742 = vmatpush1.bf16.xpose.msra.mxu0 0
    %4743 = vmatprep.subr.bf16.mxu0 0
    %4744 = vmatpush1.bf16.xpose.msra.mxu0 0
    %4745 = vmatprep.subr.bf16.mxu0 0
    %4746 = vmatpush1.bf16.xpose.msra.mxu0 0
    %4747 = vmatprep.subr.bf16.mxu0 0
    %4748 = vmatpush1.bf16.xpose.msra.mxu0 0
    %4749 = vmatprep.mubr.bf16.mxu0 0
    %4750 = vmatmul.mubr.bf16.gmra.mrb[0].mxu0 %v4712
    %v4751 = vpop.f32.mrb[0].mxu0
    %v4752 = vadd.f32 0.0, %v4751
    %v4753 = vpop.f32.mrb[0].mxu0
    %v4754 = vpop.f32.mrb[0].mxu0
    %v4755 = vpop.f32.mrb[0].mxu0
    %4756 = vdwg.mxu0
    %v4757 = vmul.f32 %v4706, 0.17677669
    %v4758 = vmul.f32 %v4752, 0.17677669
    %v4759 = vsel %vm849, %v4757, -inf
    %4760 = vmax.xlane.f32.xlu0 %v4759
    %v4761 = vpop.xlane.xlu0 %4760
    %v4762 = vsel %vm849, %v4758, -inf
    %4763 = vmax.xlane.f32.xlu0 %v4762
    %v4764 = vpop.xlane.xlu0 %4763
    %v4765 = vsub.f32 %v4757, %v4761
    %v4766 = vsub.f32 %v4758, %v4764
    %v4767 = vmul.f32 %v4765, 1.442695
    %v4768 = vpow.pop %v4767
    %v4769 = vmul.f32 %v4766, 1.442695
    %v4770 = vpow.pop %v4769
    %v4771 = vsel %vm849, %v4768, 0.0
    %4772 = vadd.xlane.f32.xlu0 %v4771
    %v4773 = vpop.xlane.xlu0 %4772
    %v4774 = vsel %vm849, %v4770, 0.0
    %4775 = vadd.xlane.f32.xlu0 %v4774
    %v4776 = vpop.xlane.xlu0 %4775
    %v4777 = vrcp.pop %v4773
    %v4778 = vrcp.pop %v4776
    %v4779 = vmul.f32 %v4768, %v4777
    %v4780 = vmul.f32 %v4770, %v4778
    %v4781 = vpack.c.bf16 %v4779, %v4779
    %v4782 = vpack.c.bf16 %v4780, %v4780
    %4784 = vrot.lane.b32.xlu0 %v287, 96
    %v4785 = vpop.permute.xlu0 %4784
    %v4788 = vsel %vm849, %v4781, 0
    %4790 = vmatprep.subr.bf16.mxu0 0
    %4791 = vmatpush1.bf16.msra.mxu0 %v4785
    %4792 = vmatprep.subr.bf16.mxu0 0
    %4793 = vmatpush1.bf16.msra.mxu0 0
    %4794 = vmatprep.subr.bf16.mxu0 0
    %4795 = vmatpush1.bf16.msra.mxu0 0
    %4796 = vmatprep.subr.bf16.mxu0 0
    %4797 = vmatpush1.bf16.msra.mxu0 0
    %4798 = vmatprep.subr.bf16.mxu0 0
    %4799 = vmatpush1.bf16.msra.mxu0 0
    %4800 = vmatprep.subr.bf16.mxu0 0
    %4801 = vmatpush1.bf16.msra.mxu0 0
    %4802 = vmatprep.subr.bf16.mxu0 0
    %4803 = vmatpush1.bf16.msra.mxu0 0
    %4804 = vmatprep.subr.bf16.mxu0 0
    %4805 = vmatpush1.bf16.msra.mxu0 0
    %4806 = vmatprep.subr.bf16.mxu0 0
    %4807 = vmatpush1.bf16.msra.mxu0 0
    %4808 = vmatprep.subr.bf16.mxu0 0
    %4809 = vmatpush1.bf16.msra.mxu0 0
    %4810 = vmatprep.subr.bf16.mxu0 0
    %4811 = vmatpush1.bf16.msra.mxu0 0
    %4812 = vmatprep.subr.bf16.mxu0 0
    %4813 = vmatpush1.bf16.msra.mxu0 0
    %4814 = vmatprep.subr.bf16.mxu0 0
    %4815 = vmatpush1.bf16.msra.mxu0 0
    %4816 = vmatprep.subr.bf16.mxu0 0
    %4817 = vmatpush1.bf16.msra.mxu0 0
    %4818 = vmatprep.subr.bf16.mxu0 0
    %4819 = vmatpush1.bf16.msra.mxu0 0
    %4820 = vmatprep.subr.bf16.mxu0 0
    %4821 = vmatpush1.bf16.msra.mxu0 0
    %4822 = vmatprep.mubr.bf16.mxu0 0
    %4823 = vmatmul.mubr.bf16.gmra.mrb[0].mxu0 %v4788
    %v4824 = vpop.f32.mrb[0].mxu0
    %v4825 = vadd.f32 0.0, %v4824
    %v4826 = vpop.f32.mrb[0].mxu0
    %v4827 = vpop.f32.mrb[0].mxu0
    %v4828 = vpop.f32.mrb[0].mxu0
    %4829 = vdwg.mxu0
    %4831 = vrot.lane.b32.xlu0 %v290, 96
    %v4832 = vpop.permute.xlu0 %4831
    %v4835 = vsel %vm849, %v4782, 0
    %4837 = vmatprep.subr.bf16.mxu0 0
    %4838 = vmatpush1.bf16.msra.mxu0 %v4832
    %4839 = vmatprep.subr.bf16.mxu0 0
    %4840 = vmatpush1.bf16.msra.mxu0 0
    %4841 = vmatprep.subr.bf16.mxu0 0
    %4842 = vmatpush1.bf16.msra.mxu0 0
    %4843 = vmatprep.subr.bf16.mxu0 0
    %4844 = vmatpush1.bf16.msra.mxu0 0
    %4845 = vmatprep.subr.bf16.mxu0 0
    %4846 = vmatpush1.bf16.msra.mxu0 0
    %4847 = vmatprep.subr.bf16.mxu0 0
    %4848 = vmatpush1.bf16.msra.mxu0 0
    %4849 = vmatprep.subr.bf16.mxu0 0
    %4850 = vmatpush1.bf16.msra.mxu0 0
    %4851 = vmatprep.subr.bf16.mxu0 0
    %4852 = vmatpush1.bf16.msra.mxu0 0
    %4853 = vmatprep.subr.bf16.mxu0 0
    %4854 = vmatpush1.bf16.msra.mxu0 0
    %4855 = vmatprep.subr.bf16.mxu0 0
    %4856 = vmatpush1.bf16.msra.mxu0 0
    %4857 = vmatprep.subr.bf16.mxu0 0
    %4858 = vmatpush1.bf16.msra.mxu0 0
    %4859 = vmatprep.subr.bf16.mxu0 0
    %4860 = vmatpush1.bf16.msra.mxu0 0
    %4861 = vmatprep.subr.bf16.mxu0 0
    %4862 = vmatpush1.bf16.msra.mxu0 0
    %4863 = vmatprep.subr.bf16.mxu0 0
    %4864 = vmatpush1.bf16.msra.mxu0 0
    %4865 = vmatprep.subr.bf16.mxu0 0
    %4866 = vmatpush1.bf16.msra.mxu0 0
    %4867 = vmatprep.subr.bf16.mxu0 0
    %4868 = vmatpush1.bf16.msra.mxu0 0
    %4869 = vmatprep.mubr.bf16.mxu0 0
    %4870 = vmatmul.mubr.bf16.gmra.mrb[0].mxu0 %v4835
    %v4871 = vpop.f32.mrb[0].mxu0
    %v4872 = vadd.f32 0.0, %v4871
    %v4873 = vpop.f32.mrb[0].mxu0
    %v4874 = vpop.f32.mrb[0].mxu0
    %v4875 = vpop.f32.mrb[0].mxu0
    %4876 = vdwg.mxu0
    %s4877 = scalar_lea.vmem [#allocation7], 64
    %v4878 = vld [vmem:[%s4877] sm:$0xf]
    %v4879 = vld [vmem:[%s4877 + $0x4] sm:$0xf]
    %v4880 = vld [vmem:[%s4877 + $0x8] sm:$0xf]
    %v4881 = vld [vmem:[%s4877 + $0xc] sm:$0xf]
    %v4882 = vpack.c.bf16 %v4872, %v4825
    %v4883 = vlaneseq
    %v4884 = vshrl.u32 %v4883, 7
    %v4885 = vsub.s32 1, %v4884
    %v4886 = vrot.slane %v4201, %v4885
    %v4891 = vunpack.c.l.b16 %v4878
    %v4892 = vunpack.c.l.b16 %v4879
    %v4893 = vunpack.c.l.b16 %v4880
    %v4894 = vunpack.c.l.b16 %v4881
    %v4895 = vpack.c.b16 %v4892, %v4891
    %v4896 = vpack.c.b16 %v4894, %v4893
    %v4900 = vsel %vm176, %v4882, 0
    %4902 = vmatprep.subr.bf16.mxu0 0
    %4903 = vmatpush1.bf16.msra.mxu0 %v4895
    %4904 = vmatprep.subr.bf16.mxu0 0
    %4905 = vmatpush1.bf16.msra.mxu0 %v4896
    %4906 = vmatprep.subr.bf16.mxu0 0
    %4907 = vmatpush1.bf16.msra.mxu0 0
    %4908 = vmatprep.subr.bf16.mxu0 0
    %4909 = vmatpush1.bf16.msra.mxu0 0
    %4910 = vmatprep.subr.bf16.mxu0 0
    %4911 = vmatpush1.bf16.msra.mxu0 0
    %4912 = vmatprep.subr.bf16.mxu0 0
    %4913 = vmatpush1.bf16.msra.mxu0 0
    %4914 = vmatprep.subr.bf16.mxu0 0
    %4915 = vmatpush1.bf16.msra.mxu0 0
    %4916 = vmatprep.subr.bf16.mxu0 0
    %4917 = vmatpush1.bf16.msra.mxu0 0
    %4918 = vmatprep.subr.bf16.mxu0 0
    %4919 = vmatpush1.bf16.msra.mxu0 0
    %4920 = vmatprep.subr.bf16.mxu0 0
    %4921 = vmatpush1.bf16.msra.mxu0 0
    %4922 = vmatprep.subr.bf16.mxu0 0
    %4923 = vmatpush1.bf16.msra.mxu0 0
    %4924 = vmatprep.subr.bf16.mxu0 0
    %4925 = vmatpush1.bf16.msra.mxu0 0
    %4926 = vmatprep.subr.bf16.mxu0 0
    %4927 = vmatpush1.bf16.msra.mxu0 0
    %4928 = vmatprep.subr.bf16.mxu0 0
    %4929 = vmatpush1.bf16.msra.mxu0 0
    %4930 = vmatprep.subr.bf16.mxu0 0
    %4931 = vmatpush1.bf16.msra.mxu0 0
    %4932 = vmatprep.subr.bf16.mxu0 0
    %4933 = vmatpush1.bf16.msra.mxu0 0
    %4934 = vmatprep.mubr.bf16.mxu0 0
    %4935 = vmatmul.mubr.bf16.gmra.mrb[0].mxu0 %v4900
    %v4936 = vpop.f32.mrb[0].mxu0
    %v4937 = vadd.f32 %v4886, %v4936
    %v4938 = vpop.f32.mrb[0].mxu0
    %v4939 = vpop.f32.mrb[0].mxu0
    %v4940 = vadd.f32 %v4886, %v4939
    %v4941 = vpop.f32.mrb[0].mxu0
    %4942 = vdwg.mxu0
    %v4943 = vadd.f32 %v4595, %v4937
    %v4944 = vadd.f32 %v4596, %v4940
    %v4945 = vsel %vm176, %v4943, 0.0
    %4946 = vadd.xlane.f32.xlu0 %v4945
    %v4947 = vpop.xlane.xlu0 %4946
    %v4948 = vsel %vm176, %v4944, 0.0
    %4949 = vadd.xlane.f32.xlu0 %v4948
    %v4950 = vpop.xlane.xlu0 %4949
    %v4951 = vmul.f32 %v4947, %v655
    %v4952 = vmul.f32 %v4950, %v655
    %v4953 = vsub.f32 %v4943, %v4951
    %v4954 = vsub.f32 %v4944, %v4952
    %v4955 = vmul.f32 %v4953, %v4953
    %v4956 = vmul.f32 %v4954, %v4954
    %v4957 = vsel %vm176, %v4955, 0.0
    %4958 = vadd.xlane.f32.xlu0 %v4957
    %v4959 = vpop.xlane.xlu0 %4958
    %v4960 = vsel %vm176, %v4956, 0.0
    %4961 = vadd.xlane.f32.xlu0 %v4960
    %v4962 = vpop.xlane.xlu0 %4961
    %v4963 = vmul.f32 %v4959, %v655
    %v4964 = vmul.f32 %v4962, %v655
    %v4965 = vadd.f32 %v4963, 1e-05
    %v4966 = vadd.f32 %v4964, 1e-05
    %v4967 = vrsqrt.pop %v4965
    %v4968 = vrsqrt.pop %v4966
    %v4969 = vmul.f32 %v4953, %v4967
    %v4970 = vmul.f32 %v4954, %v4968
    %v4971 = vlaneseq
    %v4972 = vshrl.u32 %v4971, 7
    %v4973 = vsub.s32 4, %v4972
    %v4974 = vrot.slane %v4201, %v4973
    %v4975 = vmul.f32 %v4969, %v4974
    %v4976 = vmul.f32 %v4970, %v4974
    %v4977 = vlaneseq
    %v4978 = vshrl.u32 %v4977, 7
    %v4979 = vsub.s32 7, %v4978
    %v4980 = vrot.slane %v4201, %v4979
    %v4981 = vadd.f32 %v4975, %v4980
    %v4982 = vadd.f32 %v4976, %v4980
    %s4983 = scalar_lea.vmem [#allocation8], 64
    %v4984 = vld [vmem:[%s4983] sm:$0xf]
    %v4985 = vld [vmem:[%s4983 + $0x4] sm:$0xf]
    %v4986 = vld [vmem:[%s4983 + $0x8] sm:$0xf]
    %v4987 = vld [vmem:[%s4983 + $0xc] sm:$0xf]
    %v4988 = vpack.c.bf16 %v4982, %v4981
    %s4989 = scalar_lea.vmem %s9, 4
    %v4990 = vld [vmem:[%s4989] sm:$0x1]
    %v4992 = vlaneseq
    %v4993 = vshrl.u32 %v4992, 7
    %v4994 = vsub.s32 0, %v4993
    %v4995 = vrot.slane %v4990, %v4994
    %v5001 = vunpack.c.l.b16 %v4984
    %v5002 = vunpack.c.l.b16 %v4985
    %v5003 = vunpack.c.l.b16 %v4986
    %v5004 = vunpack.c.l.b16 %v4987
    %v5005 = vpack.c.b16 %v5002, %v5001
    %v5006 = vpack.c.b16 %v5004, %v5003
    %v5010 = vsel %vm176, %v4988, 0
    %5012 = vmatprep.subr.bf16.mxu0 0
    %5013 = vmatpush1.bf16.msra.mxu0 %v5005
    %5014 = vmatprep.subr.bf16.mxu0 0
    %5015 = vmatpush1.bf16.msra.mxu0 %v5006
    %5016 = vmatprep.subr.bf16.mxu0 0
    %5017 = vmatpush1.bf16.msra.mxu0 0
    %5018 = vmatprep.subr.bf16.mxu0 0
    %5019 = vmatpush1.bf16.msra.mxu0 0
    %5020 = vmatprep.subr.bf16.mxu0 0
    %5021 = vmatpush1.bf16.msra.mxu0 0
    %5022 = vmatprep.subr.bf16.mxu0 0
    %5023 = vmatpush1.bf16.msra.mxu0 0
    %5024 = vmatprep.subr.bf16.mxu0 0
    %5025 = vmatpush1.bf16.msra.mxu0 0
    %5026 = vmatprep.subr.bf16.mxu0 0
    %5027 = vmatpush1.bf16.msra.mxu0 0
    %5028 = vmatprep.subr.bf16.mxu0 0
    %5029 = vmatpush1.bf16.msra.mxu0 0
    %5030 = vmatprep.subr.bf16.mxu0 0
    %5031 = vmatpush1.bf16.msra.mxu0 0
    %5032 = vmatprep.subr.bf16.mxu0 0
    %5033 = vmatpush1.bf16.msra.mxu0 0
    %5034 = vmatprep.subr.bf16.mxu0 0
    %5035 = vmatpush1.bf16.msra.mxu0 0
    %5036 = vmatprep.subr.bf16.mxu0 0
    %5037 = vmatpush1.bf16.msra.mxu0 0
    %5038 = vmatprep.subr.bf16.mxu0 0
    %5039 = vmatpush1.bf16.msra.mxu0 0
    %5040 = vmatprep.subr.bf16.mxu0 0
    %5041 = vmatpush1.bf16.msra.mxu0 0
    %5042 = vmatprep.subr.bf16.mxu0 0
    %5043 = vmatpush1.bf16.msra.mxu0 0
    %5044 = vmatprep.mubr.bf16.mxu0 0
    %5045 = vmatmul.mubr.bf16.gmra.mrb[0].mxu0 %v5010
    %v5046 = vpop.f32.mrb[0].mxu0
    %v5047 = vadd.f32 %v4995, %v5046
    %v5048 = vpop.f32.mrb[0].mxu0
    %v5049 = vpop.f32.mrb[0].mxu0
    %v5050 = vadd.f32 %v4995, %v5049
    %v5051 = vpop.f32.mrb[0].mxu0
    %5052 = vdwg.mxu0
    %v5053 = vmax.f32 %v5047, 0.0
    %v5054 = vmax.f32 %v5050, 0.0
    %s5055 = scalar_lea.vmem %s7, 128
    %v5056 = vld [vmem:[%s5055] sm:$0xf]
    %v5057 = vld [vmem:[%s5055 + $0x4] sm:$0xf]
    %v5058 = vld [vmem:[%s5055 + $0x8] sm:$0xf]
    %v5059 = vld [vmem:[%s5055 + $0xc] sm:$0xf]
    %v5060 = vld [vmem:[%s5055 + $0x10] sm:$0xf]
    %v5061 = vld [vmem:[%s5055 + $0x14] sm:$0xf]
    %v5062 = vld [vmem:[%s5055 + $0x18] sm:$0xf]
    %v5063 = vld [vmem:[%s5055 + $0x1c] sm:$0xf]
    %v5064 = vpack.c.bf16 %v5054, %v5053
    %v5065 = vlaneseq
    %v5066 = vshrl.u32 %v5065, 7
    %v5067 = vsub.s32 2, %v5066
    %v5068 = vrot.slane %v4201, %v5067
    %v5077 = vunpack.c.l.b16 %v5056
    %v5078 = vunpack.c.l.b16 %v5057
    %v5079 = vunpack.c.l.b16 %v5058
    %v5080 = vunpack.c.l.b16 %v5059
    %v5081 = vunpack.c.l.b16 %v5060
    %v5082 = vunpack.c.l.b16 %v5061
    %v5083 = vunpack.c.l.b16 %v5062
    %v5084 = vunpack.c.l.b16 %v5063
    %v5085 = vpack.c.b16 %v5078, %v5077
    %v5086 = vpack.c.b16 %v5080, %v5079
    %v5087 = vpack.c.b16 %v5082, %v5081
    %v5088 = vpack.c.b16 %v5084, %v5083
    %v5094 = vsel %vm1180, %v5064, 0
    %5096 = vmatprep.subr.bf16.mxu0 0
    %5097 = vmatpush1.bf16.msra.mxu0 %v5085
    %5098 = vmatprep.subr.bf16.mxu0 0
    %5099 = vmatpush1.bf16.msra.mxu0 %v5086
    %5100 = vmatprep.subr.bf16.mxu0 0
    %5101 = vmatpush1.bf16.msra.mxu0 %v5087
    %5102 = vmatprep.subr.bf16.mxu0 0
    %5103 = vmatpush1.bf16.msra.mxu0 %v5088
    %5104 = vmatprep.subr.bf16.mxu0 0
    %5105 = vmatpush1.bf16.msra.mxu0 0
    %5106 = vmatprep.subr.bf16.mxu0 0
    %5107 = vmatpush1.bf16.msra.mxu0 0
    %5108 = vmatprep.subr.bf16.mxu0 0
    %5109 = vmatpush1.bf16.msra.mxu0 0
    %5110 = vmatprep.subr.bf16.mxu0 0
    %5111 = vmatpush1.bf16.msra.mxu0 0
    %5112 = vmatprep.subr.bf16.mxu0 0
    %5113 = vmatpush1.bf16.msra.mxu0 0
    %5114 = vmatprep.subr.bf16.mxu0 0
    %5115 = vmatpush1.bf16.msra.mxu0 0
    %5116 = vmatprep.subr.bf16.mxu0 0
    %5117 = vmatpush1.bf16.msra.mxu0 0
    %5118 = vmatprep.subr.bf16.mxu0 0
    %5119 = vmatpush1.bf16.msra.mxu0 0
    %5120 = vmatprep.subr.bf16.mxu0 0
    %5121 = vmatpush1.bf16.msra.mxu0 0
    %5122 = vmatprep.subr.bf16.mxu0 0
    %5123 = vmatpush1.bf16.msra.mxu0 0
    %5124 = vmatprep.subr.bf16.mxu0 0
    %5125 = vmatpush1.bf16.msra.mxu0 0
    %5126 = vmatprep.subr.bf16.mxu0 0
    %5127 = vmatpush1.bf16.msra.mxu0 0
    %5128 = vmatprep.mubr.bf16.mxu0 0
    %5129 = vmatmul.mubr.bf16.gmra.mrb[0].mxu0 %v5094
    %v5130 = vpop.f32.mrb[0].mxu0
    %v5131 = vadd.f32 %v5068, %v5130
    %v5132 = vpop.f32.mrb[0].mxu0
    %v5133 = vpop.f32.mrb[0].mxu0
    %v5134 = vadd.f32 %v5068, %v5133
    %v5135 = vpop.f32.mrb[0].mxu0
    %5136 = vdwg.mxu0
    %v5137 = vadd.f32 %v4981, %v5131
    %v5138 = vadd.f32 %v4982, %v5134
    %v5139 = vsel %vm176, %v5137, 0.0
    %5140 = vadd.xlane.f32.xlu0 %v5139
    %v5141 = vpop.xlane.xlu0 %5140
    %v5142 = vsel %vm176, %v5138, 0.0
    %5143 = vadd.xlane.f32.xlu0 %v5142
    %v5144 = vpop.xlane.xlu0 %5143
    %v5145 = vmul.f32 %v5141, %v655
    %v5146 = vmul.f32 %v5144, %v655
    %v5147 = vsub.f32 %v5137, %v5145
    %v5148 = vsub.f32 %v5138, %v5146
    %v5149 = vmul.f32 %v5147, %v5147
    %v5150 = vmul.f32 %v5148, %v5148
    %v5151 = vsel %vm176, %v5149, 0.0
    %5152 = vadd.xlane.f32.xlu0 %v5151
    %v5153 = vpop.xlane.xlu0 %5152
    %v5154 = vsel %vm176, %v5150, 0.0
    %5155 = vadd.xlane.f32.xlu0 %v5154
    %v5156 = vpop.xlane.xlu0 %5155
    %v5157 = vmul.f32 %v5153, %v655
    %v5158 = vmul.f32 %v5156, %v655
    %v5159 = vadd.f32 %v5157, 1e-05
    %v5160 = vadd.f32 %v5158, 1e-05
    %v5161 = vrsqrt.pop %v5159
    %v5162 = vrsqrt.pop %v5160
    %v5163 = vmul.f32 %v5147, %v5161
    %v5164 = vmul.f32 %v5148, %v5162
    %v5165 = vlaneseq
    %v5166 = vshrl.u32 %v5165, 7
    %v5167 = vsub.s32 5, %v5166
    %v5168 = vrot.slane %v4201, %v5167
    %v5169 = vmul.f32 %v5163, %v5168
    %v5170 = vmul.f32 %v5164, %v5168
    %v5171 = vlaneseq
    %v5172 = vshrl.u32 %v5171, 7
    %v5173 = vsub.s32 0, %v5172
    %v5174 = vrot.slane %v4202, %v5173
    %v5175 = vadd.f32 %v5169, %v5174
    %v5176 = vadd.f32 %v5170, %v5174
    %s5177 = scalar_lea.vmem [#allocation11], 80
    %v5178 = vld [vmem:[%s5177] sm:$0xff]
    %v5179 = vld [vmem:[%s5177 + $0x8] sm:$0xff]
    %s5180 = scalar_lea.vmem %s2, 80
    %v5181 = vld [vmem:[%s5180] sm:$0xf]
    %v5182 = vld [vmem:[%s5180 + $0x4] sm:$0xf]
    %v5183 = vld [vmem:[%s5180 + $0x8] sm:$0xf]
    %v5184 = vld [vmem:[%s5180 + $0xc] sm:$0xf]
    %v5185 = vpack.c.bf16 %v5176, %v5175
    %v5190 = vunpack.c.l.b16 %v5181
    %v5191 = vunpack.c.l.b16 %v5182
    %v5192 = vunpack.c.l.b16 %v5183
    %v5193 = vunpack.c.l.b16 %v5184
    %v5194 = vpack.c.b16 %v5191, %v5190
    %v5195 = vpack.c.b16 %v5193, %v5192
    %v5199 = vsel %vm176, %v5185, 0
    %5201 = vmatprep.subr.bf16.mxu0 0
    %5202 = vmatpush1.bf16.msra.mxu0 %v5194
    %5203 = vmatprep.subr.bf16.mxu0 0
    %5204 = vmatpush1.bf16.msra.mxu0 %v5195
    %5205 = vmatprep.subr.bf16.mxu0 0
    %5206 = vmatpush1.bf16.msra.mxu0 0
    %5207 = vmatprep.subr.bf16.mxu0 0
    %5208 = vmatpush1.bf16.msra.mxu0 0
    %5209 = vmatprep.subr.bf16.mxu0 0
    %5210 = vmatpush1.bf16.msra.mxu0 0
    %5211 = vmatprep.subr.bf16.mxu0 0
    %5212 = vmatpush1.bf16.msra.mxu0 0
    %5213 = vmatprep.subr.bf16.mxu0 0
    %5214 = vmatpush1.bf16.msra.mxu0 0
    %5215 = vmatprep.subr.bf16.mxu0 0
    %5216 = vmatpush1.bf16.msra.mxu0 0
    %5217 = vmatprep.subr.bf16.mxu0 0
    %5218 = vmatpush1.bf16.msra.mxu0 0
    %5219 = vmatprep.subr.bf16.mxu0 0
    %5220 = vmatpush1.bf16.msra.mxu0 0
    %5221 = vmatprep.subr.bf16.mxu0 0
    %5222 = vmatpush1.bf16.msra.mxu0 0
    %5223 = vmatprep.subr.bf16.mxu0 0
    %5224 = vmatpush1.bf16.msra.mxu0 0
    %5225 = vmatprep.subr.bf16.mxu0 0
    %5226 = vmatpush1.bf16.msra.mxu0 0
    %5227 = vmatprep.subr.bf16.mxu0 0
    %5228 = vmatpush1.bf16.msra.mxu0 0
    %5229 = vmatprep.subr.bf16.mxu0 0
    %5230 = vmatpush1.bf16.msra.mxu0 0
    %5231 = vmatprep.subr.bf16.mxu0 0
    %5232 = vmatpush1.bf16.msra.mxu0 0
    %5233 = vmatprep.mubr.bf16.mxu0 0
    %5234 = vmatmul.mubr.bf16.gmra.mrb[0].mxu0 %v5199
    %v5235 = vpop.f32.mrb[0].mxu0
    %v5236 = vadd.f32 0.0, %v5235
    %v5237 = vpop.f32.mrb[0].mxu0
    %v5238 = vpop.f32.mrb[0].mxu0
    %v5239 = vadd.f32 0.0, %v5238
    %v5240 = vpop.f32.mrb[0].mxu0
    %5241 = vdwg.mxu0
    %v5242 = vpack.c.bf16 %v5239, %v5236
    %v5244 = vunpack.c.l.b16 %v5242
    %v5245 = vunpack.c.h.b16 %v5242
    %v5246 = vpack.c.b16 %v5244, %v5244
    %v5247 = vpack.c.b16 %v5245, %v5245
    %5248 = vrot.lane.b32.xlu0 %v5246, 96
    %v5249 = vpop.permute.xlu0 %5248
    %v5251 = vsel %vm176, %v5246, 0
    %v5254 = vsel %vm176, %v5249, 0
    %5256 = vmatprep.subr.bf16.mxu0 0
    %5257 = vmatpush1.bf16.xpose.msra.mxu0 %v5254
    %5258 = vmatprep.subr.bf16.mxu0 0
    %5259 = vmatpush1.bf16.xpose.msra.mxu0 0
    %5260 = vmatprep.subr.bf16.mxu0 0
    %5261 = vmatpush1.bf16.xpose.msra.mxu0 0
    %5262 = vmatprep.subr.bf16.mxu0 0
    %5263 = vmatpush1.bf16.xpose.msra.mxu0 0
    %5264 = vmatprep.subr.bf16.mxu0 0
    %5265 = vmatpush1.bf16.xpose.msra.mxu0 0
    %5266 = vmatprep.subr.bf16.mxu0 0
    %5267 = vmatpush1.bf16.xpose.msra.mxu0 0
    %5268 = vmatprep.subr.bf16.mxu0 0
    %5269 = vmatpush1.bf16.xpose.msra.mxu0 0
    %5270 = vmatprep.subr.bf16.mxu0 0
    %5271 = vmatpush1.bf16.xpose.msra.mxu0 0
    %5272 = vmatprep.subr.bf16.mxu0 0
    %5273 = vmatpush1.bf16.xpose.msra.mxu0 0
    %5274 = vmatprep.subr.bf16.mxu0 0
    %5275 = vmatpush1.bf16.xpose.msra.mxu0 0
    %5276 = vmatprep.subr.bf16.mxu0 0
    %5277 = vmatpush1.bf16.xpose.msra.mxu0 0
    %5278 = vmatprep.subr.bf16.mxu0 0
    %5279 = vmatpush1.bf16.xpose.msra.mxu0 0
    %5280 = vmatprep.subr.bf16.mxu0 0
    %5281 = vmatpush1.bf16.xpose.msra.mxu0 0
    %5282 = vmatprep.subr.bf16.mxu0 0
    %5283 = vmatpush1.bf16.xpose.msra.mxu0 0
    %5284 = vmatprep.subr.bf16.mxu0 0
    %5285 = vmatpush1.bf16.xpose.msra.mxu0 0
    %5286 = vmatprep.subr.bf16.mxu0 0
    %5287 = vmatpush1.bf16.xpose.msra.mxu0 0
    %5288 = vmatprep.mubr.bf16.mxu0 0
    %5289 = vmatmul.mubr.bf16.gmra.mrb[0].mxu0 %v5251
    %v5290 = vpop.f32.mrb[0].mxu0
    %v5291 = vadd.f32 0.0, %v5290
    %v5292 = vpop.f32.mrb[0].mxu0
    %v5293 = vpop.f32.mrb[0].mxu0
    %v5294 = vpop.f32.mrb[0].mxu0
    %5295 = vdwg.mxu0
    %5296 = vrot.lane.b32.xlu0 %v5247, 96
    %v5297 = vpop.permute.xlu0 %5296
    %v5299 = vsel %vm176, %v5247, 0
    %v5302 = vsel %vm176, %v5297, 0
    %5304 = vmatprep.subr.bf16.mxu0 0
    %5305 = vmatpush1.bf16.xpose.msra.mxu0 %v5302
    %5306 = vmatprep.subr.bf16.mxu0 0
    %5307 = vmatpush1.bf16.xpose.msra.mxu0 0
    %5308 = vmatprep.subr.bf16.mxu0 0
    %5309 = vmatpush1.bf16.xpose.msra.mxu0 0
    %5310 = vmatprep.subr.bf16.mxu0 0
    %5311 = vmatpush1.bf16.xpose.msra.mxu0 0
    %5312 = vmatprep.subr.bf16.mxu0 0
    %5313 = vmatpush1.bf16.xpose.msra.mxu0 0
    %5314 = vmatprep.subr.bf16.mxu0 0
    %5315 = vmatpush1.bf16.xpose.msra.mxu0 0
    %5316 = vmatprep.subr.bf16.mxu0 0
    %5317 = vmatpush1.bf16.xpose.msra.mxu0 0
    %5318 = vmatprep.subr.bf16.mxu0 0
    %5319 = vmatpush1.bf16.xpose.msra.mxu0 0
    %5320 = vmatprep.subr.bf16.mxu0 0
    %5321 = vmatpush1.bf16.xpose.msra.mxu0 0
    %5322 = vmatprep.subr.bf16.mxu0 0
    %5323 = vmatpush1.bf16.xpose.msra.mxu0 0
    %5324 = vmatprep.subr.bf16.mxu0 0
    %5325 = vmatpush1.bf16.xpose.msra.mxu0 0
    %5326 = vmatprep.subr.bf16.mxu0 0
    %5327 = vmatpush1.bf16.xpose.msra.mxu0 0
    %5328 = vmatprep.subr.bf16.mxu0 0
    %5329 = vmatpush1.bf16.xpose.msra.mxu0 0
    %5330 = vmatprep.subr.bf16.mxu0 0
    %5331 = vmatpush1.bf16.xpose.msra.mxu0 0
    %5332 = vmatprep.subr.bf16.mxu0 0
    %5333 = vmatpush1.bf16.xpose.msra.mxu0 0
    %5334 = vmatprep.subr.bf16.mxu0 0
    %5335 = vmatpush1.bf16.xpose.msra.mxu0 0
    %5336 = vmatprep.mubr.bf16.mxu0 0
    %5337 = vmatmul.mubr.bf16.gmra.mrb[0].mxu0 %v5299
    %v5338 = vpop.f32.mrb[0].mxu0
    %v5339 = vadd.f32 0.0, %v5338
    %v5340 = vpop.f32.mrb[0].mxu0
    %v5341 = vpop.f32.mrb[0].mxu0
    %v5342 = vpop.f32.mrb[0].mxu0
    %5343 = vdwg.mxu0
    %v5344 = vmul.f32 %v5291, 0.17677669
    %v5345 = vmul.f32 %v5339, 0.17677669
    %v5346 = vadd.f32 %v5344, %v135
    %v5347 = vadd.f32 %v5345, %v135
    %v5348 = vsel %vm460, %v5346, -inf
    %5349 = vmax.xlane.f32.xlu0 %v5348
    %v5350 = vpop.xlane.xlu0 %5349
    %v5351 = vsel %vm460, %v5347, -inf
    %5352 = vmax.xlane.f32.xlu0 %v5351
    %v5353 = vpop.xlane.xlu0 %5352
    %v5354 = vsub.f32 %v5346, %v5350
    %v5355 = vsub.f32 %v5347, %v5353
    %v5356 = vmul.f32 %v5354, 1.442695
    %v5357 = vpow.pop %v5356
    %v5358 = vmul.f32 %v5355, 1.442695
    %v5359 = vpow.pop %v5358
    %v5360 = vsel %vm460, %v5357, 0.0
    %5361 = vadd.xlane.f32.xlu0 %v5360
    %v5362 = vpop.xlane.xlu0 %5361
    %v5363 = vsel %vm460, %v5359, 0.0
    %5364 = vadd.xlane.f32.xlu0 %v5363
    %v5365 = vpop.xlane.xlu0 %5364
    %v5366 = vrcp.pop %v5362
    %v5367 = vrcp.pop %v5365
    %v5368 = vmul.f32 %v5357, %v5366
    %v5369 = vmul.f32 %v5359, %v5367
    %v5370 = vpack.c.bf16 %v5368, %v5368
    %v5371 = vpack.c.bf16 %v5369, %v5369
    %5372 = vrot.lane.b32.xlu0 %v5246, 64
    %v5373 = vpop.permute.xlu0 %5372
    %v5375 = vsel %vm460, %v5370, 0
    %v5378 = vsel %vm490, %v5373, 0
    %5380 = vmatprep.subr.bf16.mxu0 0
    %5381 = vmatpush1.bf16.msra.mxu0 %v5378
    %5382 = vmatprep.subr.bf16.mxu0 0
    %5383 = vmatpush1.bf16.msra.mxu0 0
    %5384 = vmatprep.subr.bf16.mxu0 0
    %5385 = vmatpush1.bf16.msra.mxu0 0
    %5386 = vmatprep.subr.bf16.mxu0 0
    %5387 = vmatpush1.bf16.msra.mxu0 0
    %5388 = vmatprep.subr.bf16.mxu0 0
    %5389 = vmatpush1.bf16.msra.mxu0 0
    %5390 = vmatprep.subr.bf16.mxu0 0
    %5391 = vmatpush1.bf16.msra.mxu0 0
    %5392 = vmatprep.subr.bf16.mxu0 0
    %5393 = vmatpush1.bf16.msra.mxu0 0
    %5394 = vmatprep.subr.bf16.mxu0 0
    %5395 = vmatpush1.bf16.msra.mxu0 0
    %5396 = vmatprep.subr.bf16.mxu0 0
    %5397 = vmatpush1.bf16.msra.mxu0 0
    %5398 = vmatprep.subr.bf16.mxu0 0
    %5399 = vmatpush1.bf16.msra.mxu0 0
    %5400 = vmatprep.subr.bf16.mxu0 0
    %5401 = vmatpush1.bf16.msra.mxu0 0
    %5402 = vmatprep.subr.bf16.mxu0 0
    %5403 = vmatpush1.bf16.msra.mxu0 0
    %5404 = vmatprep.subr.bf16.mxu0 0
    %5405 = vmatpush1.bf16.msra.mxu0 0
    %5406 = vmatprep.subr.bf16.mxu0 0
    %5407 = vmatpush1.bf16.msra.mxu0 0
    %5408 = vmatprep.subr.bf16.mxu0 0
    %5409 = vmatpush1.bf16.msra.mxu0 0
    %5410 = vmatprep.subr.bf16.mxu0 0
    %5411 = vmatpush1.bf16.msra.mxu0 0
    %5412 = vmatprep.mubr.bf16.mxu0 0
    %5413 = vmatmul.mubr.bf16.gmra.mrb[0].mxu0 %v5375
    %v5414 = vpop.f32.mrb[0].mxu0
    %v5415 = vadd.f32 0.0, %v5414
    %v5416 = vpop.f32.mrb[0].mxu0
    %v5417 = vpop.f32.mrb[0].mxu0
    %v5418 = vpop.f32.mrb[0].mxu0
    %5419 = vdwg.mxu0
    %5420 = vrot.lane.b32.xlu0 %v5247, 64
    %v5421 = vpop.permute.xlu0 %5420
    %v5423 = vsel %vm460, %v5371, 0
    %v5426 = vsel %vm490, %v5421, 0
    %5428 = vmatprep.subr.bf16.mxu0 0
    %5429 = vmatpush1.bf16.msra.mxu0 %v5426
    %5430 = vmatprep.subr.bf16.mxu0 0
    %5431 = vmatpush1.bf16.msra.mxu0 0
    %5432 = vmatprep.subr.bf16.mxu0 0
    %5433 = vmatpush1.bf16.msra.mxu0 0
    %5434 = vmatprep.subr.bf16.mxu0 0
    %5435 = vmatpush1.bf16.msra.mxu0 0
    %5436 = vmatprep.subr.bf16.mxu0 0
    %5437 = vmatpush1.bf16.msra.mxu0 0
    %5438 = vmatprep.subr.bf16.mxu0 0
    %5439 = vmatpush1.bf16.msra.mxu0 0
    %5440 = vmatprep.subr.bf16.mxu0 0
    %5441 = vmatpush1.bf16.msra.mxu0 0
    %5442 = vmatprep.subr.bf16.mxu0 0
    %5443 = vmatpush1.bf16.msra.mxu0 0
    %5444 = vmatprep.subr.bf16.mxu0 0
    %5445 = vmatpush1.bf16.msra.mxu0 0
    %5446 = vmatprep.subr.bf16.mxu0 0
    %5447 = vmatpush1.bf16.msra.mxu0 0
    %5448 = vmatprep.subr.bf16.mxu0 0
    %5449 = vmatpush1.bf16.msra.mxu0 0
    %5450 = vmatprep.subr.bf16.mxu0 0
    %5451 = vmatpush1.bf16.msra.mxu0 0
    %5452 = vmatprep.subr.bf16.mxu0 0
    %5453 = vmatpush1.bf16.msra.mxu0 0
    %5454 = vmatprep.subr.bf16.mxu0 0
    %5455 = vmatpush1.bf16.msra.mxu0 0
    %5456 = vmatprep.subr.bf16.mxu0 0
    %5457 = vmatpush1.bf16.msra.mxu0 0
    %5458 = vmatprep.subr.bf16.mxu0 0
    %5459 = vmatpush1.bf16.msra.mxu0 0
    %5460 = vmatprep.mubr.bf16.mxu0 0
    %5461 = vmatmul.mubr.bf16.gmra.mrb[0].mxu0 %v5423
    %v5462 = vpop.f32.mrb[0].mxu0
    %v5463 = vadd.f32 0.0, %v5462
    %v5464 = vpop.f32.mrb[0].mxu0
    %v5465 = vpop.f32.mrb[0].mxu0
    %v5466 = vpop.f32.mrb[0].mxu0
    %5467 = vdwg.mxu0
    %s5468 = scalar_lea.vmem %s3, 80
    %v5469 = vld [vmem:[%s5468] sm:$0xf]
    %v5470 = vld [vmem:[%s5468 + $0x4] sm:$0xf]
    %v5471 = vld [vmem:[%s5468 + $0x8] sm:$0xf]
    %v5472 = vld [vmem:[%s5468 + $0xc] sm:$0xf]
    %v5473 = vpack.c.bf16 %v5463, %v5415
    %v5474 = vlaneseq
    %v5475 = vshrl.u32 %v5474, 7
    %v5476 = vsub.s32 0, %v5475
    %v5477 = vrot.slane %v5178, %v5476
    %v5482 = vunpack.c.l.b16 %v5469
    %v5483 = vunpack.c.l.b16 %v5470
    %v5484 = vunpack.c.l.b16 %v5471
    %v5485 = vunpack.c.l.b16 %v5472
    %v5486 = vpack.c.b16 %v5483, %v5482
    %v5487 = vpack.c.b16 %v5485, %v5484
    %v5491 = vsel %vm176, %v5473, 0
    %5493 = vmatprep.subr.bf16.mxu0 0
    %5494 = vmatpush1.bf16.msra.mxu0 %v5486
    %5495 = vmatprep.subr.bf16.mxu0 0
    %5496 = vmatpush1.bf16.msra.mxu0 %v5487
    %5497 = vmatprep.subr.bf16.mxu0 0
    %5498 = vmatpush1.bf16.msra.mxu0 0
    %5499 = vmatprep.subr.bf16.mxu0 0
    %5500 = vmatpush1.bf16.msra.mxu0 0
    %5501 = vmatprep.subr.bf16.mxu0 0
    %5502 = vmatpush1.bf16.msra.mxu0 0
    %5503 = vmatprep.subr.bf16.mxu0 0
    %5504 = vmatpush1.bf16.msra.mxu0 0
    %5505 = vmatprep.subr.bf16.mxu0 0
    %5506 = vmatpush1.bf16.msra.mxu0 0
    %5507 = vmatprep.subr.bf16.mxu0 0
    %5508 = vmatpush1.bf16.msra.mxu0 0
    %5509 = vmatprep.subr.bf16.mxu0 0
    %5510 = vmatpush1.bf16.msra.mxu0 0
    %5511 = vmatprep.subr.bf16.mxu0 0
    %5512 = vmatpush1.bf16.msra.mxu0 0
    %5513 = vmatprep.subr.bf16.mxu0 0
    %5514 = vmatpush1.bf16.msra.mxu0 0
    %5515 = vmatprep.subr.bf16.mxu0 0
    %5516 = vmatpush1.bf16.msra.mxu0 0
    %5517 = vmatprep.subr.bf16.mxu0 0
    %5518 = vmatpush1.bf16.msra.mxu0 0
    %5519 = vmatprep.subr.bf16.mxu0 0
    %5520 = vmatpush1.bf16.msra.mxu0 0
    %5521 = vmatprep.subr.bf16.mxu0 0
    %5522 = vmatpush1.bf16.msra.mxu0 0
    %5523 = vmatprep.subr.bf16.mxu0 0
    %5524 = vmatpush1.bf16.msra.mxu0 0
    %5525 = vmatprep.mubr.bf16.mxu0 0
    %5526 = vmatmul.mubr.bf16.gmra.mrb[0].mxu0 %v5491
    %v5527 = vpop.f32.mrb[0].mxu0
    %v5528 = vadd.f32 %v5477, %v5527
    %v5529 = vpop.f32.mrb[0].mxu0
    %v5530 = vpop.f32.mrb[0].mxu0
    %v5531 = vadd.f32 %v5477, %v5530
    %v5532 = vpop.f32.mrb[0].mxu0
    %5533 = vdwg.mxu0
    %v5534 = vadd.f32 %v5175, %v5528
    %v5535 = vadd.f32 %v5176, %v5531
    %v5536 = vsel %vm176, %v5534, 0.0
    %5537 = vadd.xlane.f32.xlu0 %v5536
    %v5538 = vpop.xlane.xlu0 %5537
    %v5539 = vsel %vm176, %v5535, 0.0
    %5540 = vadd.xlane.f32.xlu0 %v5539
    %v5541 = vpop.xlane.xlu0 %5540
    %v5542 = vmul.f32 %v5538, %v655
    %v5543 = vmul.f32 %v5541, %v655
    %v5544 = vsub.f32 %v5534, %v5542
    %v5545 = vsub.f32 %v5535, %v5543
    %v5546 = vmul.f32 %v5544, %v5544
    %v5547 = vmul.f32 %v5545, %v5545
    %v5548 = vsel %vm176, %v5546, 0.0
    %5549 = vadd.xlane.f32.xlu0 %v5548
    %v5550 = vpop.xlane.xlu0 %5549
    %v5551 = vsel %vm176, %v5547, 0.0
    %5552 = vadd.xlane.f32.xlu0 %v5551
    %v5553 = vpop.xlane.xlu0 %5552
    %v5554 = vmul.f32 %v5550, %v655
    %v5555 = vmul.f32 %v5553, %v655
    %v5556 = vadd.f32 %v5554, 1e-05
    %v5557 = vadd.f32 %v5555, 1e-05
    %v5558 = vrsqrt.pop %v5556
    %v5559 = vrsqrt.pop %v5557
    %v5560 = vmul.f32 %v5544, %v5558
    %v5561 = vmul.f32 %v5545, %v5559
    %v5562 = vlaneseq
    %v5563 = vshrl.u32 %v5562, 7
    %v5564 = vsub.s32 3, %v5563
    %v5565 = vrot.slane %v5178, %v5564
    %v5566 = vmul.f32 %v5560, %v5565
    %v5567 = vmul.f32 %v5561, %v5565
    %v5568 = vlaneseq
    %v5569 = vshrl.u32 %v5568, 7
    %v5570 = vsub.s32 6, %v5569
    %v5571 = vrot.slane %v5178, %v5570
    %v5572 = vadd.f32 %v5566, %v5571
    %v5573 = vadd.f32 %v5567, %v5571
    %s5574 = scalar_lea.vmem %s4, 80
    %v5575 = vld [vmem:[%s5574] sm:$0xf]
    %v5576 = vld [vmem:[%s5574 + $0x4] sm:$0xf]
    %v5577 = vld [vmem:[%s5574 + $0x8] sm:$0xf]
    %v5578 = vld [vmem:[%s5574 + $0xc] sm:$0xf]
    %v5579 = vpack.c.bf16 %v5573, %v5572
    %v5584 = vunpack.c.l.b16 %v5575
    %v5585 = vunpack.c.l.b16 %v5576
    %v5586 = vunpack.c.l.b16 %v5577
    %v5587 = vunpack.c.l.b16 %v5578
    %v5588 = vpack.c.b16 %v5585, %v5584
    %v5589 = vpack.c.b16 %v5587, %v5586
    %v5593 = vsel %vm176, %v5579, 0
    %5595 = vmatprep.subr.bf16.mxu0 0
    %5596 = vmatpush1.bf16.msra.mxu0 %v5588
    %5597 = vmatprep.subr.bf16.mxu0 0
    %5598 = vmatpush1.bf16.msra.mxu0 %v5589
    %5599 = vmatprep.subr.bf16.mxu0 0
    %5600 = vmatpush1.bf16.msra.mxu0 0
    %5601 = vmatprep.subr.bf16.mxu0 0
    %5602 = vmatpush1.bf16.msra.mxu0 0
    %5603 = vmatprep.subr.bf16.mxu0 0
    %5604 = vmatpush1.bf16.msra.mxu0 0
    %5605 = vmatprep.subr.bf16.mxu0 0
    %5606 = vmatpush1.bf16.msra.mxu0 0
    %5607 = vmatprep.subr.bf16.mxu0 0
    %5608 = vmatpush1.bf16.msra.mxu0 0
    %5609 = vmatprep.subr.bf16.mxu0 0
    %5610 = vmatpush1.bf16.msra.mxu0 0
    %5611 = vmatprep.subr.bf16.mxu0 0
    %5612 = vmatpush1.bf16.msra.mxu0 0
    %5613 = vmatprep.subr.bf16.mxu0 0
    %5614 = vmatpush1.bf16.msra.mxu0 0
    %5615 = vmatprep.subr.bf16.mxu0 0
    %5616 = vmatpush1.bf16.msra.mxu0 0
    %5617 = vmatprep.subr.bf16.mxu0 0
    %5618 = vmatpush1.bf16.msra.mxu0 0
    %5619 = vmatprep.subr.bf16.mxu0 0
    %5620 = vmatpush1.bf16.msra.mxu0 0
    %5621 = vmatprep.subr.bf16.mxu0 0
    %5622 = vmatpush1.bf16.msra.mxu0 0
    %5623 = vmatprep.subr.bf16.mxu0 0
    %5624 = vmatpush1.bf16.msra.mxu0 0
    %5625 = vmatprep.subr.bf16.mxu0 0
    %5626 = vmatpush1.bf16.msra.mxu0 0
    %5627 = vmatprep.mubr.bf16.mxu0 0
    %5628 = vmatmul.mubr.bf16.gmra.mrb[0].mxu0 %v5593
    %v5629 = vpop.f32.mrb[0].mxu0
    %v5630 = vadd.f32 0.0, %v5629
    %v5631 = vpop.f32.mrb[0].mxu0
    %v5632 = vpop.f32.mrb[0].mxu0
    %v5633 = vadd.f32 0.0, %v5632
    %v5634 = vpop.f32.mrb[0].mxu0
    %5635 = vdwg.mxu0
    %v5636 = vpack.c.bf16 %v5633, %v5630
    %v5638 = vunpack.c.l.b16 %v5636
    %v5639 = vunpack.c.h.b16 %v5636
    %v5640 = vpack.c.b16 %v5638, %v5638
    %v5641 = vpack.c.b16 %v5639, %v5639
    %5642 = vrot.lane.b32.xlu0 %v287, 64
    %v5643 = vpop.permute.xlu0 %5642
    %v5645 = vsel %vm176, %v5640, 0
    %v5648 = vsel %vm176, %v5643, 0
    %5650 = vmatprep.subr.bf16.mxu0 0
    %5651 = vmatpush1.bf16.xpose.msra.mxu0 %v5648
    %5652 = vmatprep.subr.bf16.mxu0 0
    %5653 = vmatpush1.bf16.xpose.msra.mxu0 0
    %5654 = vmatprep.subr.bf16.mxu0 0
    %5655 = vmatpush1.bf16.xpose.msra.mxu0 0
    %5656 = vmatprep.subr.bf16.mxu0 0
    %5657 = vmatpush1.bf16.xpose.msra.mxu0 0
    %5658 = vmatprep.subr.bf16.mxu0 0
    %5659 = vmatpush1.bf16.xpose.msra.mxu0 0
    %5660 = vmatprep.subr.bf16.mxu0 0
    %5661 = vmatpush1.bf16.xpose.msra.mxu0 0
    %5662 = vmatprep.subr.bf16.mxu0 0
    %5663 = vmatpush1.bf16.xpose.msra.mxu0 0
    %5664 = vmatprep.subr.bf16.mxu0 0
    %5665 = vmatpush1.bf16.xpose.msra.mxu0 0
    %5666 = vmatprep.subr.bf16.mxu0 0
    %5667 = vmatpush1.bf16.xpose.msra.mxu0 0
    %5668 = vmatprep.subr.bf16.mxu0 0
    %5669 = vmatpush1.bf16.xpose.msra.mxu0 0
    %5670 = vmatprep.subr.bf16.mxu0 0
    %5671 = vmatpush1.bf16.xpose.msra.mxu0 0
    %5672 = vmatprep.subr.bf16.mxu0 0
    %5673 = vmatpush1.bf16.xpose.msra.mxu0 0
    %5674 = vmatprep.subr.bf16.mxu0 0
    %5675 = vmatpush1.bf16.xpose.msra.mxu0 0
    %5676 = vmatprep.subr.bf16.mxu0 0
    %5677 = vmatpush1.bf16.xpose.msra.mxu0 0
    %5678 = vmatprep.subr.bf16.mxu0 0
    %5679 = vmatpush1.bf16.xpose.msra.mxu0 0
    %5680 = vmatprep.subr.bf16.mxu0 0
    %5681 = vmatpush1.bf16.xpose.msra.mxu0 0
    %5682 = vmatprep.mubr.bf16.mxu0 0
    %5683 = vmatmul.mubr.bf16.gmra.mrb[0].mxu0 %v5645
    %v5684 = vpop.f32.mrb[0].mxu0
    %v5685 = vadd.f32 0.0, %v5684
    %v5686 = vpop.f32.mrb[0].mxu0
    %v5687 = vpop.f32.mrb[0].mxu0
    %v5688 = vpop.f32.mrb[0].mxu0
    %5689 = vdwg.mxu0
    %5690 = vrot.lane.b32.xlu0 %v290, 64
    %v5691 = vpop.permute.xlu0 %5690
    %v5693 = vsel %vm176, %v5641, 0
    %v5696 = vsel %vm176, %v5691, 0
    %5698 = vmatprep.subr.bf16.mxu0 0
    %5699 = vmatpush1.bf16.xpose.msra.mxu0 %v5696
    %5700 = vmatprep.subr.bf16.mxu0 0
    %5701 = vmatpush1.bf16.xpose.msra.mxu0 0
    %5702 = vmatprep.subr.bf16.mxu0 0
    %5703 = vmatpush1.bf16.xpose.msra.mxu0 0
    %5704 = vmatprep.subr.bf16.mxu0 0
    %5705 = vmatpush1.bf16.xpose.msra.mxu0 0
    %5706 = vmatprep.subr.bf16.mxu0 0
    %5707 = vmatpush1.bf16.xpose.msra.mxu0 0
    %5708 = vmatprep.subr.bf16.mxu0 0
    %5709 = vmatpush1.bf16.xpose.msra.mxu0 0
    %5710 = vmatprep.subr.bf16.mxu0 0
    %5711 = vmatpush1.bf16.xpose.msra.mxu0 0
    %5712 = vmatprep.subr.bf16.mxu0 0
    %5713 = vmatpush1.bf16.xpose.msra.mxu0 0
    %5714 = vmatprep.subr.bf16.mxu0 0
    %5715 = vmatpush1.bf16.xpose.msra.mxu0 0
    %5716 = vmatprep.subr.bf16.mxu0 0
    %5717 = vmatpush1.bf16.xpose.msra.mxu0 0
    %5718 = vmatprep.subr.bf16.mxu0 0
    %5719 = vmatpush1.bf16.xpose.msra.mxu0 0
    %5720 = vmatprep.subr.bf16.mxu0 0
    %5721 = vmatpush1.bf16.xpose.msra.mxu0 0
    %5722 = vmatprep.subr.bf16.mxu0 0
    %5723 = vmatpush1.bf16.xpose.msra.mxu0 0
    %5724 = vmatprep.subr.bf16.mxu0 0
    %5725 = vmatpush1.bf16.xpose.msra.mxu0 0
    %5726 = vmatprep.subr.bf16.mxu0 0
    %5727 = vmatpush1.bf16.xpose.msra.mxu0 0
    %5728 = vmatprep.subr.bf16.mxu0 0
    %5729 = vmatpush1.bf16.xpose.msra.mxu0 0
    %5730 = vmatprep.mubr.bf16.mxu0 0
    %5731 = vmatmul.mubr.bf16.gmra.mrb[0].mxu0 %v5693
    %v5732 = vpop.f32.mrb[0].mxu0
    %v5733 = vadd.f32 0.0, %v5732
    %v5734 = vpop.f32.mrb[0].mxu0
    %v5735 = vpop.f32.mrb[0].mxu0
    %v5736 = vpop.f32.mrb[0].mxu0
    %5737 = vdwg.mxu0
    %v5738 = vmul.f32 %v5685, 0.17677669
    %v5739 = vmul.f32 %v5733, 0.17677669
    %v5740 = vsel %vm849, %v5738, -inf
    %5741 = vmax.xlane.f32.xlu0 %v5740
    %v5742 = vpop.xlane.xlu0 %5741
    %v5743 = vsel %vm849, %v5739, -inf
    %5744 = vmax.xlane.f32.xlu0 %v5743
    %v5745 = vpop.xlane.xlu0 %5744
    %v5746 = vsub.f32 %v5738, %v5742
    %v5747 = vsub.f32 %v5739, %v5745
    %v5748 = vmul.f32 %v5746, 1.442695
    %v5749 = vpow.pop %v5748
    %v5750 = vmul.f32 %v5747, 1.442695
    %v5751 = vpow.pop %v5750
    %v5752 = vsel %vm849, %v5749, 0.0
    %5753 = vadd.xlane.f32.xlu0 %v5752
    %v5754 = vpop.xlane.xlu0 %5753
    %v5755 = vsel %vm849, %v5751, 0.0
    %5756 = vadd.xlane.f32.xlu0 %v5755
    %v5757 = vpop.xlane.xlu0 %5756
    %v5758 = vrcp.pop %v5754
    %v5759 = vrcp.pop %v5757
    %v5760 = vmul.f32 %v5749, %v5758
    %v5761 = vmul.f32 %v5751, %v5759
    %v5762 = vpack.c.bf16 %v5760, %v5760
    %v5763 = vpack.c.bf16 %v5761, %v5761
    %5764 = vrot.lane.b32.xlu0 %v287, 32
    %v5765 = vpop.permute.xlu0 %5764
    %v5768 = vsel %vm849, %v5762, 0
    %5770 = vmatprep.subr.bf16.mxu0 0
    %5771 = vmatpush1.bf16.msra.mxu0 %v5765
    %5772 = vmatprep.subr.bf16.mxu0 0
    %5773 = vmatpush1.bf16.msra.mxu0 0
    %5774 = vmatprep.subr.bf16.mxu0 0
    %5775 = vmatpush1.bf16.msra.mxu0 0
    %5776 = vmatprep.subr.bf16.mxu0 0
    %5777 = vmatpush1.bf16.msra.mxu0 0
    %5778 = vmatprep.subr.bf16.mxu0 0
    %5779 = vmatpush1.bf16.msra.mxu0 0
    %5780 = vmatprep.subr.bf16.mxu0 0
    %5781 = vmatpush1.bf16.msra.mxu0 0
    %5782 = vmatprep.subr.bf16.mxu0 0
    %5783 = vmatpush1.bf16.msra.mxu0 0
    %5784 = vmatprep.subr.bf16.mxu0 0
    %5785 = vmatpush1.bf16.msra.mxu0 0
    %5786 = vmatprep.subr.bf16.mxu0 0
    %5787 = vmatpush1.bf16.msra.mxu0 0
    %5788 = vmatprep.subr.bf16.mxu0 0
    %5789 = vmatpush1.bf16.msra.mxu0 0
    %5790 = vmatprep.subr.bf16.mxu0 0
    %5791 = vmatpush1.bf16.msra.mxu0 0
    %5792 = vmatprep.subr.bf16.mxu0 0
    %5793 = vmatpush1.bf16.msra.mxu0 0
    %5794 = vmatprep.subr.bf16.mxu0 0
    %5795 = vmatpush1.bf16.msra.mxu0 0
    %5796 = vmatprep.subr.bf16.mxu0 0
    %5797 = vmatpush1.bf16.msra.mxu0 0
    %5798 = vmatprep.subr.bf16.mxu0 0
    %5799 = vmatpush1.bf16.msra.mxu0 0
    %5800 = vmatprep.subr.bf16.mxu0 0
    %5801 = vmatpush1.bf16.msra.mxu0 0
    %5802 = vmatprep.mubr.bf16.mxu0 0
    %5803 = vmatmul.mubr.bf16.gmra.mrb[0].mxu0 %v5768
    %v5804 = vpop.f32.mrb[0].mxu0
    %v5805 = vadd.f32 0.0, %v5804
    %v5806 = vpop.f32.mrb[0].mxu0
    %v5807 = vpop.f32.mrb[0].mxu0
    %v5808 = vpop.f32.mrb[0].mxu0
    %5809 = vdwg.mxu0
    %5810 = vrot.lane.b32.xlu0 %v290, 32
    %v5811 = vpop.permute.xlu0 %5810
    %v5814 = vsel %vm849, %v5763, 0
    %5816 = vmatprep.subr.bf16.mxu0 0
    %5817 = vmatpush1.bf16.msra.mxu0 %v5811
    %5818 = vmatprep.subr.bf16.mxu0 0
    %5819 = vmatpush1.bf16.msra.mxu0 0
    %5820 = vmatprep.subr.bf16.mxu0 0
    %5821 = vmatpush1.bf16.msra.mxu0 0
    %5822 = vmatprep.subr.bf16.mxu0 0
    %5823 = vmatpush1.bf16.msra.mxu0 0
    %5824 = vmatprep.subr.bf16.mxu0 0
    %5825 = vmatpush1.bf16.msra.mxu0 0
    %5826 = vmatprep.subr.bf16.mxu0 0
    %5827 = vmatpush1.bf16.msra.mxu0 0
    %5828 = vmatprep.subr.bf16.mxu0 0
    %5829 = vmatpush1.bf16.msra.mxu0 0
    %5830 = vmatprep.subr.bf16.mxu0 0
    %5831 = vmatpush1.bf16.msra.mxu0 0
    %5832 = vmatprep.subr.bf16.mxu0 0
    %5833 = vmatpush1.bf16.msra.mxu0 0
    %5834 = vmatprep.subr.bf16.mxu0 0
    %5835 = vmatpush1.bf16.msra.mxu0 0
    %5836 = vmatprep.subr.bf16.mxu0 0
    %5837 = vmatpush1.bf16.msra.mxu0 0
    %5838 = vmatprep.subr.bf16.mxu0 0
    %5839 = vmatpush1.bf16.msra.mxu0 0
    %5840 = vmatprep.subr.bf16.mxu0 0
    %5841 = vmatpush1.bf16.msra.mxu0 0
    %5842 = vmatprep.subr.bf16.mxu0 0
    %5843 = vmatpush1.bf16.msra.mxu0 0
    %5844 = vmatprep.subr.bf16.mxu0 0
    %5845 = vmatpush1.bf16.msra.mxu0 0
    %5846 = vmatprep.subr.bf16.mxu0 0
    %5847 = vmatpush1.bf16.msra.mxu0 0
    %5848 = vmatprep.mubr.bf16.mxu0 0
    %5849 = vmatmul.mubr.bf16.gmra.mrb[0].mxu0 %v5814
    %v5850 = vpop.f32.mrb[0].mxu0
    %v5851 = vadd.f32 0.0, %v5850
    %v5852 = vpop.f32.mrb[0].mxu0
    %v5853 = vpop.f32.mrb[0].mxu0
    %v5854 = vpop.f32.mrb[0].mxu0
    %5855 = vdwg.mxu0
    %s5856 = scalar_lea.vmem [#allocation7], 80
    %v5857 = vld [vmem:[%s5856] sm:$0xf]
    %v5858 = vld [vmem:[%s5856 + $0x4] sm:$0xf]
    %v5859 = vld [vmem:[%s5856 + $0x8] sm:$0xf]
    %v5860 = vld [vmem:[%s5856 + $0xc] sm:$0xf]
    %v5861 = vpack.c.bf16 %v5851, %v5805
    %v5862 = vlaneseq
    %v5863 = vshrl.u32 %v5862, 7
    %v5864 = vsub.s32 1, %v5863
    %v5865 = vrot.slane %v5178, %v5864
    %v5870 = vunpack.c.l.b16 %v5857
    %v5871 = vunpack.c.l.b16 %v5858
    %v5872 = vunpack.c.l.b16 %v5859
    %v5873 = vunpack.c.l.b16 %v5860
    %v5874 = vpack.c.b16 %v5871, %v5870
    %v5875 = vpack.c.b16 %v5873, %v5872
    %v5879 = vsel %vm176, %v5861, 0
    %5881 = vmatprep.subr.bf16.mxu0 0
    %5882 = vmatpush1.bf16.msra.mxu0 %v5874
    %5883 = vmatprep.subr.bf16.mxu0 0
    %5884 = vmatpush1.bf16.msra.mxu0 %v5875
    %5885 = vmatprep.subr.bf16.mxu0 0
    %5886 = vmatpush1.bf16.msra.mxu0 0
    %5887 = vmatprep.subr.bf16.mxu0 0
    %5888 = vmatpush1.bf16.msra.mxu0 0
    %5889 = vmatprep.subr.bf16.mxu0 0
    %5890 = vmatpush1.bf16.msra.mxu0 0
    %5891 = vmatprep.subr.bf16.mxu0 0
    %5892 = vmatpush1.bf16.msra.mxu0 0
    %5893 = vmatprep.subr.bf16.mxu0 0
    %5894 = vmatpush1.bf16.msra.mxu0 0
    %5895 = vmatprep.subr.bf16.mxu0 0
    %5896 = vmatpush1.bf16.msra.mxu0 0
    %5897 = vmatprep.subr.bf16.mxu0 0
    %5898 = vmatpush1.bf16.msra.mxu0 0
    %5899 = vmatprep.subr.bf16.mxu0 0
    %5900 = vmatpush1.bf16.msra.mxu0 0
    %5901 = vmatprep.subr.bf16.mxu0 0
    %5902 = vmatpush1.bf16.msra.mxu0 0
    %5903 = vmatprep.subr.bf16.mxu0 0
    %5904 = vmatpush1.bf16.msra.mxu0 0
    %5905 = vmatprep.subr.bf16.mxu0 0
    %5906 = vmatpush1.bf16.msra.mxu0 0
    %5907 = vmatprep.subr.bf16.mxu0 0
    %5908 = vmatpush1.bf16.msra.mxu0 0
    %5909 = vmatprep.subr.bf16.mxu0 0
    %5910 = vmatpush1.bf16.msra.mxu0 0
    %5911 = vmatprep.subr.bf16.mxu0 0
    %5912 = vmatpush1.bf16.msra.mxu0 0
    %5913 = vmatprep.mubr.bf16.mxu0 0
    %5914 = vmatmul.mubr.bf16.gmra.mrb[0].mxu0 %v5879
    %v5915 = vpop.f32.mrb[0].mxu0
    %v5916 = vadd.f32 %v5865, %v5915
    %v5917 = vpop.f32.mrb[0].mxu0
    %v5918 = vpop.f32.mrb[0].mxu0
    %v5919 = vadd.f32 %v5865, %v5918
    %v5920 = vpop.f32.mrb[0].mxu0
    %5921 = vdwg.mxu0
    %v5922 = vadd.f32 %v5572, %v5916
    %v5923 = vadd.f32 %v5573, %v5919
    %v5924 = vsel %vm176, %v5922, 0.0
    %5925 = vadd.xlane.f32.xlu0 %v5924
    %v5926 = vpop.xlane.xlu0 %5925
    %v5927 = vsel %vm176, %v5923, 0.0
    %5928 = vadd.xlane.f32.xlu0 %v5927
    %v5929 = vpop.xlane.xlu0 %5928
    %v5930 = vmul.f32 %v5926, %v655
    %v5931 = vmul.f32 %v5929, %v655
    %v5932 = vsub.f32 %v5922, %v5930
    %v5933 = vsub.f32 %v5923, %v5931
    %v5934 = vmul.f32 %v5932, %v5932
    %v5935 = vmul.f32 %v5933, %v5933
    %v5936 = vsel %vm176, %v5934, 0.0
    %5937 = vadd.xlane.f32.xlu0 %v5936
    %v5938 = vpop.xlane.xlu0 %5937
    %v5939 = vsel %vm176, %v5935, 0.0
    %5940 = vadd.xlane.f32.xlu0 %v5939
    %v5941 = vpop.xlane.xlu0 %5940
    %v5942 = vmul.f32 %v5938, %v655
    %v5943 = vmul.f32 %v5941, %v655
    %v5944 = vadd.f32 %v5942, 1e-05
    %v5945 = vadd.f32 %v5943, 1e-05
    %v5946 = vrsqrt.pop %v5944
    %v5947 = vrsqrt.pop %v5945
    %v5948 = vmul.f32 %v5932, %v5946
    %v5949 = vmul.f32 %v5933, %v5947
    %v5950 = vlaneseq
    %v5951 = vshrl.u32 %v5950, 7
    %v5952 = vsub.s32 4, %v5951
    %v5953 = vrot.slane %v5178, %v5952
    %v5954 = vmul.f32 %v5948, %v5953
    %v5955 = vmul.f32 %v5949, %v5953
    %v5956 = vlaneseq
    %v5957 = vshrl.u32 %v5956, 7
    %v5958 = vsub.s32 7, %v5957
    %v5959 = vrot.slane %v5178, %v5958
    %v5960 = vadd.f32 %v5954, %v5959
    %v5961 = vadd.f32 %v5955, %v5959
    %s5962 = scalar_lea.vmem [#allocation8], 80
    %v5963 = vld [vmem:[%s5962] sm:$0xf]
    %v5964 = vld [vmem:[%s5962 + $0x4] sm:$0xf]
    %v5965 = vld [vmem:[%s5962 + $0x8] sm:$0xf]
    %v5966 = vld [vmem:[%s5962 + $0xc] sm:$0xf]
    %v5967 = vpack.c.bf16 %v5961, %v5960
    %s5968 = scalar_lea.vmem %s9, 5
    %v5969 = vld [vmem:[%s5968] sm:$0x1]
    %v5971 = vlaneseq
    %v5972 = vshrl.u32 %v5971, 7
    %v5973 = vsub.s32 0, %v5972
    %v5974 = vrot.slane %v5969, %v5973
    %v5980 = vunpack.c.l.b16 %v5963
    %v5981 = vunpack.c.l.b16 %v5964
    %v5982 = vunpack.c.l.b16 %v5965
    %v5983 = vunpack.c.l.b16 %v5966
    %v5984 = vpack.c.b16 %v5981, %v5980
    %v5985 = vpack.c.b16 %v5983, %v5982
    %v5989 = vsel %vm176, %v5967, 0
    %5991 = vmatprep.subr.bf16.mxu0 0
    %5992 = vmatpush1.bf16.msra.mxu0 %v5984
    %5993 = vmatprep.subr.bf16.mxu0 0
    %5994 = vmatpush1.bf16.msra.mxu0 %v5985
    %5995 = vmatprep.subr.bf16.mxu0 0
    %5996 = vmatpush1.bf16.msra.mxu0 0
    %5997 = vmatprep.subr.bf16.mxu0 0
    %5998 = vmatpush1.bf16.msra.mxu0 0
    %5999 = vmatprep.subr.bf16.mxu0 0
    %6000 = vmatpush1.bf16.msra.mxu0 0
    %6001 = vmatprep.subr.bf16.mxu0 0
    %6002 = vmatpush1.bf16.msra.mxu0 0
    %6003 = vmatprep.subr.bf16.mxu0 0
    %6004 = vmatpush1.bf16.msra.mxu0 0
    %6005 = vmatprep.subr.bf16.mxu0 0
    %6006 = vmatpush1.bf16.msra.mxu0 0
    %6007 = vmatprep.subr.bf16.mxu0 0
    %6008 = vmatpush1.bf16.msra.mxu0 0
    %6009 = vmatprep.subr.bf16.mxu0 0
    %6010 = vmatpush1.bf16.msra.mxu0 0
    %6011 = vmatprep.subr.bf16.mxu0 0
    %6012 = vmatpush1.bf16.msra.mxu0 0
    %6013 = vmatprep.subr.bf16.mxu0 0
    %6014 = vmatpush1.bf16.msra.mxu0 0
    %6015 = vmatprep.subr.bf16.mxu0 0
    %6016 = vmatpush1.bf16.msra.mxu0 0
    %6017 = vmatprep.subr.bf16.mxu0 0
    %6018 = vmatpush1.bf16.msra.mxu0 0
    %6019 = vmatprep.subr.bf16.mxu0 0
    %6020 = vmatpush1.bf16.msra.mxu0 0
    %6021 = vmatprep.subr.bf16.mxu0 0
    %6022 = vmatpush1.bf16.msra.mxu0 0
    %6023 = vmatprep.mubr.bf16.mxu0 0
    %6024 = vmatmul.mubr.bf16.gmra.mrb[0].mxu0 %v5989
    %v6025 = vpop.f32.mrb[0].mxu0
    %v6026 = vadd.f32 %v5974, %v6025
    %v6027 = vpop.f32.mrb[0].mxu0
    %v6028 = vpop.f32.mrb[0].mxu0
    %v6029 = vadd.f32 %v5974, %v6028
    %v6030 = vpop.f32.mrb[0].mxu0
    %6031 = vdwg.mxu0
    %v6032 = vmax.f32 %v6026, 0.0
    %v6033 = vmax.f32 %v6029, 0.0
    %s6034 = scalar_lea.vmem %s7, 160
    %v6035 = vld [vmem:[%s6034] sm:$0xf]
    %v6036 = vld [vmem:[%s6034 + $0x4] sm:$0xf]
    %v6037 = vld [vmem:[%s6034 + $0x8] sm:$0xf]
    %v6038 = vld [vmem:[%s6034 + $0xc] sm:$0xf]
    %v6039 = vld [vmem:[%s6034 + $0x10] sm:$0xf]
    %v6040 = vld [vmem:[%s6034 + $0x14] sm:$0xf]
    %v6041 = vld [vmem:[%s6034 + $0x18] sm:$0xf]
    %v6042 = vld [vmem:[%s6034 + $0x1c] sm:$0xf]
    %v6043 = vpack.c.bf16 %v6033, %v6032
    %v6044 = vlaneseq
    %v6045 = vshrl.u32 %v6044, 7
    %v6046 = vsub.s32 2, %v6045
    %v6047 = vrot.slane %v5178, %v6046
    %v6056 = vunpack.c.l.b16 %v6035
    %v6057 = vunpack.c.l.b16 %v6036
    %v6058 = vunpack.c.l.b16 %v6037
    %v6059 = vunpack.c.l.b16 %v6038
    %v6060 = vunpack.c.l.b16 %v6039
    %v6061 = vunpack.c.l.b16 %v6040
    %v6062 = vunpack.c.l.b16 %v6041
    %v6063 = vunpack.c.l.b16 %v6042
    %v6064 = vpack.c.b16 %v6057, %v6056
    %v6065 = vpack.c.b16 %v6059, %v6058
    %v6066 = vpack.c.b16 %v6061, %v6060
    %v6067 = vpack.c.b16 %v6063, %v6062
    %v6073 = vsel %vm1180, %v6043, 0
    %6075 = vmatprep.subr.bf16.mxu0 0
    %6076 = vmatpush1.bf16.msra.mxu0 %v6064
    %6077 = vmatprep.subr.bf16.mxu0 0
    %6078 = vmatpush1.bf16.msra.mxu0 %v6065
    %6079 = vmatprep.subr.bf16.mxu0 0
    %6080 = vmatpush1.bf16.msra.mxu0 %v6066
    %6081 = vmatprep.subr.bf16.mxu0 0
    %6082 = vmatpush1.bf16.msra.mxu0 %v6067
    %6083 = vmatprep.subr.bf16.mxu0 0
    %6084 = vmatpush1.bf16.msra.mxu0 0
    %6085 = vmatprep.subr.bf16.mxu0 0
    %6086 = vmatpush1.bf16.msra.mxu0 0
    %6087 = vmatprep.subr.bf16.mxu0 0
    %6088 = vmatpush1.bf16.msra.mxu0 0
    %6089 = vmatprep.subr.bf16.mxu0 0
    %6090 = vmatpush1.bf16.msra.mxu0 0
    %6091 = vmatprep.subr.bf16.mxu0 0
    %6092 = vmatpush1.bf16.msra.mxu0 0
    %6093 = vmatprep.subr.bf16.mxu0 0
    %6094 = vmatpush1.bf16.msra.mxu0 0
    %6095 = vmatprep.subr.bf16.mxu0 0
    %6096 = vmatpush1.bf16.msra.mxu0 0
    %6097 = vmatprep.subr.bf16.mxu0 0
    %6098 = vmatpush1.bf16.msra.mxu0 0
    %6099 = vmatprep.subr.bf16.mxu0 0
    %6100 = vmatpush1.bf16.msra.mxu0 0
    %6101 = vmatprep.subr.bf16.mxu0 0
    %6102 = vmatpush1.bf16.msra.mxu0 0
    %6103 = vmatprep.subr.bf16.mxu0 0
    %6104 = vmatpush1.bf16.msra.mxu0 0
    %6105 = vmatprep.subr.bf16.mxu0 0
    %6106 = vmatpush1.bf16.msra.mxu0 0
    %6107 = vmatprep.mubr.bf16.mxu0 0
    %6108 = vmatmul.mubr.bf16.gmra.mrb[0].mxu0 %v6073
    %v6109 = vpop.f32.mrb[0].mxu0
    %v6110 = vadd.f32 %v6047, %v6109
    %v6111 = vpop.f32.mrb[0].mxu0
    %v6112 = vpop.f32.mrb[0].mxu0
    %v6113 = vadd.f32 %v6047, %v6112
    %v6114 = vpop.f32.mrb[0].mxu0
    %6115 = vdwg.mxu0
    %v6116 = vadd.f32 %v5960, %v6110
    %v6117 = vadd.f32 %v5961, %v6113
    %v6118 = vsel %vm176, %v6116, 0.0
    %6119 = vadd.xlane.f32.xlu0 %v6118
    %v6120 = vpop.xlane.xlu0 %6119
    %v6121 = vsel %vm176, %v6117, 0.0
    %6122 = vadd.xlane.f32.xlu0 %v6121
    %v6123 = vpop.xlane.xlu0 %6122
    %v6124 = vmul.f32 %v6120, %v655
    %v6125 = vmul.f32 %v6123, %v655
    %v6126 = vsub.f32 %v6116, %v6124
    %v6127 = vsub.f32 %v6117, %v6125
    %v6128 = vmul.f32 %v6126, %v6126
    %v6129 = vmul.f32 %v6127, %v6127
    %v6130 = vsel %vm176, %v6128, 0.0
    %6131 = vadd.xlane.f32.xlu0 %v6130
    %v6132 = vpop.xlane.xlu0 %6131
    %v6133 = vsel %vm176, %v6129, 0.0
    %6134 = vadd.xlane.f32.xlu0 %v6133
    %v6135 = vpop.xlane.xlu0 %6134
    %v6136 = vmul.f32 %v6132, %v655
    %v6137 = vmul.f32 %v6135, %v655
    %v6138 = vadd.f32 %v6136, 1e-05
    %v6139 = vadd.f32 %v6137, 1e-05
    %v6140 = vrsqrt.pop %v6138
    %v6141 = vrsqrt.pop %v6139
    %v6142 = vmul.f32 %v6126, %v6140
    %v6143 = vmul.f32 %v6127, %v6141
    %v6144 = vlaneseq
    %v6145 = vshrl.u32 %v6144, 7
    %v6146 = vsub.s32 5, %v6145
    %v6147 = vrot.slane %v5178, %v6146
    %v6148 = vmul.f32 %v6142, %v6147
    %v6149 = vmul.f32 %v6143, %v6147
    %v6150 = vlaneseq
    %v6151 = vshrl.u32 %v6150, 7
    %v6152 = vsub.s32 0, %v6151
    %v6153 = vrot.slane %v5179, %v6152
    %v6154 = vadd.f32 %v6148, %v6153
    %v6155 = vadd.f32 %v6149, %v6153
    %6156 = vst.msk [vmem:[#allocation13] sm:$0xff] %vm176, %v6154
    %6157 = vst.msk [vmem:[#allocation13 + $0x8] sm:$0xff] %vm176, %v6155
    // Predicated region
    $region70: #{tpu_custom_call.1} parent=1 // pred_check
      _
    $region71: #{tpu_custom_call.1} parent=1 // pred_check_branch
      %6159 = sbr.rel (0) target = $region73
    $region72: #{tpu_custom_call.1} parent=1 // pred_region
      %s6161 = ssub.s32 256, 256
      %6162 = vsyncadd [#allocation4], %s6161
      %s6163 = sshll.u32 [#allocation13], 4
      %s6164 = int_to_ptr.vmem [resolvable:$true] %s6163
      %6169 = dma.vmem_to_hbm [thread:$0]  %s6164, 256, %s11, [#allocation4], 128, 128, 8
    $region73: #{tpu_custom_call.1} parent=1 // pred_fallthru
      _
    // Predicated region
    $region74: #{tpu_custom_call.1} parent=1 // pred_check
      _
    $region75: #{tpu_custom_call.1} parent=1 // pred_check_branch
      %6171 = sbr.rel (0) target = $region77
    $region76: #{tpu_custom_call.1} parent=1 // pred_region
      %6172 = dma.done [#allocation4], 256
    $region77: #{tpu_custom_call.1} parent=1 // pred_fallthru
      _
    %6173 = vsyncpa [#allocation3], 1
    %6174 = vsyncpa [#allocation6], 1
    %6175 = vsyncpa [#allocation9], 1
    %6176 = vsyncpa [#allocation12], 1
    %6177 = vsyncpa [#allocation4], 1

</llo_original>
